<compile_context>
chip_gen: v6e
topology: v6e:2x2x1
jax: 0.10.0
libtpu: 0.0.40
codegen_flags: <defaults>
</compile_context>

<pallas_src>
import functools
import math

import jax
import jax.numpy as jnp
from jax.experimental import pallas as pl
from jax.experimental.pallas import tpu as pltpu

_F32 = jnp.float32
_BF16 = jnp.bfloat16
_HI = jax.lax.Precision.HIGHEST


def _ghost_bottleneck_kernel(W, c1i, c2i,
                             masks_ref, pool_ref, expand_ref, x_ref,
                             wp1_ref, bp1_ref, wd1_ref, bd1_ref,
                             wfc1a_ref, wfc1b_ref, bfc1_ref,
                             wfc2_ref, bfc2_ref,
                             wp2a_ref, wp2b_ref, bp2_ref, wd2_ref, bd2_ref,
                             o_ref):
    x = x_ref[...]                      # (cin, L) f32, L = Bt*H*W
    masks = masks_ref[...]              # (9, L)  f32 {0,1} zero-pad masks
    L = x.shape[-1]

    def dw3x3(z, wd_t, bias):
        # Depthwise 3x3, stride 1, zero pad 1, on a (C, L) tile.  Lane rolls
        # (XLU) + precomputed validity masks give exact zero-padding; the
        # masks are shared by both depthwise convs.
        acc = jnp.zeros_like(z)
        for oi in (-1, 0, 1):
            for oj in (-1, 0, 1):
                k = (oi + 1) * 3 + (oj + 1)      # PyTorch tap order ki*3+kj
                tap = wd_t[:, k:k + 1]           # (C, 1) per-channel weight
                d = oi * W + oj
                if d == 0:
                    acc = acc + z * tap
                else:
                    sh = pltpu.roll(z, shift=(-d) % L, axis=1)
                    acc = acc + (sh * masks[k:k + 1, :]) * tap
        return acc + bias

    # --- GhostModule 1: 1x1 conv (BN folded, bf16 MXU inputs) + ReLU,
    #     then 3x3 depthwise conv + BN + ReLU.
    p1 = jnp.dot(wp1_ref[...].astype(_BF16), x.astype(_BF16),
                 preferred_element_type=_F32)                  # (c1i, L)
    p1 = jnp.maximum(p1 + bp1_ref[...], 0.0)
    d1 = jnp.maximum(dw3x3(p1, wd1_ref[...], bd1_ref[...]), 0.0)

    # --- SELayer on h = [p1; d1]: per-image mean over each image's lanes.
    m1 = jnp.dot(p1, pool_ref[...], precision=_HI,
                 preferred_element_type=_F32)                  # (c1i, Bt)
    m2 = jnp.dot(d1, pool_ref[...], precision=_HI,
                 preferred_element_type=_F32)                  # (c1i, Bt)
    z = (jnp.dot(wfc1a_ref[...], m1, precision=_HI, preferred_element_type=_F32)
         + jnp.dot(wfc1b_ref[...], m2, precision=_HI, preferred_element_type=_F32)
         + bfc1_ref[...])
    z = jnp.maximum(z, 0.0)                                    # (red, Bt)
    g = (jnp.dot(wfc2_ref[...], z, precision=_HI, preferred_element_type=_F32)
         + bfc2_ref[...])
    g = jnp.clip(g, 0.0, 1.0)                                  # (hidden, Bt)
    # broadcast each image's gate back over that image's lanes (no concat)
    g1 = jnp.dot(g[:c1i, :], expand_ref[...], precision=_HI,
                 preferred_element_type=_F32)                  # (c1i, L)
    g2 = jnp.dot(g[c1i:, :], expand_ref[...], precision=_HI,
                 preferred_element_type=_F32)                  # (c1i, L)
    p1 = p1 * g1
    d1 = d1 * g2

    # --- GhostModule 2: 1x1 conv over [p1; d1] as a split matmul (no concat),
    #     BN folded, no ReLU; then 3x3 depthwise conv + BN (no ReLU).
    p2 = (jnp.dot(wp2a_ref[...].astype(_BF16), p1.astype(_BF16),
                  preferred_element_type=_F32)
          + jnp.dot(wp2b_ref[...].astype(_BF16), d1.astype(_BF16),
                    preferred_element_type=_F32)
          + bp2_ref[...])                                      # (c2i, L)
    d2 = dw3x3(p2, wd2_ref[...], bd2_ref[...])                 # (c2i, L)

    # --- identity shortcut (stride=1, inp==oup) + disjoint-channel stores.
    o_ref[0:c2i, :] = (p2 + x[0:c2i, :]).astype(o_ref.dtype)
    o_ref[c2i:2 * c2i, :] = (d2 + x[c2i:2 * c2i, :]).astype(o_ref.dtype)


def _pick_images_per_block(n, hw, max_ch):
    """Largest divisor of n whose block stays under ~512 KiB while keeping at
    least 2 grid steps when possible (so v7x can shard the batch axis)."""
    cap = max(1, (512 * 1024) // (hw * max_ch * 4))
    divs = [d for d in range(1, n + 1) if n % d == 0 and d <= cap]
    pref = [d for d in divs if n // d >= 2]
    return max(pref) if pref else max(divs)


def ghost_bottleneck(x, params, hidden_dim, oup):
    """GhostBottleneck forward (stride=1, use_se=True, identity shortcut).

    x: (N, H, W, Cin) NHWC float32.  Returns (N, H, W, oup) float32.
    """
    N, H, W, cin = x.shape
    HW = H * W
    c1i = math.ceil(hidden_dim / 2)      # GhostModule ratio = 2
    c2i = math.ceil(oup / 2)
    assert cin == oup, "identity shortcut requires inp == oup (stride=1)"
    assert hidden_dim == 2 * c1i and oup == 2 * c2i, "even ghost widths only"
    # TODO(synk): stride=2 path (extra dw conv + conv shortcut) not implemented.

    bt = _pick_images_per_block(N, HW, max(cin, hidden_dim, oup))
    L = bt * HW

    # ---- constant auxiliary arrays (constant index_map -> VMEM-resident).
    # 3x3 zero-padding validity masks over the flattened (image,row,col) lanes.
    ii = jnp.arange(H).reshape(1, H, 1)
    jj = jnp.arange(W).reshape(1, 1, W)
    rows = []
    for oi in (-1, 0, 1):
        for oj in (-1, 0, 1):
            valid = ((ii + oi >= 0) & (ii + oi < H) &
                     (jj + oj >= 0) & (jj + oj < W))
            rows.append(jnp.broadcast_to(valid, (bt, H, W)).reshape(L))
    masks = jnp.stack(rows, axis=0).astype(_F32)               # (9, L)
    # per-image average-pool / gate-broadcast matrices for the SE layer
    img_of_lane = jnp.repeat(jnp.arange(bt), HW)
    onehot = (img_of_lane[:, None] == jnp.arange(bt)[None, :]).astype(_F32)
    pool = onehot / float(HW)                                  # (L, bt)
    expand = onehot.T                                          # (bt, L)

    # ---- fold BN scales into conv weights; transpose to (C_out, C_in)/(C, 9).
    p = params
    wp1 = (p["wp1"] * p["sp1"]).T                              # (c1i, cin)
    bp1 = p["bp1"].reshape(c1i, 1)
    wd1 = (p["wd1"] * p["sd1"]).T                              # (c1i, 9)
    bd1 = p["bd1"].reshape(c1i, 1)
    wfc1t = p["wfc1"].T                                        # (red, hidden)
    wfc1a = wfc1t[:, :c1i]
    wfc1b = wfc1t[:, c1i:]
    bfc1 = p["bfc1"].reshape(-1, 1)
    wfc2 = p["wfc2"].T                                         # (hidden, red)
    bfc2 = p["bfc2"].reshape(hidden_dim, 1)
    wp2t = (p["wp2"] * p["sp2"]).T                             # (c2i, hidden)
    wp2a = wp2t[:, :c1i]
    wp2b = wp2t[:, c1i:]
    bp2 = p["bp2"].reshape(c2i, 1)
    wd2 = (p["wd2"] * p["sd2"]).T                              # (c2i, 9)
    bd2 = p["bd2"].reshape(c2i, 1)
    weights = [wp1, bp1, wd1, bd1, wfc1a, wfc1b, bfc1, wfc2, bfc2,
               wp2a, wp2b, bp2, wd2, bd2]
    # TODO(synk): the many tiny weight arrays could be packed into one slab to
    #             further cut per-call DMA descriptors.

    # ---- channels-first, flattened-spatial layout (lane-dense blocks).
    x_t = x.transpose(3, 0, 1, 2).reshape(cin, N * HW)

    def const_spec(a):
        return pl.BlockSpec(a.shape, lambda i: (0,) * a.ndim)

    kernel = functools.partial(_ghost_bottleneck_kernel, W, c1i, c2i)
    out_t = pl.pallas_call(
        kernel,
        out_shape=jax.ShapeDtypeStruct((oup, N * HW), x.dtype),
        grid=(N // bt,),
        in_specs=[const_spec(masks), const_spec(pool), const_spec(expand),
                  pl.BlockSpec((cin, L), lambda i: (0, i))]
                 + [const_spec(w) for w in weights],
        out_specs=pl.BlockSpec((oup, L), lambda i: (0, i)),
        compiler_params=pltpu.CompilerParams(
            dimension_semantics=("parallel",)),
    )(masks, pool, expand, x_t, *weights)

    return out_t.reshape(oup, N, H, W).transpose(1, 2, 3, 0)


def init_params(key, inp, hidden_dim, oup, ratio=2, reduction=4, eps=1e-5):
    c1i = math.ceil(hidden_dim / ratio)
    c2i = math.ceil(oup / ratio)
    red = hidden_dim // reduction
    keys = iter(jax.random.split(key, 32))

    def nrm(shape, scale=0.1, shift=0.0):
        return shift + scale * jax.random.normal(next(keys), shape, jnp.float32)

    def bn_fold(c):
        gamma = nrm((1, c), shift=1.0)
        beta = nrm((1, c))
        mean = nrm((1, c))
        var = jnp.abs(nrm((1, c), shift=1.0))
        scale = gamma / jnp.sqrt(var + eps)
        bias = beta - mean * scale
        return scale, bias

    p = {}
    p["wp1"] = nrm((inp, c1i))
    p["sp1"], p["bp1"] = bn_fold(c1i)
    p["wd1"] = nrm((9, c1i))
    p["sd1"], p["bd1"] = bn_fold(c1i)
    p["wfc1"] = nrm((hidden_dim, red), scale=0.3)
    p["bfc1"] = nrm((1, red))
    p["wfc2"] = nrm((red, hidden_dim), scale=0.3)
    p["bfc2"] = nrm((1, hidden_dim), shift=0.5)
    p["wp2"] = nrm((hidden_dim, c2i))
    p["sp2"], p["bp2"] = bn_fold(c2i)
    p["wd2"] = nrm((9, c2i))
    p["sd2"], p["bd2"] = bn_fold(c2i)
    return p


def reference(x, p, hidden_dim, oup):
    """Pure-JAX NHWC reference (same math).  Mirrors the kernel's bf16
    rounding of the two 1x1-conv matmul inputs (BN scale folded first);
    everything else is f32."""
    N, H, W, cin = x.shape
    hp = jax.lax.Precision.HIGHEST
    q = lambda t: t.astype(jnp.bfloat16).astype(jnp.float32)

    def dw3x3(z, wd):
        zp = jnp.pad(z, ((0, 0), (1, 1), (1, 1), (0, 0)))
        acc = jnp.zeros_like(z)
        for ki in range(3):
            for kj in range(3):
                acc = acc + zp[:, ki:ki + H, kj:kj + W, :] * wd[ki * 3 + kj]
        return acc

    x2 = x.reshape(N, H * W, cin)
    # GhostModule 1 (relu=True)
    w1 = q(p["wp1"] * p["sp1"])
    p1 = jnp.maximum(jnp.matmul(q(x2), w1, precision=hp) + p["bp1"], 0.0)
    c1i = p1.shape[-1]
    d1 = dw3x3(p1.reshape(N, H, W, c1i), p["wd1"]).reshape(N, H * W, c1i)
    d1 = jnp.maximum(d1 * p["sd1"] + p["bd1"], 0.0)
    h = jnp.concatenate([p1, d1], axis=-1)[..., :hidden_dim]
    # SELayer
    y = jnp.mean(h, axis=1, keepdims=True)
    y = jnp.maximum(jnp.matmul(y, p["wfc1"], precision=hp) + p["bfc1"], 0.0)
    y = jnp.clip(jnp.matmul(y, p["wfc2"], precision=hp) + p["bfc2"], 0.0, 1.0)
    h = h * y
    # GhostModule 2 (relu=False)
    w2 = q(p["wp2"] * p["sp2"])
    p2 = jnp.matmul(q(h), w2, precision=hp) + p["bp2"]
    c2i = p2.shape[-1]
    d2 = dw3x3(p2.reshape(N, H, W, c2i), p["wd2"]).reshape(N, H * W, c2i)
    d2 = d2 * p["sd2"] + p["bd2"]
    out = jnp.concatenate([p2, d2], axis=-1)[..., :oup] + x2
    return out.reshape(N, H, W, oup)


if __name__ == "__main__":
    key = jax.random.PRNGKey(0)
    kx, kp = jax.random.split(key)

    # GhostBottleneck(inp=16, hidden_dim=32, oup=16, kernel_size=3, stride=1,
    #                 use_se=True); batch=4 so we get 2 images per block and
    #                 2 "parallel" grid steps.
    N, H, W = 4, 16, 16
    inp = oup = 16
    hidden_dim = 32

    x = jax.random.normal(kx, (N, H, W, inp), jnp.float32)   # NHWC
    params = init_params(kp, inp, hidden_dim, oup)

    out = ghost_bottleneck(x, params, hidden_dim, oup)
    out = jax.block_until_ready(out)

    ref = reference(x, params, hidden_dim, oup)
    assert out.shape == (N, H, W, oup), out.shape
    max_err = float(jnp.max(jnp.abs(out - ref)))
    # bf16 MXU inputs (mirrored in the reference) -> remaining mismatch is
    # accumulation-order level; 2e-3 gives comfortable margin.
    assert jnp.allclose(out, ref, atol=2e-3, rtol=2e-3), max_err

    print("KERNEL_OK")
</pallas_src>

<mosaic_0001>
module attributes {stable_mosaic.version = 11 : i64} {
  func.func @_ghost_bottleneck_kernel(%arg0: i32, %arg1: memref<9x512xf32, #tpu.memory_space<vmem>>, %arg2: memref<512x2xf32, #tpu.memory_space<vmem>>, %arg3: memref<2x512xf32, #tpu.memory_space<vmem>>, %arg4: memref<16x512xf32, #tpu.memory_space<vmem>>, %arg5: memref<16x16xf32, #tpu.memory_space<vmem>>, %arg6: memref<16x1xf32, #tpu.memory_space<vmem>>, %arg7: memref<16x9xf32, #tpu.memory_space<vmem>>, %arg8: memref<16x1xf32, #tpu.memory_space<vmem>>, %arg9: memref<8x16xf32, #tpu.memory_space<vmem>>, %arg10: memref<8x16xf32, #tpu.memory_space<vmem>>, %arg11: memref<8x1xf32, #tpu.memory_space<vmem>>, %arg12: memref<32x8xf32, #tpu.memory_space<vmem>>, %arg13: memref<32x1xf32, #tpu.memory_space<vmem>>, %arg14: memref<8x16xf32, #tpu.memory_space<vmem>>, %arg15: memref<8x16xf32, #tpu.memory_space<vmem>>, %arg16: memref<8x1xf32, #tpu.memory_space<vmem>>, %arg17: memref<8x9xf32, #tpu.memory_space<vmem>>, %arg18: memref<8x1xf32, #tpu.memory_space<vmem>>, %arg19: memref<16x512xf32, #tpu.memory_space<vmem>>) attributes {dimension_semantics = [#tpu.dimension_semantics<parallel>], iteration_bounds = array<i64: 2>, scalar_prefetch = 0 : i64, scratch_operands = 0 : i64, tpu.core_type = #tpu.core_type<tc>, window_params = [{pipeline_mode = #tpu.pipeline_mode<synchronous>, transform_indices = @transform_0, window_bounds = array<i64: 9, 512>}, {pipeline_mode = #tpu.pipeline_mode<synchronous>, transform_indices = @transform_1, window_bounds = array<i64: 512, 2>}, {pipeline_mode = #tpu.pipeline_mode<synchronous>, transform_indices = @transform_2, window_bounds = array<i64: 2, 512>}, {transform_indices = @transform_3, window_bounds = array<i64: 16, 512>}, {pipeline_mode = #tpu.pipeline_mode<synchronous>, transform_indices = @transform_4, window_bounds = array<i64: 16, 16>}, {pipeline_mode = #tpu.pipeline_mode<synchronous>, transform_indices = @transform_5, window_bounds = array<i64: 16, 1>}, {pipeline_mode = #tpu.pipeline_mode<synchronous>, transform_indices = @transform_6, window_bounds = array<i64: 16, 9>}, {pipeline_mode = #tpu.pipeline_mode<synchronous>, transform_indices = @transform_7, window_bounds = array<i64: 16, 1>}, {pipeline_mode = #tpu.pipeline_mode<synchronous>, transform_indices = @transform_8, window_bounds = array<i64: 8, 16>}, {pipeline_mode = #tpu.pipeline_mode<synchronous>, transform_indices = @transform_9, window_bounds = array<i64: 8, 16>}, {pipeline_mode = #tpu.pipeline_mode<synchronous>, transform_indices = @transform_10, window_bounds = array<i64: 8, 1>}, {pipeline_mode = #tpu.pipeline_mode<synchronous>, transform_indices = @transform_11, window_bounds = array<i64: 32, 8>}, {pipeline_mode = #tpu.pipeline_mode<synchronous>, transform_indices = @transform_12, window_bounds = array<i64: 32, 1>}, {pipeline_mode = #tpu.pipeline_mode<synchronous>, transform_indices = @transform_13, window_bounds = array<i64: 8, 16>}, {pipeline_mode = #tpu.pipeline_mode<synchronous>, transform_indices = @transform_14, window_bounds = array<i64: 8, 16>}, {pipeline_mode = #tpu.pipeline_mode<synchronous>, transform_indices = @transform_15, window_bounds = array<i64: 8, 1>}, {pipeline_mode = #tpu.pipeline_mode<synchronous>, transform_indices = @transform_16, window_bounds = array<i64: 8, 9>}, {pipeline_mode = #tpu.pipeline_mode<synchronous>, transform_indices = @transform_17, window_bounds = array<i64: 8, 1>}, {transform_indices = @transform_18, window_bounds = array<i64: 16, 512>}]} {
    %c0 = arith.constant 0 : index
    %c0_0 = arith.constant 0 : index
    %0 = vector.load %arg4[%c0, %c0_0] : memref<16x512xf32, #tpu.memory_space<vmem>>, vector<16x512xf32>
    %c0_1 = arith.constant 0 : index
    %c0_2 = arith.constant 0 : index
    %1 = vector.load %arg1[%c0_1, %c0_2] : memref<9x512xf32, #tpu.memory_space<vmem>>, vector<9x512xf32>
    %c0_3 = arith.constant 0 : index
    %c0_4 = arith.constant 0 : index
    %2 = vector.load %arg5[%c0_3, %c0_4] : memref<16x16xf32, #tpu.memory_space<vmem>>, vector<16x16xf32>
    %3 = arith.truncf %2 : vector<16x16xf32> to vector<16x16xbf16>
    %4 = arith.truncf %0 : vector<16x512xf32> to vector<16x512xbf16>
    %cst = arith.constant dense<0.000000e+00> : vector<16x512xf32>
    %5 = tpu.matmul %3, %4, %cst {dimension_numbers = #tpu.dot_dimension_numbers<[1], [0], [0], [1], [0, 0, 1, 1], [], []>} : vector<16x16xbf16>, vector<16x512xbf16>, vector<16x512xf32> -> vector<16x512xf32>
    %c0_5 = arith.constant 0 : index
    %c0_6 = arith.constant 0 : index
    %6 = vector.load %arg6[%c0_5, %c0_6] : memref<16x1xf32, #tpu.memory_space<vmem>>, vector<16x1xf32>
    %7 = vector.broadcast %6 : vector<16x1xf32> to vector<16x512xf32>
    %8 = arith.addf %5, %7 : vector<16x512xf32>
    %cst_7 = arith.constant 0.000000e+00 : f32
    %9 = vector.broadcast %cst_7 : f32 to vector<16x512xf32>
    %10 = arith.maximumf %8, %9 : vector<16x512xf32>
    %c0_8 = arith.constant 0 : index
    %c0_9 = arith.constant 0 : index
    %11 = vector.load %arg7[%c0_8, %c0_9] : memref<16x9xf32, #tpu.memory_space<vmem>>, vector<16x9xf32>
    %c0_10 = arith.constant 0 : index
    %c0_11 = arith.constant 0 : index
    %12 = vector.load %arg8[%c0_10, %c0_11] : memref<16x1xf32, #tpu.memory_space<vmem>>, vector<16x1xf32>
    %cst_12 = arith.constant 0.000000e+00 : f32
    %13 = vector.broadcast %cst_12 : f32 to vector<16x512xf32>
    %14 = vector.extract_strided_slice %11 {offsets = [0, 0], sizes = [16, 1], strides = [1, 1]} : vector<16x9xf32> to vector<16x1xf32>
    %c17_i32 = arith.constant 17 : i32
    %15 = tpu.dynamic_rotate %10 by %c17_i32 dim 1 : vector<16x512xf32>, i32 -> vector<16x512xf32>
    %16 = vector.extract_strided_slice %1 {offsets = [0, 0], sizes = [1, 512], strides = [1, 1]} : vector<9x512xf32> to vector<1x512xf32>
    %17 = vector.broadcast %16 : vector<1x512xf32> to vector<16x512xf32>
    %18 = arith.mulf %15, %17 : vector<16x512xf32>
    %19 = vector.broadcast %14 : vector<16x1xf32> to vector<16x512xf32>
    %20 = arith.mulf %18, %19 : vector<16x512xf32>
    %21 = arith.addf %13, %20 : vector<16x512xf32>
    %22 = vector.extract_strided_slice %11 {offsets = [0, 1], sizes = [16, 1], strides = [1, 1]} : vector<16x9xf32> to vector<16x1xf32>
    %c16_i32 = arith.constant 16 : i32
    %23 = tpu.dynamic_rotate %10 by %c16_i32 dim 1 : vector<16x512xf32>, i32 -> vector<16x512xf32>
    %24 = vector.extract_strided_slice %1 {offsets = [1, 0], sizes = [1, 512], strides = [1, 1]} : vector<9x512xf32> to vector<1x512xf32>
    %25 = vector.broadcast %24 : vector<1x512xf32> to vector<16x512xf32>
    %26 = arith.mulf %23, %25 : vector<16x512xf32>
    %27 = vector.broadcast %22 : vector<16x1xf32> to vector<16x512xf32>
    %28 = arith.mulf %26, %27 : vector<16x512xf32>
    %29 = arith.addf %21, %28 : vector<16x512xf32>
    %30 = vector.extract_strided_slice %11 {offsets = [0, 2], sizes = [16, 1], strides = [1, 1]} : vector<16x9xf32> to vector<16x1xf32>
    %c15_i32 = arith.constant 15 : i32
    %31 = tpu.dynamic_rotate %10 by %c15_i32 dim 1 : vector<16x512xf32>, i32 -> vector<16x512xf32>
    %32 = vector.extract_strided_slice %1 {offsets = [2, 0], sizes = [1, 512], strides = [1, 1]} : vector<9x512xf32> to vector<1x512xf32>
    %33 = vector.broadcast %32 : vector<1x512xf32> to vector<16x512xf32>
    %34 = arith.mulf %31, %33 : vector<16x512xf32>
    %35 = vector.broadcast %30 : vector<16x1xf32> to vector<16x512xf32>
    %36 = arith.mulf %34, %35 : vector<16x512xf32>
    %37 = arith.addf %29, %36 : vector<16x512xf32>
    %38 = vector.extract_strided_slice %11 {offsets = [0, 3], sizes = [16, 1], strides = [1, 1]} : vector<16x9xf32> to vector<16x1xf32>
    %c1_i32 = arith.constant 1 : i32
    %39 = tpu.dynamic_rotate %10 by %c1_i32 dim 1 : vector<16x512xf32>, i32 -> vector<16x512xf32>
    %40 = vector.extract_strided_slice %1 {offsets = [3, 0], sizes = [1, 512], strides = [1, 1]} : vector<9x512xf32> to vector<1x512xf32>
    %41 = vector.broadcast %40 : vector<1x512xf32> to vector<16x512xf32>
    %42 = arith.mulf %39, %41 : vector<16x512xf32>
    %43 = vector.broadcast %38 : vector<16x1xf32> to vector<16x512xf32>
    %44 = arith.mulf %42, %43 : vector<16x512xf32>
    %45 = arith.addf %37, %44 : vector<16x512xf32>
    %46 = vector.extract_strided_slice %11 {offsets = [0, 4], sizes = [16, 1], strides = [1, 1]} : vector<16x9xf32> to vector<16x1xf32>
    %47 = vector.broadcast %46 : vector<16x1xf32> to vector<16x512xf32>
    %48 = arith.mulf %10, %47 : vector<16x512xf32>
    %49 = arith.addf %45, %48 : vector<16x512xf32>
    %50 = vector.extract_strided_slice %11 {offsets = [0, 5], sizes = [16, 1], strides = [1, 1]} : vector<16x9xf32> to vector<16x1xf32>
    %c511_i32 = arith.constant 511 : i32
    %51 = tpu.dynamic_rotate %10 by %c511_i32 dim 1 : vector<16x512xf32>, i32 -> vector<16x512xf32>
    %52 = vector.extract_strided_slice %1 {offsets = [5, 0], sizes = [1, 512], strides = [1, 1]} : vector<9x512xf32> to vector<1x512xf32>
    %53 = vector.broadcast %52 : vector<1x512xf32> to vector<16x512xf32>
    %54 = arith.mulf %51, %53 : vector<16x512xf32>
    %55 = vector.broadcast %50 : vector<16x1xf32> to vector<16x512xf32>
    %56 = arith.mulf %54, %55 : vector<16x512xf32>
    %57 = arith.addf %49, %56 : vector<16x512xf32>
    %58 = vector.extract_strided_slice %11 {offsets = [0, 6], sizes = [16, 1], strides = [1, 1]} : vector<16x9xf32> to vector<16x1xf32>
    %c497_i32 = arith.constant 497 : i32
    %59 = tpu.dynamic_rotate %10 by %c497_i32 dim 1 : vector<16x512xf32>, i32 -> vector<16x512xf32>
    %60 = vector.extract_strided_slice %1 {offsets = [6, 0], sizes = [1, 512], strides = [1, 1]} : vector<9x512xf32> to vector<1x512xf32>
    %61 = vector.broadcast %60 : vector<1x512xf32> to vector<16x512xf32>
    %62 = arith.mulf %59, %61 : vector<16x512xf32>
    %63 = vector.broadcast %58 : vector<16x1xf32> to vector<16x512xf32>
    %64 = arith.mulf %62, %63 : vector<16x512xf32>
    %65 = arith.addf %57, %64 : vector<16x512xf32>
    %66 = vector.extract_strided_slice %11 {offsets = [0, 7], sizes = [16, 1], strides = [1, 1]} : vector<16x9xf32> to vector<16x1xf32>
    %c496_i32 = arith.constant 496 : i32
    %67 = tpu.dynamic_rotate %10 by %c496_i32 dim 1 : vector<16x512xf32>, i32 -> vector<16x512xf32>
    %68 = vector.extract_strided_slice %1 {offsets = [7, 0], sizes = [1, 512], strides = [1, 1]} : vector<9x512xf32> to vector<1x512xf32>
    %69 = vector.broadcast %68 : vector<1x512xf32> to vector<16x512xf32>
    %70 = arith.mulf %67, %69 : vector<16x512xf32>
    %71 = vector.broadcast %66 : vector<16x1xf32> to vector<16x512xf32>
    %72 = arith.mulf %70, %71 : vector<16x512xf32>
    %73 = arith.addf %65, %72 : vector<16x512xf32>
    %74 = vector.extract_strided_slice %11 {offsets = [0, 8], sizes = [16, 1], strides = [1, 1]} : vector<16x9xf32> to vector<16x1xf32>
    %c495_i32 = arith.constant 495 : i32
    %75 = tpu.dynamic_rotate %10 by %c495_i32 dim 1 : vector<16x512xf32>, i32 -> vector<16x512xf32>
    %76 = vector.extract_strided_slice %1 {offsets = [8, 0], sizes = [1, 512], strides = [1, 1]} : vector<9x512xf32> to vector<1x512xf32>
    %77 = vector.broadcast %76 : vector<1x512xf32> to vector<16x512xf32>
    %78 = arith.mulf %75, %77 : vector<16x512xf32>
    %79 = vector.broadcast %74 : vector<16x1xf32> to vector<16x512xf32>
    %80 = arith.mulf %78, %79 : vector<16x512xf32>
    %81 = arith.addf %73, %80 : vector<16x512xf32>
    %82 = vector.broadcast %12 : vector<16x1xf32> to vector<16x512xf32>
    %83 = arith.addf %81, %82 : vector<16x512xf32>
    %cst_13 = arith.constant 0.000000e+00 : f32
    %84 = vector.broadcast %cst_13 : f32 to vector<16x512xf32>
    %85 = arith.maximumf %83, %84 : vector<16x512xf32>
    %c0_14 = arith.constant 0 : index
    %c0_15 = arith.constant 0 : index
    %86 = vector.load %arg2[%c0_14, %c0_15] : memref<512x2xf32, #tpu.memory_space<vmem>>, vector<512x2xf32>
    %cst_16 = arith.constant dense<0.000000e+00> : vector<16x2xf32>
    %87 = tpu.matmul %10, %86, %cst_16 {dimension_numbers = #tpu.dot_dimension_numbers<[1], [0], [0], [1], [0, 0, 1, 1], [], []>, precision = #tpu.contract_precision<fp32>} : vector<16x512xf32>, vector<512x2xf32>, vector<16x2xf32> -> vector<16x2xf32>
    %c0_17 = arith.constant 0 : index
    %c0_18 = arith.constant 0 : index
    %88 = vector.load %arg2[%c0_17, %c0_18] : memref<512x2xf32, #tpu.memory_space<vmem>>, vector<512x2xf32>
    %cst_19 = arith.constant dense<0.000000e+00> : vector<16x2xf32>
    %89 = tpu.matmul %85, %88, %cst_19 {dimension_numbers = #tpu.dot_dimension_numbers<[1], [0], [0], [1], [0, 0, 1, 1], [], []>, precision = #tpu.contract_precision<fp32>} : vector<16x512xf32>, vector<512x2xf32>, vector<16x2xf32> -> vector<16x2xf32>
    %c0_20 = arith.constant 0 : index
    %c0_21 = arith.constant 0 : index
    %90 = vector.load %arg9[%c0_20, %c0_21] : memref<8x16xf32, #tpu.memory_space<vmem>>, vector<8x16xf32>
    %cst_22 = arith.constant dense<0.000000e+00> : vector<8x2xf32>
    %91 = tpu.matmul %90, %87, %cst_22 {dimension_numbers = #tpu.dot_dimension_numbers<[1], [0], [0], [1], [0, 0, 1, 1], [], []>, precision = #tpu.contract_precision<fp32>} : vector<8x16xf32>, vector<16x2xf32>, vector<8x2xf32> -> vector<8x2xf32>
    %c0_23 = arith.constant 0 : index
    %c0_24 = arith.constant 0 : index
    %92 = vector.load %arg10[%c0_23, %c0_24] : memref<8x16xf32, #tpu.memory_space<vmem>>, vector<8x16xf32>
    %cst_25 = arith.constant dense<0.000000e+00> : vector<8x2xf32>
    %93 = tpu.matmul %92, %89, %cst_25 {dimension_numbers = #tpu.dot_dimension_numbers<[1], [0], [0], [1], [0, 0, 1, 1], [], []>, precision = #tpu.contract_precision<fp32>} : vector<8x16xf32>, vector<16x2xf32>, vector<8x2xf32> -> vector<8x2xf32>
    %94 = arith.addf %91, %93 : vector<8x2xf32>
    %c0_26 = arith.constant 0 : index
    %c0_27 = arith.constant 0 : index
    %95 = vector.load %arg11[%c0_26, %c0_27] : memref<8x1xf32, #tpu.memory_space<vmem>>, vector<8x1xf32>
    %96 = vector.broadcast %95 : vector<8x1xf32> to vector<8x2xf32>
    %97 = arith.addf %94, %96 : vector<8x2xf32>
    %cst_28 = arith.constant 0.000000e+00 : f32
    %98 = vector.broadcast %cst_28 : f32 to vector<8x2xf32>
    %99 = arith.maximumf %97, %98 : vector<8x2xf32>
    %c0_29 = arith.constant 0 : index
    %c0_30 = arith.constant 0 : index
    %100 = vector.load %arg12[%c0_29, %c0_30] : memref<32x8xf32, #tpu.memory_space<vmem>>, vector<32x8xf32>
    %cst_31 = arith.constant dense<0.000000e+00> : vector<32x2xf32>
    %101 = tpu.matmul %100, %99, %cst_31 {dimension_numbers = #tpu.dot_dimension_numbers<[1], [0], [0], [1], [0, 0, 1, 1], [], []>, precision = #tpu.contract_precision<fp32>} : vector<32x8xf32>, vector<8x2xf32>, vector<32x2xf32> -> vector<32x2xf32>
    %c0_32 = arith.constant 0 : index
    %c0_33 = arith.constant 0 : index
    %102 = vector.load %arg13[%c0_32, %c0_33] : memref<32x1xf32, #tpu.memory_space<vmem>>, vector<32x1xf32>
    %103 = vector.broadcast %102 : vector<32x1xf32> to vector<32x2xf32>
    %104 = arith.addf %101, %103 : vector<32x2xf32>
    %cst_34 = arith.constant 0.000000e+00 : f32
    %cst_35 = arith.constant 1.000000e+00 : f32
    %105 = vector.broadcast %cst_34 : f32 to vector<32x2xf32>
    %106 = arith.maximumf %105, %104 : vector<32x2xf32>
    %107 = vector.broadcast %cst_35 : f32 to vector<32x2xf32>
    %108 = arith.minimumf %107, %106 : vector<32x2xf32>
    %109 = vector.extract_strided_slice %108 {offsets = [0, 0], sizes = [16, 2], strides = [1, 1]} : vector<32x2xf32> to vector<16x2xf32>
    %c0_36 = arith.constant 0 : index
    %c0_37 = arith.constant 0 : index
    %110 = vector.load %arg3[%c0_36, %c0_37] : memref<2x512xf32, #tpu.memory_space<vmem>>, vector<2x512xf32>
    %cst_38 = arith.constant dense<0.000000e+00> : vector<16x512xf32>
    %111 = tpu.matmul %109, %110, %cst_38 {dimension_numbers = #tpu.dot_dimension_numbers<[1], [0], [0], [1], [0, 0, 1, 1], [], []>, precision = #tpu.contract_precision<fp32>} : vector<16x2xf32>, vector<2x512xf32>, vector<16x512xf32> -> vector<16x512xf32>
    %112 = vector.extract_strided_slice %108 {offsets = [16, 0], sizes = [16, 2], strides = [1, 1]} : vector<32x2xf32> to vector<16x2xf32>
    %c0_39 = arith.constant 0 : index
    %c0_40 = arith.constant 0 : index
    %113 = vector.load %arg3[%c0_39, %c0_40] : memref<2x512xf32, #tpu.memory_space<vmem>>, vector<2x512xf32>
    %cst_41 = arith.constant dense<0.000000e+00> : vector<16x512xf32>
    %114 = tpu.matmul %112, %113, %cst_41 {dimension_numbers = #tpu.dot_dimension_numbers<[1], [0], [0], [1], [0, 0, 1, 1], [], []>, precision = #tpu.contract_precision<fp32>} : vector<16x2xf32>, vector<2x512xf32>, vector<16x512xf32> -> vector<16x512xf32>
    %115 = arith.mulf %10, %111 : vector<16x512xf32>
    %116 = arith.mulf %85, %114 : vector<16x512xf32>
    %c0_42 = arith.constant 0 : index
    %c0_43 = arith.constant 0 : index
    %117 = vector.load %arg14[%c0_42, %c0_43] : memref<8x16xf32, #tpu.memory_space<vmem>>, vector<8x16xf32>
    %118 = arith.truncf %117 : vector<8x16xf32> to vector<8x16xbf16>
    %119 = arith.truncf %115 : vector<16x512xf32> to vector<16x512xbf16>
    %cst_44 = arith.constant dense<0.000000e+00> : vector<8x512xf32>
    %120 = tpu.matmul %118, %119, %cst_44 {dimension_numbers = #tpu.dot_dimension_numbers<[1], [0], [0], [1], [0, 0, 1, 1], [], []>} : vector<8x16xbf16>, vector<16x512xbf16>, vector<8x512xf32> -> vector<8x512xf32>
    %c0_45 = arith.constant 0 : index
    %c0_46 = arith.constant 0 : index
    %121 = vector.load %arg15[%c0_45, %c0_46] : memref<8x16xf32, #tpu.memory_space<vmem>>, vector<8x16xf32>
    %122 = arith.truncf %121 : vector<8x16xf32> to vector<8x16xbf16>
    %123 = arith.truncf %116 : vector<16x512xf32> to vector<16x512xbf16>
    %cst_47 = arith.constant dense<0.000000e+00> : vector<8x512xf32>
    %124 = tpu.matmul %122, %123, %cst_47 {dimension_numbers = #tpu.dot_dimension_numbers<[1], [0], [0], [1], [0, 0, 1, 1], [], []>} : vector<8x16xbf16>, vector<16x512xbf16>, vector<8x512xf32> -> vector<8x512xf32>
    %125 = arith.addf %120, %124 : vector<8x512xf32>
    %c0_48 = arith.constant 0 : index
    %c0_49 = arith.constant 0 : index
    %126 = vector.load %arg16[%c0_48, %c0_49] : memref<8x1xf32, #tpu.memory_space<vmem>>, vector<8x1xf32>
    %127 = vector.broadcast %126 : vector<8x1xf32> to vector<8x512xf32>
    %128 = arith.addf %125, %127 : vector<8x512xf32>
    %c0_50 = arith.constant 0 : index
    %c0_51 = arith.constant 0 : index
    %129 = vector.load %arg17[%c0_50, %c0_51] : memref<8x9xf32, #tpu.memory_space<vmem>>, vector<8x9xf32>
    %c0_52 = arith.constant 0 : index
    %c0_53 = arith.constant 0 : index
    %130 = vector.load %arg18[%c0_52, %c0_53] : memref<8x1xf32, #tpu.memory_space<vmem>>, vector<8x1xf32>
    %cst_54 = arith.constant 0.000000e+00 : f32
    %131 = vector.broadcast %cst_54 : f32 to vector<8x512xf32>
    %132 = vector.extract_strided_slice %129 {offsets = [0, 0], sizes = [8, 1], strides = [1, 1]} : vector<8x9xf32> to vector<8x1xf32>
    %c17_i32_55 = arith.constant 17 : i32
    %133 = tpu.dynamic_rotate %128 by %c17_i32_55 dim 1 : vector<8x512xf32>, i32 -> vector<8x512xf32>
    %134 = vector.extract_strided_slice %1 {offsets = [0, 0], sizes = [1, 512], strides = [1, 1]} : vector<9x512xf32> to vector<1x512xf32>
    %135 = vector.broadcast %134 : vector<1x512xf32> to vector<8x512xf32>
    %136 = arith.mulf %133, %135 : vector<8x512xf32>
    %137 = vector.broadcast %132 : vector<8x1xf32> to vector<8x512xf32>
    %138 = arith.mulf %136, %137 : vector<8x512xf32>
    %139 = arith.addf %131, %138 : vector<8x512xf32>
    %140 = vector.extract_strided_slice %129 {offsets = [0, 1], sizes = [8, 1], strides = [1, 1]} : vector<8x9xf32> to vector<8x1xf32>
    %c16_i32_56 = arith.constant 16 : i32
    %141 = tpu.dynamic_rotate %128 by %c16_i32_56 dim 1 : vector<8x512xf32>, i32 -> vector<8x512xf32>
    %142 = vector.extract_strided_slice %1 {offsets = [1, 0], sizes = [1, 512], strides = [1, 1]} : vector<9x512xf32> to vector<1x512xf32>
    %143 = vector.broadcast %142 : vector<1x512xf32> to vector<8x512xf32>
    %144 = arith.mulf %141, %143 : vector<8x512xf32>
    %145 = vector.broadcast %140 : vector<8x1xf32> to vector<8x512xf32>
    %146 = arith.mulf %144, %145 : vector<8x512xf32>
    %147 = arith.addf %139, %146 : vector<8x512xf32>
    %148 = vector.extract_strided_slice %129 {offsets = [0, 2], sizes = [8, 1], strides = [1, 1]} : vector<8x9xf32> to vector<8x1xf32>
    %c15_i32_57 = arith.constant 15 : i32
    %149 = tpu.dynamic_rotate %128 by %c15_i32_57 dim 1 : vector<8x512xf32>, i32 -> vector<8x512xf32>
    %150 = vector.extract_strided_slice %1 {offsets = [2, 0], sizes = [1, 512], strides = [1, 1]} : vector<9x512xf32> to vector<1x512xf32>
    %151 = vector.broadcast %150 : vector<1x512xf32> to vector<8x512xf32>
    %152 = arith.mulf %149, %151 : vector<8x512xf32>
    %153 = vector.broadcast %148 : vector<8x1xf32> to vector<8x512xf32>
    %154 = arith.mulf %152, %153 : vector<8x512xf32>
    %155 = arith.addf %147, %154 : vector<8x512xf32>
    %156 = vector.extract_strided_slice %129 {offsets = [0, 3], sizes = [8, 1], strides = [1, 1]} : vector<8x9xf32> to vector<8x1xf32>
    %c1_i32_58 = arith.constant 1 : i32
    %157 = tpu.dynamic_rotate %128 by %c1_i32_58 dim 1 : vector<8x512xf32>, i32 -> vector<8x512xf32>
    %158 = vector.extract_strided_slice %1 {offsets = [3, 0], sizes = [1, 512], strides = [1, 1]} : vector<9x512xf32> to vector<1x512xf32>
    %159 = vector.broadcast %158 : vector<1x512xf32> to vector<8x512xf32>
    %160 = arith.mulf %157, %159 : vector<8x512xf32>
    %161 = vector.broadcast %156 : vector<8x1xf32> to vector<8x512xf32>
    %162 = arith.mulf %160, %161 : vector<8x512xf32>
    %163 = arith.addf %155, %162 : vector<8x512xf32>
    %164 = vector.extract_strided_slice %129 {offsets = [0, 4], sizes = [8, 1], strides = [1, 1]} : vector<8x9xf32> to vector<8x1xf32>
    %165 = vector.broadcast %164 : vector<8x1xf32> to vector<8x512xf32>
    %166 = arith.mulf %128, %165 : vector<8x512xf32>
    %167 = arith.addf %163, %166 : vector<8x512xf32>
    %168 = vector.extract_strided_slice %129 {offsets = [0, 5], sizes = [8, 1], strides = [1, 1]} : vector<8x9xf32> to vector<8x1xf32>
    %c511_i32_59 = arith.constant 511 : i32
    %169 = tpu.dynamic_rotate %128 by %c511_i32_59 dim 1 : vector<8x512xf32>, i32 -> vector<8x512xf32>
    %170 = vector.extract_strided_slice %1 {offsets = [5, 0], sizes = [1, 512], strides = [1, 1]} : vector<9x512xf32> to vector<1x512xf32>
    %171 = vector.broadcast %170 : vector<1x512xf32> to vector<8x512xf32>
    %172 = arith.mulf %169, %171 : vector<8x512xf32>
    %173 = vector.broadcast %168 : vector<8x1xf32> to vector<8x512xf32>
    %174 = arith.mulf %172, %173 : vector<8x512xf32>
    %175 = arith.addf %167, %174 : vector<8x512xf32>
    %176 = vector.extract_strided_slice %129 {offsets = [0, 6], sizes = [8, 1], strides = [1, 1]} : vector<8x9xf32> to vector<8x1xf32>
    %c497_i32_60 = arith.constant 497 : i32
    %177 = tpu.dynamic_rotate %128 by %c497_i32_60 dim 1 : vector<8x512xf32>, i32 -> vector<8x512xf32>
    %178 = vector.extract_strided_slice %1 {offsets = [6, 0], sizes = [1, 512], strides = [1, 1]} : vector<9x512xf32> to vector<1x512xf32>
    %179 = vector.broadcast %178 : vector<1x512xf32> to vector<8x512xf32>
    %180 = arith.mulf %177, %179 : vector<8x512xf32>
    %181 = vector.broadcast %176 : vector<8x1xf32> to vector<8x512xf32>
    %182 = arith.mulf %180, %181 : vector<8x512xf32>
    %183 = arith.addf %175, %182 : vector<8x512xf32>
    %184 = vector.extract_strided_slice %129 {offsets = [0, 7], sizes = [8, 1], strides = [1, 1]} : vector<8x9xf32> to vector<8x1xf32>
    %c496_i32_61 = arith.constant 496 : i32
    %185 = tpu.dynamic_rotate %128 by %c496_i32_61 dim 1 : vector<8x512xf32>, i32 -> vector<8x512xf32>
    %186 = vector.extract_strided_slice %1 {offsets = [7, 0], sizes = [1, 512], strides = [1, 1]} : vector<9x512xf32> to vector<1x512xf32>
    %187 = vector.broadcast %186 : vector<1x512xf32> to vector<8x512xf32>
    %188 = arith.mulf %185, %187 : vector<8x512xf32>
    %189 = vector.broadcast %184 : vector<8x1xf32> to vector<8x512xf32>
    %190 = arith.mulf %188, %189 : vector<8x512xf32>
    %191 = arith.addf %183, %190 : vector<8x512xf32>
    %192 = vector.extract_strided_slice %129 {offsets = [0, 8], sizes = [8, 1], strides = [1, 1]} : vector<8x9xf32> to vector<8x1xf32>
    %c495_i32_62 = arith.constant 495 : i32
    %193 = tpu.dynamic_rotate %128 by %c495_i32_62 dim 1 : vector<8x512xf32>, i32 -> vector<8x512xf32>
    %194 = vector.extract_strided_slice %1 {offsets = [8, 0], sizes = [1, 512], strides = [1, 1]} : vector<9x512xf32> to vector<1x512xf32>
    %195 = vector.broadcast %194 : vector<1x512xf32> to vector<8x512xf32>
    %196 = arith.mulf %193, %195 : vector<8x512xf32>
    %197 = vector.broadcast %192 : vector<8x1xf32> to vector<8x512xf32>
    %198 = arith.mulf %196, %197 : vector<8x512xf32>
    %199 = arith.addf %191, %198 : vector<8x512xf32>
    %200 = vector.broadcast %130 : vector<8x1xf32> to vector<8x512xf32>
    %201 = arith.addf %199, %200 : vector<8x512xf32>
    %202 = vector.extract_strided_slice %0 {offsets = [0, 0], sizes = [8, 512], strides = [1, 1]} : vector<16x512xf32> to vector<8x512xf32>
    %203 = arith.addf %128, %202 : vector<8x512xf32>
    %c0_63 = arith.constant 0 : index
    %c0_64 = arith.constant 0 : index
    %204 = vector.load %arg19[%c0_63, %c0_64] : memref<16x512xf32, #tpu.memory_space<vmem>>, vector<8x512xf32>
    tpu.vector_store %arg19[%c0_63, %c0_64], %203 {strides = array<i32>} : memref<16x512xf32, #tpu.memory_space<vmem>>, vector<8x512xf32>,
    %205 = vector.extract_strided_slice %0 {offsets = [8, 0], sizes = [8, 512], strides = [1, 1]} : vector<16x512xf32> to vector<8x512xf32>
    %206 = arith.addf %201, %205 : vector<8x512xf32>
    %c8 = arith.constant 8 : index
    %c0_65 = arith.constant 0 : index
    %207 = vector.load %arg19[%c8, %c0_65] : memref<16x512xf32, #tpu.memory_space<vmem>>, vector<8x512xf32>
    tpu.vector_store %arg19[%c8, %c0_65], %206 {strides = array<i32>} : memref<16x512xf32, #tpu.memory_space<vmem>>, vector<8x512xf32>,
    return
  }
  func.func @transform_0(%arg0: i32) -> (i32, i32) {
    %c0_i32 = arith.constant 0 : i32
    %c0_i32_0 = arith.constant 0 : i32
    %c0_i32_1 = arith.constant 0 : i32
    return %c0_i32, %c0_i32_0 : i32, i32
  }
  func.func @transform_1(%arg0: i32) -> (i32, i32) {
    %c0_i32 = arith.constant 0 : i32
    %c0_i32_0 = arith.constant 0 : i32
    %c0_i32_1 = arith.constant 0 : i32
    return %c0_i32, %c0_i32_0 : i32, i32
  }
  func.func @transform_2(%arg0: i32) -> (i32, i32) {
    %c0_i32 = arith.constant 0 : i32
    %c0_i32_0 = arith.constant 0 : i32
    %c0_i32_1 = arith.constant 0 : i32
    return %c0_i32, %c0_i32_0 : i32, i32
  }
  func.func @transform_3(%arg0: i32) -> (i32, i32) {
    %c0_i32 = arith.constant 0 : i32
    %c0_i32_0 = arith.constant 0 : i32
    return %c0_i32, %arg0 : i32, i32
  }
  func.func @transform_4(%arg0: i32) -> (i32, i32) {
    %c0_i32 = arith.constant 0 : i32
    %c0_i32_0 = arith.constant 0 : i32
    %c0_i32_1 = arith.constant 0 : i32
    return %c0_i32, %c0_i32_0 : i32, i32
  }
  func.func @transform_5(%arg0: i32) -> (i32, i32) {
    %c0_i32 = arith.constant 0 : i32
    %c0_i32_0 = arith.constant 0 : i32
    %c0_i32_1 = arith.constant 0 : i32
    return %c0_i32, %c0_i32_0 : i32, i32
  }
  func.func @transform_6(%arg0: i32) -> (i32, i32) {
    %c0_i32 = arith.constant 0 : i32
    %c0_i32_0 = arith.constant 0 : i32
    %c0_i32_1 = arith.constant 0 : i32
    return %c0_i32, %c0_i32_0 : i32, i32
  }
  func.func @transform_7(%arg0: i32) -> (i32, i32) {
    %c0_i32 = arith.constant 0 : i32
    %c0_i32_0 = arith.constant 0 : i32
    %c0_i32_1 = arith.constant 0 : i32
    return %c0_i32, %c0_i32_0 : i32, i32
  }
  func.func @transform_8(%arg0: i32) -> (i32, i32) {
    %c0_i32 = arith.constant 0 : i32
    %c0_i32_0 = arith.constant 0 : i32
    %c0_i32_1 = arith.constant 0 : i32
    return %c0_i32, %c0_i32_0 : i32, i32
  }
  func.func @transform_9(%arg0: i32) -> (i32, i32) {
    %c0_i32 = arith.constant 0 : i32
    %c0_i32_0 = arith.constant 0 : i32
    %c0_i32_1 = arith.constant 0 : i32
    return %c0_i32, %c0_i32_0 : i32, i32
  }
  func.func @transform_10(%arg0: i32) -> (i32, i32) {
    %c0_i32 = arith.constant 0 : i32
    %c0_i32_0 = arith.constant 0 : i32
    %c0_i32_1 = arith.constant 0 : i32
    return %c0_i32, %c0_i32_0 : i32, i32
  }
  func.func @transform_11(%arg0: i32) -> (i32, i32) {
    %c0_i32 = arith.constant 0 : i32
    %c0_i32_0 = arith.constant 0 : i32
    %c0_i32_1 = arith.constant 0 : i32
    return %c0_i32, %c0_i32_0 : i32, i32
  }
  func.func @transform_12(%arg0: i32) -> (i32, i32) {
    %c0_i32 = arith.constant 0 : i32
    %c0_i32_0 = arith.constant 0 : i32
    %c0_i32_1 = arith.constant 0 : i32
    return %c0_i32, %c0_i32_0 : i32, i32
  }
  func.func @transform_13(%arg0: i32) -> (i32, i32) {
    %c0_i32 = arith.constant 0 : i32
    %c0_i32_0 = arith.constant 0 : i32
    %c0_i32_1 = arith.constant 0 : i32
    return %c0_i32, %c0_i32_0 : i32, i32
  }
  func.func @transform_14(%arg0: i32) -> (i32, i32) {
    %c0_i32 = arith.constant 0 : i32
    %c0_i32_0 = arith.constant 0 : i32
    %c0_i32_1 = arith.constant 0 : i32
    return %c0_i32, %c0_i32_0 : i32, i32
  }
  func.func @transform_15(%arg0: i32) -> (i32, i32) {
    %c0_i32 = arith.constant 0 : i32
    %c0_i32_0 = arith.constant 0 : i32
    %c0_i32_1 = arith.constant 0 : i32
    return %c0_i32, %c0_i32_0 : i32, i32
  }
  func.func @transform_16(%arg0: i32) -> (i32, i32) {
    %c0_i32 = arith.constant 0 : i32
    %c0_i32_0 = arith.constant 0 : i32
    %c0_i32_1 = arith.constant 0 : i32
    return %c0_i32, %c0_i32_0 : i32, i32
  }
  func.func @transform_17(%arg0: i32) -> (i32, i32) {
    %c0_i32 = arith.constant 0 : i32
    %c0_i32_0 = arith.constant 0 : i32
    %c0_i32_1 = arith.constant 0 : i32
    return %c0_i32, %c0_i32_0 : i32, i32
  }
  func.func @transform_18(%arg0: i32) -> (i32, i32) {
    %c0_i32 = arith.constant 0 : i32
    %c0_i32_0 = arith.constant 0 : i32
    return %c0_i32, %arg0 : i32, i32
  }
}

</mosaic_0001>

<llo_original>
// kernel: tpu_custom_call.1
$region0: #{tpu_custom_call.1}
  #allocation0 [shape = 'u32[]', space=smem, size = 0x4, offset = 0x4, fixed_abs, tag = 'smem constant byte address 0x4 - core index']
  #allocation1 [shape = 'u32[144,128]{1,0:T(1,128)}', space=vmem, size = 0x12000, scoped, tag = 'internal scratch']
  %s0 = inlined_call_operand.vmem [shape: f32[9,512], index: 0, kind: input, shape index: {}]
  %s1 = inlined_call_operand.vmem [shape: f32[512,2], index: 1, kind: input, shape index: {}]
  %s2 = inlined_call_operand.vmem [shape: f32[2,512], index: 2, kind: input, shape index: {}]
  %s3 = inlined_call_operand.vmem [shape: f32[16,1024], index: 3, kind: input, shape index: {}]
  %s4 = inlined_call_operand.vmem [shape: f32[16,16], index: 4, kind: input, shape index: {}]
  %s5 = inlined_call_operand.vmem [shape: f32[16,1], index: 5, kind: input, shape index: {}]
  %s6 = inlined_call_operand.vmem [shape: f32[16,9], index: 6, kind: input, shape index: {}]
  %s7 = inlined_call_operand.vmem [shape: f32[16,1], index: 7, kind: input, shape index: {}]
  %s8 = inlined_call_operand.vmem [shape: f32[8,16], index: 8, kind: input, shape index: {}]
  %s9 = inlined_call_operand.vmem [shape: f32[8,16], index: 9, kind: input, shape index: {}]
  %s10 = inlined_call_operand.vmem [shape: f32[8,1], index: 10, kind: input, shape index: {}]
  %s11 = inlined_call_operand.vmem [shape: f32[32,8], index: 11, kind: input, shape index: {}]
  %s12 = inlined_call_operand.vmem [shape: f32[32,1], index: 12, kind: input, shape index: {}]
  %s13 = inlined_call_operand.vmem [shape: f32[8,16], index: 13, kind: input, shape index: {}]
  %s14 = inlined_call_operand.vmem [shape: f32[8,16], index: 14, kind: input, shape index: {}]
  %s15 = inlined_call_operand.vmem [shape: f32[8,1], index: 15, kind: input, shape index: {}]
  %s16 = inlined_call_operand.vmem [shape: f32[8,9], index: 16, kind: input, shape index: {}]
  %s17 = inlined_call_operand.vmem [shape: f32[8,1], index: 17, kind: input, shape index: {}]
  %s18 = inlined_call_operand.hbm [shape: f32[16,1024], index: 18, kind: output, shape index: {}]
  %s19 = sld [smem:[#allocation0]]
  $region128: #{tpu_custom_call.1} parent=0
    _
  %s21 = ssub.s32 1, %s19
  %s22 = scalar_select 0, %s21, %s19
  $region1: #{tpu_custom_call.1} parent=0
    #allocation2 [shape = 'u8[65536]{0}', space=vmem, size = 0x10000, scoped, tag = 'input window, operand 3']
    #allocation3 [shape = 'u8[65536]{0}', space=vmem, size = 0x10000, scoped, tag = 'output window, operand 0']
    #allocation4 [shape = 's32[2]{0}', space=sflag, size = 0x8, scoped, tag = 'scoped memory for tpu_custom_call.1']
    %23 = vsyncpa [#allocation4], 0
    %s24 = scalar_lea.sflag [#allocation4], 1
    %25 = vsyncpa %s24, 0
    loop: start=0, step=1, limit=4
    $region2: #{tpu_custom_call.1} parent=1 // loop_pre_header
      _
    $region3: #{tpu_custom_call.1} parent=1 // loop_header
      %s27 = sphi 0, %s31
      %p28 = scmp.ge.s32.totalorder %s27, 4
      %s35 = sphi 0, %s35
      %s37 = sphi 0, %s35
      %s38 = sphi 0, %s37
      %s52 = sphi 0, %s38
      %s56 = sphi 0, %s56
      %s58 = sphi 0, %s56
      %s59 = sphi 0, %s58
      %s73 = sphi 0, %s59
      %s77 = sphi 0, %s77
      %s79 = sphi 0, %s77
      %s80 = sphi 0, %s79
      %s94 = sphi 0, %s80
      %s100 = sphi 0, %s102
      %s103 = sphi 0, %s100
      %s104 = sphi 0, %s103
      %s120 = sphi 0, %s104
      %s124 = sphi 0, %s124
      %s126 = sphi 0, %s124
      %s127 = sphi 0, %s126
      %s141 = sphi 0, %s127
      %s145 = sphi 0, %s145
      %s147 = sphi 0, %s145
      %s148 = sphi 0, %s147
      %s162 = sphi 0, %s148
      %s166 = sphi 0, %s166
      %s168 = sphi 0, %s166
      %s169 = sphi 0, %s168
      %s183 = sphi 0, %s169
      %s187 = sphi 0, %s187
      %s189 = sphi 0, %s187
      %s190 = sphi 0, %s189
      %s204 = sphi 0, %s190
      %s208 = sphi 0, %s208
      %s210 = sphi 0, %s208
      %s211 = sphi 0, %s210
      %s225 = sphi 0, %s211
      %s229 = sphi 0, %s229
      %s231 = sphi 0, %s229
      %s232 = sphi 0, %s231
      %s246 = sphi 0, %s232
      %s250 = sphi 0, %s250
      %s252 = sphi 0, %s250
      %s253 = sphi 0, %s252
      %s267 = sphi 0, %s253
      %s271 = sphi 0, %s271
      %s273 = sphi 0, %s271
      %s274 = sphi 0, %s273
      %s288 = sphi 0, %s274
      %s292 = sphi 0, %s292
      %s294 = sphi 0, %s292
      %s295 = sphi 0, %s294
      %s309 = sphi 0, %s295
      %s313 = sphi 0, %s313
      %s315 = sphi 0, %s313
      %s316 = sphi 0, %s315
      %s330 = sphi 0, %s316
      %s334 = sphi 0, %s334
      %s336 = sphi 0, %s334
      %s337 = sphi 0, %s336
      %s351 = sphi 0, %s337
      %s355 = sphi 0, %s355
      %s357 = sphi 0, %s355
      %s358 = sphi 0, %s357
      %s372 = sphi 0, %s358
      %s376 = sphi 0, %s376
      %s378 = sphi 0, %s376
      %s379 = sphi 0, %s378
      %s393 = sphi 0, %s379
      %s397 = sphi 0, %s397
      %s399 = sphi 0, %s397
      %s400 = sphi 0, %s399
      %s414 = sphi 0, %s400
      %s420 = sphi 0, %s422
      %s423 = sphi 0, %s420
      %s424 = sphi 0, %s423
      %s440 = sphi 0, %s424
    $region4: #{tpu_custom_call.1} parent=1 // loop_header_branch
      %30 = sbr.rel (%p28) target = $region8
    $region5: #{tpu_custom_call.1} parent=1 // loop_body
      %s32 = ssub.s32 %s27, 1
      %s33 = ssub.s32 %s27, 2
      %s34 = sadd.s32 %s27, 1
      %s36 = sadd.s32 %s35, 1
      %p39 = scmp.eq.s32.totalorder %s27, 1
      %p40 = scmp.ne.s32.totalorder %s35, %s37
      %p41 = scmp.eq.s32.totalorder %s27, 0
      %p42 = por %p40, %p41
      %p43 = scmp.ne.s32.totalorder %s35, %s37
      %p44 = scmp.eq.s32.totalorder %s32, 1
      %p45 = por %p43, %p44
      %p46 = scmp.ne.s32.totalorder %s37, %s38
      %p47 = scmp.eq.s32.totalorder %s32, 0
      %p48 = por %p46, %p47
      %p49 = scmp.ne.s32.totalorder %s37, %s38
      %p50 = scmp.eq.s32.totalorder %s33, 1
      %p51 = por %p49, %p50
      %p53 = scmp.ne.s32.totalorder %s38, %s52
      %p54 = scmp.eq.s32.totalorder %s33, 0
      %p55 = por %p53, %p54
      %s57 = sadd.s32 %s56, 1
      %p60 = scmp.eq.s32.totalorder %s27, 1
      %p61 = scmp.ne.s32.totalorder %s56, %s58
      %p62 = scmp.eq.s32.totalorder %s27, 0
      %p63 = por %p61, %p62
      %p64 = scmp.ne.s32.totalorder %s56, %s58
      %p65 = scmp.eq.s32.totalorder %s32, 1
      %p66 = por %p64, %p65
      %p67 = scmp.ne.s32.totalorder %s58, %s59
      %p68 = scmp.eq.s32.totalorder %s32, 0
      %p69 = por %p67, %p68
      %p70 = scmp.ne.s32.totalorder %s58, %s59
      %p71 = scmp.eq.s32.totalorder %s33, 1
      %p72 = por %p70, %p71
      %p74 = scmp.ne.s32.totalorder %s59, %s73
      %p75 = scmp.eq.s32.totalorder %s33, 0
      %p76 = por %p74, %p75
      %s78 = sadd.s32 %s77, 1
      %p81 = scmp.eq.s32.totalorder %s27, 1
      %p82 = scmp.ne.s32.totalorder %s77, %s79
      %p83 = scmp.eq.s32.totalorder %s27, 0
      %p84 = por %p82, %p83
      %p85 = scmp.ne.s32.totalorder %s77, %s79
      %p86 = scmp.eq.s32.totalorder %s32, 1
      %p87 = por %p85, %p86
      %p88 = scmp.ne.s32.totalorder %s79, %s80
      %p89 = scmp.eq.s32.totalorder %s32, 0
      %p90 = por %p88, %p89
      %p91 = scmp.ne.s32.totalorder %s79, %s80
      %p92 = scmp.eq.s32.totalorder %s33, 1
      %p93 = por %p91, %p92
      %p95 = scmp.ne.s32.totalorder %s80, %s94
      %p96 = scmp.eq.s32.totalorder %s33, 0
      %p97 = por %p95, %p96
      %s98 = ssub.s32 %s27, %s34
      %p99 = scmp.eq.s32.totalorder %s98, 0
      %s101 = sadd.s32 %s100, 1
      %s102 = scalar_select %p99, %s100, %s101
      %p105 = pneg %p99
      %p106 = scmp.eq.s32.totalorder %s27, 1
      %p107 = por %p105, %p106
      %p108 = scmp.ne.s32.totalorder %s100, %s103
      %p109 = scmp.eq.s32.totalorder %s27, 0
      %p110 = por %p108, %p109
      %p111 = scmp.ne.s32.totalorder %s100, %s103
      %p112 = scmp.eq.s32.totalorder %s32, 1
      %p113 = por %p111, %p112
      %p114 = scmp.ne.s32.totalorder %s103, %s104
      %p115 = scmp.eq.s32.totalorder %s32, 0
      %p116 = por %p114, %p115
      %p117 = scmp.ne.s32.totalorder %s103, %s104
      %p118 = scmp.eq.s32.totalorder %s33, 1
      %p119 = por %p117, %p118
      %p121 = scmp.ne.s32.totalorder %s104, %s120
      %p122 = scmp.eq.s32.totalorder %s33, 0
      %p123 = por %p121, %p122
      %s125 = sadd.s32 %s124, 1
      %p128 = scmp.eq.s32.totalorder %s27, 1
      %p129 = scmp.ne.s32.totalorder %s124, %s126
      %p130 = scmp.eq.s32.totalorder %s27, 0
      %p131 = por %p129, %p130
      %p132 = scmp.ne.s32.totalorder %s124, %s126
      %p133 = scmp.eq.s32.totalorder %s32, 1
      %p134 = por %p132, %p133
      %p135 = scmp.ne.s32.totalorder %s126, %s127
      %p136 = scmp.eq.s32.totalorder %s32, 0
      %p137 = por %p135, %p136
      %p138 = scmp.ne.s32.totalorder %s126, %s127
      %p139 = scmp.eq.s32.totalorder %s33, 1
      %p140 = por %p138, %p139
      %p142 = scmp.ne.s32.totalorder %s127, %s141
      %p143 = scmp.eq.s32.totalorder %s33, 0
      %p144 = por %p142, %p143
      %s146 = sadd.s32 %s145, 1
      %p149 = scmp.eq.s32.totalorder %s27, 1
      %p150 = scmp.ne.s32.totalorder %s145, %s147
      %p151 = scmp.eq.s32.totalorder %s27, 0
      %p152 = por %p150, %p151
      %p153 = scmp.ne.s32.totalorder %s145, %s147
      %p154 = scmp.eq.s32.totalorder %s32, 1
      %p155 = por %p153, %p154
      %p156 = scmp.ne.s32.totalorder %s147, %s148
      %p157 = scmp.eq.s32.totalorder %s32, 0
      %p158 = por %p156, %p157
      %p159 = scmp.ne.s32.totalorder %s147, %s148
      %p160 = scmp.eq.s32.totalorder %s33, 1
      %p161 = por %p159, %p160
      %p163 = scmp.ne.s32.totalorder %s148, %s162
      %p164 = scmp.eq.s32.totalorder %s33, 0
      %p165 = por %p163, %p164
      %s167 = sadd.s32 %s166, 1
      %p170 = scmp.eq.s32.totalorder %s27, 1
      %p171 = scmp.ne.s32.totalorder %s166, %s168
      %p172 = scmp.eq.s32.totalorder %s27, 0
      %p173 = por %p171, %p172
      %p174 = scmp.ne.s32.totalorder %s166, %s168
      %p175 = scmp.eq.s32.totalorder %s32, 1
      %p176 = por %p174, %p175
      %p177 = scmp.ne.s32.totalorder %s168, %s169
      %p178 = scmp.eq.s32.totalorder %s32, 0
      %p179 = por %p177, %p178
      %p180 = scmp.ne.s32.totalorder %s168, %s169
      %p181 = scmp.eq.s32.totalorder %s33, 1
      %p182 = por %p180, %p181
      %p184 = scmp.ne.s32.totalorder %s169, %s183
      %p185 = scmp.eq.s32.totalorder %s33, 0
      %p186 = por %p184, %p185
      %s188 = sadd.s32 %s187, 1
      %p191 = scmp.eq.s32.totalorder %s27, 1
      %p192 = scmp.ne.s32.totalorder %s187, %s189
      %p193 = scmp.eq.s32.totalorder %s27, 0
      %p194 = por %p192, %p193
      %p195 = scmp.ne.s32.totalorder %s187, %s189
      %p196 = scmp.eq.s32.totalorder %s32, 1
      %p197 = por %p195, %p196
      %p198 = scmp.ne.s32.totalorder %s189, %s190
      %p199 = scmp.eq.s32.totalorder %s32, 0
      %p200 = por %p198, %p199
      %p201 = scmp.ne.s32.totalorder %s189, %s190
      %p202 = scmp.eq.s32.totalorder %s33, 1
      %p203 = por %p201, %p202
      %p205 = scmp.ne.s32.totalorder %s190, %s204
      %p206 = scmp.eq.s32.totalorder %s33, 0
      %p207 = por %p205, %p206
      %s209 = sadd.s32 %s208, 1
      %p212 = scmp.eq.s32.totalorder %s27, 1
      %p213 = scmp.ne.s32.totalorder %s208, %s210
      %p214 = scmp.eq.s32.totalorder %s27, 0
      %p215 = por %p213, %p214
      %p216 = scmp.ne.s32.totalorder %s208, %s210
      %p217 = scmp.eq.s32.totalorder %s32, 1
      %p218 = por %p216, %p217
      %p219 = scmp.ne.s32.totalorder %s210, %s211
      %p220 = scmp.eq.s32.totalorder %s32, 0
      %p221 = por %p219, %p220
      %p222 = scmp.ne.s32.totalorder %s210, %s211
      %p223 = scmp.eq.s32.totalorder %s33, 1
      %p224 = por %p222, %p223
      %p226 = scmp.ne.s32.totalorder %s211, %s225
      %p227 = scmp.eq.s32.totalorder %s33, 0
      %p228 = por %p226, %p227
      %s230 = sadd.s32 %s229, 1
      %p233 = scmp.eq.s32.totalorder %s27, 1
      %p234 = scmp.ne.s32.totalorder %s229, %s231
      %p235 = scmp.eq.s32.totalorder %s27, 0
      %p236 = por %p234, %p235
      %p237 = scmp.ne.s32.totalorder %s229, %s231
      %p238 = scmp.eq.s32.totalorder %s32, 1
      %p239 = por %p237, %p238
      %p240 = scmp.ne.s32.totalorder %s231, %s232
      %p241 = scmp.eq.s32.totalorder %s32, 0
      %p242 = por %p240, %p241
      %p243 = scmp.ne.s32.totalorder %s231, %s232
      %p244 = scmp.eq.s32.totalorder %s33, 1
      %p245 = por %p243, %p244
      %p247 = scmp.ne.s32.totalorder %s232, %s246
      %p248 = scmp.eq.s32.totalorder %s33, 0
      %p249 = por %p247, %p248
      %s251 = sadd.s32 %s250, 1
      %p254 = scmp.eq.s32.totalorder %s27, 1
      %p255 = scmp.ne.s32.totalorder %s250, %s252
      %p256 = scmp.eq.s32.totalorder %s27, 0
      %p257 = por %p255, %p256
      %p258 = scmp.ne.s32.totalorder %s250, %s252
      %p259 = scmp.eq.s32.totalorder %s32, 1
      %p260 = por %p258, %p259
      %p261 = scmp.ne.s32.totalorder %s252, %s253
      %p262 = scmp.eq.s32.totalorder %s32, 0
      %p263 = por %p261, %p262
      %p264 = scmp.ne.s32.totalorder %s252, %s253
      %p265 = scmp.eq.s32.totalorder %s33, 1
      %p266 = por %p264, %p265
      %p268 = scmp.ne.s32.totalorder %s253, %s267
      %p269 = scmp.eq.s32.totalorder %s33, 0
      %p270 = por %p268, %p269
      %s272 = sadd.s32 %s271, 1
      %p275 = scmp.eq.s32.totalorder %s27, 1
      %p276 = scmp.ne.s32.totalorder %s271, %s273
      %p277 = scmp.eq.s32.totalorder %s27, 0
      %p278 = por %p276, %p277
      %p279 = scmp.ne.s32.totalorder %s271, %s273
      %p280 = scmp.eq.s32.totalorder %s32, 1
      %p281 = por %p279, %p280
      %p282 = scmp.ne.s32.totalorder %s273, %s274
      %p283 = scmp.eq.s32.totalorder %s32, 0
      %p284 = por %p282, %p283
      %p285 = scmp.ne.s32.totalorder %s273, %s274
      %p286 = scmp.eq.s32.totalorder %s33, 1
      %p287 = por %p285, %p286
      %p289 = scmp.ne.s32.totalorder %s274, %s288
      %p290 = scmp.eq.s32.totalorder %s33, 0
      %p291 = por %p289, %p290
      %s293 = sadd.s32 %s292, 1
      %p296 = scmp.eq.s32.totalorder %s27, 1
      %p297 = scmp.ne.s32.totalorder %s292, %s294
      %p298 = scmp.eq.s32.totalorder %s27, 0
      %p299 = por %p297, %p298
      %p300 = scmp.ne.s32.totalorder %s292, %s294
      %p301 = scmp.eq.s32.totalorder %s32, 1
      %p302 = por %p300, %p301
      %p303 = scmp.ne.s32.totalorder %s294, %s295
      %p304 = scmp.eq.s32.totalorder %s32, 0
      %p305 = por %p303, %p304
      %p306 = scmp.ne.s32.totalorder %s294, %s295
      %p307 = scmp.eq.s32.totalorder %s33, 1
      %p308 = por %p306, %p307
      %p310 = scmp.ne.s32.totalorder %s295, %s309
      %p311 = scmp.eq.s32.totalorder %s33, 0
      %p312 = por %p310, %p311
      %s314 = sadd.s32 %s313, 1
      %p317 = scmp.eq.s32.totalorder %s27, 1
      %p318 = scmp.ne.s32.totalorder %s313, %s315
      %p319 = scmp.eq.s32.totalorder %s27, 0
      %p320 = por %p318, %p319
      %p321 = scmp.ne.s32.totalorder %s313, %s315
      %p322 = scmp.eq.s32.totalorder %s32, 1
      %p323 = por %p321, %p322
      %p324 = scmp.ne.s32.totalorder %s315, %s316
      %p325 = scmp.eq.s32.totalorder %s32, 0
      %p326 = por %p324, %p325
      %p327 = scmp.ne.s32.totalorder %s315, %s316
      %p328 = scmp.eq.s32.totalorder %s33, 1
      %p329 = por %p327, %p328
      %p331 = scmp.ne.s32.totalorder %s316, %s330
      %p332 = scmp.eq.s32.totalorder %s33, 0
      %p333 = por %p331, %p332
      %s335 = sadd.s32 %s334, 1
      %p338 = scmp.eq.s32.totalorder %s27, 1
      %p339 = scmp.ne.s32.totalorder %s334, %s336
      %p340 = scmp.eq.s32.totalorder %s27, 0
      %p341 = por %p339, %p340
      %p342 = scmp.ne.s32.totalorder %s334, %s336
      %p343 = scmp.eq.s32.totalorder %s32, 1
      %p344 = por %p342, %p343
      %p345 = scmp.ne.s32.totalorder %s336, %s337
      %p346 = scmp.eq.s32.totalorder %s32, 0
      %p347 = por %p345, %p346
      %p348 = scmp.ne.s32.totalorder %s336, %s337
      %p349 = scmp.eq.s32.totalorder %s33, 1
      %p350 = por %p348, %p349
      %p352 = scmp.ne.s32.totalorder %s337, %s351
      %p353 = scmp.eq.s32.totalorder %s33, 0
      %p354 = por %p352, %p353
      %s356 = sadd.s32 %s355, 1
      %p359 = scmp.eq.s32.totalorder %s27, 1
      %p360 = scmp.ne.s32.totalorder %s355, %s357
      %p361 = scmp.eq.s32.totalorder %s27, 0
      %p362 = por %p360, %p361
      %p363 = scmp.ne.s32.totalorder %s355, %s357
      %p364 = scmp.eq.s32.totalorder %s32, 1
      %p365 = por %p363, %p364
      %p366 = scmp.ne.s32.totalorder %s357, %s358
      %p367 = scmp.eq.s32.totalorder %s32, 0
      %p368 = por %p366, %p367
      %p369 = scmp.ne.s32.totalorder %s357, %s358
      %p370 = scmp.eq.s32.totalorder %s33, 1
      %p371 = por %p369, %p370
      %p373 = scmp.ne.s32.totalorder %s358, %s372
      %p374 = scmp.eq.s32.totalorder %s33, 0
      %p375 = por %p373, %p374
      %s377 = sadd.s32 %s376, 1
      %p380 = scmp.eq.s32.totalorder %s27, 1
      %p381 = scmp.ne.s32.totalorder %s376, %s378
      %p382 = scmp.eq.s32.totalorder %s27, 0
      %p383 = por %p381, %p382
      %p384 = scmp.ne.s32.totalorder %s376, %s378
      %p385 = scmp.eq.s32.totalorder %s32, 1
      %p386 = por %p384, %p385
      %p387 = scmp.ne.s32.totalorder %s378, %s379
      %p388 = scmp.eq.s32.totalorder %s32, 0
      %p389 = por %p387, %p388
      %p390 = scmp.ne.s32.totalorder %s378, %s379
      %p391 = scmp.eq.s32.totalorder %s33, 1
      %p392 = por %p390, %p391
      %p394 = scmp.ne.s32.totalorder %s379, %s393
      %p395 = scmp.eq.s32.totalorder %s33, 0
      %p396 = por %p394, %p395
      %s398 = sadd.s32 %s397, 1
      %p401 = scmp.eq.s32.totalorder %s27, 1
      %p402 = scmp.ne.s32.totalorder %s397, %s399
      %p403 = scmp.eq.s32.totalorder %s27, 0
      %p404 = por %p402, %p403
      %p405 = scmp.ne.s32.totalorder %s397, %s399
      %p406 = scmp.eq.s32.totalorder %s32, 1
      %p407 = por %p405, %p406
      %p408 = scmp.ne.s32.totalorder %s399, %s400
      %p409 = scmp.eq.s32.totalorder %s32, 0
      %p410 = por %p408, %p409
      %p411 = scmp.ne.s32.totalorder %s399, %s400
      %p412 = scmp.eq.s32.totalorder %s33, 1
      %p413 = por %p411, %p412
      %p415 = scmp.ne.s32.totalorder %s400, %s414
      %p416 = scmp.eq.s32.totalorder %s33, 0
      %p417 = por %p415, %p416
      %s418 = ssub.s32 %s27, %s34
      %p419 = scmp.eq.s32.totalorder %s418, 0
      %s421 = sadd.s32 %s420, 1
      %s422 = scalar_select %p419, %s420, %s421
      %p425 = pneg %p419
      %p426 = scmp.eq.s32.totalorder %s27, 1
      %p427 = por %p425, %p426
      %p428 = scmp.ne.s32.totalorder %s420, %s423
      %p429 = scmp.eq.s32.totalorder %s27, 0
      %p430 = por %p428, %p429
      %p431 = scmp.ne.s32.totalorder %s420, %s423
      %p432 = scmp.eq.s32.totalorder %s32, 1
      %p433 = por %p431, %p432
      %p434 = scmp.ne.s32.totalorder %s423, %s424
      %p435 = scmp.eq.s32.totalorder %s32, 0
      %p436 = por %p434, %p435
      %p437 = scmp.ne.s32.totalorder %s423, %s424
      %p438 = scmp.eq.s32.totalorder %s33, 1
      %p439 = por %p437, %p438
      %p441 = scmp.ne.s32.totalorder %s424, %s440
      %p442 = scmp.eq.s32.totalorder %s33, 0
      %p443 = por %p441, %p442
      %p444 = scmp.le.s32.totalorder 1, %s27
      %p445 = scmp.lt.s32.totalorder %s27, 3
      %p446 = pnand %p444, %p445
      %p447 = pneg %p446
      // Predicated region
      $region9: #{tpu_custom_call.1} parent=5 // pred_check
        _
      $region10: #{tpu_custom_call.1} parent=5 // pred_check_branch
        %449 = sbr.rel (%p446) target = $region12
      $region11: #{tpu_custom_call.1} parent=5 // pred_region
        %s450 = ssub.s32 %s27, 1
        // Predicated region
        $region13: #{tpu_custom_call.1} parent=11 // pred_check
          %p451 = pneg %p48
        $region14: #{tpu_custom_call.1} parent=11 // pred_check_branch
          %453 = sbr.rel (%p451) target = $region16
        $region15: #{tpu_custom_call.1} parent=11 // pred_region
          _
        $region16: #{tpu_custom_call.1} parent=11 // pred_fallthru
          _
        // Predicated region
        $region17: #{tpu_custom_call.1} parent=11 // pred_check
          %p454 = pneg %p69
        $region18: #{tpu_custom_call.1} parent=11 // pred_check_branch
          %456 = sbr.rel (%p454) target = $region20
        $region19: #{tpu_custom_call.1} parent=11 // pred_region
          _
        $region20: #{tpu_custom_call.1} parent=11 // pred_fallthru
          _
        // Predicated region
        $region21: #{tpu_custom_call.1} parent=11 // pred_check
          %p457 = pneg %p90
        $region22: #{tpu_custom_call.1} parent=11 // pred_check_branch
          %459 = sbr.rel (%p457) target = $region24
        $region23: #{tpu_custom_call.1} parent=11 // pred_region
          _
        $region24: #{tpu_custom_call.1} parent=11 // pred_fallthru
          _
        // Predicated region
        $region25: #{tpu_custom_call.1} parent=11 // pred_check
          %p460 = pneg %p137
        $region26: #{tpu_custom_call.1} parent=11 // pred_check_branch
          %462 = sbr.rel (%p460) target = $region28
        $region27: #{tpu_custom_call.1} parent=11 // pred_region
          _
        $region28: #{tpu_custom_call.1} parent=11 // pred_fallthru
          _
        // Predicated region
        $region29: #{tpu_custom_call.1} parent=11 // pred_check
          %p463 = pneg %p158
        $region30: #{tpu_custom_call.1} parent=11 // pred_check_branch
          %465 = sbr.rel (%p463) target = $region32
        $region31: #{tpu_custom_call.1} parent=11 // pred_region
          _
        $region32: #{tpu_custom_call.1} parent=11 // pred_fallthru
          _
        // Predicated region
        $region33: #{tpu_custom_call.1} parent=11 // pred_check
          %p466 = pneg %p179
        $region34: #{tpu_custom_call.1} parent=11 // pred_check_branch
          %468 = sbr.rel (%p466) target = $region36
        $region35: #{tpu_custom_call.1} parent=11 // pred_region
          _
        $region36: #{tpu_custom_call.1} parent=11 // pred_fallthru
          _
        // Predicated region
        $region37: #{tpu_custom_call.1} parent=11 // pred_check
          %p469 = pneg %p200
        $region38: #{tpu_custom_call.1} parent=11 // pred_check_branch
          %471 = sbr.rel (%p469) target = $region40
        $region39: #{tpu_custom_call.1} parent=11 // pred_region
          _
        $region40: #{tpu_custom_call.1} parent=11 // pred_fallthru
          _
        // Predicated region
        $region41: #{tpu_custom_call.1} parent=11 // pred_check
          %p472 = pneg %p221
        $region42: #{tpu_custom_call.1} parent=11 // pred_check_branch
          %474 = sbr.rel (%p472) target = $region44
        $region43: #{tpu_custom_call.1} parent=11 // pred_region
          _
        $region44: #{tpu_custom_call.1} parent=11 // pred_fallthru
          _
        // Predicated region
        $region45: #{tpu_custom_call.1} parent=11 // pred_check
          %p475 = pneg %p242
        $region46: #{tpu_custom_call.1} parent=11 // pred_check_branch
          %477 = sbr.rel (%p475) target = $region48
        $region47: #{tpu_custom_call.1} parent=11 // pred_region
          _
        $region48: #{tpu_custom_call.1} parent=11 // pred_fallthru
          _
        // Predicated region
        $region49: #{tpu_custom_call.1} parent=11 // pred_check
          %p478 = pneg %p263
        $region50: #{tpu_custom_call.1} parent=11 // pred_check_branch
          %480 = sbr.rel (%p478) target = $region52
        $region51: #{tpu_custom_call.1} parent=11 // pred_region
          _
        $region52: #{tpu_custom_call.1} parent=11 // pred_fallthru
          _
        // Predicated region
        $region53: #{tpu_custom_call.1} parent=11 // pred_check
          %p481 = pneg %p284
        $region54: #{tpu_custom_call.1} parent=11 // pred_check_branch
          %483 = sbr.rel (%p481) target = $region56
        $region55: #{tpu_custom_call.1} parent=11 // pred_region
          _
        $region56: #{tpu_custom_call.1} parent=11 // pred_fallthru
          _
        // Predicated region
        $region57: #{tpu_custom_call.1} parent=11 // pred_check
          %p484 = pneg %p305
        $region58: #{tpu_custom_call.1} parent=11 // pred_check_branch
          %486 = sbr.rel (%p484) target = $region60
        $region59: #{tpu_custom_call.1} parent=11 // pred_region
          _
        $region60: #{tpu_custom_call.1} parent=11 // pred_fallthru
          _
        // Predicated region
        $region61: #{tpu_custom_call.1} parent=11 // pred_check
          %p487 = pneg %p326
        $region62: #{tpu_custom_call.1} parent=11 // pred_check_branch
          %489 = sbr.rel (%p487) target = $region64
        $region63: #{tpu_custom_call.1} parent=11 // pred_region
          _
        $region64: #{tpu_custom_call.1} parent=11 // pred_fallthru
          _
        // Predicated region
        $region65: #{tpu_custom_call.1} parent=11 // pred_check
          %p490 = pneg %p347
        $region66: #{tpu_custom_call.1} parent=11 // pred_check_branch
          %492 = sbr.rel (%p490) target = $region68
        $region67: #{tpu_custom_call.1} parent=11 // pred_region
          _
        $region68: #{tpu_custom_call.1} parent=11 // pred_fallthru
          _
        // Predicated region
        $region69: #{tpu_custom_call.1} parent=11 // pred_check
          %p493 = pneg %p368
        $region70: #{tpu_custom_call.1} parent=11 // pred_check_branch
          %495 = sbr.rel (%p493) target = $region72
        $region71: #{tpu_custom_call.1} parent=11 // pred_region
          _
        $region72: #{tpu_custom_call.1} parent=11 // pred_fallthru
          _
        // Predicated region
        $region73: #{tpu_custom_call.1} parent=11 // pred_check
          %p496 = pneg %p389
        $region74: #{tpu_custom_call.1} parent=11 // pred_check_branch
          %498 = sbr.rel (%p496) target = $region76
        $region75: #{tpu_custom_call.1} parent=11 // pred_region
          _
        $region76: #{tpu_custom_call.1} parent=11 // pred_fallthru
          _
        // Predicated region
        $region77: #{tpu_custom_call.1} parent=11 // pred_check
          %p499 = pneg %p410
        $region78: #{tpu_custom_call.1} parent=11 // pred_check_branch
          %501 = sbr.rel (%p499) target = $region80
        $region79: #{tpu_custom_call.1} parent=11 // pred_region
          _
        $region80: #{tpu_custom_call.1} parent=11 // pred_fallthru
          _
      $region12: #{tpu_custom_call.1} parent=5 // pred_fallthru
        _
      %p502 = scmp.lt.s32.totalorder %s27, 2
      // Predicated region
      $region81: #{tpu_custom_call.1} parent=5 // pred_check
        %p503 = pneg %p502
      $region82: #{tpu_custom_call.1} parent=5 // pred_check_branch
        %505 = sbr.rel (%p503) target = $region84
      $region83: #{tpu_custom_call.1} parent=5 // pred_region
        // Predicated region
        $region85: #{tpu_custom_call.1} parent=83 // pred_check
          %p506 = pneg %p110
        $region86: #{tpu_custom_call.1} parent=83 // pred_check_branch
          %508 = sbr.rel (%p506) target = $region88
        $region87: #{tpu_custom_call.1} parent=83 // pred_region
          %s509 = sand.u32 %s100, 1
          %s510 = sand.u32 %s100, 1
          %s511 = smul.addr %s510, 64
          %s512 = scalar_lea.vmem [#allocation2], %s511
          %s513 = smul.u32 4, %s27
          %s514 = smul.addr %s513, 8
          %s515 = scalar_lea.vmem %s3, %s514
          // Predicated region
          $region89: #{tpu_custom_call.1} parent=87 // pred_check
            _
          $region90: #{tpu_custom_call.1} parent=87 // pred_check_branch
            %517 = sbr.rel (0) target = $region92
          $region91: #{tpu_custom_call.1} parent=87 // pred_region
            // Predicated region
            $region93: #{tpu_custom_call.1} parent=91 // pred_check
              _
            $region94: #{tpu_custom_call.1} parent=91 // pred_check_branch
              %519 = sbr.rel (0) target = $region96
            $region95: #{tpu_custom_call.1} parent=91 // pred_region
              loop: start=0, step=1, limit=1
              $region97: #{tpu_custom_call.1} parent=95 // loop_pre_header
                _
              $region98: #{tpu_custom_call.1} parent=95 // loop_header
                %s521 = sphi 0, %s525
                %p522 = scmp.ge.s32.totalorder %s521, 1
                %s526 = sphi %s515, %s515
                %s527 = sphi %s512, %s512
              $region99: #{tpu_custom_call.1} parent=95 // loop_header_branch
                %524 = sbr.rel (%p522) target = $region103
              $region100: #{tpu_custom_call.1} parent=95 // loop_body
                %v528 = vld [vmem:[%s526] sm:$0xff]
                %529 = vst [vmem:[%s527] sm:$0xff] %v528
                %v530 = vld [vmem:[%s526 + $0x8] sm:$0xff]
                %531 = vst [vmem:[%s527 + $0x8] sm:$0xff] %v530
                %v532 = vld [vmem:[%s526 + $0x10] sm:$0xff]
                %533 = vst [vmem:[%s527 + $0x10] sm:$0xff] %v532
                %v534 = vld [vmem:[%s526 + $0x18] sm:$0xff]
                %535 = vst [vmem:[%s527 + $0x18] sm:$0xff] %v534
                %v536 = vld [vmem:[%s526 + $0x40] sm:$0xff]
                %537 = vst [vmem:[%s527 + $0x20] sm:$0xff] %v536
                %v538 = vld [vmem:[%s526 + $0x48] sm:$0xff]
                %539 = vst [vmem:[%s527 + $0x28] sm:$0xff] %v538
                %v540 = vld [vmem:[%s526 + $0x50] sm:$0xff]
                %541 = vst [vmem:[%s527 + $0x30] sm:$0xff] %v540
                %v542 = vld [vmem:[%s526 + $0x58] sm:$0xff]
                %543 = vst [vmem:[%s527 + $0x38] sm:$0xff] %v542
              $region101: #{tpu_custom_call.1} parent=95 // loop_footer
                %s525 = sadd.s32 1, %s521
              $region102: #{tpu_custom_call.1} parent=95 // loop_footer_branch
                %520 = sbr.rel target = $region98
              $region103: #{tpu_custom_call.1} parent=95 // loop_exit
                _
            $region96: #{tpu_custom_call.1} parent=91 // pred_fallthru
              _
            // Predicated region
            $region104: #{tpu_custom_call.1} parent=91 // pred_check
              _
            $region105: #{tpu_custom_call.1} parent=91 // pred_check_branch
              %545 = sbr.rel target = $region107
            $region106: #{tpu_custom_call.1} parent=91 // pred_region
              _
            $region107: #{tpu_custom_call.1} parent=91 // pred_fallthru
              _
          $region92: #{tpu_custom_call.1} parent=87 // pred_fallthru
            _
          %546 = vnop
        $region88: #{tpu_custom_call.1} parent=83 // pred_fallthru
          _
      $region84: #{tpu_custom_call.1} parent=5 // pred_fallthru
        _
      %p547 = scmp.le.s32.totalorder 1, %s27
      %p548 = scmp.lt.s32.totalorder %s27, 3
      %p549 = pnand %p547, %p548
      %p550 = pneg %p549
      // Predicated region
      $region108: #{tpu_custom_call.1} parent=5 // pred_check
        _
      $region109: #{tpu_custom_call.1} parent=5 // pred_check_branch
        %552 = sbr.rel (%p549) target = $region111
      $region110: #{tpu_custom_call.1} parent=5 // pred_region
        %s553 = ssub.s32 %s27, 1
        %s554 = sand.u32 %s103, 1
        %s555 = sand.u32 %s103, 1
        %s556 = smul.addr %s555, 64
        %s557 = scalar_lea.vmem [#allocation2], %s556
        // Predicated region
        $region112: #{tpu_custom_call.1} parent=110 // pred_check
          %p558 = pneg %p116
        $region113: #{tpu_custom_call.1} parent=110 // pred_check_branch
          %560 = sbr.rel (%p558) target = $region115
        $region114: #{tpu_custom_call.1} parent=110 // pred_region
          _
        $region115: #{tpu_custom_call.1} parent=110 // pred_fallthru
          _
        %p561 = pneg %p48
        %p562 = pneg %p45
        %p563 = pneg %p69
        %p564 = pneg %p66
        %p565 = pneg %p90
        %p566 = pneg %p87
        %s567 = sand.u32 %s103, 1
        %s568 = sand.u32 %s103, 1
        %s569 = smul.addr %s568, 64
        %s570 = scalar_lea.vmem [#allocation2], %s569
        %p571 = pneg %p116
        %p572 = pneg %p113
        %p573 = pneg %p137
        %p574 = pneg %p134
        %p575 = pneg %p158
        %p576 = pneg %p155
        %p577 = pneg %p179
        %p578 = pneg %p176
        %p579 = pneg %p200
        %p580 = pneg %p197
        %p581 = pneg %p221
        %p582 = pneg %p218
        %p583 = pneg %p242
        %p584 = pneg %p239
        %p585 = pneg %p263
        %p586 = pneg %p260
        %p587 = pneg %p284
        %p588 = pneg %p281
        %p589 = pneg %p305
        %p590 = pneg %p302
        %p591 = pneg %p326
        %p592 = pneg %p323
        %p593 = pneg %p347
        %p594 = pneg %p344
        %p595 = pneg %p368
        %p596 = pneg %p365
        %p597 = pneg %p389
        %p598 = pneg %p386
        %p599 = pneg %p410
        %p600 = pneg %p407
        %p601 = pneg %p436
        %p602 = pneg %p433
        %s603 = sand.u32 %s423, 1
        %s604 = scalar_lea.sflag [#allocation4], %s603
        %s605 = sand.u32 %s423, 1
        %s606 = smul.addr %s605, 64
        %s607 = scalar_lea.vmem [#allocation3], %s606
        %s608 = smul.u32 4, %s32
        %s609 = smul.u32 4, %s32
        %v611 = vld [vmem:[%s557] sm:$0xff]
        %v612 = vld [vmem:[%s557 + $0x8] sm:$0xff]
        %v613 = vld [vmem:[%s557 + $0x10] sm:$0xff]
        %v614 = vld [vmem:[%s557 + $0x18] sm:$0xff]
        %v615 = vld [vmem:[%s557 + $0x20] sm:$0xff]
        %v616 = vld [vmem:[%s557 + $0x28] sm:$0xff]
        %v617 = vld [vmem:[%s557 + $0x30] sm:$0xff]
        %v618 = vld [vmem:[%s557 + $0x38] sm:$0xff]
        %v619 = vld [vmem:[%s0] sm:$0xff]
        %v620 = vld [vmem:[%s0 + $0x8] sm:$0xff]
        %v621 = vld [vmem:[%s0 + $0x10] sm:$0xff]
        %v622 = vld [vmem:[%s0 + $0x18] sm:$0xff]
        %v623 = vld [vmem:[%s0 + $0x20] sm:$0x1]
        %v624 = vld [vmem:[%s0 + $0x28] sm:$0x1]
        %v625 = vld [vmem:[%s0 + $0x30] sm:$0x1]
        %v626 = vld [vmem:[%s0 + $0x38] sm:$0x1]
        %v627 = vld [vmem:[%s4] sm:$0xff]
        %v628 = vld [vmem:[%s4 + $0x8] sm:$0xff]
        %v629 = vpack.c.bf16 %v628, %v627
        %v630 = vpack.c.bf16 %v615, %v611
        %v631 = vpack.c.bf16 %v616, %v612
        %v632 = vpack.c.bf16 %v617, %v613
        %v633 = vpack.c.bf16 %v618, %v614
        %v634 = vld [vmem:[%s5] sm:$0xff]
        %v635 = vld [vmem:[%s5 + $0x8] sm:$0xff]
        %637 = vset.pattern.permute.xlu0 0
        %638 = vperm.xlu0 %637, %v634
        %v639 = vpop.permute.xlu0 %638
        %642 = vset.pattern.permute.xlu0 0
        %643 = vperm.xlu0 %642, %v635
        %v644 = vpop.permute.xlu0 %643
        %vm646 = vcmask 130048
        %v648 = vsel %vm646, %v629, 0
        %650 = vmatprep.subr.bf16.mxu0 0
        %651 = vmatpush1.bf16.msra.mxu0 0
        %652 = vmatprep.subr.bf16.mxu0 0
        %653 = vmatpush1.bf16.msra.mxu0 0
        %654 = vmatprep.subr.bf16.mxu0 0
        %655 = vmatpush1.bf16.msra.mxu0 0
        %656 = vmatprep.subr.bf16.mxu0 0
        %657 = vmatpush1.bf16.msra.mxu0 0
        %658 = vmatprep.subr.bf16.mxu0 0
        %659 = vmatpush1.bf16.msra.mxu0 0
        %660 = vmatprep.subr.bf16.mxu0 0
        %661 = vmatpush1.bf16.msra.mxu0 0
        %662 = vmatprep.subr.bf16.mxu0 0
        %663 = vmatpush1.bf16.msra.mxu0 0
        %664 = vmatprep.subr.bf16.mxu0 %v631
        %665 = vmatpush1.bf16.msra.mxu0 %v630
        %666 = vmatprep.subr.bf16.mxu0 0
        %667 = vmatpush2.bf16.msra.mxu0 0
        %668 = vmatprep.subr.bf16.mxu0 0
        %669 = vmatpush2.bf16.msra.mxu0 0
        %670 = vmatprep.subr.bf16.mxu0 0
        %671 = vmatpush2.bf16.msra.mxu0 0
        %672 = vmatprep.subr.bf16.mxu0 0
        %673 = vmatpush2.bf16.msra.mxu0 0
        %674 = vmatprep.subr.bf16.mxu0 0
        %675 = vmatpush2.bf16.msra.mxu0 0
        %676 = vmatprep.subr.bf16.mxu0 0
        %677 = vmatpush2.bf16.msra.mxu0 0
        %678 = vmatprep.subr.bf16.mxu0 0
        %679 = vmatpush2.bf16.msra.mxu0 0
        %680 = vmatprep.subr.bf16.mxu0 0
        %681 = vmatpush2.bf16.msra.mxu0 0
        %682 = vmatprep.mubr.bf16.mxu0 0
        %683 = vmatmul.mubr.bf16.gmra.mxu0 %v648
        %v684 = vpop.f32.mrf.mxu0
        %v685 = vadd.f32 %v639, %v684
        %v686 = vpop.f32.mrf.mxu0
        %v687 = vadd.f32 %v639, %v686
        %v688 = vpop.f32.mrf.mxu0
        %v689 = vadd.f32 %v644, %v688
        %v690 = vpop.f32.mrf.mxu0
        %v691 = vadd.f32 %v644, %v690
        %692 = vdwg.mxu0
        %693 = vmatprep.subr.bf16.mxu0 0
        %694 = vmatpush1.bf16.msra.mxu0 0
        %695 = vmatprep.subr.bf16.mxu0 0
        %696 = vmatpush1.bf16.msra.mxu0 0
        %697 = vmatprep.subr.bf16.mxu0 0
        %698 = vmatpush1.bf16.msra.mxu0 0
        %699 = vmatprep.subr.bf16.mxu0 0
        %700 = vmatpush1.bf16.msra.mxu0 0
        %701 = vmatprep.subr.bf16.mxu0 0
        %702 = vmatpush1.bf16.msra.mxu0 0
        %703 = vmatprep.subr.bf16.mxu0 0
        %704 = vmatpush1.bf16.msra.mxu0 0
        %705 = vmatprep.subr.bf16.mxu0 0
        %706 = vmatpush1.bf16.msra.mxu0 0
        %707 = vmatprep.subr.bf16.mxu0 %v633
        %708 = vmatpush1.bf16.msra.mxu0 %v632
        %709 = vmatprep.subr.bf16.mxu0 0
        %710 = vmatpush2.bf16.msra.mxu0 0
        %711 = vmatprep.subr.bf16.mxu0 0
        %712 = vmatpush2.bf16.msra.mxu0 0
        %713 = vmatprep.subr.bf16.mxu0 0
        %714 = vmatpush2.bf16.msra.mxu0 0
        %715 = vmatprep.subr.bf16.mxu0 0
        %716 = vmatpush2.bf16.msra.mxu0 0
        %717 = vmatprep.subr.bf16.mxu0 0
        %718 = vmatpush2.bf16.msra.mxu0 0
        %719 = vmatprep.subr.bf16.mxu0 0
        %720 = vmatpush2.bf16.msra.mxu0 0
        %721 = vmatprep.subr.bf16.mxu0 0
        %722 = vmatpush2.bf16.msra.mxu0 0
        %723 = vmatprep.subr.bf16.mxu0 0
        %724 = vmatpush2.bf16.msra.mxu0 0
        %725 = vmatprep.mubr.bf16.mxu0 0
        %726 = vmatmul.mubr.bf16.gmra.mxu0 %v648
        %v727 = vpop.f32.mrf.mxu0
        %v728 = vadd.f32 %v639, %v727
        %v729 = vpop.f32.mrf.mxu0
        %v730 = vadd.f32 %v639, %v729
        %v731 = vpop.f32.mrf.mxu0
        %v732 = vadd.f32 %v644, %v731
        %v733 = vpop.f32.mrf.mxu0
        %v734 = vadd.f32 %v644, %v733
        %735 = vdwg.mxu0
        %v736 = vmax.f32 %v685, 0.0
        %v737 = vmax.f32 %v687, 0.0
        %v738 = vmax.f32 %v728, 0.0
        %v739 = vmax.f32 %v730, 0.0
        %v740 = vmax.f32 %v689, 0.0
        %v741 = vmax.f32 %v691, 0.0
        %v742 = vmax.f32 %v732, 0.0
        %v743 = vmax.f32 %v734, 0.0
        %v744 = vld [vmem:[%s6] sm:$0xff]
        %v745 = vld [vmem:[%s6 + $0x8] sm:$0xff]
        %v746 = vld [vmem:[%s7] sm:$0xff]
        %v747 = vld [vmem:[%s7 + $0x8] sm:$0xff]
        %748 = vrot.lane.b32.xlu0 %v736, 17
        %v749 = vpop.permute.xlu0 %748
        %750 = vrot.lane.b32.xlu0 %v740, 17
        %v751 = vpop.permute.xlu0 %750
        %752 = vrot.lane.b32.xlu0 %v737, 17
        %v753 = vpop.permute.xlu0 %752
        %754 = vrot.lane.b32.xlu0 %v741, 17
        %v755 = vpop.permute.xlu0 %754
        %756 = vrot.lane.b32.xlu0 %v738, 17
        %v757 = vpop.permute.xlu0 %756
        %758 = vrot.lane.b32.xlu0 %v742, 17
        %v759 = vpop.permute.xlu0 %758
        %760 = vrot.lane.b32.xlu0 %v739, 17
        %v761 = vpop.permute.xlu0 %760
        %762 = vrot.lane.b32.xlu0 %v743, 17
        %v763 = vpop.permute.xlu0 %762
        %v764 = vlaneseq
        %v765 = vand.u32 %v764, 127
        %vm766 = vcmp.lt.s32.totalorder %v765, 17
        %v767 = vsel %vm766, %v757, %v761
        %v768 = vsel %vm766, %v759, %v763
        %v769 = vsel %vm766, %v753, %v757
        %v770 = vsel %vm766, %v755, %v759
        %v771 = vsel %vm766, %v749, %v753
        %v772 = vsel %vm766, %v751, %v755
        %v773 = vsel %vm766, %v761, %v749
        %v774 = vsel %vm766, %v763, %v751
        %v775 = vlaneseq
        %v776 = vshrl.u32 %v775, 7
        %v777 = vsub.s32 0, %v776
        %v778 = vrot.slane %v619, %v777
        %v779 = vlaneseq
        %v780 = vshrl.u32 %v779, 7
        %v781 = vsub.s32 0, %v780
        %v782 = vrot.slane %v620, %v781
        %v783 = vlaneseq
        %v784 = vshrl.u32 %v783, 7
        %v785 = vsub.s32 0, %v784
        %v786 = vrot.slane %v621, %v785
        %v787 = vlaneseq
        %v788 = vshrl.u32 %v787, 7
        %v789 = vsub.s32 0, %v788
        %v790 = vrot.slane %v622, %v789
        %v791 = vmul.f32 %v773, %v778
        %v792 = vmul.f32 %v771, %v782
        %v793 = vmul.f32 %v769, %v786
        %v794 = vmul.f32 %v767, %v790
        %v795 = vmul.f32 %v774, %v778
        %v796 = vmul.f32 %v772, %v782
        %v797 = vmul.f32 %v770, %v786
        %v798 = vmul.f32 %v768, %v790
        %800 = vset.pattern.permute.xlu0 0
        %801 = vperm.xlu0 %800, %v744
        %v802 = vpop.permute.xlu0 %801
        %805 = vset.pattern.permute.xlu0 0
        %806 = vperm.xlu0 %805, %v745
        %v807 = vpop.permute.xlu0 %806
        %v809 = vmul.f32 %v791, %v802
        %v810 = vmul.f32 %v792, %v802
        %v811 = vmul.f32 %v793, %v802
        %v812 = vmul.f32 %v794, %v802
        %v813 = vmul.f32 %v795, %v807
        %v814 = vmul.f32 %v796, %v807
        %v815 = vmul.f32 %v797, %v807
        %v816 = vmul.f32 %v798, %v807
        %v817 = vadd.f32 %v809, 0.0
        %v818 = vadd.f32 %v810, 0.0
        %v819 = vadd.f32 %v811, 0.0
        %v820 = vadd.f32 %v812, 0.0
        %v821 = vadd.f32 %v813, 0.0
        %v822 = vadd.f32 %v814, 0.0
        %v823 = vadd.f32 %v815, 0.0
        %v824 = vadd.f32 %v816, 0.0
        %825 = vrot.lane.b32.xlu0 %v736, 16
        %v826 = vpop.permute.xlu0 %825
        %827 = vrot.lane.b32.xlu0 %v740, 16
        %v828 = vpop.permute.xlu0 %827
        %829 = vrot.lane.b32.xlu0 %v737, 16
        %v830 = vpop.permute.xlu0 %829
        %831 = vrot.lane.b32.xlu0 %v741, 16
        %v832 = vpop.permute.xlu0 %831
        %833 = vrot.lane.b32.xlu0 %v738, 16
        %v834 = vpop.permute.xlu0 %833
        %835 = vrot.lane.b32.xlu0 %v742, 16
        %v836 = vpop.permute.xlu0 %835
        %837 = vrot.lane.b32.xlu0 %v739, 16
        %v838 = vpop.permute.xlu0 %837
        %839 = vrot.lane.b32.xlu0 %v743, 16
        %v840 = vpop.permute.xlu0 %839
        %vm841 = vcmp.lt.s32.totalorder %v765, 16
        %v842 = vsel %vm841, %v834, %v838
        %v843 = vsel %vm841, %v836, %v840
        %v844 = vsel %vm841, %v830, %v834
        %v845 = vsel %vm841, %v832, %v836
        %v846 = vsel %vm841, %v826, %v830
        %v847 = vsel %vm841, %v828, %v832
        %v848 = vsel %vm841, %v838, %v826
        %v849 = vsel %vm841, %v840, %v828
        %v850 = vlaneseq
        %v851 = vshrl.u32 %v850, 7
        %v852 = vsub.s32 1, %v851
        %v853 = vrot.slane %v619, %v852
        %v854 = vlaneseq
        %v855 = vshrl.u32 %v854, 7
        %v856 = vsub.s32 1, %v855
        %v857 = vrot.slane %v620, %v856
        %v858 = vlaneseq
        %v859 = vshrl.u32 %v858, 7
        %v860 = vsub.s32 1, %v859
        %v861 = vrot.slane %v621, %v860
        %v862 = vlaneseq
        %v863 = vshrl.u32 %v862, 7
        %v864 = vsub.s32 1, %v863
        %v865 = vrot.slane %v622, %v864
        %v866 = vmul.f32 %v848, %v853
        %v867 = vmul.f32 %v846, %v857
        %v868 = vmul.f32 %v844, %v861
        %v869 = vmul.f32 %v842, %v865
        %v870 = vmul.f32 %v849, %v853
        %v871 = vmul.f32 %v847, %v857
        %v872 = vmul.f32 %v845, %v861
        %v873 = vmul.f32 %v843, %v865
        %874 = vset.pattern.permute.xlu0 1
        %875 = vperm.xlu0 %874, %v744
        %v876 = vpop.permute.xlu0 %875
        %878 = vset.pattern.permute.xlu0 1
        %879 = vperm.xlu0 %878, %v745
        %v880 = vpop.permute.xlu0 %879
        %v882 = vmul.f32 %v866, %v876
        %v883 = vmul.f32 %v867, %v876
        %v884 = vmul.f32 %v868, %v876
        %v885 = vmul.f32 %v869, %v876
        %v886 = vmul.f32 %v870, %v880
        %v887 = vmul.f32 %v871, %v880
        %v888 = vmul.f32 %v872, %v880
        %v889 = vmul.f32 %v873, %v880
        %v890 = vadd.f32 %v817, %v882
        %v891 = vadd.f32 %v818, %v883
        %v892 = vadd.f32 %v819, %v884
        %v893 = vadd.f32 %v820, %v885
        %v894 = vadd.f32 %v821, %v886
        %v895 = vadd.f32 %v822, %v887
        %v896 = vadd.f32 %v823, %v888
        %v897 = vadd.f32 %v824, %v889
        %898 = vrot.lane.b32.xlu0 %v736, 15
        %v899 = vpop.permute.xlu0 %898
        %900 = vrot.lane.b32.xlu0 %v740, 15
        %v901 = vpop.permute.xlu0 %900
        %902 = vrot.lane.b32.xlu0 %v737, 15
        %v903 = vpop.permute.xlu0 %902
        %904 = vrot.lane.b32.xlu0 %v741, 15
        %v905 = vpop.permute.xlu0 %904
        %906 = vrot.lane.b32.xlu0 %v738, 15
        %v907 = vpop.permute.xlu0 %906
        %908 = vrot.lane.b32.xlu0 %v742, 15
        %v909 = vpop.permute.xlu0 %908
        %910 = vrot.lane.b32.xlu0 %v739, 15
        %v911 = vpop.permute.xlu0 %910
        %912 = vrot.lane.b32.xlu0 %v743, 15
        %v913 = vpop.permute.xlu0 %912
        %vm914 = vcmp.lt.s32.totalorder %v765, 15
        %v915 = vsel %vm914, %v907, %v911
        %v916 = vsel %vm914, %v909, %v913
        %v917 = vsel %vm914, %v903, %v907
        %v918 = vsel %vm914, %v905, %v909
        %v919 = vsel %vm914, %v899, %v903
        %v920 = vsel %vm914, %v901, %v905
        %v921 = vsel %vm914, %v911, %v899
        %v922 = vsel %vm914, %v913, %v901
        %v923 = vlaneseq
        %v924 = vshrl.u32 %v923, 7
        %v925 = vsub.s32 2, %v924
        %v926 = vrot.slane %v619, %v925
        %v927 = vlaneseq
        %v928 = vshrl.u32 %v927, 7
        %v929 = vsub.s32 2, %v928
        %v930 = vrot.slane %v620, %v929
        %v931 = vlaneseq
        %v932 = vshrl.u32 %v931, 7
        %v933 = vsub.s32 2, %v932
        %v934 = vrot.slane %v621, %v933
        %v935 = vlaneseq
        %v936 = vshrl.u32 %v935, 7
        %v937 = vsub.s32 2, %v936
        %v938 = vrot.slane %v622, %v937
        %v939 = vmul.f32 %v921, %v926
        %v940 = vmul.f32 %v919, %v930
        %v941 = vmul.f32 %v917, %v934
        %v942 = vmul.f32 %v915, %v938
        %v943 = vmul.f32 %v922, %v926
        %v944 = vmul.f32 %v920, %v930
        %v945 = vmul.f32 %v918, %v934
        %v946 = vmul.f32 %v916, %v938
        %947 = vset.pattern.permute.xlu0 2
        %948 = vperm.xlu0 %947, %v744
        %v949 = vpop.permute.xlu0 %948
        %951 = vset.pattern.permute.xlu0 2
        %952 = vperm.xlu0 %951, %v745
        %v953 = vpop.permute.xlu0 %952
        %v955 = vmul.f32 %v939, %v949
        %v956 = vmul.f32 %v940, %v949
        %v957 = vmul.f32 %v941, %v949
        %v958 = vmul.f32 %v942, %v949
        %v959 = vmul.f32 %v943, %v953
        %v960 = vmul.f32 %v944, %v953
        %v961 = vmul.f32 %v945, %v953
        %v962 = vmul.f32 %v946, %v953
        %v963 = vadd.f32 %v890, %v955
        %v964 = vadd.f32 %v891, %v956
        %v965 = vadd.f32 %v892, %v957
        %v966 = vadd.f32 %v893, %v958
        %v967 = vadd.f32 %v894, %v959
        %v968 = vadd.f32 %v895, %v960
        %v969 = vadd.f32 %v896, %v961
        %v970 = vadd.f32 %v897, %v962
        %971 = vrot.lane.b32.xlu0 %v736, 1
        %v972 = vpop.permute.xlu0 %971
        %973 = vrot.lane.b32.xlu0 %v740, 1
        %v974 = vpop.permute.xlu0 %973
        %975 = vrot.lane.b32.xlu0 %v737, 1
        %v976 = vpop.permute.xlu0 %975
        %977 = vrot.lane.b32.xlu0 %v741, 1
        %v978 = vpop.permute.xlu0 %977
        %979 = vrot.lane.b32.xlu0 %v738, 1
        %v980 = vpop.permute.xlu0 %979
        %981 = vrot.lane.b32.xlu0 %v742, 1
        %v982 = vpop.permute.xlu0 %981
        %983 = vrot.lane.b32.xlu0 %v739, 1
        %v984 = vpop.permute.xlu0 %983
        %985 = vrot.lane.b32.xlu0 %v743, 1
        %v986 = vpop.permute.xlu0 %985
        %vm987 = vcmp.lt.s32.totalorder %v765, 1
        %v988 = vsel %vm987, %v980, %v984
        %v989 = vsel %vm987, %v982, %v986
        %v990 = vsel %vm987, %v976, %v980
        %v991 = vsel %vm987, %v978, %v982
        %v992 = vsel %vm987, %v972, %v976
        %v993 = vsel %vm987, %v974, %v978
        %v994 = vsel %vm987, %v984, %v972
        %v995 = vsel %vm987, %v986, %v974
        %v996 = vlaneseq
        %v997 = vshrl.u32 %v996, 7
        %v998 = vsub.s32 3, %v997
        %v999 = vrot.slane %v619, %v998
        %v1000 = vlaneseq
        %v1001 = vshrl.u32 %v1000, 7
        %v1002 = vsub.s32 3, %v1001
        %v1003 = vrot.slane %v620, %v1002
        %v1004 = vlaneseq
        %v1005 = vshrl.u32 %v1004, 7
        %v1006 = vsub.s32 3, %v1005
        %v1007 = vrot.slane %v621, %v1006
        %v1008 = vlaneseq
        %v1009 = vshrl.u32 %v1008, 7
        %v1010 = vsub.s32 3, %v1009
        %v1011 = vrot.slane %v622, %v1010
        %v1012 = vmul.f32 %v994, %v999
        %v1013 = vmul.f32 %v992, %v1003
        %v1014 = vmul.f32 %v990, %v1007
        %v1015 = vmul.f32 %v988, %v1011
        %v1016 = vmul.f32 %v995, %v999
        %v1017 = vmul.f32 %v993, %v1003
        %v1018 = vmul.f32 %v991, %v1007
        %v1019 = vmul.f32 %v989, %v1011
        %1020 = vset.pattern.permute.xlu0 3
        %1021 = vperm.xlu0 %1020, %v744
        %v1022 = vpop.permute.xlu0 %1021
        %1024 = vset.pattern.permute.xlu0 3
        %1025 = vperm.xlu0 %1024, %v745
        %v1026 = vpop.permute.xlu0 %1025
        %v1028 = vmul.f32 %v1012, %v1022
        %v1029 = vmul.f32 %v1013, %v1022
        %v1030 = vmul.f32 %v1014, %v1022
        %v1031 = vmul.f32 %v1015, %v1022
        %v1032 = vmul.f32 %v1016, %v1026
        %v1033 = vmul.f32 %v1017, %v1026
        %v1034 = vmul.f32 %v1018, %v1026
        %v1035 = vmul.f32 %v1019, %v1026
        %v1036 = vadd.f32 %v963, %v1028
        %v1037 = vadd.f32 %v964, %v1029
        %v1038 = vadd.f32 %v965, %v1030
        %v1039 = vadd.f32 %v966, %v1031
        %v1040 = vadd.f32 %v967, %v1032
        %v1041 = vadd.f32 %v968, %v1033
        %v1042 = vadd.f32 %v969, %v1034
        %v1043 = vadd.f32 %v970, %v1035
        %1044 = vset.pattern.permute.xlu0 4
        %1045 = vperm.xlu0 %1044, %v744
        %v1046 = vpop.permute.xlu0 %1045
        %1048 = vset.pattern.permute.xlu0 4
        %1049 = vperm.xlu0 %1048, %v745
        %v1050 = vpop.permute.xlu0 %1049
        %v1052 = vmul.f32 %v736, %v1046
        %v1053 = vmul.f32 %v737, %v1046
        %v1054 = vmul.f32 %v738, %v1046
        %v1055 = vmul.f32 %v739, %v1046
        %v1056 = vmul.f32 %v740, %v1050
        %v1057 = vmul.f32 %v741, %v1050
        %v1058 = vmul.f32 %v742, %v1050
        %v1059 = vmul.f32 %v743, %v1050
        %v1060 = vadd.f32 %v1036, %v1052
        %v1061 = vadd.f32 %v1037, %v1053
        %v1062 = vadd.f32 %v1038, %v1054
        %v1063 = vadd.f32 %v1039, %v1055
        %v1064 = vadd.f32 %v1040, %v1056
        %v1065 = vadd.f32 %v1041, %v1057
        %v1066 = vadd.f32 %v1042, %v1058
        %v1067 = vadd.f32 %v1043, %v1059
        %1068 = vrot.lane.b32.xlu0 %v736, 127
        %v1069 = vpop.permute.xlu0 %1068
        %1070 = vrot.lane.b32.xlu0 %v740, 127
        %v1071 = vpop.permute.xlu0 %1070
        %1072 = vrot.lane.b32.xlu0 %v737, 127
        %v1073 = vpop.permute.xlu0 %1072
        %1074 = vrot.lane.b32.xlu0 %v741, 127
        %v1075 = vpop.permute.xlu0 %1074
        %1076 = vrot.lane.b32.xlu0 %v738, 127
        %v1077 = vpop.permute.xlu0 %1076
        %1078 = vrot.lane.b32.xlu0 %v742, 127
        %v1079 = vpop.permute.xlu0 %1078
        %1080 = vrot.lane.b32.xlu0 %v739, 127
        %v1081 = vpop.permute.xlu0 %1080
        %1082 = vrot.lane.b32.xlu0 %v743, 127
        %v1083 = vpop.permute.xlu0 %1082
        %vm1084 = vcmp.lt.s32.totalorder %v765, 127
        %v1085 = vsel %vm1084, %v1077, %v1081
        %v1086 = vsel %vm1084, %v1079, %v1083
        %v1087 = vsel %vm1084, %v1073, %v1077
        %v1088 = vsel %vm1084, %v1075, %v1079
        %v1089 = vsel %vm1084, %v1069, %v1073
        %v1090 = vsel %vm1084, %v1071, %v1075
        %v1091 = vsel %vm1084, %v1081, %v1069
        %v1092 = vsel %vm1084, %v1083, %v1071
        %v1093 = vlaneseq
        %v1094 = vshrl.u32 %v1093, 7
        %v1095 = vsub.s32 5, %v1094
        %v1096 = vrot.slane %v619, %v1095
        %v1097 = vlaneseq
        %v1098 = vshrl.u32 %v1097, 7
        %v1099 = vsub.s32 5, %v1098
        %v1100 = vrot.slane %v620, %v1099
        %v1101 = vlaneseq
        %v1102 = vshrl.u32 %v1101, 7
        %v1103 = vsub.s32 5, %v1102
        %v1104 = vrot.slane %v621, %v1103
        %v1105 = vlaneseq
        %v1106 = vshrl.u32 %v1105, 7
        %v1107 = vsub.s32 5, %v1106
        %v1108 = vrot.slane %v622, %v1107
        %v1109 = vmul.f32 %v1089, %v1096
        %v1110 = vmul.f32 %v1087, %v1100
        %v1111 = vmul.f32 %v1085, %v1104
        %v1112 = vmul.f32 %v1091, %v1108
        %v1113 = vmul.f32 %v1090, %v1096
        %v1114 = vmul.f32 %v1088, %v1100
        %v1115 = vmul.f32 %v1086, %v1104
        %v1116 = vmul.f32 %v1092, %v1108
        %1117 = vset.pattern.permute.xlu0 5
        %1118 = vperm.xlu0 %1117, %v744
        %v1119 = vpop.permute.xlu0 %1118
        %1121 = vset.pattern.permute.xlu0 5
        %1122 = vperm.xlu0 %1121, %v745
        %v1123 = vpop.permute.xlu0 %1122
        %v1125 = vmul.f32 %v1109, %v1119
        %v1126 = vmul.f32 %v1110, %v1119
        %v1127 = vmul.f32 %v1111, %v1119
        %v1128 = vmul.f32 %v1112, %v1119
        %v1129 = vmul.f32 %v1113, %v1123
        %v1130 = vmul.f32 %v1114, %v1123
        %v1131 = vmul.f32 %v1115, %v1123
        %v1132 = vmul.f32 %v1116, %v1123
        %v1133 = vadd.f32 %v1060, %v1125
        %v1134 = vadd.f32 %v1061, %v1126
        %v1135 = vadd.f32 %v1062, %v1127
        %v1136 = vadd.f32 %v1063, %v1128
        %v1137 = vadd.f32 %v1064, %v1129
        %v1138 = vadd.f32 %v1065, %v1130
        %v1139 = vadd.f32 %v1066, %v1131
        %v1140 = vadd.f32 %v1067, %v1132
        %1141 = vrot.lane.b32.xlu0 %v736, 113
        %v1142 = vpop.permute.xlu0 %1141
        %1143 = vrot.lane.b32.xlu0 %v740, 113
        %v1144 = vpop.permute.xlu0 %1143
        %1145 = vrot.lane.b32.xlu0 %v737, 113
        %v1146 = vpop.permute.xlu0 %1145
        %1147 = vrot.lane.b32.xlu0 %v741, 113
        %v1148 = vpop.permute.xlu0 %1147
        %1149 = vrot.lane.b32.xlu0 %v738, 113
        %v1150 = vpop.permute.xlu0 %1149
        %1151 = vrot.lane.b32.xlu0 %v742, 113
        %v1152 = vpop.permute.xlu0 %1151
        %1153 = vrot.lane.b32.xlu0 %v739, 113
        %v1154 = vpop.permute.xlu0 %1153
        %1155 = vrot.lane.b32.xlu0 %v743, 113
        %v1156 = vpop.permute.xlu0 %1155
        %vm1157 = vcmp.lt.s32.totalorder %v765, 113
        %v1158 = vsel %vm1157, %v1150, %v1154
        %v1159 = vsel %vm1157, %v1152, %v1156
        %v1160 = vsel %vm1157, %v1146, %v1150
        %v1161 = vsel %vm1157, %v1148, %v1152
        %v1162 = vsel %vm1157, %v1142, %v1146
        %v1163 = vsel %vm1157, %v1144, %v1148
        %v1164 = vsel %vm1157, %v1154, %v1142
        %v1165 = vsel %vm1157, %v1156, %v1144
        %v1166 = vlaneseq
        %v1167 = vshrl.u32 %v1166, 7
        %v1168 = vsub.s32 6, %v1167
        %v1169 = vrot.slane %v619, %v1168
        %v1170 = vlaneseq
        %v1171 = vshrl.u32 %v1170, 7
        %v1172 = vsub.s32 6, %v1171
        %v1173 = vrot.slane %v620, %v1172
        %v1174 = vlaneseq
        %v1175 = vshrl.u32 %v1174, 7
        %v1176 = vsub.s32 6, %v1175
        %v1177 = vrot.slane %v621, %v1176
        %v1178 = vlaneseq
        %v1179 = vshrl.u32 %v1178, 7
        %v1180 = vsub.s32 6, %v1179
        %v1181 = vrot.slane %v622, %v1180
        %v1182 = vmul.f32 %v1162, %v1169
        %v1183 = vmul.f32 %v1160, %v1173
        %v1184 = vmul.f32 %v1158, %v1177
        %v1185 = vmul.f32 %v1164, %v1181
        %v1186 = vmul.f32 %v1163, %v1169
        %v1187 = vmul.f32 %v1161, %v1173
        %v1188 = vmul.f32 %v1159, %v1177
        %v1189 = vmul.f32 %v1165, %v1181
        %1190 = vset.pattern.permute.xlu0 6
        %1191 = vperm.xlu0 %1190, %v744
        %v1192 = vpop.permute.xlu0 %1191
        %1194 = vset.pattern.permute.xlu0 6
        %1195 = vperm.xlu0 %1194, %v745
        %v1196 = vpop.permute.xlu0 %1195
        %v1198 = vmul.f32 %v1182, %v1192
        %v1199 = vmul.f32 %v1183, %v1192
        %v1200 = vmul.f32 %v1184, %v1192
        %v1201 = vmul.f32 %v1185, %v1192
        %v1202 = vmul.f32 %v1186, %v1196
        %v1203 = vmul.f32 %v1187, %v1196
        %v1204 = vmul.f32 %v1188, %v1196
        %v1205 = vmul.f32 %v1189, %v1196
        %v1206 = vadd.f32 %v1133, %v1198
        %v1207 = vadd.f32 %v1134, %v1199
        %v1208 = vadd.f32 %v1135, %v1200
        %v1209 = vadd.f32 %v1136, %v1201
        %v1210 = vadd.f32 %v1137, %v1202
        %v1211 = vadd.f32 %v1138, %v1203
        %v1212 = vadd.f32 %v1139, %v1204
        %v1213 = vadd.f32 %v1140, %v1205
        %1214 = vrot.lane.b32.xlu0 %v736, 112
        %v1215 = vpop.permute.xlu0 %1214
        %1216 = vrot.lane.b32.xlu0 %v740, 112
        %v1217 = vpop.permute.xlu0 %1216
        %1218 = vrot.lane.b32.xlu0 %v737, 112
        %v1219 = vpop.permute.xlu0 %1218
        %1220 = vrot.lane.b32.xlu0 %v741, 112
        %v1221 = vpop.permute.xlu0 %1220
        %1222 = vrot.lane.b32.xlu0 %v738, 112
        %v1223 = vpop.permute.xlu0 %1222
        %1224 = vrot.lane.b32.xlu0 %v742, 112
        %v1225 = vpop.permute.xlu0 %1224
        %1226 = vrot.lane.b32.xlu0 %v739, 112
        %v1227 = vpop.permute.xlu0 %1226
        %1228 = vrot.lane.b32.xlu0 %v743, 112
        %v1229 = vpop.permute.xlu0 %1228
        %vm1230 = vcmp.lt.s32.totalorder %v765, 112
        %v1231 = vsel %vm1230, %v1223, %v1227
        %v1232 = vsel %vm1230, %v1225, %v1229
        %v1233 = vsel %vm1230, %v1219, %v1223
        %v1234 = vsel %vm1230, %v1221, %v1225
        %v1235 = vsel %vm1230, %v1215, %v1219
        %v1236 = vsel %vm1230, %v1217, %v1221
        %v1237 = vsel %vm1230, %v1227, %v1215
        %v1238 = vsel %vm1230, %v1229, %v1217
        %v1239 = vlaneseq
        %v1240 = vshrl.u32 %v1239, 7
        %v1241 = vsub.s32 7, %v1240
        %v1242 = vrot.slane %v619, %v1241
        %v1243 = vlaneseq
        %v1244 = vshrl.u32 %v1243, 7
        %v1245 = vsub.s32 7, %v1244
        %v1246 = vrot.slane %v620, %v1245
        %v1247 = vlaneseq
        %v1248 = vshrl.u32 %v1247, 7
        %v1249 = vsub.s32 7, %v1248
        %v1250 = vrot.slane %v621, %v1249
        %v1251 = vlaneseq
        %v1252 = vshrl.u32 %v1251, 7
        %v1253 = vsub.s32 7, %v1252
        %v1254 = vrot.slane %v622, %v1253
        %v1255 = vmul.f32 %v1235, %v1242
        %v1256 = vmul.f32 %v1233, %v1246
        %v1257 = vmul.f32 %v1231, %v1250
        %v1258 = vmul.f32 %v1237, %v1254
        %v1259 = vmul.f32 %v1236, %v1242
        %v1260 = vmul.f32 %v1234, %v1246
        %v1261 = vmul.f32 %v1232, %v1250
        %v1262 = vmul.f32 %v1238, %v1254
        %1263 = vset.pattern.permute.xlu0 7
        %1264 = vperm.xlu0 %1263, %v744
        %v1265 = vpop.permute.xlu0 %1264
        %1267 = vset.pattern.permute.xlu0 7
        %1268 = vperm.xlu0 %1267, %v745
        %v1269 = vpop.permute.xlu0 %1268
        %v1271 = vmul.f32 %v1255, %v1265
        %v1272 = vmul.f32 %v1256, %v1265
        %v1273 = vmul.f32 %v1257, %v1265
        %v1274 = vmul.f32 %v1258, %v1265
        %v1275 = vmul.f32 %v1259, %v1269
        %v1276 = vmul.f32 %v1260, %v1269
        %v1277 = vmul.f32 %v1261, %v1269
        %v1278 = vmul.f32 %v1262, %v1269
        %v1279 = vadd.f32 %v1206, %v1271
        %v1280 = vadd.f32 %v1207, %v1272
        %v1281 = vadd.f32 %v1208, %v1273
        %v1282 = vadd.f32 %v1209, %v1274
        %v1283 = vadd.f32 %v1210, %v1275
        %v1284 = vadd.f32 %v1211, %v1276
        %v1285 = vadd.f32 %v1212, %v1277
        %v1286 = vadd.f32 %v1213, %v1278
        %1287 = vrot.lane.b32.xlu0 %v736, 111
        %v1288 = vpop.permute.xlu0 %1287
        %1289 = vrot.lane.b32.xlu0 %v740, 111
        %v1290 = vpop.permute.xlu0 %1289
        %1291 = vrot.lane.b32.xlu0 %v737, 111
        %v1292 = vpop.permute.xlu0 %1291
        %1293 = vrot.lane.b32.xlu0 %v741, 111
        %v1294 = vpop.permute.xlu0 %1293
        %1295 = vrot.lane.b32.xlu0 %v738, 111
        %v1296 = vpop.permute.xlu0 %1295
        %1297 = vrot.lane.b32.xlu0 %v742, 111
        %v1298 = vpop.permute.xlu0 %1297
        %1299 = vrot.lane.b32.xlu0 %v739, 111
        %v1300 = vpop.permute.xlu0 %1299
        %1301 = vrot.lane.b32.xlu0 %v743, 111
        %v1302 = vpop.permute.xlu0 %1301
        %vm1303 = vcmp.lt.s32.totalorder %v765, 111
        %v1304 = vsel %vm1303, %v1296, %v1300
        %v1305 = vsel %vm1303, %v1298, %v1302
        %v1306 = vsel %vm1303, %v1292, %v1296
        %v1307 = vsel %vm1303, %v1294, %v1298
        %v1308 = vsel %vm1303, %v1288, %v1292
        %v1309 = vsel %vm1303, %v1290, %v1294
        %v1310 = vsel %vm1303, %v1300, %v1288
        %v1311 = vsel %vm1303, %v1302, %v1290
        %v1312 = vlaneseq
        %v1313 = vshrl.u32 %v1312, 7
        %v1314 = vsub.s32 0, %v1313
        %v1315 = vrot.slane %v623, %v1314
        %v1316 = vlaneseq
        %v1317 = vshrl.u32 %v1316, 7
        %v1318 = vsub.s32 0, %v1317
        %v1319 = vrot.slane %v624, %v1318
        %v1320 = vlaneseq
        %v1321 = vshrl.u32 %v1320, 7
        %v1322 = vsub.s32 0, %v1321
        %v1323 = vrot.slane %v625, %v1322
        %v1324 = vlaneseq
        %v1325 = vshrl.u32 %v1324, 7
        %v1326 = vsub.s32 0, %v1325
        %v1327 = vrot.slane %v626, %v1326
        %v1328 = vmul.f32 %v1308, %v1315
        %v1329 = vmul.f32 %v1306, %v1319
        %v1330 = vmul.f32 %v1304, %v1323
        %v1331 = vmul.f32 %v1310, %v1327
        %v1332 = vmul.f32 %v1309, %v1315
        %v1333 = vmul.f32 %v1307, %v1319
        %v1334 = vmul.f32 %v1305, %v1323
        %v1335 = vmul.f32 %v1311, %v1327
        %1336 = vset.pattern.permute.xlu0 8
        %1337 = vperm.xlu0 %1336, %v744
        %v1338 = vpop.permute.xlu0 %1337
        %1340 = vset.pattern.permute.xlu0 8
        %1341 = vperm.xlu0 %1340, %v745
        %v1342 = vpop.permute.xlu0 %1341
        %v1344 = vmul.f32 %v1328, %v1338
        %v1345 = vmul.f32 %v1329, %v1338
        %v1346 = vmul.f32 %v1330, %v1338
        %v1347 = vmul.f32 %v1331, %v1338
        %v1348 = vmul.f32 %v1332, %v1342
        %v1349 = vmul.f32 %v1333, %v1342
        %v1350 = vmul.f32 %v1334, %v1342
        %v1351 = vmul.f32 %v1335, %v1342
        %v1352 = vadd.f32 %v1279, %v1344
        %v1353 = vadd.f32 %v1280, %v1345
        %v1354 = vadd.f32 %v1281, %v1346
        %v1355 = vadd.f32 %v1282, %v1347
        %v1356 = vadd.f32 %v1283, %v1348
        %v1357 = vadd.f32 %v1284, %v1349
        %v1358 = vadd.f32 %v1285, %v1350
        %v1359 = vadd.f32 %v1286, %v1351
        %1361 = vset.pattern.permute.xlu0 0
        %1362 = vperm.xlu0 %1361, %v746
        %v1363 = vpop.permute.xlu0 %1362
        %1366 = vset.pattern.permute.xlu0 0
        %1367 = vperm.xlu0 %1366, %v747
        %v1368 = vpop.permute.xlu0 %1367
        %v1370 = vadd.f32 %v1352, %v1363
        %v1371 = vadd.f32 %v1353, %v1363
        %v1372 = vadd.f32 %v1354, %v1363
        %v1373 = vadd.f32 %v1355, %v1363
        %v1374 = vadd.f32 %v1356, %v1368
        %v1375 = vadd.f32 %v1357, %v1368
        %v1376 = vadd.f32 %v1358, %v1368
        %v1377 = vadd.f32 %v1359, %v1368
        %v1378 = vmax.f32 %v1370, 0.0
        %v1379 = vmax.f32 %v1371, 0.0
        %v1380 = vmax.f32 %v1372, 0.0
        %v1381 = vmax.f32 %v1373, 0.0
        %v1382 = vmax.f32 %v1374, 0.0
        %v1383 = vmax.f32 %v1375, 0.0
        %v1384 = vmax.f32 %v1376, 0.0
        %v1385 = vmax.f32 %v1377, 0.0
        %v1386 = vld [vmem:[%s1] sm:$0xff]
        %v1387 = vld [vmem:[%s1 + $0x8] sm:$0xff]
        %v1388 = vld [vmem:[%s1 + $0x10] sm:$0xff]
        %v1389 = vld [vmem:[%s1 + $0x18] sm:$0xff]
        %v1390 = vld [vmem:[%s1 + $0x20] sm:$0xff]
        %v1391 = vld [vmem:[%s1 + $0x28] sm:$0xff]
        %v1392 = vld [vmem:[%s1 + $0x30] sm:$0xff]
        %v1393 = vld [vmem:[%s1 + $0x38] sm:$0xff]
        %v1394 = vld [vmem:[%s1 + $0x40] sm:$0xff]
        %v1395 = vld [vmem:[%s1 + $0x48] sm:$0xff]
        %v1396 = vld [vmem:[%s1 + $0x50] sm:$0xff]
        %v1397 = vld [vmem:[%s1 + $0x58] sm:$0xff]
        %v1398 = vld [vmem:[%s1 + $0x60] sm:$0xff]
        %v1399 = vld [vmem:[%s1 + $0x68] sm:$0xff]
        %v1400 = vld [vmem:[%s1 + $0x70] sm:$0xff]
        %v1401 = vld [vmem:[%s1 + $0x78] sm:$0xff]
        %v1402 = vld [vmem:[%s1 + $0x80] sm:$0xff]
        %v1403 = vld [vmem:[%s1 + $0x88] sm:$0xff]
        %v1404 = vld [vmem:[%s1 + $0x90] sm:$0xff]
        %v1405 = vld [vmem:[%s1 + $0x98] sm:$0xff]
        %v1406 = vld [vmem:[%s1 + $0xa0] sm:$0xff]
        %v1407 = vld [vmem:[%s1 + $0xa8] sm:$0xff]
        %v1408 = vld [vmem:[%s1 + $0xb0] sm:$0xff]
        %v1409 = vld [vmem:[%s1 + $0xb8] sm:$0xff]
        %v1410 = vld [vmem:[%s1 + $0xc0] sm:$0xff]
        %v1411 = vld [vmem:[%s1 + $0xc8] sm:$0xff]
        %v1412 = vld [vmem:[%s1 + $0xd0] sm:$0xff]
        %v1413 = vld [vmem:[%s1 + $0xd8] sm:$0xff]
        %v1414 = vld [vmem:[%s1 + $0xe0] sm:$0xff]
        %v1415 = vld [vmem:[%s1 + $0xe8] sm:$0xff]
        %v1416 = vld [vmem:[%s1 + $0xf0] sm:$0xff]
        %v1417 = vld [vmem:[%s1 + $0xf8] sm:$0xff]
        %v1418 = vld [vmem:[%s1 + $0x100] sm:$0xff]
        %v1419 = vld [vmem:[%s1 + $0x108] sm:$0xff]
        %v1420 = vld [vmem:[%s1 + $0x110] sm:$0xff]
        %v1421 = vld [vmem:[%s1 + $0x118] sm:$0xff]
        %v1422 = vld [vmem:[%s1 + $0x120] sm:$0xff]
        %v1423 = vld [vmem:[%s1 + $0x128] sm:$0xff]
        %v1424 = vld [vmem:[%s1 + $0x130] sm:$0xff]
        %v1425 = vld [vmem:[%s1 + $0x138] sm:$0xff]
        %v1426 = vld [vmem:[%s1 + $0x140] sm:$0xff]
        %v1427 = vld [vmem:[%s1 + $0x148] sm:$0xff]
        %v1428 = vld [vmem:[%s1 + $0x150] sm:$0xff]
        %v1429 = vld [vmem:[%s1 + $0x158] sm:$0xff]
        %v1430 = vld [vmem:[%s1 + $0x160] sm:$0xff]
        %v1431 = vld [vmem:[%s1 + $0x168] sm:$0xff]
        %v1432 = vld [vmem:[%s1 + $0x170] sm:$0xff]
        %v1433 = vld [vmem:[%s1 + $0x178] sm:$0xff]
        %v1434 = vld [vmem:[%s1 + $0x180] sm:$0xff]
        %v1435 = vld [vmem:[%s1 + $0x188] sm:$0xff]
        %v1436 = vld [vmem:[%s1 + $0x190] sm:$0xff]
        %v1437 = vld [vmem:[%s1 + $0x198] sm:$0xff]
        %v1438 = vld [vmem:[%s1 + $0x1a0] sm:$0xff]
        %v1439 = vld [vmem:[%s1 + $0x1a8] sm:$0xff]
        %v1440 = vld [vmem:[%s1 + $0x1b0] sm:$0xff]
        %v1441 = vld [vmem:[%s1 + $0x1b8] sm:$0xff]
        %v1442 = vld [vmem:[%s1 + $0x1c0] sm:$0xff]
        %v1443 = vld [vmem:[%s1 + $0x1c8] sm:$0xff]
        %v1444 = vld [vmem:[%s1 + $0x1d0] sm:$0xff]
        %v1445 = vld [vmem:[%s1 + $0x1d8] sm:$0xff]
        %v1446 = vld [vmem:[%s1 + $0x1e0] sm:$0xff]
        %v1447 = vld [vmem:[%s1 + $0x1e8] sm:$0xff]
        %v1448 = vld [vmem:[%s1 + $0x1f0] sm:$0xff]
        %v1449 = vld [vmem:[%s1 + $0x1f8] sm:$0xff]
        %1450 = vmatprep.subr.mxu0 0.0
        %v1451 = vand.u32 %v1401, 4294901760
        %1452 = vmatpush1.msra.mxu0 %v1451
        %1453 = vmatprep.subr.mxu0 0.0
        %v1454 = vand.u32 %v1400, 4294901760
        %1455 = vmatpush1.msra.mxu0 %v1454
        %1456 = vmatprep.subr.mxu0 0.0
        %v1457 = vand.u32 %v1399, 4294901760
        %1458 = vmatpush1.msra.mxu0 %v1457
        %1459 = vmatprep.subr.mxu0 0.0
        %v1460 = vand.u32 %v1398, 4294901760
        %1461 = vmatpush1.msra.mxu0 %v1460
        %1462 = vmatprep.subr.mxu0 0.0
        %v1463 = vand.u32 %v1397, 4294901760
        %1464 = vmatpush1.msra.mxu0 %v1463
        %1465 = vmatprep.subr.mxu0 0.0
        %v1466 = vand.u32 %v1396, 4294901760
        %1467 = vmatpush1.msra.mxu0 %v1466
        %1468 = vmatprep.subr.mxu0 0.0
        %v1469 = vand.u32 %v1395, 4294901760
        %1470 = vmatpush1.msra.mxu0 %v1469
        %1471 = vmatprep.subr.mxu0 0.0
        %v1472 = vand.u32 %v1394, 4294901760
        %1473 = vmatpush1.msra.mxu0 %v1472
        %1474 = vmatprep.subr.mxu0 0.0
        %v1475 = vand.u32 %v1393, 4294901760
        %1476 = vmatpush1.msra.mxu0 %v1475
        %1477 = vmatprep.subr.mxu0 0.0
        %v1478 = vand.u32 %v1392, 4294901760
        %1479 = vmatpush1.msra.mxu0 %v1478
        %1480 = vmatprep.subr.mxu0 0.0
        %v1481 = vand.u32 %v1391, 4294901760
        %1482 = vmatpush1.msra.mxu0 %v1481
        %1483 = vmatprep.subr.mxu0 0.0
        %v1484 = vand.u32 %v1390, 4294901760
        %1485 = vmatpush1.msra.mxu0 %v1484
        %1486 = vmatprep.subr.mxu0 0.0
        %v1487 = vand.u32 %v1389, 4294901760
        %1488 = vmatpush1.msra.mxu0 %v1487
        %1489 = vmatprep.subr.mxu0 0.0
        %v1490 = vand.u32 %v1388, 4294901760
        %1491 = vmatpush1.msra.mxu0 %v1490
        %1492 = vmatprep.subr.mxu0 0.0
        %v1493 = vand.u32 %v1387, 4294901760
        %1494 = vmatpush1.msra.mxu0 %v1493
        %1495 = vmatprep.subr.mxu0 0.0
        %v1496 = vand.u32 %v1386, 4294901760
        %1497 = vmatpush1.msra.mxu0 %v1496
        %1498 = vmatprep.subr.mxu0 0.0
        %v1499 = vand.u32 %v1417, 4294901760
        %1500 = vmatpush2.msra.mxu0 %v1499
        %1501 = vmatprep.subr.mxu0 0.0
        %v1502 = vand.u32 %v1416, 4294901760
        %1503 = vmatpush2.msra.mxu0 %v1502
        %1504 = vmatprep.subr.mxu0 0.0
        %v1505 = vand.u32 %v1415, 4294901760
        %1506 = vmatpush2.msra.mxu0 %v1505
        %1507 = vmatprep.subr.mxu0 0.0
        %v1508 = vand.u32 %v1414, 4294901760
        %1509 = vmatpush2.msra.mxu0 %v1508
        %1510 = vmatprep.subr.mxu0 0.0
        %v1511 = vand.u32 %v1413, 4294901760
        %1512 = vmatpush2.msra.mxu0 %v1511
        %1513 = vmatprep.subr.mxu0 0.0
        %v1514 = vand.u32 %v1412, 4294901760
        %1515 = vmatpush2.msra.mxu0 %v1514
        %1516 = vmatprep.subr.mxu0 0.0
        %v1517 = vand.u32 %v1411, 4294901760
        %1518 = vmatpush2.msra.mxu0 %v1517
        %1519 = vmatprep.subr.mxu0 0.0
        %v1520 = vand.u32 %v1410, 4294901760
        %1521 = vmatpush2.msra.mxu0 %v1520
        %1522 = vmatprep.subr.mxu0 0.0
        %v1523 = vand.u32 %v1409, 4294901760
        %1524 = vmatpush2.msra.mxu0 %v1523
        %1525 = vmatprep.subr.mxu0 0.0
        %v1526 = vand.u32 %v1408, 4294901760
        %1527 = vmatpush2.msra.mxu0 %v1526
        %1528 = vmatprep.subr.mxu0 0.0
        %v1529 = vand.u32 %v1407, 4294901760
        %1530 = vmatpush2.msra.mxu0 %v1529
        %1531 = vmatprep.subr.mxu0 0.0
        %v1532 = vand.u32 %v1406, 4294901760
        %1533 = vmatpush2.msra.mxu0 %v1532
        %1534 = vmatprep.subr.mxu0 0.0
        %v1535 = vand.u32 %v1405, 4294901760
        %1536 = vmatpush2.msra.mxu0 %v1535
        %1537 = vmatprep.subr.mxu0 0.0
        %v1538 = vand.u32 %v1404, 4294901760
        %1539 = vmatpush2.msra.mxu0 %v1538
        %1540 = vmatprep.subr.mxu0 0.0
        %v1541 = vand.u32 %v1403, 4294901760
        %1542 = vmatpush2.msra.mxu0 %v1541
        %1543 = vmatprep.subr.mxu0 0.0
        %v1544 = vand.u32 %v1402, 4294901760
        %1545 = vmatpush2.msra.mxu0 %v1544
        %v1546 = vand.u32 %v737, 4294901760
        %v1547 = vsub.f32 %v737, %v1546
        %v1548 = vand.u32 %v1547, 4294901760
        %v1549 = vsub.f32 %v1547, %v1548
        %v1550 = vand.u32 %v1549, 4294901760
        %1551 = vmatprep.mubr.f32.mxu0 %v1550
        %v1552 = vand.u32 %v736, 4294901760
        %v1553 = vsub.f32 %v736, %v1552
        %v1554 = vand.u32 %v1553, 4294901760
        %v1555 = vsub.f32 %v1553, %v1554
        %v1556 = vand.u32 %v1555, 4294901760
        %1557 = vmatmul.mubr.f32.gmra.mxu0 %v1556
        %v1558 = vpop.f32.mrf.mxu0
        %v1559 = vadd.f32 0.0, %v1558
        %v1560 = vpop.f32.mrf.mxu0
        %v1561 = vand.u32 %v741, 4294901760
        %v1562 = vsub.f32 %v741, %v1561
        %v1563 = vand.u32 %v1562, 4294901760
        %v1564 = vsub.f32 %v1562, %v1563
        %v1565 = vand.u32 %v1564, 4294901760
        %1566 = vmatprep.mubr.f32.mxu0 %v1565
        %v1567 = vand.u32 %v740, 4294901760
        %v1568 = vsub.f32 %v740, %v1567
        %v1569 = vand.u32 %v1568, 4294901760
        %v1570 = vsub.f32 %v1568, %v1569
        %v1571 = vand.u32 %v1570, 4294901760
        %1572 = vmatmul.mubr.f32.gmra.mxu0 %v1571
        %v1573 = vpop.f32.mrf.mxu0
        %v1574 = vadd.f32 0.0, %v1573
        %v1575 = vpop.f32.mrf.mxu0
        %1576 = vdwg.mxu0
        %1577 = vmatprep.subr.mxu0 0.0
        %v1578 = vand.u32 %v1401, 4294901760
        %v1579 = vsub.f32 %v1401, %v1578
        %v1580 = vand.u32 %v1579, 4294901760
        %v1581 = vsub.f32 %v1579, %v1580
        %v1582 = vand.u32 %v1581, 4294901760
        %1583 = vmatpush1.msra.mxu0 %v1582
        %1584 = vmatprep.subr.mxu0 0.0
        %v1585 = vand.u32 %v1400, 4294901760
        %v1586 = vsub.f32 %v1400, %v1585
        %v1587 = vand.u32 %v1586, 4294901760
        %v1588 = vsub.f32 %v1586, %v1587
        %v1589 = vand.u32 %v1588, 4294901760
        %1590 = vmatpush1.msra.mxu0 %v1589
        %1591 = vmatprep.subr.mxu0 0.0
        %v1592 = vand.u32 %v1399, 4294901760
        %v1593 = vsub.f32 %v1399, %v1592
        %v1594 = vand.u32 %v1593, 4294901760
        %v1595 = vsub.f32 %v1593, %v1594
        %v1596 = vand.u32 %v1595, 4294901760
        %1597 = vmatpush1.msra.mxu0 %v1596
        %1598 = vmatprep.subr.mxu0 0.0
        %v1599 = vand.u32 %v1398, 4294901760
        %v1600 = vsub.f32 %v1398, %v1599
        %v1601 = vand.u32 %v1600, 4294901760
        %v1602 = vsub.f32 %v1600, %v1601
        %v1603 = vand.u32 %v1602, 4294901760
        %1604 = vmatpush1.msra.mxu0 %v1603
        %1605 = vmatprep.subr.mxu0 0.0
        %v1606 = vand.u32 %v1397, 4294901760
        %v1607 = vsub.f32 %v1397, %v1606
        %v1608 = vand.u32 %v1607, 4294901760
        %v1609 = vsub.f32 %v1607, %v1608
        %v1610 = vand.u32 %v1609, 4294901760
        %1611 = vmatpush1.msra.mxu0 %v1610
        %1612 = vmatprep.subr.mxu0 0.0
        %v1613 = vand.u32 %v1396, 4294901760
        %v1614 = vsub.f32 %v1396, %v1613
        %v1615 = vand.u32 %v1614, 4294901760
        %v1616 = vsub.f32 %v1614, %v1615
        %v1617 = vand.u32 %v1616, 4294901760
        %1618 = vmatpush1.msra.mxu0 %v1617
        %1619 = vmatprep.subr.mxu0 0.0
        %v1620 = vand.u32 %v1395, 4294901760
        %v1621 = vsub.f32 %v1395, %v1620
        %v1622 = vand.u32 %v1621, 4294901760
        %v1623 = vsub.f32 %v1621, %v1622
        %v1624 = vand.u32 %v1623, 4294901760
        %1625 = vmatpush1.msra.mxu0 %v1624
        %1626 = vmatprep.subr.mxu0 0.0
        %v1627 = vand.u32 %v1394, 4294901760
        %v1628 = vsub.f32 %v1394, %v1627
        %v1629 = vand.u32 %v1628, 4294901760
        %v1630 = vsub.f32 %v1628, %v1629
        %v1631 = vand.u32 %v1630, 4294901760
        %1632 = vmatpush1.msra.mxu0 %v1631
        %1633 = vmatprep.subr.mxu0 0.0
        %v1634 = vand.u32 %v1393, 4294901760
        %v1635 = vsub.f32 %v1393, %v1634
        %v1636 = vand.u32 %v1635, 4294901760
        %v1637 = vsub.f32 %v1635, %v1636
        %v1638 = vand.u32 %v1637, 4294901760
        %1639 = vmatpush1.msra.mxu0 %v1638
        %1640 = vmatprep.subr.mxu0 0.0
        %v1641 = vand.u32 %v1392, 4294901760
        %v1642 = vsub.f32 %v1392, %v1641
        %v1643 = vand.u32 %v1642, 4294901760
        %v1644 = vsub.f32 %v1642, %v1643
        %v1645 = vand.u32 %v1644, 4294901760
        %1646 = vmatpush1.msra.mxu0 %v1645
        %1647 = vmatprep.subr.mxu0 0.0
        %v1648 = vand.u32 %v1391, 4294901760
        %v1649 = vsub.f32 %v1391, %v1648
        %v1650 = vand.u32 %v1649, 4294901760
        %v1651 = vsub.f32 %v1649, %v1650
        %v1652 = vand.u32 %v1651, 4294901760
        %1653 = vmatpush1.msra.mxu0 %v1652
        %1654 = vmatprep.subr.mxu0 0.0
        %v1655 = vand.u32 %v1390, 4294901760
        %v1656 = vsub.f32 %v1390, %v1655
        %v1657 = vand.u32 %v1656, 4294901760
        %v1658 = vsub.f32 %v1656, %v1657
        %v1659 = vand.u32 %v1658, 4294901760
        %1660 = vmatpush1.msra.mxu0 %v1659
        %1661 = vmatprep.subr.mxu0 0.0
        %v1662 = vand.u32 %v1389, 4294901760
        %v1663 = vsub.f32 %v1389, %v1662
        %v1664 = vand.u32 %v1663, 4294901760
        %v1665 = vsub.f32 %v1663, %v1664
        %v1666 = vand.u32 %v1665, 4294901760
        %1667 = vmatpush1.msra.mxu0 %v1666
        %1668 = vmatprep.subr.mxu0 0.0
        %v1669 = vand.u32 %v1388, 4294901760
        %v1670 = vsub.f32 %v1388, %v1669
        %v1671 = vand.u32 %v1670, 4294901760
        %v1672 = vsub.f32 %v1670, %v1671
        %v1673 = vand.u32 %v1672, 4294901760
        %1674 = vmatpush1.msra.mxu0 %v1673
        %1675 = vmatprep.subr.mxu0 0.0
        %v1676 = vand.u32 %v1387, 4294901760
        %v1677 = vsub.f32 %v1387, %v1676
        %v1678 = vand.u32 %v1677, 4294901760
        %v1679 = vsub.f32 %v1677, %v1678
        %v1680 = vand.u32 %v1679, 4294901760
        %1681 = vmatpush1.msra.mxu0 %v1680
        %1682 = vmatprep.subr.mxu0 0.0
        %v1683 = vand.u32 %v1386, 4294901760
        %v1684 = vsub.f32 %v1386, %v1683
        %v1685 = vand.u32 %v1684, 4294901760
        %v1686 = vsub.f32 %v1684, %v1685
        %v1687 = vand.u32 %v1686, 4294901760
        %1688 = vmatpush1.msra.mxu0 %v1687
        %1689 = vmatprep.subr.mxu0 0.0
        %v1690 = vand.u32 %v1417, 4294901760
        %v1691 = vsub.f32 %v1417, %v1690
        %v1692 = vand.u32 %v1691, 4294901760
        %v1693 = vsub.f32 %v1691, %v1692
        %v1694 = vand.u32 %v1693, 4294901760
        %1695 = vmatpush2.msra.mxu0 %v1694
        %1696 = vmatprep.subr.mxu0 0.0
        %v1697 = vand.u32 %v1416, 4294901760
        %v1698 = vsub.f32 %v1416, %v1697
        %v1699 = vand.u32 %v1698, 4294901760
        %v1700 = vsub.f32 %v1698, %v1699
        %v1701 = vand.u32 %v1700, 4294901760
        %1702 = vmatpush2.msra.mxu0 %v1701
        %1703 = vmatprep.subr.mxu0 0.0
        %v1704 = vand.u32 %v1415, 4294901760
        %v1705 = vsub.f32 %v1415, %v1704
        %v1706 = vand.u32 %v1705, 4294901760
        %v1707 = vsub.f32 %v1705, %v1706
        %v1708 = vand.u32 %v1707, 4294901760
        %1709 = vmatpush2.msra.mxu0 %v1708
        %1710 = vmatprep.subr.mxu0 0.0
        %v1711 = vand.u32 %v1414, 4294901760
        %v1712 = vsub.f32 %v1414, %v1711
        %v1713 = vand.u32 %v1712, 4294901760
        %v1714 = vsub.f32 %v1712, %v1713
        %v1715 = vand.u32 %v1714, 4294901760
        %1716 = vmatpush2.msra.mxu0 %v1715
        %1717 = vmatprep.subr.mxu0 0.0
        %v1718 = vand.u32 %v1413, 4294901760
        %v1719 = vsub.f32 %v1413, %v1718
        %v1720 = vand.u32 %v1719, 4294901760
        %v1721 = vsub.f32 %v1719, %v1720
        %v1722 = vand.u32 %v1721, 4294901760
        %1723 = vmatpush2.msra.mxu0 %v1722
        %1724 = vmatprep.subr.mxu0 0.0
        %v1725 = vand.u32 %v1412, 4294901760
        %v1726 = vsub.f32 %v1412, %v1725
        %v1727 = vand.u32 %v1726, 4294901760
        %v1728 = vsub.f32 %v1726, %v1727
        %v1729 = vand.u32 %v1728, 4294901760
        %1730 = vmatpush2.msra.mxu0 %v1729
        %1731 = vmatprep.subr.mxu0 0.0
        %v1732 = vand.u32 %v1411, 4294901760
        %v1733 = vsub.f32 %v1411, %v1732
        %v1734 = vand.u32 %v1733, 4294901760
        %v1735 = vsub.f32 %v1733, %v1734
        %v1736 = vand.u32 %v1735, 4294901760
        %1737 = vmatpush2.msra.mxu0 %v1736
        %1738 = vmatprep.subr.mxu0 0.0
        %v1739 = vand.u32 %v1410, 4294901760
        %v1740 = vsub.f32 %v1410, %v1739
        %v1741 = vand.u32 %v1740, 4294901760
        %v1742 = vsub.f32 %v1740, %v1741
        %v1743 = vand.u32 %v1742, 4294901760
        %1744 = vmatpush2.msra.mxu0 %v1743
        %1745 = vmatprep.subr.mxu0 0.0
        %v1746 = vand.u32 %v1409, 4294901760
        %v1747 = vsub.f32 %v1409, %v1746
        %v1748 = vand.u32 %v1747, 4294901760
        %v1749 = vsub.f32 %v1747, %v1748
        %v1750 = vand.u32 %v1749, 4294901760
        %1751 = vmatpush2.msra.mxu0 %v1750
        %1752 = vmatprep.subr.mxu0 0.0
        %v1753 = vand.u32 %v1408, 4294901760
        %v1754 = vsub.f32 %v1408, %v1753
        %v1755 = vand.u32 %v1754, 4294901760
        %v1756 = vsub.f32 %v1754, %v1755
        %v1757 = vand.u32 %v1756, 4294901760
        %1758 = vmatpush2.msra.mxu0 %v1757
        %1759 = vmatprep.subr.mxu0 0.0
        %v1760 = vand.u32 %v1407, 4294901760
        %v1761 = vsub.f32 %v1407, %v1760
        %v1762 = vand.u32 %v1761, 4294901760
        %v1763 = vsub.f32 %v1761, %v1762
        %v1764 = vand.u32 %v1763, 4294901760
        %1765 = vmatpush2.msra.mxu0 %v1764
        %1766 = vmatprep.subr.mxu0 0.0
        %v1767 = vand.u32 %v1406, 4294901760
        %v1768 = vsub.f32 %v1406, %v1767
        %v1769 = vand.u32 %v1768, 4294901760
        %v1770 = vsub.f32 %v1768, %v1769
        %v1771 = vand.u32 %v1770, 4294901760
        %1772 = vmatpush2.msra.mxu0 %v1771
        %1773 = vmatprep.subr.mxu0 0.0
        %v1774 = vand.u32 %v1405, 4294901760
        %v1775 = vsub.f32 %v1405, %v1774
        %v1776 = vand.u32 %v1775, 4294901760
        %v1777 = vsub.f32 %v1775, %v1776
        %v1778 = vand.u32 %v1777, 4294901760
        %1779 = vmatpush2.msra.mxu0 %v1778
        %1780 = vmatprep.subr.mxu0 0.0
        %v1781 = vand.u32 %v1404, 4294901760
        %v1782 = vsub.f32 %v1404, %v1781
        %v1783 = vand.u32 %v1782, 4294901760
        %v1784 = vsub.f32 %v1782, %v1783
        %v1785 = vand.u32 %v1784, 4294901760
        %1786 = vmatpush2.msra.mxu0 %v1785
        %1787 = vmatprep.subr.mxu0 0.0
        %v1788 = vand.u32 %v1403, 4294901760
        %v1789 = vsub.f32 %v1403, %v1788
        %v1790 = vand.u32 %v1789, 4294901760
        %v1791 = vsub.f32 %v1789, %v1790
        %v1792 = vand.u32 %v1791, 4294901760
        %1793 = vmatpush2.msra.mxu0 %v1792
        %1794 = vmatprep.subr.mxu0 0.0
        %v1795 = vand.u32 %v1402, 4294901760
        %v1796 = vsub.f32 %v1402, %v1795
        %v1797 = vand.u32 %v1796, 4294901760
        %v1798 = vsub.f32 %v1796, %v1797
        %v1799 = vand.u32 %v1798, 4294901760
        %1800 = vmatpush2.msra.mxu0 %v1799
        %v1801 = vand.u32 %v737, 4294901760
        %1802 = vmatprep.mubr.f32.mxu0 %v1801
        %v1803 = vand.u32 %v736, 4294901760
        %1804 = vmatmul.mubr.f32.gmra.mxu0 %v1803
        %v1805 = vpop.f32.mrf.mxu0
        %v1806 = vadd.f32 %v1559, %v1805
        %v1807 = vpop.f32.mrf.mxu0
        %v1808 = vand.u32 %v741, 4294901760
        %1809 = vmatprep.mubr.f32.mxu0 %v1808
        %v1810 = vand.u32 %v740, 4294901760
        %1811 = vmatmul.mubr.f32.gmra.mxu0 %v1810
        %v1812 = vpop.f32.mrf.mxu0
        %v1813 = vadd.f32 %v1574, %v1812
        %v1814 = vpop.f32.mrf.mxu0
        %1815 = vdwg.mxu0
        %1816 = vmatprep.subr.mxu0 0.0
        %v1817 = vand.u32 %v1401, 4294901760
        %v1818 = vsub.f32 %v1401, %v1817
        %1819 = vmatpush1.msra.mxu0 %v1818
        %1820 = vmatprep.subr.mxu0 0.0
        %v1821 = vand.u32 %v1400, 4294901760
        %v1822 = vsub.f32 %v1400, %v1821
        %1823 = vmatpush1.msra.mxu0 %v1822
        %1824 = vmatprep.subr.mxu0 0.0
        %v1825 = vand.u32 %v1399, 4294901760
        %v1826 = vsub.f32 %v1399, %v1825
        %1827 = vmatpush1.msra.mxu0 %v1826
        %1828 = vmatprep.subr.mxu0 0.0
        %v1829 = vand.u32 %v1398, 4294901760
        %v1830 = vsub.f32 %v1398, %v1829
        %1831 = vmatpush1.msra.mxu0 %v1830
        %1832 = vmatprep.subr.mxu0 0.0
        %v1833 = vand.u32 %v1397, 4294901760
        %v1834 = vsub.f32 %v1397, %v1833
        %1835 = vmatpush1.msra.mxu0 %v1834
        %1836 = vmatprep.subr.mxu0 0.0
        %v1837 = vand.u32 %v1396, 4294901760
        %v1838 = vsub.f32 %v1396, %v1837
        %1839 = vmatpush1.msra.mxu0 %v1838
        %1840 = vmatprep.subr.mxu0 0.0
        %v1841 = vand.u32 %v1395, 4294901760
        %v1842 = vsub.f32 %v1395, %v1841
        %1843 = vmatpush1.msra.mxu0 %v1842
        %1844 = vmatprep.subr.mxu0 0.0
        %v1845 = vand.u32 %v1394, 4294901760
        %v1846 = vsub.f32 %v1394, %v1845
        %1847 = vmatpush1.msra.mxu0 %v1846
        %1848 = vmatprep.subr.mxu0 0.0
        %v1849 = vand.u32 %v1393, 4294901760
        %v1850 = vsub.f32 %v1393, %v1849
        %1851 = vmatpush1.msra.mxu0 %v1850
        %1852 = vmatprep.subr.mxu0 0.0
        %v1853 = vand.u32 %v1392, 4294901760
        %v1854 = vsub.f32 %v1392, %v1853
        %1855 = vmatpush1.msra.mxu0 %v1854
        %1856 = vmatprep.subr.mxu0 0.0
        %v1857 = vand.u32 %v1391, 4294901760
        %v1858 = vsub.f32 %v1391, %v1857
        %1859 = vmatpush1.msra.mxu0 %v1858
        %1860 = vmatprep.subr.mxu0 0.0
        %v1861 = vand.u32 %v1390, 4294901760
        %v1862 = vsub.f32 %v1390, %v1861
        %1863 = vmatpush1.msra.mxu0 %v1862
        %1864 = vmatprep.subr.mxu0 0.0
        %v1865 = vand.u32 %v1389, 4294901760
        %v1866 = vsub.f32 %v1389, %v1865
        %1867 = vmatpush1.msra.mxu0 %v1866
        %1868 = vmatprep.subr.mxu0 0.0
        %v1869 = vand.u32 %v1388, 4294901760
        %v1870 = vsub.f32 %v1388, %v1869
        %1871 = vmatpush1.msra.mxu0 %v1870
        %1872 = vmatprep.subr.mxu0 0.0
        %v1873 = vand.u32 %v1387, 4294901760
        %v1874 = vsub.f32 %v1387, %v1873
        %1875 = vmatpush1.msra.mxu0 %v1874
        %1876 = vmatprep.subr.mxu0 0.0
        %v1877 = vand.u32 %v1386, 4294901760
        %v1878 = vsub.f32 %v1386, %v1877
        %1879 = vmatpush1.msra.mxu0 %v1878
        %1880 = vmatprep.subr.mxu0 0.0
        %v1881 = vand.u32 %v1417, 4294901760
        %v1882 = vsub.f32 %v1417, %v1881
        %1883 = vmatpush2.msra.mxu0 %v1882
        %1884 = vmatprep.subr.mxu0 0.0
        %v1885 = vand.u32 %v1416, 4294901760
        %v1886 = vsub.f32 %v1416, %v1885
        %1887 = vmatpush2.msra.mxu0 %v1886
        %1888 = vmatprep.subr.mxu0 0.0
        %v1889 = vand.u32 %v1415, 4294901760
        %v1890 = vsub.f32 %v1415, %v1889
        %1891 = vmatpush2.msra.mxu0 %v1890
        %1892 = vmatprep.subr.mxu0 0.0
        %v1893 = vand.u32 %v1414, 4294901760
        %v1894 = vsub.f32 %v1414, %v1893
        %1895 = vmatpush2.msra.mxu0 %v1894
        %1896 = vmatprep.subr.mxu0 0.0
        %v1897 = vand.u32 %v1413, 4294901760
        %v1898 = vsub.f32 %v1413, %v1897
        %1899 = vmatpush2.msra.mxu0 %v1898
        %1900 = vmatprep.subr.mxu0 0.0
        %v1901 = vand.u32 %v1412, 4294901760
        %v1902 = vsub.f32 %v1412, %v1901
        %1903 = vmatpush2.msra.mxu0 %v1902
        %1904 = vmatprep.subr.mxu0 0.0
        %v1905 = vand.u32 %v1411, 4294901760
        %v1906 = vsub.f32 %v1411, %v1905
        %1907 = vmatpush2.msra.mxu0 %v1906
        %1908 = vmatprep.subr.mxu0 0.0
        %v1909 = vand.u32 %v1410, 4294901760
        %v1910 = vsub.f32 %v1410, %v1909
        %1911 = vmatpush2.msra.mxu0 %v1910
        %1912 = vmatprep.subr.mxu0 0.0
        %v1913 = vand.u32 %v1409, 4294901760
        %v1914 = vsub.f32 %v1409, %v1913
        %1915 = vmatpush2.msra.mxu0 %v1914
        %1916 = vmatprep.subr.mxu0 0.0
        %v1917 = vand.u32 %v1408, 4294901760
        %v1918 = vsub.f32 %v1408, %v1917
        %1919 = vmatpush2.msra.mxu0 %v1918
        %1920 = vmatprep.subr.mxu0 0.0
        %v1921 = vand.u32 %v1407, 4294901760
        %v1922 = vsub.f32 %v1407, %v1921
        %1923 = vmatpush2.msra.mxu0 %v1922
        %1924 = vmatprep.subr.mxu0 0.0
        %v1925 = vand.u32 %v1406, 4294901760
        %v1926 = vsub.f32 %v1406, %v1925
        %1927 = vmatpush2.msra.mxu0 %v1926
        %1928 = vmatprep.subr.mxu0 0.0
        %v1929 = vand.u32 %v1405, 4294901760
        %v1930 = vsub.f32 %v1405, %v1929
        %1931 = vmatpush2.msra.mxu0 %v1930
        %1932 = vmatprep.subr.mxu0 0.0
        %v1933 = vand.u32 %v1404, 4294901760
        %v1934 = vsub.f32 %v1404, %v1933
        %1935 = vmatpush2.msra.mxu0 %v1934
        %1936 = vmatprep.subr.mxu0 0.0
        %v1937 = vand.u32 %v1403, 4294901760
        %v1938 = vsub.f32 %v1403, %v1937
        %1939 = vmatpush2.msra.mxu0 %v1938
        %1940 = vmatprep.subr.mxu0 0.0
        %v1941 = vand.u32 %v1402, 4294901760
        %v1942 = vsub.f32 %v1402, %v1941
        %1943 = vmatpush2.msra.mxu0 %v1942
        %v1944 = vand.u32 %v737, 4294901760
        %v1945 = vsub.f32 %v737, %v1944
        %1946 = vmatprep.mubr.f32.mxu0 %v1945
        %v1947 = vand.u32 %v736, 4294901760
        %v1948 = vsub.f32 %v736, %v1947
        %1949 = vmatmul.mubr.f32.gmra.mxu0 %v1948
        %v1950 = vpop.f32.mrf.mxu0
        %v1951 = vadd.f32 %v1806, %v1950
        %v1952 = vpop.f32.mrf.mxu0
        %v1953 = vand.u32 %v741, 4294901760
        %v1954 = vsub.f32 %v741, %v1953
        %1955 = vmatprep.mubr.f32.mxu0 %v1954
        %v1956 = vand.u32 %v740, 4294901760
        %v1957 = vsub.f32 %v740, %v1956
        %1958 = vmatmul.mubr.f32.gmra.mxu0 %v1957
        %v1959 = vpop.f32.mrf.mxu0
        %v1960 = vadd.f32 %v1813, %v1959
        %v1961 = vpop.f32.mrf.mxu0
        %1962 = vdwg.mxu0
        %1963 = vmatprep.subr.mxu0 0.0
        %v1964 = vand.u32 %v1401, 4294901760
        %1965 = vmatpush1.msra.mxu0 %v1964
        %1966 = vmatprep.subr.mxu0 0.0
        %v1967 = vand.u32 %v1400, 4294901760
        %1968 = vmatpush1.msra.mxu0 %v1967
        %1969 = vmatprep.subr.mxu0 0.0
        %v1970 = vand.u32 %v1399, 4294901760
        %1971 = vmatpush1.msra.mxu0 %v1970
        %1972 = vmatprep.subr.mxu0 0.0
        %v1973 = vand.u32 %v1398, 4294901760
        %1974 = vmatpush1.msra.mxu0 %v1973
        %1975 = vmatprep.subr.mxu0 0.0
        %v1976 = vand.u32 %v1397, 4294901760
        %1977 = vmatpush1.msra.mxu0 %v1976
        %1978 = vmatprep.subr.mxu0 0.0
        %v1979 = vand.u32 %v1396, 4294901760
        %1980 = vmatpush1.msra.mxu0 %v1979
        %1981 = vmatprep.subr.mxu0 0.0
        %v1982 = vand.u32 %v1395, 4294901760
        %1983 = vmatpush1.msra.mxu0 %v1982
        %1984 = vmatprep.subr.mxu0 0.0
        %v1985 = vand.u32 %v1394, 4294901760
        %1986 = vmatpush1.msra.mxu0 %v1985
        %1987 = vmatprep.subr.mxu0 0.0
        %v1988 = vand.u32 %v1393, 4294901760
        %1989 = vmatpush1.msra.mxu0 %v1988
        %1990 = vmatprep.subr.mxu0 0.0
        %v1991 = vand.u32 %v1392, 4294901760
        %1992 = vmatpush1.msra.mxu0 %v1991
        %1993 = vmatprep.subr.mxu0 0.0
        %v1994 = vand.u32 %v1391, 4294901760
        %1995 = vmatpush1.msra.mxu0 %v1994
        %1996 = vmatprep.subr.mxu0 0.0
        %v1997 = vand.u32 %v1390, 4294901760
        %1998 = vmatpush1.msra.mxu0 %v1997
        %1999 = vmatprep.subr.mxu0 0.0
        %v2000 = vand.u32 %v1389, 4294901760
        %2001 = vmatpush1.msra.mxu0 %v2000
        %2002 = vmatprep.subr.mxu0 0.0
        %v2003 = vand.u32 %v1388, 4294901760
        %2004 = vmatpush1.msra.mxu0 %v2003
        %2005 = vmatprep.subr.mxu0 0.0
        %v2006 = vand.u32 %v1387, 4294901760
        %2007 = vmatpush1.msra.mxu0 %v2006
        %2008 = vmatprep.subr.mxu0 0.0
        %v2009 = vand.u32 %v1386, 4294901760
        %2010 = vmatpush1.msra.mxu0 %v2009
        %2011 = vmatprep.subr.mxu0 0.0
        %v2012 = vand.u32 %v1417, 4294901760
        %2013 = vmatpush2.msra.mxu0 %v2012
        %2014 = vmatprep.subr.mxu0 0.0
        %v2015 = vand.u32 %v1416, 4294901760
        %2016 = vmatpush2.msra.mxu0 %v2015
        %2017 = vmatprep.subr.mxu0 0.0
        %v2018 = vand.u32 %v1415, 4294901760
        %2019 = vmatpush2.msra.mxu0 %v2018
        %2020 = vmatprep.subr.mxu0 0.0
        %v2021 = vand.u32 %v1414, 4294901760
        %2022 = vmatpush2.msra.mxu0 %v2021
        %2023 = vmatprep.subr.mxu0 0.0
        %v2024 = vand.u32 %v1413, 4294901760
        %2025 = vmatpush2.msra.mxu0 %v2024
        %2026 = vmatprep.subr.mxu0 0.0
        %v2027 = vand.u32 %v1412, 4294901760
        %2028 = vmatpush2.msra.mxu0 %v2027
        %2029 = vmatprep.subr.mxu0 0.0
        %v2030 = vand.u32 %v1411, 4294901760
        %2031 = vmatpush2.msra.mxu0 %v2030
        %2032 = vmatprep.subr.mxu0 0.0
        %v2033 = vand.u32 %v1410, 4294901760
        %2034 = vmatpush2.msra.mxu0 %v2033
        %2035 = vmatprep.subr.mxu0 0.0
        %v2036 = vand.u32 %v1409, 4294901760
        %2037 = vmatpush2.msra.mxu0 %v2036
        %2038 = vmatprep.subr.mxu0 0.0
        %v2039 = vand.u32 %v1408, 4294901760
        %2040 = vmatpush2.msra.mxu0 %v2039
        %2041 = vmatprep.subr.mxu0 0.0
        %v2042 = vand.u32 %v1407, 4294901760
        %2043 = vmatpush2.msra.mxu0 %v2042
        %2044 = vmatprep.subr.mxu0 0.0
        %v2045 = vand.u32 %v1406, 4294901760
        %2046 = vmatpush2.msra.mxu0 %v2045
        %2047 = vmatprep.subr.mxu0 0.0
        %v2048 = vand.u32 %v1405, 4294901760
        %2049 = vmatpush2.msra.mxu0 %v2048
        %2050 = vmatprep.subr.mxu0 0.0
        %v2051 = vand.u32 %v1404, 4294901760
        %2052 = vmatpush2.msra.mxu0 %v2051
        %2053 = vmatprep.subr.mxu0 0.0
        %v2054 = vand.u32 %v1403, 4294901760
        %2055 = vmatpush2.msra.mxu0 %v2054
        %2056 = vmatprep.subr.mxu0 0.0
        %v2057 = vand.u32 %v1402, 4294901760
        %2058 = vmatpush2.msra.mxu0 %v2057
        %v2059 = vand.u32 %v737, 4294901760
        %v2060 = vsub.f32 %v737, %v2059
        %v2061 = vand.u32 %v2060, 4294901760
        %2062 = vmatprep.mubr.f32.mxu0 %v2061
        %v2063 = vand.u32 %v736, 4294901760
        %v2064 = vsub.f32 %v736, %v2063
        %v2065 = vand.u32 %v2064, 4294901760
        %2066 = vmatmul.mubr.f32.gmra.mxu0 %v2065
        %v2067 = vpop.f32.mrf.mxu0
        %v2068 = vadd.f32 %v1951, %v2067
        %v2069 = vpop.f32.mrf.mxu0
        %v2070 = vand.u32 %v741, 4294901760
        %v2071 = vsub.f32 %v741, %v2070
        %v2072 = vand.u32 %v2071, 4294901760
        %2073 = vmatprep.mubr.f32.mxu0 %v2072
        %v2074 = vand.u32 %v740, 4294901760
        %v2075 = vsub.f32 %v740, %v2074
        %v2076 = vand.u32 %v2075, 4294901760
        %2077 = vmatmul.mubr.f32.gmra.mxu0 %v2076
        %v2078 = vpop.f32.mrf.mxu0
        %v2079 = vadd.f32 %v1960, %v2078
        %v2080 = vpop.f32.mrf.mxu0
        %2081 = vdwg.mxu0
        %2082 = vmatprep.subr.mxu0 0.0
        %v2083 = vand.u32 %v1401, 4294901760
        %v2084 = vsub.f32 %v1401, %v2083
        %v2085 = vand.u32 %v2084, 4294901760
        %2086 = vmatpush1.msra.mxu0 %v2085
        %2087 = vmatprep.subr.mxu0 0.0
        %v2088 = vand.u32 %v1400, 4294901760
        %v2089 = vsub.f32 %v1400, %v2088
        %v2090 = vand.u32 %v2089, 4294901760
        %2091 = vmatpush1.msra.mxu0 %v2090
        %2092 = vmatprep.subr.mxu0 0.0
        %v2093 = vand.u32 %v1399, 4294901760
        %v2094 = vsub.f32 %v1399, %v2093
        %v2095 = vand.u32 %v2094, 4294901760
        %2096 = vmatpush1.msra.mxu0 %v2095
        %2097 = vmatprep.subr.mxu0 0.0
        %v2098 = vand.u32 %v1398, 4294901760
        %v2099 = vsub.f32 %v1398, %v2098
        %v2100 = vand.u32 %v2099, 4294901760
        %2101 = vmatpush1.msra.mxu0 %v2100
        %2102 = vmatprep.subr.mxu0 0.0
        %v2103 = vand.u32 %v1397, 4294901760
        %v2104 = vsub.f32 %v1397, %v2103
        %v2105 = vand.u32 %v2104, 4294901760
        %2106 = vmatpush1.msra.mxu0 %v2105
        %2107 = vmatprep.subr.mxu0 0.0
        %v2108 = vand.u32 %v1396, 4294901760
        %v2109 = vsub.f32 %v1396, %v2108
        %v2110 = vand.u32 %v2109, 4294901760
        %2111 = vmatpush1.msra.mxu0 %v2110
        %2112 = vmatprep.subr.mxu0 0.0
        %v2113 = vand.u32 %v1395, 4294901760
        %v2114 = vsub.f32 %v1395, %v2113
        %v2115 = vand.u32 %v2114, 4294901760
        %2116 = vmatpush1.msra.mxu0 %v2115
        %2117 = vmatprep.subr.mxu0 0.0
        %v2118 = vand.u32 %v1394, 4294901760
        %v2119 = vsub.f32 %v1394, %v2118
        %v2120 = vand.u32 %v2119, 4294901760
        %2121 = vmatpush1.msra.mxu0 %v2120
        %2122 = vmatprep.subr.mxu0 0.0
        %v2123 = vand.u32 %v1393, 4294901760
        %v2124 = vsub.f32 %v1393, %v2123
        %v2125 = vand.u32 %v2124, 4294901760
        %2126 = vmatpush1.msra.mxu0 %v2125
        %2127 = vmatprep.subr.mxu0 0.0
        %v2128 = vand.u32 %v1392, 4294901760
        %v2129 = vsub.f32 %v1392, %v2128
        %v2130 = vand.u32 %v2129, 4294901760
        %2131 = vmatpush1.msra.mxu0 %v2130
        %2132 = vmatprep.subr.mxu0 0.0
        %v2133 = vand.u32 %v1391, 4294901760
        %v2134 = vsub.f32 %v1391, %v2133
        %v2135 = vand.u32 %v2134, 4294901760
        %2136 = vmatpush1.msra.mxu0 %v2135
        %2137 = vmatprep.subr.mxu0 0.0
        %v2138 = vand.u32 %v1390, 4294901760
        %v2139 = vsub.f32 %v1390, %v2138
        %v2140 = vand.u32 %v2139, 4294901760
        %2141 = vmatpush1.msra.mxu0 %v2140
        %2142 = vmatprep.subr.mxu0 0.0
        %v2143 = vand.u32 %v1389, 4294901760
        %v2144 = vsub.f32 %v1389, %v2143
        %v2145 = vand.u32 %v2144, 4294901760
        %2146 = vmatpush1.msra.mxu0 %v2145
        %2147 = vmatprep.subr.mxu0 0.0
        %v2148 = vand.u32 %v1388, 4294901760
        %v2149 = vsub.f32 %v1388, %v2148
        %v2150 = vand.u32 %v2149, 4294901760
        %2151 = vmatpush1.msra.mxu0 %v2150
        %2152 = vmatprep.subr.mxu0 0.0
        %v2153 = vand.u32 %v1387, 4294901760
        %v2154 = vsub.f32 %v1387, %v2153
        %v2155 = vand.u32 %v2154, 4294901760
        %2156 = vmatpush1.msra.mxu0 %v2155
        %2157 = vmatprep.subr.mxu0 0.0
        %v2158 = vand.u32 %v1386, 4294901760
        %v2159 = vsub.f32 %v1386, %v2158
        %v2160 = vand.u32 %v2159, 4294901760
        %2161 = vmatpush1.msra.mxu0 %v2160
        %2162 = vmatprep.subr.mxu0 0.0
        %v2163 = vand.u32 %v1417, 4294901760
        %v2164 = vsub.f32 %v1417, %v2163
        %v2165 = vand.u32 %v2164, 4294901760
        %2166 = vmatpush2.msra.mxu0 %v2165
        %2167 = vmatprep.subr.mxu0 0.0
        %v2168 = vand.u32 %v1416, 4294901760
        %v2169 = vsub.f32 %v1416, %v2168
        %v2170 = vand.u32 %v2169, 4294901760
        %2171 = vmatpush2.msra.mxu0 %v2170
        %2172 = vmatprep.subr.mxu0 0.0
        %v2173 = vand.u32 %v1415, 4294901760
        %v2174 = vsub.f32 %v1415, %v2173
        %v2175 = vand.u32 %v2174, 4294901760
        %2176 = vmatpush2.msra.mxu0 %v2175
        %2177 = vmatprep.subr.mxu0 0.0
        %v2178 = vand.u32 %v1414, 4294901760
        %v2179 = vsub.f32 %v1414, %v2178
        %v2180 = vand.u32 %v2179, 4294901760
        %2181 = vmatpush2.msra.mxu0 %v2180
        %2182 = vmatprep.subr.mxu0 0.0
        %v2183 = vand.u32 %v1413, 4294901760
        %v2184 = vsub.f32 %v1413, %v2183
        %v2185 = vand.u32 %v2184, 4294901760
        %2186 = vmatpush2.msra.mxu0 %v2185
        %2187 = vmatprep.subr.mxu0 0.0
        %v2188 = vand.u32 %v1412, 4294901760
        %v2189 = vsub.f32 %v1412, %v2188
        %v2190 = vand.u32 %v2189, 4294901760
        %2191 = vmatpush2.msra.mxu0 %v2190
        %2192 = vmatprep.subr.mxu0 0.0
        %v2193 = vand.u32 %v1411, 4294901760
        %v2194 = vsub.f32 %v1411, %v2193
        %v2195 = vand.u32 %v2194, 4294901760
        %2196 = vmatpush2.msra.mxu0 %v2195
        %2197 = vmatprep.subr.mxu0 0.0
        %v2198 = vand.u32 %v1410, 4294901760
        %v2199 = vsub.f32 %v1410, %v2198
        %v2200 = vand.u32 %v2199, 4294901760
        %2201 = vmatpush2.msra.mxu0 %v2200
        %2202 = vmatprep.subr.mxu0 0.0
        %v2203 = vand.u32 %v1409, 4294901760
        %v2204 = vsub.f32 %v1409, %v2203
        %v2205 = vand.u32 %v2204, 4294901760
        %2206 = vmatpush2.msra.mxu0 %v2205
        %2207 = vmatprep.subr.mxu0 0.0
        %v2208 = vand.u32 %v1408, 4294901760
        %v2209 = vsub.f32 %v1408, %v2208
        %v2210 = vand.u32 %v2209, 4294901760
        %2211 = vmatpush2.msra.mxu0 %v2210
        %2212 = vmatprep.subr.mxu0 0.0
        %v2213 = vand.u32 %v1407, 4294901760
        %v2214 = vsub.f32 %v1407, %v2213
        %v2215 = vand.u32 %v2214, 4294901760
        %2216 = vmatpush2.msra.mxu0 %v2215
        %2217 = vmatprep.subr.mxu0 0.0
        %v2218 = vand.u32 %v1406, 4294901760
        %v2219 = vsub.f32 %v1406, %v2218
        %v2220 = vand.u32 %v2219, 4294901760
        %2221 = vmatpush2.msra.mxu0 %v2220
        %2222 = vmatprep.subr.mxu0 0.0
        %v2223 = vand.u32 %v1405, 4294901760
        %v2224 = vsub.f32 %v1405, %v2223
        %v2225 = vand.u32 %v2224, 4294901760
        %2226 = vmatpush2.msra.mxu0 %v2225
        %2227 = vmatprep.subr.mxu0 0.0
        %v2228 = vand.u32 %v1404, 4294901760
        %v2229 = vsub.f32 %v1404, %v2228
        %v2230 = vand.u32 %v2229, 4294901760
        %2231 = vmatpush2.msra.mxu0 %v2230
        %2232 = vmatprep.subr.mxu0 0.0
        %v2233 = vand.u32 %v1403, 4294901760
        %v2234 = vsub.f32 %v1403, %v2233
        %v2235 = vand.u32 %v2234, 4294901760
        %2236 = vmatpush2.msra.mxu0 %v2235
        %2237 = vmatprep.subr.mxu0 0.0
        %v2238 = vand.u32 %v1402, 4294901760
        %v2239 = vsub.f32 %v1402, %v2238
        %v2240 = vand.u32 %v2239, 4294901760
        %2241 = vmatpush2.msra.mxu0 %v2240
        %v2242 = vand.u32 %v737, 4294901760
        %2243 = vmatprep.mubr.f32.mxu0 %v2242
        %v2244 = vand.u32 %v736, 4294901760
        %2245 = vmatmul.mubr.f32.gmra.mxu0 %v2244
        %v2246 = vpop.f32.mrf.mxu0
        %v2247 = vadd.f32 %v2068, %v2246
        %v2248 = vpop.f32.mrf.mxu0
        %v2249 = vand.u32 %v741, 4294901760
        %2250 = vmatprep.mubr.f32.mxu0 %v2249
        %v2251 = vand.u32 %v740, 4294901760
        %2252 = vmatmul.mubr.f32.gmra.mxu0 %v2251
        %v2253 = vpop.f32.mrf.mxu0
        %v2254 = vadd.f32 %v2079, %v2253
        %v2255 = vpop.f32.mrf.mxu0
        %2256 = vdwg.mxu0
        %2257 = vmatprep.subr.mxu0 0.0
        %v2258 = vand.u32 %v1401, 4294901760
        %2259 = vmatpush1.msra.mxu0 %v2258
        %2260 = vmatprep.subr.mxu0 0.0
        %v2261 = vand.u32 %v1400, 4294901760
        %2262 = vmatpush1.msra.mxu0 %v2261
        %2263 = vmatprep.subr.mxu0 0.0
        %v2264 = vand.u32 %v1399, 4294901760
        %2265 = vmatpush1.msra.mxu0 %v2264
        %2266 = vmatprep.subr.mxu0 0.0
        %v2267 = vand.u32 %v1398, 4294901760
        %2268 = vmatpush1.msra.mxu0 %v2267
        %2269 = vmatprep.subr.mxu0 0.0
        %v2270 = vand.u32 %v1397, 4294901760
        %2271 = vmatpush1.msra.mxu0 %v2270
        %2272 = vmatprep.subr.mxu0 0.0
        %v2273 = vand.u32 %v1396, 4294901760
        %2274 = vmatpush1.msra.mxu0 %v2273
        %2275 = vmatprep.subr.mxu0 0.0
        %v2276 = vand.u32 %v1395, 4294901760
        %2277 = vmatpush1.msra.mxu0 %v2276
        %2278 = vmatprep.subr.mxu0 0.0
        %v2279 = vand.u32 %v1394, 4294901760
        %2280 = vmatpush1.msra.mxu0 %v2279
        %2281 = vmatprep.subr.mxu0 0.0
        %v2282 = vand.u32 %v1393, 4294901760
        %2283 = vmatpush1.msra.mxu0 %v2282
        %2284 = vmatprep.subr.mxu0 0.0
        %v2285 = vand.u32 %v1392, 4294901760
        %2286 = vmatpush1.msra.mxu0 %v2285
        %2287 = vmatprep.subr.mxu0 0.0
        %v2288 = vand.u32 %v1391, 4294901760
        %2289 = vmatpush1.msra.mxu0 %v2288
        %2290 = vmatprep.subr.mxu0 0.0
        %v2291 = vand.u32 %v1390, 4294901760
        %2292 = vmatpush1.msra.mxu0 %v2291
        %2293 = vmatprep.subr.mxu0 0.0
        %v2294 = vand.u32 %v1389, 4294901760
        %2295 = vmatpush1.msra.mxu0 %v2294
        %2296 = vmatprep.subr.mxu0 0.0
        %v2297 = vand.u32 %v1388, 4294901760
        %2298 = vmatpush1.msra.mxu0 %v2297
        %2299 = vmatprep.subr.mxu0 0.0
        %v2300 = vand.u32 %v1387, 4294901760
        %2301 = vmatpush1.msra.mxu0 %v2300
        %2302 = vmatprep.subr.mxu0 0.0
        %v2303 = vand.u32 %v1386, 4294901760
        %2304 = vmatpush1.msra.mxu0 %v2303
        %2305 = vmatprep.subr.mxu0 0.0
        %v2306 = vand.u32 %v1417, 4294901760
        %2307 = vmatpush2.msra.mxu0 %v2306
        %2308 = vmatprep.subr.mxu0 0.0
        %v2309 = vand.u32 %v1416, 4294901760
        %2310 = vmatpush2.msra.mxu0 %v2309
        %2311 = vmatprep.subr.mxu0 0.0
        %v2312 = vand.u32 %v1415, 4294901760
        %2313 = vmatpush2.msra.mxu0 %v2312
        %2314 = vmatprep.subr.mxu0 0.0
        %v2315 = vand.u32 %v1414, 4294901760
        %2316 = vmatpush2.msra.mxu0 %v2315
        %2317 = vmatprep.subr.mxu0 0.0
        %v2318 = vand.u32 %v1413, 4294901760
        %2319 = vmatpush2.msra.mxu0 %v2318
        %2320 = vmatprep.subr.mxu0 0.0
        %v2321 = vand.u32 %v1412, 4294901760
        %2322 = vmatpush2.msra.mxu0 %v2321
        %2323 = vmatprep.subr.mxu0 0.0
        %v2324 = vand.u32 %v1411, 4294901760
        %2325 = vmatpush2.msra.mxu0 %v2324
        %2326 = vmatprep.subr.mxu0 0.0
        %v2327 = vand.u32 %v1410, 4294901760
        %2328 = vmatpush2.msra.mxu0 %v2327
        %2329 = vmatprep.subr.mxu0 0.0
        %v2330 = vand.u32 %v1409, 4294901760
        %2331 = vmatpush2.msra.mxu0 %v2330
        %2332 = vmatprep.subr.mxu0 0.0
        %v2333 = vand.u32 %v1408, 4294901760
        %2334 = vmatpush2.msra.mxu0 %v2333
        %2335 = vmatprep.subr.mxu0 0.0
        %v2336 = vand.u32 %v1407, 4294901760
        %2337 = vmatpush2.msra.mxu0 %v2336
        %2338 = vmatprep.subr.mxu0 0.0
        %v2339 = vand.u32 %v1406, 4294901760
        %2340 = vmatpush2.msra.mxu0 %v2339
        %2341 = vmatprep.subr.mxu0 0.0
        %v2342 = vand.u32 %v1405, 4294901760
        %2343 = vmatpush2.msra.mxu0 %v2342
        %2344 = vmatprep.subr.mxu0 0.0
        %v2345 = vand.u32 %v1404, 4294901760
        %2346 = vmatpush2.msra.mxu0 %v2345
        %2347 = vmatprep.subr.mxu0 0.0
        %v2348 = vand.u32 %v1403, 4294901760
        %2349 = vmatpush2.msra.mxu0 %v2348
        %2350 = vmatprep.subr.mxu0 0.0
        %v2351 = vand.u32 %v1402, 4294901760
        %2352 = vmatpush2.msra.mxu0 %v2351
        %v2353 = vand.u32 %v737, 4294901760
        %2354 = vmatprep.mubr.f32.mxu0 %v2353
        %v2355 = vand.u32 %v736, 4294901760
        %2356 = vmatmul.mubr.f32.gmra.mxu0 %v2355
        %v2357 = vpop.f32.mrf.mxu0
        %v2358 = vadd.f32 %v2247, %v2357
        %v2359 = vpop.f32.mrf.mxu0
        %v2360 = vand.u32 %v741, 4294901760
        %2361 = vmatprep.mubr.f32.mxu0 %v2360
        %v2362 = vand.u32 %v740, 4294901760
        %2363 = vmatmul.mubr.f32.gmra.mxu0 %v2362
        %v2364 = vpop.f32.mrf.mxu0
        %v2365 = vadd.f32 %v2254, %v2364
        %v2366 = vpop.f32.mrf.mxu0
        %2367 = vdwg.mxu0
        %2368 = vmatprep.subr.mxu0 0.0
        %v2369 = vand.u32 %v1433, 4294901760
        %2370 = vmatpush1.msra.mxu0 %v2369
        %2371 = vmatprep.subr.mxu0 0.0
        %v2372 = vand.u32 %v1432, 4294901760
        %2373 = vmatpush1.msra.mxu0 %v2372
        %2374 = vmatprep.subr.mxu0 0.0
        %v2375 = vand.u32 %v1431, 4294901760
        %2376 = vmatpush1.msra.mxu0 %v2375
        %2377 = vmatprep.subr.mxu0 0.0
        %v2378 = vand.u32 %v1430, 4294901760
        %2379 = vmatpush1.msra.mxu0 %v2378
        %2380 = vmatprep.subr.mxu0 0.0
        %v2381 = vand.u32 %v1429, 4294901760
        %2382 = vmatpush1.msra.mxu0 %v2381
        %2383 = vmatprep.subr.mxu0 0.0
        %v2384 = vand.u32 %v1428, 4294901760
        %2385 = vmatpush1.msra.mxu0 %v2384
        %2386 = vmatprep.subr.mxu0 0.0
        %v2387 = vand.u32 %v1427, 4294901760
        %2388 = vmatpush1.msra.mxu0 %v2387
        %2389 = vmatprep.subr.mxu0 0.0
        %v2390 = vand.u32 %v1426, 4294901760
        %2391 = vmatpush1.msra.mxu0 %v2390
        %2392 = vmatprep.subr.mxu0 0.0
        %v2393 = vand.u32 %v1425, 4294901760
        %2394 = vmatpush1.msra.mxu0 %v2393
        %2395 = vmatprep.subr.mxu0 0.0
        %v2396 = vand.u32 %v1424, 4294901760
        %2397 = vmatpush1.msra.mxu0 %v2396
        %2398 = vmatprep.subr.mxu0 0.0
        %v2399 = vand.u32 %v1423, 4294901760
        %2400 = vmatpush1.msra.mxu0 %v2399
        %2401 = vmatprep.subr.mxu0 0.0
        %v2402 = vand.u32 %v1422, 4294901760
        %2403 = vmatpush1.msra.mxu0 %v2402
        %2404 = vmatprep.subr.mxu0 0.0
        %v2405 = vand.u32 %v1421, 4294901760
        %2406 = vmatpush1.msra.mxu0 %v2405
        %2407 = vmatprep.subr.mxu0 0.0
        %v2408 = vand.u32 %v1420, 4294901760
        %2409 = vmatpush1.msra.mxu0 %v2408
        %2410 = vmatprep.subr.mxu0 0.0
        %v2411 = vand.u32 %v1419, 4294901760
        %2412 = vmatpush1.msra.mxu0 %v2411
        %2413 = vmatprep.subr.mxu0 0.0
        %v2414 = vand.u32 %v1418, 4294901760
        %2415 = vmatpush1.msra.mxu0 %v2414
        %2416 = vmatprep.subr.mxu0 0.0
        %v2417 = vand.u32 %v1449, 4294901760
        %2418 = vmatpush2.msra.mxu0 %v2417
        %2419 = vmatprep.subr.mxu0 0.0
        %v2420 = vand.u32 %v1448, 4294901760
        %2421 = vmatpush2.msra.mxu0 %v2420
        %2422 = vmatprep.subr.mxu0 0.0
        %v2423 = vand.u32 %v1447, 4294901760
        %2424 = vmatpush2.msra.mxu0 %v2423
        %2425 = vmatprep.subr.mxu0 0.0
        %v2426 = vand.u32 %v1446, 4294901760
        %2427 = vmatpush2.msra.mxu0 %v2426
        %2428 = vmatprep.subr.mxu0 0.0
        %v2429 = vand.u32 %v1445, 4294901760
        %2430 = vmatpush2.msra.mxu0 %v2429
        %2431 = vmatprep.subr.mxu0 0.0
        %v2432 = vand.u32 %v1444, 4294901760
        %2433 = vmatpush2.msra.mxu0 %v2432
        %2434 = vmatprep.subr.mxu0 0.0
        %v2435 = vand.u32 %v1443, 4294901760
        %2436 = vmatpush2.msra.mxu0 %v2435
        %2437 = vmatprep.subr.mxu0 0.0
        %v2438 = vand.u32 %v1442, 4294901760
        %2439 = vmatpush2.msra.mxu0 %v2438
        %2440 = vmatprep.subr.mxu0 0.0
        %v2441 = vand.u32 %v1441, 4294901760
        %2442 = vmatpush2.msra.mxu0 %v2441
        %2443 = vmatprep.subr.mxu0 0.0
        %v2444 = vand.u32 %v1440, 4294901760
        %2445 = vmatpush2.msra.mxu0 %v2444
        %2446 = vmatprep.subr.mxu0 0.0
        %v2447 = vand.u32 %v1439, 4294901760
        %2448 = vmatpush2.msra.mxu0 %v2447
        %2449 = vmatprep.subr.mxu0 0.0
        %v2450 = vand.u32 %v1438, 4294901760
        %2451 = vmatpush2.msra.mxu0 %v2450
        %2452 = vmatprep.subr.mxu0 0.0
        %v2453 = vand.u32 %v1437, 4294901760
        %2454 = vmatpush2.msra.mxu0 %v2453
        %2455 = vmatprep.subr.mxu0 0.0
        %v2456 = vand.u32 %v1436, 4294901760
        %2457 = vmatpush2.msra.mxu0 %v2456
        %2458 = vmatprep.subr.mxu0 0.0
        %v2459 = vand.u32 %v1435, 4294901760
        %2460 = vmatpush2.msra.mxu0 %v2459
        %2461 = vmatprep.subr.mxu0 0.0
        %v2462 = vand.u32 %v1434, 4294901760
        %2463 = vmatpush2.msra.mxu0 %v2462
        %v2464 = vand.u32 %v739, 4294901760
        %v2465 = vsub.f32 %v739, %v2464
        %v2466 = vand.u32 %v2465, 4294901760
        %v2467 = vsub.f32 %v2465, %v2466
        %v2468 = vand.u32 %v2467, 4294901760
        %2469 = vmatprep.mubr.f32.mxu0 %v2468
        %v2470 = vand.u32 %v738, 4294901760
        %v2471 = vsub.f32 %v738, %v2470
        %v2472 = vand.u32 %v2471, 4294901760
        %v2473 = vsub.f32 %v2471, %v2472
        %v2474 = vand.u32 %v2473, 4294901760
        %2475 = vmatmul.mubr.f32.gmra.mxu0 %v2474
        %v2476 = vpop.f32.mrf.mxu0
        %v2477 = vadd.f32 %v2358, %v2476
        %v2478 = vpop.f32.mrf.mxu0
        %v2479 = vand.u32 %v743, 4294901760
        %v2480 = vsub.f32 %v743, %v2479
        %v2481 = vand.u32 %v2480, 4294901760
        %v2482 = vsub.f32 %v2480, %v2481
        %v2483 = vand.u32 %v2482, 4294901760
        %2484 = vmatprep.mubr.f32.mxu0 %v2483
        %v2485 = vand.u32 %v742, 4294901760
        %v2486 = vsub.f32 %v742, %v2485
        %v2487 = vand.u32 %v2486, 4294901760
        %v2488 = vsub.f32 %v2486, %v2487
        %v2489 = vand.u32 %v2488, 4294901760
        %2490 = vmatmul.mubr.f32.gmra.mxu0 %v2489
        %v2491 = vpop.f32.mrf.mxu0
        %v2492 = vadd.f32 %v2365, %v2491
        %v2493 = vpop.f32.mrf.mxu0
        %2494 = vdwg.mxu0
        %2495 = vmatprep.subr.mxu0 0.0
        %v2496 = vand.u32 %v1433, 4294901760
        %v2497 = vsub.f32 %v1433, %v2496
        %v2498 = vand.u32 %v2497, 4294901760
        %v2499 = vsub.f32 %v2497, %v2498
        %v2500 = vand.u32 %v2499, 4294901760
        %2501 = vmatpush1.msra.mxu0 %v2500
        %2502 = vmatprep.subr.mxu0 0.0
        %v2503 = vand.u32 %v1432, 4294901760
        %v2504 = vsub.f32 %v1432, %v2503
        %v2505 = vand.u32 %v2504, 4294901760
        %v2506 = vsub.f32 %v2504, %v2505
        %v2507 = vand.u32 %v2506, 4294901760
        %2508 = vmatpush1.msra.mxu0 %v2507
        %2509 = vmatprep.subr.mxu0 0.0
        %v2510 = vand.u32 %v1431, 4294901760
        %v2511 = vsub.f32 %v1431, %v2510
        %v2512 = vand.u32 %v2511, 4294901760
        %v2513 = vsub.f32 %v2511, %v2512
        %v2514 = vand.u32 %v2513, 4294901760
        %2515 = vmatpush1.msra.mxu0 %v2514
        %2516 = vmatprep.subr.mxu0 0.0
        %v2517 = vand.u32 %v1430, 4294901760
        %v2518 = vsub.f32 %v1430, %v2517
        %v2519 = vand.u32 %v2518, 4294901760
        %v2520 = vsub.f32 %v2518, %v2519
        %v2521 = vand.u32 %v2520, 4294901760
        %2522 = vmatpush1.msra.mxu0 %v2521
        %2523 = vmatprep.subr.mxu0 0.0
        %v2524 = vand.u32 %v1429, 4294901760
        %v2525 = vsub.f32 %v1429, %v2524
        %v2526 = vand.u32 %v2525, 4294901760
        %v2527 = vsub.f32 %v2525, %v2526
        %v2528 = vand.u32 %v2527, 4294901760
        %2529 = vmatpush1.msra.mxu0 %v2528
        %2530 = vmatprep.subr.mxu0 0.0
        %v2531 = vand.u32 %v1428, 4294901760
        %v2532 = vsub.f32 %v1428, %v2531
        %v2533 = vand.u32 %v2532, 4294901760
        %v2534 = vsub.f32 %v2532, %v2533
        %v2535 = vand.u32 %v2534, 4294901760
        %2536 = vmatpush1.msra.mxu0 %v2535
        %2537 = vmatprep.subr.mxu0 0.0
        %v2538 = vand.u32 %v1427, 4294901760
        %v2539 = vsub.f32 %v1427, %v2538
        %v2540 = vand.u32 %v2539, 4294901760
        %v2541 = vsub.f32 %v2539, %v2540
        %v2542 = vand.u32 %v2541, 4294901760
        %2543 = vmatpush1.msra.mxu0 %v2542
        %2544 = vmatprep.subr.mxu0 0.0
        %v2545 = vand.u32 %v1426, 4294901760
        %v2546 = vsub.f32 %v1426, %v2545
        %v2547 = vand.u32 %v2546, 4294901760
        %v2548 = vsub.f32 %v2546, %v2547
        %v2549 = vand.u32 %v2548, 4294901760
        %2550 = vmatpush1.msra.mxu0 %v2549
        %2551 = vmatprep.subr.mxu0 0.0
        %v2552 = vand.u32 %v1425, 4294901760
        %v2553 = vsub.f32 %v1425, %v2552
        %v2554 = vand.u32 %v2553, 4294901760
        %v2555 = vsub.f32 %v2553, %v2554
        %v2556 = vand.u32 %v2555, 4294901760
        %2557 = vmatpush1.msra.mxu0 %v2556
        %2558 = vmatprep.subr.mxu0 0.0
        %v2559 = vand.u32 %v1424, 4294901760
        %v2560 = vsub.f32 %v1424, %v2559
        %v2561 = vand.u32 %v2560, 4294901760
        %v2562 = vsub.f32 %v2560, %v2561
        %v2563 = vand.u32 %v2562, 4294901760
        %2564 = vmatpush1.msra.mxu0 %v2563
        %2565 = vmatprep.subr.mxu0 0.0
        %v2566 = vand.u32 %v1423, 4294901760
        %v2567 = vsub.f32 %v1423, %v2566
        %v2568 = vand.u32 %v2567, 4294901760
        %v2569 = vsub.f32 %v2567, %v2568
        %v2570 = vand.u32 %v2569, 4294901760
        %2571 = vmatpush1.msra.mxu0 %v2570
        %2572 = vmatprep.subr.mxu0 0.0
        %v2573 = vand.u32 %v1422, 4294901760
        %v2574 = vsub.f32 %v1422, %v2573
        %v2575 = vand.u32 %v2574, 4294901760
        %v2576 = vsub.f32 %v2574, %v2575
        %v2577 = vand.u32 %v2576, 4294901760
        %2578 = vmatpush1.msra.mxu0 %v2577
        %2579 = vmatprep.subr.mxu0 0.0
        %v2580 = vand.u32 %v1421, 4294901760
        %v2581 = vsub.f32 %v1421, %v2580
        %v2582 = vand.u32 %v2581, 4294901760
        %v2583 = vsub.f32 %v2581, %v2582
        %v2584 = vand.u32 %v2583, 4294901760
        %2585 = vmatpush1.msra.mxu0 %v2584
        %2586 = vmatprep.subr.mxu0 0.0
        %v2587 = vand.u32 %v1420, 4294901760
        %v2588 = vsub.f32 %v1420, %v2587
        %v2589 = vand.u32 %v2588, 4294901760
        %v2590 = vsub.f32 %v2588, %v2589
        %v2591 = vand.u32 %v2590, 4294901760
        %2592 = vmatpush1.msra.mxu0 %v2591
        %2593 = vmatprep.subr.mxu0 0.0
        %v2594 = vand.u32 %v1419, 4294901760
        %v2595 = vsub.f32 %v1419, %v2594
        %v2596 = vand.u32 %v2595, 4294901760
        %v2597 = vsub.f32 %v2595, %v2596
        %v2598 = vand.u32 %v2597, 4294901760
        %2599 = vmatpush1.msra.mxu0 %v2598
        %2600 = vmatprep.subr.mxu0 0.0
        %v2601 = vand.u32 %v1418, 4294901760
        %v2602 = vsub.f32 %v1418, %v2601
        %v2603 = vand.u32 %v2602, 4294901760
        %v2604 = vsub.f32 %v2602, %v2603
        %v2605 = vand.u32 %v2604, 4294901760
        %2606 = vmatpush1.msra.mxu0 %v2605
        %2607 = vmatprep.subr.mxu0 0.0
        %v2608 = vand.u32 %v1449, 4294901760
        %v2609 = vsub.f32 %v1449, %v2608
        %v2610 = vand.u32 %v2609, 4294901760
        %v2611 = vsub.f32 %v2609, %v2610
        %v2612 = vand.u32 %v2611, 4294901760
        %2613 = vmatpush2.msra.mxu0 %v2612
        %2614 = vmatprep.subr.mxu0 0.0
        %v2615 = vand.u32 %v1448, 4294901760
        %v2616 = vsub.f32 %v1448, %v2615
        %v2617 = vand.u32 %v2616, 4294901760
        %v2618 = vsub.f32 %v2616, %v2617
        %v2619 = vand.u32 %v2618, 4294901760
        %2620 = vmatpush2.msra.mxu0 %v2619
        %2621 = vmatprep.subr.mxu0 0.0
        %v2622 = vand.u32 %v1447, 4294901760
        %v2623 = vsub.f32 %v1447, %v2622
        %v2624 = vand.u32 %v2623, 4294901760
        %v2625 = vsub.f32 %v2623, %v2624
        %v2626 = vand.u32 %v2625, 4294901760
        %2627 = vmatpush2.msra.mxu0 %v2626
        %2628 = vmatprep.subr.mxu0 0.0
        %v2629 = vand.u32 %v1446, 4294901760
        %v2630 = vsub.f32 %v1446, %v2629
        %v2631 = vand.u32 %v2630, 4294901760
        %v2632 = vsub.f32 %v2630, %v2631
        %v2633 = vand.u32 %v2632, 4294901760
        %2634 = vmatpush2.msra.mxu0 %v2633
        %2635 = vmatprep.subr.mxu0 0.0
        %v2636 = vand.u32 %v1445, 4294901760
        %v2637 = vsub.f32 %v1445, %v2636
        %v2638 = vand.u32 %v2637, 4294901760
        %v2639 = vsub.f32 %v2637, %v2638
        %v2640 = vand.u32 %v2639, 4294901760
        %2641 = vmatpush2.msra.mxu0 %v2640
        %2642 = vmatprep.subr.mxu0 0.0
        %v2643 = vand.u32 %v1444, 4294901760
        %v2644 = vsub.f32 %v1444, %v2643
        %v2645 = vand.u32 %v2644, 4294901760
        %v2646 = vsub.f32 %v2644, %v2645
        %v2647 = vand.u32 %v2646, 4294901760
        %2648 = vmatpush2.msra.mxu0 %v2647
        %2649 = vmatprep.subr.mxu0 0.0
        %v2650 = vand.u32 %v1443, 4294901760
        %v2651 = vsub.f32 %v1443, %v2650
        %v2652 = vand.u32 %v2651, 4294901760
        %v2653 = vsub.f32 %v2651, %v2652
        %v2654 = vand.u32 %v2653, 4294901760
        %2655 = vmatpush2.msra.mxu0 %v2654
        %2656 = vmatprep.subr.mxu0 0.0
        %v2657 = vand.u32 %v1442, 4294901760
        %v2658 = vsub.f32 %v1442, %v2657
        %v2659 = vand.u32 %v2658, 4294901760
        %v2660 = vsub.f32 %v2658, %v2659
        %v2661 = vand.u32 %v2660, 4294901760
        %2662 = vmatpush2.msra.mxu0 %v2661
        %2663 = vmatprep.subr.mxu0 0.0
        %v2664 = vand.u32 %v1441, 4294901760
        %v2665 = vsub.f32 %v1441, %v2664
        %v2666 = vand.u32 %v2665, 4294901760
        %v2667 = vsub.f32 %v2665, %v2666
        %v2668 = vand.u32 %v2667, 4294901760
        %2669 = vmatpush2.msra.mxu0 %v2668
        %2670 = vmatprep.subr.mxu0 0.0
        %v2671 = vand.u32 %v1440, 4294901760
        %v2672 = vsub.f32 %v1440, %v2671
        %v2673 = vand.u32 %v2672, 4294901760
        %v2674 = vsub.f32 %v2672, %v2673
        %v2675 = vand.u32 %v2674, 4294901760
        %2676 = vmatpush2.msra.mxu0 %v2675
        %2677 = vmatprep.subr.mxu0 0.0
        %v2678 = vand.u32 %v1439, 4294901760
        %v2679 = vsub.f32 %v1439, %v2678
        %v2680 = vand.u32 %v2679, 4294901760
        %v2681 = vsub.f32 %v2679, %v2680
        %v2682 = vand.u32 %v2681, 4294901760
        %2683 = vmatpush2.msra.mxu0 %v2682
        %2684 = vmatprep.subr.mxu0 0.0
        %v2685 = vand.u32 %v1438, 4294901760
        %v2686 = vsub.f32 %v1438, %v2685
        %v2687 = vand.u32 %v2686, 4294901760
        %v2688 = vsub.f32 %v2686, %v2687
        %v2689 = vand.u32 %v2688, 4294901760
        %2690 = vmatpush2.msra.mxu0 %v2689
        %2691 = vmatprep.subr.mxu0 0.0
        %v2692 = vand.u32 %v1437, 4294901760
        %v2693 = vsub.f32 %v1437, %v2692
        %v2694 = vand.u32 %v2693, 4294901760
        %v2695 = vsub.f32 %v2693, %v2694
        %v2696 = vand.u32 %v2695, 4294901760
        %2697 = vmatpush2.msra.mxu0 %v2696
        %2698 = vmatprep.subr.mxu0 0.0
        %v2699 = vand.u32 %v1436, 4294901760
        %v2700 = vsub.f32 %v1436, %v2699
        %v2701 = vand.u32 %v2700, 4294901760
        %v2702 = vsub.f32 %v2700, %v2701
        %v2703 = vand.u32 %v2702, 4294901760
        %2704 = vmatpush2.msra.mxu0 %v2703
        %2705 = vmatprep.subr.mxu0 0.0
        %v2706 = vand.u32 %v1435, 4294901760
        %v2707 = vsub.f32 %v1435, %v2706
        %v2708 = vand.u32 %v2707, 4294901760
        %v2709 = vsub.f32 %v2707, %v2708
        %v2710 = vand.u32 %v2709, 4294901760
        %2711 = vmatpush2.msra.mxu0 %v2710
        %2712 = vmatprep.subr.mxu0 0.0
        %v2713 = vand.u32 %v1434, 4294901760
        %v2714 = vsub.f32 %v1434, %v2713
        %v2715 = vand.u32 %v2714, 4294901760
        %v2716 = vsub.f32 %v2714, %v2715
        %v2717 = vand.u32 %v2716, 4294901760
        %2718 = vmatpush2.msra.mxu0 %v2717
        %v2719 = vand.u32 %v739, 4294901760
        %2720 = vmatprep.mubr.f32.mxu0 %v2719
        %v2721 = vand.u32 %v738, 4294901760
        %2722 = vmatmul.mubr.f32.gmra.mxu0 %v2721
        %v2723 = vpop.f32.mrf.mxu0
        %v2724 = vadd.f32 %v2477, %v2723
        %v2725 = vpop.f32.mrf.mxu0
        %v2726 = vand.u32 %v743, 4294901760
        %2727 = vmatprep.mubr.f32.mxu0 %v2726
        %v2728 = vand.u32 %v742, 4294901760
        %2729 = vmatmul.mubr.f32.gmra.mxu0 %v2728
        %v2730 = vpop.f32.mrf.mxu0
        %v2731 = vadd.f32 %v2492, %v2730
        %v2732 = vpop.f32.mrf.mxu0
        %2733 = vdwg.mxu0
        %2734 = vmatprep.subr.mxu0 0.0
        %v2735 = vand.u32 %v1433, 4294901760
        %v2736 = vsub.f32 %v1433, %v2735
        %2737 = vmatpush1.msra.mxu0 %v2736
        %2738 = vmatprep.subr.mxu0 0.0
        %v2739 = vand.u32 %v1432, 4294901760
        %v2740 = vsub.f32 %v1432, %v2739
        %2741 = vmatpush1.msra.mxu0 %v2740
        %2742 = vmatprep.subr.mxu0 0.0
        %v2743 = vand.u32 %v1431, 4294901760
        %v2744 = vsub.f32 %v1431, %v2743
        %2745 = vmatpush1.msra.mxu0 %v2744
        %2746 = vmatprep.subr.mxu0 0.0
        %v2747 = vand.u32 %v1430, 4294901760
        %v2748 = vsub.f32 %v1430, %v2747
        %2749 = vmatpush1.msra.mxu0 %v2748
        %2750 = vmatprep.subr.mxu0 0.0
        %v2751 = vand.u32 %v1429, 4294901760
        %v2752 = vsub.f32 %v1429, %v2751
        %2753 = vmatpush1.msra.mxu0 %v2752
        %2754 = vmatprep.subr.mxu0 0.0
        %v2755 = vand.u32 %v1428, 4294901760
        %v2756 = vsub.f32 %v1428, %v2755
        %2757 = vmatpush1.msra.mxu0 %v2756
        %2758 = vmatprep.subr.mxu0 0.0
        %v2759 = vand.u32 %v1427, 4294901760
        %v2760 = vsub.f32 %v1427, %v2759
        %2761 = vmatpush1.msra.mxu0 %v2760
        %2762 = vmatprep.subr.mxu0 0.0
        %v2763 = vand.u32 %v1426, 4294901760
        %v2764 = vsub.f32 %v1426, %v2763
        %2765 = vmatpush1.msra.mxu0 %v2764
        %2766 = vmatprep.subr.mxu0 0.0
        %v2767 = vand.u32 %v1425, 4294901760
        %v2768 = vsub.f32 %v1425, %v2767
        %2769 = vmatpush1.msra.mxu0 %v2768
        %2770 = vmatprep.subr.mxu0 0.0
        %v2771 = vand.u32 %v1424, 4294901760
        %v2772 = vsub.f32 %v1424, %v2771
        %2773 = vmatpush1.msra.mxu0 %v2772
        %2774 = vmatprep.subr.mxu0 0.0
        %v2775 = vand.u32 %v1423, 4294901760
        %v2776 = vsub.f32 %v1423, %v2775
        %2777 = vmatpush1.msra.mxu0 %v2776
        %2778 = vmatprep.subr.mxu0 0.0
        %v2779 = vand.u32 %v1422, 4294901760
        %v2780 = vsub.f32 %v1422, %v2779
        %2781 = vmatpush1.msra.mxu0 %v2780
        %2782 = vmatprep.subr.mxu0 0.0
        %v2783 = vand.u32 %v1421, 4294901760
        %v2784 = vsub.f32 %v1421, %v2783
        %2785 = vmatpush1.msra.mxu0 %v2784
        %2786 = vmatprep.subr.mxu0 0.0
        %v2787 = vand.u32 %v1420, 4294901760
        %v2788 = vsub.f32 %v1420, %v2787
        %2789 = vmatpush1.msra.mxu0 %v2788
        %2790 = vmatprep.subr.mxu0 0.0
        %v2791 = vand.u32 %v1419, 4294901760
        %v2792 = vsub.f32 %v1419, %v2791
        %2793 = vmatpush1.msra.mxu0 %v2792
        %2794 = vmatprep.subr.mxu0 0.0
        %v2795 = vand.u32 %v1418, 4294901760
        %v2796 = vsub.f32 %v1418, %v2795
        %2797 = vmatpush1.msra.mxu0 %v2796
        %2798 = vmatprep.subr.mxu0 0.0
        %v2799 = vand.u32 %v1449, 4294901760
        %v2800 = vsub.f32 %v1449, %v2799
        %2801 = vmatpush2.msra.mxu0 %v2800
        %2802 = vmatprep.subr.mxu0 0.0
        %v2803 = vand.u32 %v1448, 4294901760
        %v2804 = vsub.f32 %v1448, %v2803
        %2805 = vmatpush2.msra.mxu0 %v2804
        %2806 = vmatprep.subr.mxu0 0.0
        %v2807 = vand.u32 %v1447, 4294901760
        %v2808 = vsub.f32 %v1447, %v2807
        %2809 = vmatpush2.msra.mxu0 %v2808
        %2810 = vmatprep.subr.mxu0 0.0
        %v2811 = vand.u32 %v1446, 4294901760
        %v2812 = vsub.f32 %v1446, %v2811
        %2813 = vmatpush2.msra.mxu0 %v2812
        %2814 = vmatprep.subr.mxu0 0.0
        %v2815 = vand.u32 %v1445, 4294901760
        %v2816 = vsub.f32 %v1445, %v2815
        %2817 = vmatpush2.msra.mxu0 %v2816
        %2818 = vmatprep.subr.mxu0 0.0
        %v2819 = vand.u32 %v1444, 4294901760
        %v2820 = vsub.f32 %v1444, %v2819
        %2821 = vmatpush2.msra.mxu0 %v2820
        %2822 = vmatprep.subr.mxu0 0.0
        %v2823 = vand.u32 %v1443, 4294901760
        %v2824 = vsub.f32 %v1443, %v2823
        %2825 = vmatpush2.msra.mxu0 %v2824
        %2826 = vmatprep.subr.mxu0 0.0
        %v2827 = vand.u32 %v1442, 4294901760
        %v2828 = vsub.f32 %v1442, %v2827
        %2829 = vmatpush2.msra.mxu0 %v2828
        %2830 = vmatprep.subr.mxu0 0.0
        %v2831 = vand.u32 %v1441, 4294901760
        %v2832 = vsub.f32 %v1441, %v2831
        %2833 = vmatpush2.msra.mxu0 %v2832
        %2834 = vmatprep.subr.mxu0 0.0
        %v2835 = vand.u32 %v1440, 4294901760
        %v2836 = vsub.f32 %v1440, %v2835
        %2837 = vmatpush2.msra.mxu0 %v2836
        %2838 = vmatprep.subr.mxu0 0.0
        %v2839 = vand.u32 %v1439, 4294901760
        %v2840 = vsub.f32 %v1439, %v2839
        %2841 = vmatpush2.msra.mxu0 %v2840
        %2842 = vmatprep.subr.mxu0 0.0
        %v2843 = vand.u32 %v1438, 4294901760
        %v2844 = vsub.f32 %v1438, %v2843
        %2845 = vmatpush2.msra.mxu0 %v2844
        %2846 = vmatprep.subr.mxu0 0.0
        %v2847 = vand.u32 %v1437, 4294901760
        %v2848 = vsub.f32 %v1437, %v2847
        %2849 = vmatpush2.msra.mxu0 %v2848
        %2850 = vmatprep.subr.mxu0 0.0
        %v2851 = vand.u32 %v1436, 4294901760
        %v2852 = vsub.f32 %v1436, %v2851
        %2853 = vmatpush2.msra.mxu0 %v2852
        %2854 = vmatprep.subr.mxu0 0.0
        %v2855 = vand.u32 %v1435, 4294901760
        %v2856 = vsub.f32 %v1435, %v2855
        %2857 = vmatpush2.msra.mxu0 %v2856
        %2858 = vmatprep.subr.mxu0 0.0
        %v2859 = vand.u32 %v1434, 4294901760
        %v2860 = vsub.f32 %v1434, %v2859
        %2861 = vmatpush2.msra.mxu0 %v2860
        %v2862 = vand.u32 %v739, 4294901760
        %v2863 = vsub.f32 %v739, %v2862
        %2864 = vmatprep.mubr.f32.mxu0 %v2863
        %v2865 = vand.u32 %v738, 4294901760
        %v2866 = vsub.f32 %v738, %v2865
        %2867 = vmatmul.mubr.f32.gmra.mxu0 %v2866
        %v2868 = vpop.f32.mrf.mxu0
        %v2869 = vadd.f32 %v2724, %v2868
        %v2870 = vpop.f32.mrf.mxu0
        %v2871 = vand.u32 %v743, 4294901760
        %v2872 = vsub.f32 %v743, %v2871
        %2873 = vmatprep.mubr.f32.mxu0 %v2872
        %v2874 = vand.u32 %v742, 4294901760
        %v2875 = vsub.f32 %v742, %v2874
        %2876 = vmatmul.mubr.f32.gmra.mxu0 %v2875
        %v2877 = vpop.f32.mrf.mxu0
        %v2878 = vadd.f32 %v2731, %v2877
        %v2879 = vpop.f32.mrf.mxu0
        %2880 = vdwg.mxu0
        %2881 = vmatprep.subr.mxu0 0.0
        %v2882 = vand.u32 %v1433, 4294901760
        %2883 = vmatpush1.msra.mxu0 %v2882
        %2884 = vmatprep.subr.mxu0 0.0
        %v2885 = vand.u32 %v1432, 4294901760
        %2886 = vmatpush1.msra.mxu0 %v2885
        %2887 = vmatprep.subr.mxu0 0.0
        %v2888 = vand.u32 %v1431, 4294901760
        %2889 = vmatpush1.msra.mxu0 %v2888
        %2890 = vmatprep.subr.mxu0 0.0
        %v2891 = vand.u32 %v1430, 4294901760
        %2892 = vmatpush1.msra.mxu0 %v2891
        %2893 = vmatprep.subr.mxu0 0.0
        %v2894 = vand.u32 %v1429, 4294901760
        %2895 = vmatpush1.msra.mxu0 %v2894
        %2896 = vmatprep.subr.mxu0 0.0
        %v2897 = vand.u32 %v1428, 4294901760
        %2898 = vmatpush1.msra.mxu0 %v2897
        %2899 = vmatprep.subr.mxu0 0.0
        %v2900 = vand.u32 %v1427, 4294901760
        %2901 = vmatpush1.msra.mxu0 %v2900
        %2902 = vmatprep.subr.mxu0 0.0
        %v2903 = vand.u32 %v1426, 4294901760
        %2904 = vmatpush1.msra.mxu0 %v2903
        %2905 = vmatprep.subr.mxu0 0.0
        %v2906 = vand.u32 %v1425, 4294901760
        %2907 = vmatpush1.msra.mxu0 %v2906
        %2908 = vmatprep.subr.mxu0 0.0
        %v2909 = vand.u32 %v1424, 4294901760
        %2910 = vmatpush1.msra.mxu0 %v2909
        %2911 = vmatprep.subr.mxu0 0.0
        %v2912 = vand.u32 %v1423, 4294901760
        %2913 = vmatpush1.msra.mxu0 %v2912
        %2914 = vmatprep.subr.mxu0 0.0
        %v2915 = vand.u32 %v1422, 4294901760
        %2916 = vmatpush1.msra.mxu0 %v2915
        %2917 = vmatprep.subr.mxu0 0.0
        %v2918 = vand.u32 %v1421, 4294901760
        %2919 = vmatpush1.msra.mxu0 %v2918
        %2920 = vmatprep.subr.mxu0 0.0
        %v2921 = vand.u32 %v1420, 4294901760
        %2922 = vmatpush1.msra.mxu0 %v2921
        %2923 = vmatprep.subr.mxu0 0.0
        %v2924 = vand.u32 %v1419, 4294901760
        %2925 = vmatpush1.msra.mxu0 %v2924
        %2926 = vmatprep.subr.mxu0 0.0
        %v2927 = vand.u32 %v1418, 4294901760
        %2928 = vmatpush1.msra.mxu0 %v2927
        %2929 = vmatprep.subr.mxu0 0.0
        %v2930 = vand.u32 %v1449, 4294901760
        %2931 = vmatpush2.msra.mxu0 %v2930
        %2932 = vmatprep.subr.mxu0 0.0
        %v2933 = vand.u32 %v1448, 4294901760
        %2934 = vmatpush2.msra.mxu0 %v2933
        %2935 = vmatprep.subr.mxu0 0.0
        %v2936 = vand.u32 %v1447, 4294901760
        %2937 = vmatpush2.msra.mxu0 %v2936
        %2938 = vmatprep.subr.mxu0 0.0
        %v2939 = vand.u32 %v1446, 4294901760
        %2940 = vmatpush2.msra.mxu0 %v2939
        %2941 = vmatprep.subr.mxu0 0.0
        %v2942 = vand.u32 %v1445, 4294901760
        %2943 = vmatpush2.msra.mxu0 %v2942
        %2944 = vmatprep.subr.mxu0 0.0
        %v2945 = vand.u32 %v1444, 4294901760
        %2946 = vmatpush2.msra.mxu0 %v2945
        %2947 = vmatprep.subr.mxu0 0.0
        %v2948 = vand.u32 %v1443, 4294901760
        %2949 = vmatpush2.msra.mxu0 %v2948
        %2950 = vmatprep.subr.mxu0 0.0
        %v2951 = vand.u32 %v1442, 4294901760
        %2952 = vmatpush2.msra.mxu0 %v2951
        %2953 = vmatprep.subr.mxu0 0.0
        %v2954 = vand.u32 %v1441, 4294901760
        %2955 = vmatpush2.msra.mxu0 %v2954
        %2956 = vmatprep.subr.mxu0 0.0
        %v2957 = vand.u32 %v1440, 4294901760
        %2958 = vmatpush2.msra.mxu0 %v2957
        %2959 = vmatprep.subr.mxu0 0.0
        %v2960 = vand.u32 %v1439, 4294901760
        %2961 = vmatpush2.msra.mxu0 %v2960
        %2962 = vmatprep.subr.mxu0 0.0
        %v2963 = vand.u32 %v1438, 4294901760
        %2964 = vmatpush2.msra.mxu0 %v2963
        %2965 = vmatprep.subr.mxu0 0.0
        %v2966 = vand.u32 %v1437, 4294901760
        %2967 = vmatpush2.msra.mxu0 %v2966
        %2968 = vmatprep.subr.mxu0 0.0
        %v2969 = vand.u32 %v1436, 4294901760
        %2970 = vmatpush2.msra.mxu0 %v2969
        %2971 = vmatprep.subr.mxu0 0.0
        %v2972 = vand.u32 %v1435, 4294901760
        %2973 = vmatpush2.msra.mxu0 %v2972
        %2974 = vmatprep.subr.mxu0 0.0
        %v2975 = vand.u32 %v1434, 4294901760
        %2976 = vmatpush2.msra.mxu0 %v2975
        %v2977 = vand.u32 %v739, 4294901760
        %v2978 = vsub.f32 %v739, %v2977
        %v2979 = vand.u32 %v2978, 4294901760
        %2980 = vmatprep.mubr.f32.mxu0 %v2979
        %v2981 = vand.u32 %v738, 4294901760
        %v2982 = vsub.f32 %v738, %v2981
        %v2983 = vand.u32 %v2982, 4294901760
        %2984 = vmatmul.mubr.f32.gmra.mxu0 %v2983
        %v2985 = vpop.f32.mrf.mxu0
        %v2986 = vadd.f32 %v2869, %v2985
        %v2987 = vpop.f32.mrf.mxu0
        %v2988 = vand.u32 %v743, 4294901760
        %v2989 = vsub.f32 %v743, %v2988
        %v2990 = vand.u32 %v2989, 4294901760
        %2991 = vmatprep.mubr.f32.mxu0 %v2990
        %v2992 = vand.u32 %v742, 4294901760
        %v2993 = vsub.f32 %v742, %v2992
        %v2994 = vand.u32 %v2993, 4294901760
        %2995 = vmatmul.mubr.f32.gmra.mxu0 %v2994
        %v2996 = vpop.f32.mrf.mxu0
        %v2997 = vadd.f32 %v2878, %v2996
        %v2998 = vpop.f32.mrf.mxu0
        %2999 = vdwg.mxu0
        %3000 = vmatprep.subr.mxu0 0.0
        %v3001 = vand.u32 %v1433, 4294901760
        %v3002 = vsub.f32 %v1433, %v3001
        %v3003 = vand.u32 %v3002, 4294901760
        %3004 = vmatpush1.msra.mxu0 %v3003
        %3005 = vmatprep.subr.mxu0 0.0
        %v3006 = vand.u32 %v1432, 4294901760
        %v3007 = vsub.f32 %v1432, %v3006
        %v3008 = vand.u32 %v3007, 4294901760
        %3009 = vmatpush1.msra.mxu0 %v3008
        %3010 = vmatprep.subr.mxu0 0.0
        %v3011 = vand.u32 %v1431, 4294901760
        %v3012 = vsub.f32 %v1431, %v3011
        %v3013 = vand.u32 %v3012, 4294901760
        %3014 = vmatpush1.msra.mxu0 %v3013
        %3015 = vmatprep.subr.mxu0 0.0
        %v3016 = vand.u32 %v1430, 4294901760
        %v3017 = vsub.f32 %v1430, %v3016
        %v3018 = vand.u32 %v3017, 4294901760
        %3019 = vmatpush1.msra.mxu0 %v3018
        %3020 = vmatprep.subr.mxu0 0.0
        %v3021 = vand.u32 %v1429, 4294901760
        %v3022 = vsub.f32 %v1429, %v3021
        %v3023 = vand.u32 %v3022, 4294901760
        %3024 = vmatpush1.msra.mxu0 %v3023
        %3025 = vmatprep.subr.mxu0 0.0
        %v3026 = vand.u32 %v1428, 4294901760
        %v3027 = vsub.f32 %v1428, %v3026
        %v3028 = vand.u32 %v3027, 4294901760
        %3029 = vmatpush1.msra.mxu0 %v3028
        %3030 = vmatprep.subr.mxu0 0.0
        %v3031 = vand.u32 %v1427, 4294901760
        %v3032 = vsub.f32 %v1427, %v3031
        %v3033 = vand.u32 %v3032, 4294901760
        %3034 = vmatpush1.msra.mxu0 %v3033
        %3035 = vmatprep.subr.mxu0 0.0
        %v3036 = vand.u32 %v1426, 4294901760
        %v3037 = vsub.f32 %v1426, %v3036
        %v3038 = vand.u32 %v3037, 4294901760
        %3039 = vmatpush1.msra.mxu0 %v3038
        %3040 = vmatprep.subr.mxu0 0.0
        %v3041 = vand.u32 %v1425, 4294901760
        %v3042 = vsub.f32 %v1425, %v3041
        %v3043 = vand.u32 %v3042, 4294901760
        %3044 = vmatpush1.msra.mxu0 %v3043
        %3045 = vmatprep.subr.mxu0 0.0
        %v3046 = vand.u32 %v1424, 4294901760
        %v3047 = vsub.f32 %v1424, %v3046
        %v3048 = vand.u32 %v3047, 4294901760
        %3049 = vmatpush1.msra.mxu0 %v3048
        %3050 = vmatprep.subr.mxu0 0.0
        %v3051 = vand.u32 %v1423, 4294901760
        %v3052 = vsub.f32 %v1423, %v3051
        %v3053 = vand.u32 %v3052, 4294901760
        %3054 = vmatpush1.msra.mxu0 %v3053
        %3055 = vmatprep.subr.mxu0 0.0
        %v3056 = vand.u32 %v1422, 4294901760
        %v3057 = vsub.f32 %v1422, %v3056
        %v3058 = vand.u32 %v3057, 4294901760
        %3059 = vmatpush1.msra.mxu0 %v3058
        %3060 = vmatprep.subr.mxu0 0.0
        %v3061 = vand.u32 %v1421, 4294901760
        %v3062 = vsub.f32 %v1421, %v3061
        %v3063 = vand.u32 %v3062, 4294901760
        %3064 = vmatpush1.msra.mxu0 %v3063
        %3065 = vmatprep.subr.mxu0 0.0
        %v3066 = vand.u32 %v1420, 4294901760
        %v3067 = vsub.f32 %v1420, %v3066
        %v3068 = vand.u32 %v3067, 4294901760
        %3069 = vmatpush1.msra.mxu0 %v3068
        %3070 = vmatprep.subr.mxu0 0.0
        %v3071 = vand.u32 %v1419, 4294901760
        %v3072 = vsub.f32 %v1419, %v3071
        %v3073 = vand.u32 %v3072, 4294901760
        %3074 = vmatpush1.msra.mxu0 %v3073
        %3075 = vmatprep.subr.mxu0 0.0
        %v3076 = vand.u32 %v1418, 4294901760
        %v3077 = vsub.f32 %v1418, %v3076
        %v3078 = vand.u32 %v3077, 4294901760
        %3079 = vmatpush1.msra.mxu0 %v3078
        %3080 = vmatprep.subr.mxu0 0.0
        %v3081 = vand.u32 %v1449, 4294901760
        %v3082 = vsub.f32 %v1449, %v3081
        %v3083 = vand.u32 %v3082, 4294901760
        %3084 = vmatpush2.msra.mxu0 %v3083
        %3085 = vmatprep.subr.mxu0 0.0
        %v3086 = vand.u32 %v1448, 4294901760
        %v3087 = vsub.f32 %v1448, %v3086
        %v3088 = vand.u32 %v3087, 4294901760
        %3089 = vmatpush2.msra.mxu0 %v3088
        %3090 = vmatprep.subr.mxu0 0.0
        %v3091 = vand.u32 %v1447, 4294901760
        %v3092 = vsub.f32 %v1447, %v3091
        %v3093 = vand.u32 %v3092, 4294901760
        %3094 = vmatpush2.msra.mxu0 %v3093
        %3095 = vmatprep.subr.mxu0 0.0
        %v3096 = vand.u32 %v1446, 4294901760
        %v3097 = vsub.f32 %v1446, %v3096
        %v3098 = vand.u32 %v3097, 4294901760
        %3099 = vmatpush2.msra.mxu0 %v3098
        %3100 = vmatprep.subr.mxu0 0.0
        %v3101 = vand.u32 %v1445, 4294901760
        %v3102 = vsub.f32 %v1445, %v3101
        %v3103 = vand.u32 %v3102, 4294901760
        %3104 = vmatpush2.msra.mxu0 %v3103
        %3105 = vmatprep.subr.mxu0 0.0
        %v3106 = vand.u32 %v1444, 4294901760
        %v3107 = vsub.f32 %v1444, %v3106
        %v3108 = vand.u32 %v3107, 4294901760
        %3109 = vmatpush2.msra.mxu0 %v3108
        %3110 = vmatprep.subr.mxu0 0.0
        %v3111 = vand.u32 %v1443, 4294901760
        %v3112 = vsub.f32 %v1443, %v3111
        %v3113 = vand.u32 %v3112, 4294901760
        %3114 = vmatpush2.msra.mxu0 %v3113
        %3115 = vmatprep.subr.mxu0 0.0
        %v3116 = vand.u32 %v1442, 4294901760
        %v3117 = vsub.f32 %v1442, %v3116
        %v3118 = vand.u32 %v3117, 4294901760
        %3119 = vmatpush2.msra.mxu0 %v3118
        %3120 = vmatprep.subr.mxu0 0.0
        %v3121 = vand.u32 %v1441, 4294901760
        %v3122 = vsub.f32 %v1441, %v3121
        %v3123 = vand.u32 %v3122, 4294901760
        %3124 = vmatpush2.msra.mxu0 %v3123
        %3125 = vmatprep.subr.mxu0 0.0
        %v3126 = vand.u32 %v1440, 4294901760
        %v3127 = vsub.f32 %v1440, %v3126
        %v3128 = vand.u32 %v3127, 4294901760
        %3129 = vmatpush2.msra.mxu0 %v3128
        %3130 = vmatprep.subr.mxu0 0.0
        %v3131 = vand.u32 %v1439, 4294901760
        %v3132 = vsub.f32 %v1439, %v3131
        %v3133 = vand.u32 %v3132, 4294901760
        %3134 = vmatpush2.msra.mxu0 %v3133
        %3135 = vmatprep.subr.mxu0 0.0
        %v3136 = vand.u32 %v1438, 4294901760
        %v3137 = vsub.f32 %v1438, %v3136
        %v3138 = vand.u32 %v3137, 4294901760
        %3139 = vmatpush2.msra.mxu0 %v3138
        %3140 = vmatprep.subr.mxu0 0.0
        %v3141 = vand.u32 %v1437, 4294901760
        %v3142 = vsub.f32 %v1437, %v3141
        %v3143 = vand.u32 %v3142, 4294901760
        %3144 = vmatpush2.msra.mxu0 %v3143
        %3145 = vmatprep.subr.mxu0 0.0
        %v3146 = vand.u32 %v1436, 4294901760
        %v3147 = vsub.f32 %v1436, %v3146
        %v3148 = vand.u32 %v3147, 4294901760
        %3149 = vmatpush2.msra.mxu0 %v3148
        %3150 = vmatprep.subr.mxu0 0.0
        %v3151 = vand.u32 %v1435, 4294901760
        %v3152 = vsub.f32 %v1435, %v3151
        %v3153 = vand.u32 %v3152, 4294901760
        %3154 = vmatpush2.msra.mxu0 %v3153
        %3155 = vmatprep.subr.mxu0 0.0
        %v3156 = vand.u32 %v1434, 4294901760
        %v3157 = vsub.f32 %v1434, %v3156
        %v3158 = vand.u32 %v3157, 4294901760
        %3159 = vmatpush2.msra.mxu0 %v3158
        %v3160 = vand.u32 %v739, 4294901760
        %3161 = vmatprep.mubr.f32.mxu0 %v3160
        %v3162 = vand.u32 %v738, 4294901760
        %3163 = vmatmul.mubr.f32.gmra.mxu0 %v3162
        %v3164 = vpop.f32.mrf.mxu0
        %v3165 = vadd.f32 %v2986, %v3164
        %v3166 = vpop.f32.mrf.mxu0
        %v3167 = vand.u32 %v743, 4294901760
        %3168 = vmatprep.mubr.f32.mxu0 %v3167
        %v3169 = vand.u32 %v742, 4294901760
        %3170 = vmatmul.mubr.f32.gmra.mxu0 %v3169
        %v3171 = vpop.f32.mrf.mxu0
        %v3172 = vadd.f32 %v2997, %v3171
        %v3173 = vpop.f32.mrf.mxu0
        %3174 = vdwg.mxu0
        %3175 = vmatprep.subr.mxu0 0.0
        %v3176 = vand.u32 %v1433, 4294901760
        %3177 = vmatpush1.msra.mxu0 %v3176
        %3178 = vmatprep.subr.mxu0 0.0
        %v3179 = vand.u32 %v1432, 4294901760
        %3180 = vmatpush1.msra.mxu0 %v3179
        %3181 = vmatprep.subr.mxu0 0.0
        %v3182 = vand.u32 %v1431, 4294901760
        %3183 = vmatpush1.msra.mxu0 %v3182
        %3184 = vmatprep.subr.mxu0 0.0
        %v3185 = vand.u32 %v1430, 4294901760
        %3186 = vmatpush1.msra.mxu0 %v3185
        %3187 = vmatprep.subr.mxu0 0.0
        %v3188 = vand.u32 %v1429, 4294901760
        %3189 = vmatpush1.msra.mxu0 %v3188
        %3190 = vmatprep.subr.mxu0 0.0
        %v3191 = vand.u32 %v1428, 4294901760
        %3192 = vmatpush1.msra.mxu0 %v3191
        %3193 = vmatprep.subr.mxu0 0.0
        %v3194 = vand.u32 %v1427, 4294901760
        %3195 = vmatpush1.msra.mxu0 %v3194
        %3196 = vmatprep.subr.mxu0 0.0
        %v3197 = vand.u32 %v1426, 4294901760
        %3198 = vmatpush1.msra.mxu0 %v3197
        %3199 = vmatprep.subr.mxu0 0.0
        %v3200 = vand.u32 %v1425, 4294901760
        %3201 = vmatpush1.msra.mxu0 %v3200
        %3202 = vmatprep.subr.mxu0 0.0
        %v3203 = vand.u32 %v1424, 4294901760
        %3204 = vmatpush1.msra.mxu0 %v3203
        %3205 = vmatprep.subr.mxu0 0.0
        %v3206 = vand.u32 %v1423, 4294901760
        %3207 = vmatpush1.msra.mxu0 %v3206
        %3208 = vmatprep.subr.mxu0 0.0
        %v3209 = vand.u32 %v1422, 4294901760
        %3210 = vmatpush1.msra.mxu0 %v3209
        %3211 = vmatprep.subr.mxu0 0.0
        %v3212 = vand.u32 %v1421, 4294901760
        %3213 = vmatpush1.msra.mxu0 %v3212
        %3214 = vmatprep.subr.mxu0 0.0
        %v3215 = vand.u32 %v1420, 4294901760
        %3216 = vmatpush1.msra.mxu0 %v3215
        %3217 = vmatprep.subr.mxu0 0.0
        %v3218 = vand.u32 %v1419, 4294901760
        %3219 = vmatpush1.msra.mxu0 %v3218
        %3220 = vmatprep.subr.mxu0 0.0
        %v3221 = vand.u32 %v1418, 4294901760
        %3222 = vmatpush1.msra.mxu0 %v3221
        %3223 = vmatprep.subr.mxu0 0.0
        %v3224 = vand.u32 %v1449, 4294901760
        %3225 = vmatpush2.msra.mxu0 %v3224
        %3226 = vmatprep.subr.mxu0 0.0
        %v3227 = vand.u32 %v1448, 4294901760
        %3228 = vmatpush2.msra.mxu0 %v3227
        %3229 = vmatprep.subr.mxu0 0.0
        %v3230 = vand.u32 %v1447, 4294901760
        %3231 = vmatpush2.msra.mxu0 %v3230
        %3232 = vmatprep.subr.mxu0 0.0
        %v3233 = vand.u32 %v1446, 4294901760
        %3234 = vmatpush2.msra.mxu0 %v3233
        %3235 = vmatprep.subr.mxu0 0.0
        %v3236 = vand.u32 %v1445, 4294901760
        %3237 = vmatpush2.msra.mxu0 %v3236
        %3238 = vmatprep.subr.mxu0 0.0
        %v3239 = vand.u32 %v1444, 4294901760
        %3240 = vmatpush2.msra.mxu0 %v3239
        %3241 = vmatprep.subr.mxu0 0.0
        %v3242 = vand.u32 %v1443, 4294901760
        %3243 = vmatpush2.msra.mxu0 %v3242
        %3244 = vmatprep.subr.mxu0 0.0
        %v3245 = vand.u32 %v1442, 4294901760
        %3246 = vmatpush2.msra.mxu0 %v3245
        %3247 = vmatprep.subr.mxu0 0.0
        %v3248 = vand.u32 %v1441, 4294901760
        %3249 = vmatpush2.msra.mxu0 %v3248
        %3250 = vmatprep.subr.mxu0 0.0
        %v3251 = vand.u32 %v1440, 4294901760
        %3252 = vmatpush2.msra.mxu0 %v3251
        %3253 = vmatprep.subr.mxu0 0.0
        %v3254 = vand.u32 %v1439, 4294901760
        %3255 = vmatpush2.msra.mxu0 %v3254
        %3256 = vmatprep.subr.mxu0 0.0
        %v3257 = vand.u32 %v1438, 4294901760
        %3258 = vmatpush2.msra.mxu0 %v3257
        %3259 = vmatprep.subr.mxu0 0.0
        %v3260 = vand.u32 %v1437, 4294901760
        %3261 = vmatpush2.msra.mxu0 %v3260
        %3262 = vmatprep.subr.mxu0 0.0
        %v3263 = vand.u32 %v1436, 4294901760
        %3264 = vmatpush2.msra.mxu0 %v3263
        %3265 = vmatprep.subr.mxu0 0.0
        %v3266 = vand.u32 %v1435, 4294901760
        %3267 = vmatpush2.msra.mxu0 %v3266
        %3268 = vmatprep.subr.mxu0 0.0
        %v3269 = vand.u32 %v1434, 4294901760
        %3270 = vmatpush2.msra.mxu0 %v3269
        %v3271 = vand.u32 %v739, 4294901760
        %3272 = vmatprep.mubr.f32.mxu0 %v3271
        %v3273 = vand.u32 %v738, 4294901760
        %3274 = vmatmul.mubr.f32.gmra.mxu0 %v3273
        %v3275 = vpop.f32.mrf.mxu0
        %v3276 = vadd.f32 %v3165, %v3275
        %v3277 = vpop.f32.mrf.mxu0
        %v3278 = vand.u32 %v743, 4294901760
        %3279 = vmatprep.mubr.f32.mxu0 %v3278
        %v3280 = vand.u32 %v742, 4294901760
        %3281 = vmatmul.mubr.f32.gmra.mxu0 %v3280
        %v3282 = vpop.f32.mrf.mxu0
        %v3283 = vadd.f32 %v3172, %v3282
        %v3284 = vpop.f32.mrf.mxu0
        %3285 = vdwg.mxu0
        %3286 = vmatprep.subr.mxu0 0.0
        %v3287 = vand.u32 %v1401, 4294901760
        %3288 = vmatpush1.msra.mxu0 %v3287
        %3289 = vmatprep.subr.mxu0 0.0
        %v3290 = vand.u32 %v1400, 4294901760
        %3291 = vmatpush1.msra.mxu0 %v3290
        %3292 = vmatprep.subr.mxu0 0.0
        %v3293 = vand.u32 %v1399, 4294901760
        %3294 = vmatpush1.msra.mxu0 %v3293
        %3295 = vmatprep.subr.mxu0 0.0
        %v3296 = vand.u32 %v1398, 4294901760
        %3297 = vmatpush1.msra.mxu0 %v3296
        %3298 = vmatprep.subr.mxu0 0.0
        %v3299 = vand.u32 %v1397, 4294901760
        %3300 = vmatpush1.msra.mxu0 %v3299
        %3301 = vmatprep.subr.mxu0 0.0
        %v3302 = vand.u32 %v1396, 4294901760
        %3303 = vmatpush1.msra.mxu0 %v3302
        %3304 = vmatprep.subr.mxu0 0.0
        %v3305 = vand.u32 %v1395, 4294901760
        %3306 = vmatpush1.msra.mxu0 %v3305
        %3307 = vmatprep.subr.mxu0 0.0
        %v3308 = vand.u32 %v1394, 4294901760
        %3309 = vmatpush1.msra.mxu0 %v3308
        %3310 = vmatprep.subr.mxu0 0.0
        %v3311 = vand.u32 %v1393, 4294901760
        %3312 = vmatpush1.msra.mxu0 %v3311
        %3313 = vmatprep.subr.mxu0 0.0
        %v3314 = vand.u32 %v1392, 4294901760
        %3315 = vmatpush1.msra.mxu0 %v3314
        %3316 = vmatprep.subr.mxu0 0.0
        %v3317 = vand.u32 %v1391, 4294901760
        %3318 = vmatpush1.msra.mxu0 %v3317
        %3319 = vmatprep.subr.mxu0 0.0
        %v3320 = vand.u32 %v1390, 4294901760
        %3321 = vmatpush1.msra.mxu0 %v3320
        %3322 = vmatprep.subr.mxu0 0.0
        %v3323 = vand.u32 %v1389, 4294901760
        %3324 = vmatpush1.msra.mxu0 %v3323
        %3325 = vmatprep.subr.mxu0 0.0
        %v3326 = vand.u32 %v1388, 4294901760
        %3327 = vmatpush1.msra.mxu0 %v3326
        %3328 = vmatprep.subr.mxu0 0.0
        %v3329 = vand.u32 %v1387, 4294901760
        %3330 = vmatpush1.msra.mxu0 %v3329
        %3331 = vmatprep.subr.mxu0 0.0
        %v3332 = vand.u32 %v1386, 4294901760
        %3333 = vmatpush1.msra.mxu0 %v3332
        %3334 = vmatprep.subr.mxu0 0.0
        %v3335 = vand.u32 %v1417, 4294901760
        %3336 = vmatpush2.msra.mxu0 %v3335
        %3337 = vmatprep.subr.mxu0 0.0
        %v3338 = vand.u32 %v1416, 4294901760
        %3339 = vmatpush2.msra.mxu0 %v3338
        %3340 = vmatprep.subr.mxu0 0.0
        %v3341 = vand.u32 %v1415, 4294901760
        %3342 = vmatpush2.msra.mxu0 %v3341
        %3343 = vmatprep.subr.mxu0 0.0
        %v3344 = vand.u32 %v1414, 4294901760
        %3345 = vmatpush2.msra.mxu0 %v3344
        %3346 = vmatprep.subr.mxu0 0.0
        %v3347 = vand.u32 %v1413, 4294901760
        %3348 = vmatpush2.msra.mxu0 %v3347
        %3349 = vmatprep.subr.mxu0 0.0
        %v3350 = vand.u32 %v1412, 4294901760
        %3351 = vmatpush2.msra.mxu0 %v3350
        %3352 = vmatprep.subr.mxu0 0.0
        %v3353 = vand.u32 %v1411, 4294901760
        %3354 = vmatpush2.msra.mxu0 %v3353
        %3355 = vmatprep.subr.mxu0 0.0
        %v3356 = vand.u32 %v1410, 4294901760
        %3357 = vmatpush2.msra.mxu0 %v3356
        %3358 = vmatprep.subr.mxu0 0.0
        %v3359 = vand.u32 %v1409, 4294901760
        %3360 = vmatpush2.msra.mxu0 %v3359
        %3361 = vmatprep.subr.mxu0 0.0
        %v3362 = vand.u32 %v1408, 4294901760
        %3363 = vmatpush2.msra.mxu0 %v3362
        %3364 = vmatprep.subr.mxu0 0.0
        %v3365 = vand.u32 %v1407, 4294901760
        %3366 = vmatpush2.msra.mxu0 %v3365
        %3367 = vmatprep.subr.mxu0 0.0
        %v3368 = vand.u32 %v1406, 4294901760
        %3369 = vmatpush2.msra.mxu0 %v3368
        %3370 = vmatprep.subr.mxu0 0.0
        %v3371 = vand.u32 %v1405, 4294901760
        %3372 = vmatpush2.msra.mxu0 %v3371
        %3373 = vmatprep.subr.mxu0 0.0
        %v3374 = vand.u32 %v1404, 4294901760
        %3375 = vmatpush2.msra.mxu0 %v3374
        %3376 = vmatprep.subr.mxu0 0.0
        %v3377 = vand.u32 %v1403, 4294901760
        %3378 = vmatpush2.msra.mxu0 %v3377
        %3379 = vmatprep.subr.mxu0 0.0
        %v3380 = vand.u32 %v1402, 4294901760
        %3381 = vmatpush2.msra.mxu0 %v3380
        %v3382 = vand.u32 %v1379, 4294901760
        %v3383 = vsub.f32 %v1379, %v3382
        %v3384 = vand.u32 %v3383, 4294901760
        %v3385 = vsub.f32 %v3383, %v3384
        %v3386 = vand.u32 %v3385, 4294901760
        %3387 = vmatprep.mubr.f32.mxu0 %v3386
        %v3388 = vand.u32 %v1378, 4294901760
        %v3389 = vsub.f32 %v1378, %v3388
        %v3390 = vand.u32 %v3389, 4294901760
        %v3391 = vsub.f32 %v3389, %v3390
        %v3392 = vand.u32 %v3391, 4294901760
        %3393 = vmatmul.mubr.f32.gmra.mxu0 %v3392
        %v3394 = vpop.f32.mrf.mxu0
        %v3395 = vadd.f32 0.0, %v3394
        %v3396 = vpop.f32.mrf.mxu0
        %v3397 = vand.u32 %v1383, 4294901760
        %v3398 = vsub.f32 %v1383, %v3397
        %v3399 = vand.u32 %v3398, 4294901760
        %v3400 = vsub.f32 %v3398, %v3399
        %v3401 = vand.u32 %v3400, 4294901760
        %3402 = vmatprep.mubr.f32.mxu0 %v3401
        %v3403 = vand.u32 %v1382, 4294901760
        %v3404 = vsub.f32 %v1382, %v3403
        %v3405 = vand.u32 %v3404, 4294901760
        %v3406 = vsub.f32 %v3404, %v3405
        %v3407 = vand.u32 %v3406, 4294901760
        %3408 = vmatmul.mubr.f32.gmra.mxu0 %v3407
        %v3409 = vpop.f32.mrf.mxu0
        %v3410 = vadd.f32 0.0, %v3409
        %v3411 = vpop.f32.mrf.mxu0
        %3412 = vdwg.mxu0
        %3413 = vmatprep.subr.mxu0 0.0
        %v3414 = vand.u32 %v1401, 4294901760
        %v3415 = vsub.f32 %v1401, %v3414
        %v3416 = vand.u32 %v3415, 4294901760
        %v3417 = vsub.f32 %v3415, %v3416
        %v3418 = vand.u32 %v3417, 4294901760
        %3419 = vmatpush1.msra.mxu0 %v3418
        %3420 = vmatprep.subr.mxu0 0.0
        %v3421 = vand.u32 %v1400, 4294901760
        %v3422 = vsub.f32 %v1400, %v3421
        %v3423 = vand.u32 %v3422, 4294901760
        %v3424 = vsub.f32 %v3422, %v3423
        %v3425 = vand.u32 %v3424, 4294901760
        %3426 = vmatpush1.msra.mxu0 %v3425
        %3427 = vmatprep.subr.mxu0 0.0
        %v3428 = vand.u32 %v1399, 4294901760
        %v3429 = vsub.f32 %v1399, %v3428
        %v3430 = vand.u32 %v3429, 4294901760
        %v3431 = vsub.f32 %v3429, %v3430
        %v3432 = vand.u32 %v3431, 4294901760
        %3433 = vmatpush1.msra.mxu0 %v3432
        %3434 = vmatprep.subr.mxu0 0.0
        %v3435 = vand.u32 %v1398, 4294901760
        %v3436 = vsub.f32 %v1398, %v3435
        %v3437 = vand.u32 %v3436, 4294901760
        %v3438 = vsub.f32 %v3436, %v3437
        %v3439 = vand.u32 %v3438, 4294901760
        %3440 = vmatpush1.msra.mxu0 %v3439
        %3441 = vmatprep.subr.mxu0 0.0
        %v3442 = vand.u32 %v1397, 4294901760
        %v3443 = vsub.f32 %v1397, %v3442
        %v3444 = vand.u32 %v3443, 4294901760
        %v3445 = vsub.f32 %v3443, %v3444
        %v3446 = vand.u32 %v3445, 4294901760
        %3447 = vmatpush1.msra.mxu0 %v3446
        %3448 = vmatprep.subr.mxu0 0.0
        %v3449 = vand.u32 %v1396, 4294901760
        %v3450 = vsub.f32 %v1396, %v3449
        %v3451 = vand.u32 %v3450, 4294901760
        %v3452 = vsub.f32 %v3450, %v3451
        %v3453 = vand.u32 %v3452, 4294901760
        %3454 = vmatpush1.msra.mxu0 %v3453
        %3455 = vmatprep.subr.mxu0 0.0
        %v3456 = vand.u32 %v1395, 4294901760
        %v3457 = vsub.f32 %v1395, %v3456
        %v3458 = vand.u32 %v3457, 4294901760
        %v3459 = vsub.f32 %v3457, %v3458
        %v3460 = vand.u32 %v3459, 4294901760
        %3461 = vmatpush1.msra.mxu0 %v3460
        %3462 = vmatprep.subr.mxu0 0.0
        %v3463 = vand.u32 %v1394, 4294901760
        %v3464 = vsub.f32 %v1394, %v3463
        %v3465 = vand.u32 %v3464, 4294901760
        %v3466 = vsub.f32 %v3464, %v3465
        %v3467 = vand.u32 %v3466, 4294901760
        %3468 = vmatpush1.msra.mxu0 %v3467
        %3469 = vmatprep.subr.mxu0 0.0
        %v3470 = vand.u32 %v1393, 4294901760
        %v3471 = vsub.f32 %v1393, %v3470
        %v3472 = vand.u32 %v3471, 4294901760
        %v3473 = vsub.f32 %v3471, %v3472
        %v3474 = vand.u32 %v3473, 4294901760
        %3475 = vmatpush1.msra.mxu0 %v3474
        %3476 = vmatprep.subr.mxu0 0.0
        %v3477 = vand.u32 %v1392, 4294901760
        %v3478 = vsub.f32 %v1392, %v3477
        %v3479 = vand.u32 %v3478, 4294901760
        %v3480 = vsub.f32 %v3478, %v3479
        %v3481 = vand.u32 %v3480, 4294901760
        %3482 = vmatpush1.msra.mxu0 %v3481
        %3483 = vmatprep.subr.mxu0 0.0
        %v3484 = vand.u32 %v1391, 4294901760
        %v3485 = vsub.f32 %v1391, %v3484
        %v3486 = vand.u32 %v3485, 4294901760
        %v3487 = vsub.f32 %v3485, %v3486
        %v3488 = vand.u32 %v3487, 4294901760
        %3489 = vmatpush1.msra.mxu0 %v3488
        %3490 = vmatprep.subr.mxu0 0.0
        %v3491 = vand.u32 %v1390, 4294901760
        %v3492 = vsub.f32 %v1390, %v3491
        %v3493 = vand.u32 %v3492, 4294901760
        %v3494 = vsub.f32 %v3492, %v3493
        %v3495 = vand.u32 %v3494, 4294901760
        %3496 = vmatpush1.msra.mxu0 %v3495
        %3497 = vmatprep.subr.mxu0 0.0
        %v3498 = vand.u32 %v1389, 4294901760
        %v3499 = vsub.f32 %v1389, %v3498
        %v3500 = vand.u32 %v3499, 4294901760
        %v3501 = vsub.f32 %v3499, %v3500
        %v3502 = vand.u32 %v3501, 4294901760
        %3503 = vmatpush1.msra.mxu0 %v3502
        %3504 = vmatprep.subr.mxu0 0.0
        %v3505 = vand.u32 %v1388, 4294901760
        %v3506 = vsub.f32 %v1388, %v3505
        %v3507 = vand.u32 %v3506, 4294901760
        %v3508 = vsub.f32 %v3506, %v3507
        %v3509 = vand.u32 %v3508, 4294901760
        %3510 = vmatpush1.msra.mxu0 %v3509
        %3511 = vmatprep.subr.mxu0 0.0
        %v3512 = vand.u32 %v1387, 4294901760
        %v3513 = vsub.f32 %v1387, %v3512
        %v3514 = vand.u32 %v3513, 4294901760
        %v3515 = vsub.f32 %v3513, %v3514
        %v3516 = vand.u32 %v3515, 4294901760
        %3517 = vmatpush1.msra.mxu0 %v3516
        %3518 = vmatprep.subr.mxu0 0.0
        %v3519 = vand.u32 %v1386, 4294901760
        %v3520 = vsub.f32 %v1386, %v3519
        %v3521 = vand.u32 %v3520, 4294901760
        %v3522 = vsub.f32 %v3520, %v3521
        %v3523 = vand.u32 %v3522, 4294901760
        %3524 = vmatpush1.msra.mxu0 %v3523
        %3525 = vmatprep.subr.mxu0 0.0
        %v3526 = vand.u32 %v1417, 4294901760
        %v3527 = vsub.f32 %v1417, %v3526
        %v3528 = vand.u32 %v3527, 4294901760
        %v3529 = vsub.f32 %v3527, %v3528
        %v3530 = vand.u32 %v3529, 4294901760
        %3531 = vmatpush2.msra.mxu0 %v3530
        %3532 = vmatprep.subr.mxu0 0.0
        %v3533 = vand.u32 %v1416, 4294901760
        %v3534 = vsub.f32 %v1416, %v3533
        %v3535 = vand.u32 %v3534, 4294901760
        %v3536 = vsub.f32 %v3534, %v3535
        %v3537 = vand.u32 %v3536, 4294901760
        %3538 = vmatpush2.msra.mxu0 %v3537
        %3539 = vmatprep.subr.mxu0 0.0
        %v3540 = vand.u32 %v1415, 4294901760
        %v3541 = vsub.f32 %v1415, %v3540
        %v3542 = vand.u32 %v3541, 4294901760
        %v3543 = vsub.f32 %v3541, %v3542
        %v3544 = vand.u32 %v3543, 4294901760
        %3545 = vmatpush2.msra.mxu0 %v3544
        %3546 = vmatprep.subr.mxu0 0.0
        %v3547 = vand.u32 %v1414, 4294901760
        %v3548 = vsub.f32 %v1414, %v3547
        %v3549 = vand.u32 %v3548, 4294901760
        %v3550 = vsub.f32 %v3548, %v3549
        %v3551 = vand.u32 %v3550, 4294901760
        %3552 = vmatpush2.msra.mxu0 %v3551
        %3553 = vmatprep.subr.mxu0 0.0
        %v3554 = vand.u32 %v1413, 4294901760
        %v3555 = vsub.f32 %v1413, %v3554
        %v3556 = vand.u32 %v3555, 4294901760
        %v3557 = vsub.f32 %v3555, %v3556
        %v3558 = vand.u32 %v3557, 4294901760
        %3559 = vmatpush2.msra.mxu0 %v3558
        %3560 = vmatprep.subr.mxu0 0.0
        %v3561 = vand.u32 %v1412, 4294901760
        %v3562 = vsub.f32 %v1412, %v3561
        %v3563 = vand.u32 %v3562, 4294901760
        %v3564 = vsub.f32 %v3562, %v3563
        %v3565 = vand.u32 %v3564, 4294901760
        %3566 = vmatpush2.msra.mxu0 %v3565
        %3567 = vmatprep.subr.mxu0 0.0
        %v3568 = vand.u32 %v1411, 4294901760
        %v3569 = vsub.f32 %v1411, %v3568
        %v3570 = vand.u32 %v3569, 4294901760
        %v3571 = vsub.f32 %v3569, %v3570
        %v3572 = vand.u32 %v3571, 4294901760
        %3573 = vmatpush2.msra.mxu0 %v3572
        %3574 = vmatprep.subr.mxu0 0.0
        %v3575 = vand.u32 %v1410, 4294901760
        %v3576 = vsub.f32 %v1410, %v3575
        %v3577 = vand.u32 %v3576, 4294901760
        %v3578 = vsub.f32 %v3576, %v3577
        %v3579 = vand.u32 %v3578, 4294901760
        %3580 = vmatpush2.msra.mxu0 %v3579
        %3581 = vmatprep.subr.mxu0 0.0
        %v3582 = vand.u32 %v1409, 4294901760
        %v3583 = vsub.f32 %v1409, %v3582
        %v3584 = vand.u32 %v3583, 4294901760
        %v3585 = vsub.f32 %v3583, %v3584
        %v3586 = vand.u32 %v3585, 4294901760
        %3587 = vmatpush2.msra.mxu0 %v3586
        %3588 = vmatprep.subr.mxu0 0.0
        %v3589 = vand.u32 %v1408, 4294901760
        %v3590 = vsub.f32 %v1408, %v3589
        %v3591 = vand.u32 %v3590, 4294901760
        %v3592 = vsub.f32 %v3590, %v3591
        %v3593 = vand.u32 %v3592, 4294901760
        %3594 = vmatpush2.msra.mxu0 %v3593
        %3595 = vmatprep.subr.mxu0 0.0
        %v3596 = vand.u32 %v1407, 4294901760
        %v3597 = vsub.f32 %v1407, %v3596
        %v3598 = vand.u32 %v3597, 4294901760
        %v3599 = vsub.f32 %v3597, %v3598
        %v3600 = vand.u32 %v3599, 4294901760
        %3601 = vmatpush2.msra.mxu0 %v3600
        %3602 = vmatprep.subr.mxu0 0.0
        %v3603 = vand.u32 %v1406, 4294901760
        %v3604 = vsub.f32 %v1406, %v3603
        %v3605 = vand.u32 %v3604, 4294901760
        %v3606 = vsub.f32 %v3604, %v3605
        %v3607 = vand.u32 %v3606, 4294901760
        %3608 = vmatpush2.msra.mxu0 %v3607
        %3609 = vmatprep.subr.mxu0 0.0
        %v3610 = vand.u32 %v1405, 4294901760
        %v3611 = vsub.f32 %v1405, %v3610
        %v3612 = vand.u32 %v3611, 4294901760
        %v3613 = vsub.f32 %v3611, %v3612
        %v3614 = vand.u32 %v3613, 4294901760
        %3615 = vmatpush2.msra.mxu0 %v3614
        %3616 = vmatprep.subr.mxu0 0.0
        %v3617 = vand.u32 %v1404, 4294901760
        %v3618 = vsub.f32 %v1404, %v3617
        %v3619 = vand.u32 %v3618, 4294901760
        %v3620 = vsub.f32 %v3618, %v3619
        %v3621 = vand.u32 %v3620, 4294901760
        %3622 = vmatpush2.msra.mxu0 %v3621
        %3623 = vmatprep.subr.mxu0 0.0
        %v3624 = vand.u32 %v1403, 4294901760
        %v3625 = vsub.f32 %v1403, %v3624
        %v3626 = vand.u32 %v3625, 4294901760
        %v3627 = vsub.f32 %v3625, %v3626
        %v3628 = vand.u32 %v3627, 4294901760
        %3629 = vmatpush2.msra.mxu0 %v3628
        %3630 = vmatprep.subr.mxu0 0.0
        %v3631 = vand.u32 %v1402, 4294901760
        %v3632 = vsub.f32 %v1402, %v3631
        %v3633 = vand.u32 %v3632, 4294901760
        %v3634 = vsub.f32 %v3632, %v3633
        %v3635 = vand.u32 %v3634, 4294901760
        %3636 = vmatpush2.msra.mxu0 %v3635
        %v3637 = vand.u32 %v1379, 4294901760
        %3638 = vmatprep.mubr.f32.mxu0 %v3637
        %v3639 = vand.u32 %v1378, 4294901760
        %3640 = vmatmul.mubr.f32.gmra.mxu0 %v3639
        %v3641 = vpop.f32.mrf.mxu0
        %v3642 = vadd.f32 %v3395, %v3641
        %v3643 = vpop.f32.mrf.mxu0
        %v3644 = vand.u32 %v1383, 4294901760
        %3645 = vmatprep.mubr.f32.mxu0 %v3644
        %v3646 = vand.u32 %v1382, 4294901760
        %3647 = vmatmul.mubr.f32.gmra.mxu0 %v3646
        %v3648 = vpop.f32.mrf.mxu0
        %v3649 = vadd.f32 %v3410, %v3648
        %v3650 = vpop.f32.mrf.mxu0
        %3651 = vdwg.mxu0
        %3652 = vmatprep.subr.mxu0 0.0
        %v3653 = vand.u32 %v1401, 4294901760
        %v3654 = vsub.f32 %v1401, %v3653
        %3655 = vmatpush1.msra.mxu0 %v3654
        %3656 = vmatprep.subr.mxu0 0.0
        %v3657 = vand.u32 %v1400, 4294901760
        %v3658 = vsub.f32 %v1400, %v3657
        %3659 = vmatpush1.msra.mxu0 %v3658
        %3660 = vmatprep.subr.mxu0 0.0
        %v3661 = vand.u32 %v1399, 4294901760
        %v3662 = vsub.f32 %v1399, %v3661
        %3663 = vmatpush1.msra.mxu0 %v3662
        %3664 = vmatprep.subr.mxu0 0.0
        %v3665 = vand.u32 %v1398, 4294901760
        %v3666 = vsub.f32 %v1398, %v3665
        %3667 = vmatpush1.msra.mxu0 %v3666
        %3668 = vmatprep.subr.mxu0 0.0
        %v3669 = vand.u32 %v1397, 4294901760
        %v3670 = vsub.f32 %v1397, %v3669
        %3671 = vmatpush1.msra.mxu0 %v3670
        %3672 = vmatprep.subr.mxu0 0.0
        %v3673 = vand.u32 %v1396, 4294901760
        %v3674 = vsub.f32 %v1396, %v3673
        %3675 = vmatpush1.msra.mxu0 %v3674
        %3676 = vmatprep.subr.mxu0 0.0
        %v3677 = vand.u32 %v1395, 4294901760
        %v3678 = vsub.f32 %v1395, %v3677
        %3679 = vmatpush1.msra.mxu0 %v3678
        %3680 = vmatprep.subr.mxu0 0.0
        %v3681 = vand.u32 %v1394, 4294901760
        %v3682 = vsub.f32 %v1394, %v3681
        %3683 = vmatpush1.msra.mxu0 %v3682
        %3684 = vmatprep.subr.mxu0 0.0
        %v3685 = vand.u32 %v1393, 4294901760
        %v3686 = vsub.f32 %v1393, %v3685
        %3687 = vmatpush1.msra.mxu0 %v3686
        %3688 = vmatprep.subr.mxu0 0.0
        %v3689 = vand.u32 %v1392, 4294901760
        %v3690 = vsub.f32 %v1392, %v3689
        %3691 = vmatpush1.msra.mxu0 %v3690
        %3692 = vmatprep.subr.mxu0 0.0
        %v3693 = vand.u32 %v1391, 4294901760
        %v3694 = vsub.f32 %v1391, %v3693
        %3695 = vmatpush1.msra.mxu0 %v3694
        %3696 = vmatprep.subr.mxu0 0.0
        %v3697 = vand.u32 %v1390, 4294901760
        %v3698 = vsub.f32 %v1390, %v3697
        %3699 = vmatpush1.msra.mxu0 %v3698
        %3700 = vmatprep.subr.mxu0 0.0
        %v3701 = vand.u32 %v1389, 4294901760
        %v3702 = vsub.f32 %v1389, %v3701
        %3703 = vmatpush1.msra.mxu0 %v3702
        %3704 = vmatprep.subr.mxu0 0.0
        %v3705 = vand.u32 %v1388, 4294901760
        %v3706 = vsub.f32 %v1388, %v3705
        %3707 = vmatpush1.msra.mxu0 %v3706
        %3708 = vmatprep.subr.mxu0 0.0
        %v3709 = vand.u32 %v1387, 4294901760
        %v3710 = vsub.f32 %v1387, %v3709
        %3711 = vmatpush1.msra.mxu0 %v3710
        %3712 = vmatprep.subr.mxu0 0.0
        %v3713 = vand.u32 %v1386, 4294901760
        %v3714 = vsub.f32 %v1386, %v3713
        %3715 = vmatpush1.msra.mxu0 %v3714
        %3716 = vmatprep.subr.mxu0 0.0
        %v3717 = vand.u32 %v1417, 4294901760
        %v3718 = vsub.f32 %v1417, %v3717
        %3719 = vmatpush2.msra.mxu0 %v3718
        %3720 = vmatprep.subr.mxu0 0.0
        %v3721 = vand.u32 %v1416, 4294901760
        %v3722 = vsub.f32 %v1416, %v3721
        %3723 = vmatpush2.msra.mxu0 %v3722
        %3724 = vmatprep.subr.mxu0 0.0
        %v3725 = vand.u32 %v1415, 4294901760
        %v3726 = vsub.f32 %v1415, %v3725
        %3727 = vmatpush2.msra.mxu0 %v3726
        %3728 = vmatprep.subr.mxu0 0.0
        %v3729 = vand.u32 %v1414, 4294901760
        %v3730 = vsub.f32 %v1414, %v3729
        %3731 = vmatpush2.msra.mxu0 %v3730
        %3732 = vmatprep.subr.mxu0 0.0
        %v3733 = vand.u32 %v1413, 4294901760
        %v3734 = vsub.f32 %v1413, %v3733
        %3735 = vmatpush2.msra.mxu0 %v3734
        %3736 = vmatprep.subr.mxu0 0.0
        %v3737 = vand.u32 %v1412, 4294901760
        %v3738 = vsub.f32 %v1412, %v3737
        %3739 = vmatpush2.msra.mxu0 %v3738
        %3740 = vmatprep.subr.mxu0 0.0
        %v3741 = vand.u32 %v1411, 4294901760
        %v3742 = vsub.f32 %v1411, %v3741
        %3743 = vmatpush2.msra.mxu0 %v3742
        %3744 = vmatprep.subr.mxu0 0.0
        %v3745 = vand.u32 %v1410, 4294901760
        %v3746 = vsub.f32 %v1410, %v3745
        %3747 = vmatpush2.msra.mxu0 %v3746
        %3748 = vmatprep.subr.mxu0 0.0
        %v3749 = vand.u32 %v1409, 4294901760
        %v3750 = vsub.f32 %v1409, %v3749
        %3751 = vmatpush2.msra.mxu0 %v3750
        %3752 = vmatprep.subr.mxu0 0.0
        %v3753 = vand.u32 %v1408, 4294901760
        %v3754 = vsub.f32 %v1408, %v3753
        %3755 = vmatpush2.msra.mxu0 %v3754
        %3756 = vmatprep.subr.mxu0 0.0
        %v3757 = vand.u32 %v1407, 4294901760
        %v3758 = vsub.f32 %v1407, %v3757
        %3759 = vmatpush2.msra.mxu0 %v3758
        %3760 = vmatprep.subr.mxu0 0.0
        %v3761 = vand.u32 %v1406, 4294901760
        %v3762 = vsub.f32 %v1406, %v3761
        %3763 = vmatpush2.msra.mxu0 %v3762
        %3764 = vmatprep.subr.mxu0 0.0
        %v3765 = vand.u32 %v1405, 4294901760
        %v3766 = vsub.f32 %v1405, %v3765
        %3767 = vmatpush2.msra.mxu0 %v3766
        %3768 = vmatprep.subr.mxu0 0.0
        %v3769 = vand.u32 %v1404, 4294901760
        %v3770 = vsub.f32 %v1404, %v3769
        %3771 = vmatpush2.msra.mxu0 %v3770
        %3772 = vmatprep.subr.mxu0 0.0
        %v3773 = vand.u32 %v1403, 4294901760
        %v3774 = vsub.f32 %v1403, %v3773
        %3775 = vmatpush2.msra.mxu0 %v3774
        %3776 = vmatprep.subr.mxu0 0.0
        %v3777 = vand.u32 %v1402, 4294901760
        %v3778 = vsub.f32 %v1402, %v3777
        %3779 = vmatpush2.msra.mxu0 %v3778
        %v3780 = vand.u32 %v1379, 4294901760
        %v3781 = vsub.f32 %v1379, %v3780
        %3782 = vmatprep.mubr.f32.mxu0 %v3781
        %v3783 = vand.u32 %v1378, 4294901760
        %v3784 = vsub.f32 %v1378, %v3783
        %3785 = vmatmul.mubr.f32.gmra.mxu0 %v3784
        %v3786 = vpop.f32.mrf.mxu0
        %v3787 = vadd.f32 %v3642, %v3786
        %v3788 = vpop.f32.mrf.mxu0
        %v3789 = vand.u32 %v1383, 4294901760
        %v3790 = vsub.f32 %v1383, %v3789
        %3791 = vmatprep.mubr.f32.mxu0 %v3790
        %v3792 = vand.u32 %v1382, 4294901760
        %v3793 = vsub.f32 %v1382, %v3792
        %3794 = vmatmul.mubr.f32.gmra.mxu0 %v3793
        %v3795 = vpop.f32.mrf.mxu0
        %v3796 = vadd.f32 %v3649, %v3795
        %v3797 = vpop.f32.mrf.mxu0
        %3798 = vdwg.mxu0
        %3799 = vmatprep.subr.mxu0 0.0
        %v3800 = vand.u32 %v1401, 4294901760
        %3801 = vmatpush1.msra.mxu0 %v3800
        %3802 = vmatprep.subr.mxu0 0.0
        %v3803 = vand.u32 %v1400, 4294901760
        %3804 = vmatpush1.msra.mxu0 %v3803
        %3805 = vmatprep.subr.mxu0 0.0
        %v3806 = vand.u32 %v1399, 4294901760
        %3807 = vmatpush1.msra.mxu0 %v3806
        %3808 = vmatprep.subr.mxu0 0.0
        %v3809 = vand.u32 %v1398, 4294901760
        %3810 = vmatpush1.msra.mxu0 %v3809
        %3811 = vmatprep.subr.mxu0 0.0
        %v3812 = vand.u32 %v1397, 4294901760
        %3813 = vmatpush1.msra.mxu0 %v3812
        %3814 = vmatprep.subr.mxu0 0.0
        %v3815 = vand.u32 %v1396, 4294901760
        %3816 = vmatpush1.msra.mxu0 %v3815
        %3817 = vmatprep.subr.mxu0 0.0
        %v3818 = vand.u32 %v1395, 4294901760
        %3819 = vmatpush1.msra.mxu0 %v3818
        %3820 = vmatprep.subr.mxu0 0.0
        %v3821 = vand.u32 %v1394, 4294901760
        %3822 = vmatpush1.msra.mxu0 %v3821
        %3823 = vmatprep.subr.mxu0 0.0
        %v3824 = vand.u32 %v1393, 4294901760
        %3825 = vmatpush1.msra.mxu0 %v3824
        %3826 = vmatprep.subr.mxu0 0.0
        %v3827 = vand.u32 %v1392, 4294901760
        %3828 = vmatpush1.msra.mxu0 %v3827
        %3829 = vmatprep.subr.mxu0 0.0
        %v3830 = vand.u32 %v1391, 4294901760
        %3831 = vmatpush1.msra.mxu0 %v3830
        %3832 = vmatprep.subr.mxu0 0.0
        %v3833 = vand.u32 %v1390, 4294901760
        %3834 = vmatpush1.msra.mxu0 %v3833
        %3835 = vmatprep.subr.mxu0 0.0
        %v3836 = vand.u32 %v1389, 4294901760
        %3837 = vmatpush1.msra.mxu0 %v3836
        %3838 = vmatprep.subr.mxu0 0.0
        %v3839 = vand.u32 %v1388, 4294901760
        %3840 = vmatpush1.msra.mxu0 %v3839
        %3841 = vmatprep.subr.mxu0 0.0
        %v3842 = vand.u32 %v1387, 4294901760
        %3843 = vmatpush1.msra.mxu0 %v3842
        %3844 = vmatprep.subr.mxu0 0.0
        %v3845 = vand.u32 %v1386, 4294901760
        %3846 = vmatpush1.msra.mxu0 %v3845
        %3847 = vmatprep.subr.mxu0 0.0
        %v3848 = vand.u32 %v1417, 4294901760
        %3849 = vmatpush2.msra.mxu0 %v3848
        %3850 = vmatprep.subr.mxu0 0.0
        %v3851 = vand.u32 %v1416, 4294901760
        %3852 = vmatpush2.msra.mxu0 %v3851
        %3853 = vmatprep.subr.mxu0 0.0
        %v3854 = vand.u32 %v1415, 4294901760
        %3855 = vmatpush2.msra.mxu0 %v3854
        %3856 = vmatprep.subr.mxu0 0.0
        %v3857 = vand.u32 %v1414, 4294901760
        %3858 = vmatpush2.msra.mxu0 %v3857
        %3859 = vmatprep.subr.mxu0 0.0
        %v3860 = vand.u32 %v1413, 4294901760
        %3861 = vmatpush2.msra.mxu0 %v3860
        %3862 = vmatprep.subr.mxu0 0.0
        %v3863 = vand.u32 %v1412, 4294901760
        %3864 = vmatpush2.msra.mxu0 %v3863
        %3865 = vmatprep.subr.mxu0 0.0
        %v3866 = vand.u32 %v1411, 4294901760
        %3867 = vmatpush2.msra.mxu0 %v3866
        %3868 = vmatprep.subr.mxu0 0.0
        %v3869 = vand.u32 %v1410, 4294901760
        %3870 = vmatpush2.msra.mxu0 %v3869
        %3871 = vmatprep.subr.mxu0 0.0
        %v3872 = vand.u32 %v1409, 4294901760
        %3873 = vmatpush2.msra.mxu0 %v3872
        %3874 = vmatprep.subr.mxu0 0.0
        %v3875 = vand.u32 %v1408, 4294901760
        %3876 = vmatpush2.msra.mxu0 %v3875
        %3877 = vmatprep.subr.mxu0 0.0
        %v3878 = vand.u32 %v1407, 4294901760
        %3879 = vmatpush2.msra.mxu0 %v3878
        %3880 = vmatprep.subr.mxu0 0.0
        %v3881 = vand.u32 %v1406, 4294901760
        %3882 = vmatpush2.msra.mxu0 %v3881
        %3883 = vmatprep.subr.mxu0 0.0
        %v3884 = vand.u32 %v1405, 4294901760
        %3885 = vmatpush2.msra.mxu0 %v3884
        %3886 = vmatprep.subr.mxu0 0.0
        %v3887 = vand.u32 %v1404, 4294901760
        %3888 = vmatpush2.msra.mxu0 %v3887
        %3889 = vmatprep.subr.mxu0 0.0
        %v3890 = vand.u32 %v1403, 4294901760
        %3891 = vmatpush2.msra.mxu0 %v3890
        %3892 = vmatprep.subr.mxu0 0.0
        %v3893 = vand.u32 %v1402, 4294901760
        %3894 = vmatpush2.msra.mxu0 %v3893
        %v3895 = vand.u32 %v1379, 4294901760
        %v3896 = vsub.f32 %v1379, %v3895
        %v3897 = vand.u32 %v3896, 4294901760
        %3898 = vmatprep.mubr.f32.mxu0 %v3897
        %v3899 = vand.u32 %v1378, 4294901760
        %v3900 = vsub.f32 %v1378, %v3899
        %v3901 = vand.u32 %v3900, 4294901760
        %3902 = vmatmul.mubr.f32.gmra.mxu0 %v3901
        %v3903 = vpop.f32.mrf.mxu0
        %v3904 = vadd.f32 %v3787, %v3903
        %v3905 = vpop.f32.mrf.mxu0
        %v3906 = vand.u32 %v1383, 4294901760
        %v3907 = vsub.f32 %v1383, %v3906
        %v3908 = vand.u32 %v3907, 4294901760
        %3909 = vmatprep.mubr.f32.mxu0 %v3908
        %v3910 = vand.u32 %v1382, 4294901760
        %v3911 = vsub.f32 %v1382, %v3910
        %v3912 = vand.u32 %v3911, 4294901760
        %3913 = vmatmul.mubr.f32.gmra.mxu0 %v3912
        %v3914 = vpop.f32.mrf.mxu0
        %v3915 = vadd.f32 %v3796, %v3914
        %v3916 = vpop.f32.mrf.mxu0
        %3917 = vdwg.mxu0
        %3918 = vmatprep.subr.mxu0 0.0
        %v3919 = vand.u32 %v1401, 4294901760
        %v3920 = vsub.f32 %v1401, %v3919
        %v3921 = vand.u32 %v3920, 4294901760
        %3922 = vmatpush1.msra.mxu0 %v3921
        %3923 = vmatprep.subr.mxu0 0.0
        %v3924 = vand.u32 %v1400, 4294901760
        %v3925 = vsub.f32 %v1400, %v3924
        %v3926 = vand.u32 %v3925, 4294901760
        %3927 = vmatpush1.msra.mxu0 %v3926
        %3928 = vmatprep.subr.mxu0 0.0
        %v3929 = vand.u32 %v1399, 4294901760
        %v3930 = vsub.f32 %v1399, %v3929
        %v3931 = vand.u32 %v3930, 4294901760
        %3932 = vmatpush1.msra.mxu0 %v3931
        %3933 = vmatprep.subr.mxu0 0.0
        %v3934 = vand.u32 %v1398, 4294901760
        %v3935 = vsub.f32 %v1398, %v3934
        %v3936 = vand.u32 %v3935, 4294901760
        %3937 = vmatpush1.msra.mxu0 %v3936
        %3938 = vmatprep.subr.mxu0 0.0
        %v3939 = vand.u32 %v1397, 4294901760
        %v3940 = vsub.f32 %v1397, %v3939
        %v3941 = vand.u32 %v3940, 4294901760
        %3942 = vmatpush1.msra.mxu0 %v3941
        %3943 = vmatprep.subr.mxu0 0.0
        %v3944 = vand.u32 %v1396, 4294901760
        %v3945 = vsub.f32 %v1396, %v3944
        %v3946 = vand.u32 %v3945, 4294901760
        %3947 = vmatpush1.msra.mxu0 %v3946
        %3948 = vmatprep.subr.mxu0 0.0
        %v3949 = vand.u32 %v1395, 4294901760
        %v3950 = vsub.f32 %v1395, %v3949
        %v3951 = vand.u32 %v3950, 4294901760
        %3952 = vmatpush1.msra.mxu0 %v3951
        %3953 = vmatprep.subr.mxu0 0.0
        %v3954 = vand.u32 %v1394, 4294901760
        %v3955 = vsub.f32 %v1394, %v3954
        %v3956 = vand.u32 %v3955, 4294901760
        %3957 = vmatpush1.msra.mxu0 %v3956
        %3958 = vmatprep.subr.mxu0 0.0
        %v3959 = vand.u32 %v1393, 4294901760
        %v3960 = vsub.f32 %v1393, %v3959
        %v3961 = vand.u32 %v3960, 4294901760
        %3962 = vmatpush1.msra.mxu0 %v3961
        %3963 = vmatprep.subr.mxu0 0.0
        %v3964 = vand.u32 %v1392, 4294901760
        %v3965 = vsub.f32 %v1392, %v3964
        %v3966 = vand.u32 %v3965, 4294901760
        %3967 = vmatpush1.msra.mxu0 %v3966
        %3968 = vmatprep.subr.mxu0 0.0
        %v3969 = vand.u32 %v1391, 4294901760
        %v3970 = vsub.f32 %v1391, %v3969
        %v3971 = vand.u32 %v3970, 4294901760
        %3972 = vmatpush1.msra.mxu0 %v3971
        %3973 = vmatprep.subr.mxu0 0.0
        %v3974 = vand.u32 %v1390, 4294901760
        %v3975 = vsub.f32 %v1390, %v3974
        %v3976 = vand.u32 %v3975, 4294901760
        %3977 = vmatpush1.msra.mxu0 %v3976
        %3978 = vmatprep.subr.mxu0 0.0
        %v3979 = vand.u32 %v1389, 4294901760
        %v3980 = vsub.f32 %v1389, %v3979
        %v3981 = vand.u32 %v3980, 4294901760
        %3982 = vmatpush1.msra.mxu0 %v3981
        %3983 = vmatprep.subr.mxu0 0.0
        %v3984 = vand.u32 %v1388, 4294901760
        %v3985 = vsub.f32 %v1388, %v3984
        %v3986 = vand.u32 %v3985, 4294901760
        %3987 = vmatpush1.msra.mxu0 %v3986
        %3988 = vmatprep.subr.mxu0 0.0
        %v3989 = vand.u32 %v1387, 4294901760
        %v3990 = vsub.f32 %v1387, %v3989
        %v3991 = vand.u32 %v3990, 4294901760
        %3992 = vmatpush1.msra.mxu0 %v3991
        %3993 = vmatprep.subr.mxu0 0.0
        %v3994 = vand.u32 %v1386, 4294901760
        %v3995 = vsub.f32 %v1386, %v3994
        %v3996 = vand.u32 %v3995, 4294901760
        %3997 = vmatpush1.msra.mxu0 %v3996
        %3998 = vmatprep.subr.mxu0 0.0
        %v3999 = vand.u32 %v1417, 4294901760
        %v4000 = vsub.f32 %v1417, %v3999
        %v4001 = vand.u32 %v4000, 4294901760
        %4002 = vmatpush2.msra.mxu0 %v4001
        %4003 = vmatprep.subr.mxu0 0.0
        %v4004 = vand.u32 %v1416, 4294901760
        %v4005 = vsub.f32 %v1416, %v4004
        %v4006 = vand.u32 %v4005, 4294901760
        %4007 = vmatpush2.msra.mxu0 %v4006
        %4008 = vmatprep.subr.mxu0 0.0
        %v4009 = vand.u32 %v1415, 4294901760
        %v4010 = vsub.f32 %v1415, %v4009
        %v4011 = vand.u32 %v4010, 4294901760
        %4012 = vmatpush2.msra.mxu0 %v4011
        %4013 = vmatprep.subr.mxu0 0.0
        %v4014 = vand.u32 %v1414, 4294901760
        %v4015 = vsub.f32 %v1414, %v4014
        %v4016 = vand.u32 %v4015, 4294901760
        %4017 = vmatpush2.msra.mxu0 %v4016
        %4018 = vmatprep.subr.mxu0 0.0
        %v4019 = vand.u32 %v1413, 4294901760
        %v4020 = vsub.f32 %v1413, %v4019
        %v4021 = vand.u32 %v4020, 4294901760
        %4022 = vmatpush2.msra.mxu0 %v4021
        %4023 = vmatprep.subr.mxu0 0.0
        %v4024 = vand.u32 %v1412, 4294901760
        %v4025 = vsub.f32 %v1412, %v4024
        %v4026 = vand.u32 %v4025, 4294901760
        %4027 = vmatpush2.msra.mxu0 %v4026
        %4028 = vmatprep.subr.mxu0 0.0
        %v4029 = vand.u32 %v1411, 4294901760
        %v4030 = vsub.f32 %v1411, %v4029
        %v4031 = vand.u32 %v4030, 4294901760
        %4032 = vmatpush2.msra.mxu0 %v4031
        %4033 = vmatprep.subr.mxu0 0.0
        %v4034 = vand.u32 %v1410, 4294901760
        %v4035 = vsub.f32 %v1410, %v4034
        %v4036 = vand.u32 %v4035, 4294901760
        %4037 = vmatpush2.msra.mxu0 %v4036
        %4038 = vmatprep.subr.mxu0 0.0
        %v4039 = vand.u32 %v1409, 4294901760
        %v4040 = vsub.f32 %v1409, %v4039
        %v4041 = vand.u32 %v4040, 4294901760
        %4042 = vmatpush2.msra.mxu0 %v4041
        %4043 = vmatprep.subr.mxu0 0.0
        %v4044 = vand.u32 %v1408, 4294901760
        %v4045 = vsub.f32 %v1408, %v4044
        %v4046 = vand.u32 %v4045, 4294901760
        %4047 = vmatpush2.msra.mxu0 %v4046
        %4048 = vmatprep.subr.mxu0 0.0
        %v4049 = vand.u32 %v1407, 4294901760
        %v4050 = vsub.f32 %v1407, %v4049
        %v4051 = vand.u32 %v4050, 4294901760
        %4052 = vmatpush2.msra.mxu0 %v4051
        %4053 = vmatprep.subr.mxu0 0.0
        %v4054 = vand.u32 %v1406, 4294901760
        %v4055 = vsub.f32 %v1406, %v4054
        %v4056 = vand.u32 %v4055, 4294901760
        %4057 = vmatpush2.msra.mxu0 %v4056
        %4058 = vmatprep.subr.mxu0 0.0
        %v4059 = vand.u32 %v1405, 4294901760
        %v4060 = vsub.f32 %v1405, %v4059
        %v4061 = vand.u32 %v4060, 4294901760
        %4062 = vmatpush2.msra.mxu0 %v4061
        %4063 = vmatprep.subr.mxu0 0.0
        %v4064 = vand.u32 %v1404, 4294901760
        %v4065 = vsub.f32 %v1404, %v4064
        %v4066 = vand.u32 %v4065, 4294901760
        %4067 = vmatpush2.msra.mxu0 %v4066
        %4068 = vmatprep.subr.mxu0 0.0
        %v4069 = vand.u32 %v1403, 4294901760
        %v4070 = vsub.f32 %v1403, %v4069
        %v4071 = vand.u32 %v4070, 4294901760
        %4072 = vmatpush2.msra.mxu0 %v4071
        %4073 = vmatprep.subr.mxu0 0.0
        %v4074 = vand.u32 %v1402, 4294901760
        %v4075 = vsub.f32 %v1402, %v4074
        %v4076 = vand.u32 %v4075, 4294901760
        %4077 = vmatpush2.msra.mxu0 %v4076
        %v4078 = vand.u32 %v1379, 4294901760
        %4079 = vmatprep.mubr.f32.mxu0 %v4078
        %v4080 = vand.u32 %v1378, 4294901760
        %4081 = vmatmul.mubr.f32.gmra.mxu0 %v4080
        %v4082 = vpop.f32.mrf.mxu0
        %v4083 = vadd.f32 %v3904, %v4082
        %v4084 = vpop.f32.mrf.mxu0
        %v4085 = vand.u32 %v1383, 4294901760
        %4086 = vmatprep.mubr.f32.mxu0 %v4085
        %v4087 = vand.u32 %v1382, 4294901760
        %4088 = vmatmul.mubr.f32.gmra.mxu0 %v4087
        %v4089 = vpop.f32.mrf.mxu0
        %v4090 = vadd.f32 %v3915, %v4089
        %v4091 = vpop.f32.mrf.mxu0
        %4092 = vdwg.mxu0
        %4093 = vmatprep.subr.mxu0 0.0
        %v4094 = vand.u32 %v1401, 4294901760
        %4095 = vmatpush1.msra.mxu0 %v4094
        %4096 = vmatprep.subr.mxu0 0.0
        %v4097 = vand.u32 %v1400, 4294901760
        %4098 = vmatpush1.msra.mxu0 %v4097
        %4099 = vmatprep.subr.mxu0 0.0
        %v4100 = vand.u32 %v1399, 4294901760
        %4101 = vmatpush1.msra.mxu0 %v4100
        %4102 = vmatprep.subr.mxu0 0.0
        %v4103 = vand.u32 %v1398, 4294901760
        %4104 = vmatpush1.msra.mxu0 %v4103
        %4105 = vmatprep.subr.mxu0 0.0
        %v4106 = vand.u32 %v1397, 4294901760
        %4107 = vmatpush1.msra.mxu0 %v4106
        %4108 = vmatprep.subr.mxu0 0.0
        %v4109 = vand.u32 %v1396, 4294901760
        %4110 = vmatpush1.msra.mxu0 %v4109
        %4111 = vmatprep.subr.mxu0 0.0
        %v4112 = vand.u32 %v1395, 4294901760
        %4113 = vmatpush1.msra.mxu0 %v4112
        %4114 = vmatprep.subr.mxu0 0.0
        %v4115 = vand.u32 %v1394, 4294901760
        %4116 = vmatpush1.msra.mxu0 %v4115
        %4117 = vmatprep.subr.mxu0 0.0
        %v4118 = vand.u32 %v1393, 4294901760
        %4119 = vmatpush1.msra.mxu0 %v4118
        %4120 = vmatprep.subr.mxu0 0.0
        %v4121 = vand.u32 %v1392, 4294901760
        %4122 = vmatpush1.msra.mxu0 %v4121
        %4123 = vmatprep.subr.mxu0 0.0
        %v4124 = vand.u32 %v1391, 4294901760
        %4125 = vmatpush1.msra.mxu0 %v4124
        %4126 = vmatprep.subr.mxu0 0.0
        %v4127 = vand.u32 %v1390, 4294901760
        %4128 = vmatpush1.msra.mxu0 %v4127
        %4129 = vmatprep.subr.mxu0 0.0
        %v4130 = vand.u32 %v1389, 4294901760
        %4131 = vmatpush1.msra.mxu0 %v4130
        %4132 = vmatprep.subr.mxu0 0.0
        %v4133 = vand.u32 %v1388, 4294901760
        %4134 = vmatpush1.msra.mxu0 %v4133
        %4135 = vmatprep.subr.mxu0 0.0
        %v4136 = vand.u32 %v1387, 4294901760
        %4137 = vmatpush1.msra.mxu0 %v4136
        %4138 = vmatprep.subr.mxu0 0.0
        %v4139 = vand.u32 %v1386, 4294901760
        %4140 = vmatpush1.msra.mxu0 %v4139
        %4141 = vmatprep.subr.mxu0 0.0
        %v4142 = vand.u32 %v1417, 4294901760
        %4143 = vmatpush2.msra.mxu0 %v4142
        %4144 = vmatprep.subr.mxu0 0.0
        %v4145 = vand.u32 %v1416, 4294901760
        %4146 = vmatpush2.msra.mxu0 %v4145
        %4147 = vmatprep.subr.mxu0 0.0
        %v4148 = vand.u32 %v1415, 4294901760
        %4149 = vmatpush2.msra.mxu0 %v4148
        %4150 = vmatprep.subr.mxu0 0.0
        %v4151 = vand.u32 %v1414, 4294901760
        %4152 = vmatpush2.msra.mxu0 %v4151
        %4153 = vmatprep.subr.mxu0 0.0
        %v4154 = vand.u32 %v1413, 4294901760
        %4155 = vmatpush2.msra.mxu0 %v4154
        %4156 = vmatprep.subr.mxu0 0.0
        %v4157 = vand.u32 %v1412, 4294901760
        %4158 = vmatpush2.msra.mxu0 %v4157
        %4159 = vmatprep.subr.mxu0 0.0
        %v4160 = vand.u32 %v1411, 4294901760
        %4161 = vmatpush2.msra.mxu0 %v4160
        %4162 = vmatprep.subr.mxu0 0.0
        %v4163 = vand.u32 %v1410, 4294901760
        %4164 = vmatpush2.msra.mxu0 %v4163
        %4165 = vmatprep.subr.mxu0 0.0
        %v4166 = vand.u32 %v1409, 4294901760
        %4167 = vmatpush2.msra.mxu0 %v4166
        %4168 = vmatprep.subr.mxu0 0.0
        %v4169 = vand.u32 %v1408, 4294901760
        %4170 = vmatpush2.msra.mxu0 %v4169
        %4171 = vmatprep.subr.mxu0 0.0
        %v4172 = vand.u32 %v1407, 4294901760
        %4173 = vmatpush2.msra.mxu0 %v4172
        %4174 = vmatprep.subr.mxu0 0.0
        %v4175 = vand.u32 %v1406, 4294901760
        %4176 = vmatpush2.msra.mxu0 %v4175
        %4177 = vmatprep.subr.mxu0 0.0
        %v4178 = vand.u32 %v1405, 4294901760
        %4179 = vmatpush2.msra.mxu0 %v4178
        %4180 = vmatprep.subr.mxu0 0.0
        %v4181 = vand.u32 %v1404, 4294901760
        %4182 = vmatpush2.msra.mxu0 %v4181
        %4183 = vmatprep.subr.mxu0 0.0
        %v4184 = vand.u32 %v1403, 4294901760
        %4185 = vmatpush2.msra.mxu0 %v4184
        %4186 = vmatprep.subr.mxu0 0.0
        %v4187 = vand.u32 %v1402, 4294901760
        %4188 = vmatpush2.msra.mxu0 %v4187
        %v4189 = vand.u32 %v1379, 4294901760
        %4190 = vmatprep.mubr.f32.mxu0 %v4189
        %v4191 = vand.u32 %v1378, 4294901760
        %4192 = vmatmul.mubr.f32.gmra.mxu0 %v4191
        %v4193 = vpop.f32.mrf.mxu0
        %v4194 = vadd.f32 %v4083, %v4193
        %v4195 = vpop.f32.mrf.mxu0
        %v4196 = vand.u32 %v1383, 4294901760
        %4197 = vmatprep.mubr.f32.mxu0 %v4196
        %v4198 = vand.u32 %v1382, 4294901760
        %4199 = vmatmul.mubr.f32.gmra.mxu0 %v4198
        %v4200 = vpop.f32.mrf.mxu0
        %v4201 = vadd.f32 %v4090, %v4200
        %v4202 = vpop.f32.mrf.mxu0
        %4203 = vdwg.mxu0
        %4204 = vmatprep.subr.mxu0 0.0
        %v4205 = vand.u32 %v1433, 4294901760
        %4206 = vmatpush1.msra.mxu0 %v4205
        %4207 = vmatprep.subr.mxu0 0.0
        %v4208 = vand.u32 %v1432, 4294901760
        %4209 = vmatpush1.msra.mxu0 %v4208
        %4210 = vmatprep.subr.mxu0 0.0
        %v4211 = vand.u32 %v1431, 4294901760
        %4212 = vmatpush1.msra.mxu0 %v4211
        %4213 = vmatprep.subr.mxu0 0.0
        %v4214 = vand.u32 %v1430, 4294901760
        %4215 = vmatpush1.msra.mxu0 %v4214
        %4216 = vmatprep.subr.mxu0 0.0
        %v4217 = vand.u32 %v1429, 4294901760
        %4218 = vmatpush1.msra.mxu0 %v4217
        %4219 = vmatprep.subr.mxu0 0.0
        %v4220 = vand.u32 %v1428, 4294901760
        %4221 = vmatpush1.msra.mxu0 %v4220
        %4222 = vmatprep.subr.mxu0 0.0
        %v4223 = vand.u32 %v1427, 4294901760
        %4224 = vmatpush1.msra.mxu0 %v4223
        %4225 = vmatprep.subr.mxu0 0.0
        %v4226 = vand.u32 %v1426, 4294901760
        %4227 = vmatpush1.msra.mxu0 %v4226
        %4228 = vmatprep.subr.mxu0 0.0
        %v4229 = vand.u32 %v1425, 4294901760
        %4230 = vmatpush1.msra.mxu0 %v4229
        %4231 = vmatprep.subr.mxu0 0.0
        %v4232 = vand.u32 %v1424, 4294901760
        %4233 = vmatpush1.msra.mxu0 %v4232
        %4234 = vmatprep.subr.mxu0 0.0
        %v4235 = vand.u32 %v1423, 4294901760
        %4236 = vmatpush1.msra.mxu0 %v4235
        %4237 = vmatprep.subr.mxu0 0.0
        %v4238 = vand.u32 %v1422, 4294901760
        %4239 = vmatpush1.msra.mxu0 %v4238
        %4240 = vmatprep.subr.mxu0 0.0
        %v4241 = vand.u32 %v1421, 4294901760
        %4242 = vmatpush1.msra.mxu0 %v4241
        %4243 = vmatprep.subr.mxu0 0.0
        %v4244 = vand.u32 %v1420, 4294901760
        %4245 = vmatpush1.msra.mxu0 %v4244
        %4246 = vmatprep.subr.mxu0 0.0
        %v4247 = vand.u32 %v1419, 4294901760
        %4248 = vmatpush1.msra.mxu0 %v4247
        %4249 = vmatprep.subr.mxu0 0.0
        %v4250 = vand.u32 %v1418, 4294901760
        %4251 = vmatpush1.msra.mxu0 %v4250
        %4252 = vmatprep.subr.mxu0 0.0
        %v4253 = vand.u32 %v1449, 4294901760
        %4254 = vmatpush2.msra.mxu0 %v4253
        %4255 = vmatprep.subr.mxu0 0.0
        %v4256 = vand.u32 %v1448, 4294901760
        %4257 = vmatpush2.msra.mxu0 %v4256
        %4258 = vmatprep.subr.mxu0 0.0
        %v4259 = vand.u32 %v1447, 4294901760
        %4260 = vmatpush2.msra.mxu0 %v4259
        %4261 = vmatprep.subr.mxu0 0.0
        %v4262 = vand.u32 %v1446, 4294901760
        %4263 = vmatpush2.msra.mxu0 %v4262
        %4264 = vmatprep.subr.mxu0 0.0
        %v4265 = vand.u32 %v1445, 4294901760
        %4266 = vmatpush2.msra.mxu0 %v4265
        %4267 = vmatprep.subr.mxu0 0.0
        %v4268 = vand.u32 %v1444, 4294901760
        %4269 = vmatpush2.msra.mxu0 %v4268
        %4270 = vmatprep.subr.mxu0 0.0
        %v4271 = vand.u32 %v1443, 4294901760
        %4272 = vmatpush2.msra.mxu0 %v4271
        %4273 = vmatprep.subr.mxu0 0.0
        %v4274 = vand.u32 %v1442, 4294901760
        %4275 = vmatpush2.msra.mxu0 %v4274
        %4276 = vmatprep.subr.mxu0 0.0
        %v4277 = vand.u32 %v1441, 4294901760
        %4278 = vmatpush2.msra.mxu0 %v4277
        %4279 = vmatprep.subr.mxu0 0.0
        %v4280 = vand.u32 %v1440, 4294901760
        %4281 = vmatpush2.msra.mxu0 %v4280
        %4282 = vmatprep.subr.mxu0 0.0
        %v4283 = vand.u32 %v1439, 4294901760
        %4284 = vmatpush2.msra.mxu0 %v4283
        %4285 = vmatprep.subr.mxu0 0.0
        %v4286 = vand.u32 %v1438, 4294901760
        %4287 = vmatpush2.msra.mxu0 %v4286
        %4288 = vmatprep.subr.mxu0 0.0
        %v4289 = vand.u32 %v1437, 4294901760
        %4290 = vmatpush2.msra.mxu0 %v4289
        %4291 = vmatprep.subr.mxu0 0.0
        %v4292 = vand.u32 %v1436, 4294901760
        %4293 = vmatpush2.msra.mxu0 %v4292
        %4294 = vmatprep.subr.mxu0 0.0
        %v4295 = vand.u32 %v1435, 4294901760
        %4296 = vmatpush2.msra.mxu0 %v4295
        %4297 = vmatprep.subr.mxu0 0.0
        %v4298 = vand.u32 %v1434, 4294901760
        %4299 = vmatpush2.msra.mxu0 %v4298
        %v4300 = vand.u32 %v1381, 4294901760
        %v4301 = vsub.f32 %v1381, %v4300
        %v4302 = vand.u32 %v4301, 4294901760
        %v4303 = vsub.f32 %v4301, %v4302
        %v4304 = vand.u32 %v4303, 4294901760
        %4305 = vmatprep.mubr.f32.mxu0 %v4304
        %v4306 = vand.u32 %v1380, 4294901760
        %v4307 = vsub.f32 %v1380, %v4306
        %v4308 = vand.u32 %v4307, 4294901760
        %v4309 = vsub.f32 %v4307, %v4308
        %v4310 = vand.u32 %v4309, 4294901760
        %4311 = vmatmul.mubr.f32.gmra.mxu0 %v4310
        %v4312 = vpop.f32.mrf.mxu0
        %v4313 = vadd.f32 %v4194, %v4312
        %v4314 = vpop.f32.mrf.mxu0
        %v4315 = vand.u32 %v1385, 4294901760
        %v4316 = vsub.f32 %v1385, %v4315
        %v4317 = vand.u32 %v4316, 4294901760
        %v4318 = vsub.f32 %v4316, %v4317
        %v4319 = vand.u32 %v4318, 4294901760
        %4320 = vmatprep.mubr.f32.mxu0 %v4319
        %v4321 = vand.u32 %v1384, 4294901760
        %v4322 = vsub.f32 %v1384, %v4321
        %v4323 = vand.u32 %v4322, 4294901760
        %v4324 = vsub.f32 %v4322, %v4323
        %v4325 = vand.u32 %v4324, 4294901760
        %4326 = vmatmul.mubr.f32.gmra.mxu0 %v4325
        %v4327 = vpop.f32.mrf.mxu0
        %v4328 = vadd.f32 %v4201, %v4327
        %v4329 = vpop.f32.mrf.mxu0
        %4330 = vdwg.mxu0
        %4331 = vmatprep.subr.mxu0 0.0
        %v4332 = vand.u32 %v1433, 4294901760
        %v4333 = vsub.f32 %v1433, %v4332
        %v4334 = vand.u32 %v4333, 4294901760
        %v4335 = vsub.f32 %v4333, %v4334
        %v4336 = vand.u32 %v4335, 4294901760
        %4337 = vmatpush1.msra.mxu0 %v4336
        %4338 = vmatprep.subr.mxu0 0.0
        %v4339 = vand.u32 %v1432, 4294901760
        %v4340 = vsub.f32 %v1432, %v4339
        %v4341 = vand.u32 %v4340, 4294901760
        %v4342 = vsub.f32 %v4340, %v4341
        %v4343 = vand.u32 %v4342, 4294901760
        %4344 = vmatpush1.msra.mxu0 %v4343
        %4345 = vmatprep.subr.mxu0 0.0
        %v4346 = vand.u32 %v1431, 4294901760
        %v4347 = vsub.f32 %v1431, %v4346
        %v4348 = vand.u32 %v4347, 4294901760
        %v4349 = vsub.f32 %v4347, %v4348
        %v4350 = vand.u32 %v4349, 4294901760
        %4351 = vmatpush1.msra.mxu0 %v4350
        %4352 = vmatprep.subr.mxu0 0.0
        %v4353 = vand.u32 %v1430, 4294901760
        %v4354 = vsub.f32 %v1430, %v4353
        %v4355 = vand.u32 %v4354, 4294901760
        %v4356 = vsub.f32 %v4354, %v4355
        %v4357 = vand.u32 %v4356, 4294901760
        %4358 = vmatpush1.msra.mxu0 %v4357
        %4359 = vmatprep.subr.mxu0 0.0
        %v4360 = vand.u32 %v1429, 4294901760
        %v4361 = vsub.f32 %v1429, %v4360
        %v4362 = vand.u32 %v4361, 4294901760
        %v4363 = vsub.f32 %v4361, %v4362
        %v4364 = vand.u32 %v4363, 4294901760
        %4365 = vmatpush1.msra.mxu0 %v4364
        %4366 = vmatprep.subr.mxu0 0.0
        %v4367 = vand.u32 %v1428, 4294901760
        %v4368 = vsub.f32 %v1428, %v4367
        %v4369 = vand.u32 %v4368, 4294901760
        %v4370 = vsub.f32 %v4368, %v4369
        %v4371 = vand.u32 %v4370, 4294901760
        %4372 = vmatpush1.msra.mxu0 %v4371
        %4373 = vmatprep.subr.mxu0 0.0
        %v4374 = vand.u32 %v1427, 4294901760
        %v4375 = vsub.f32 %v1427, %v4374
        %v4376 = vand.u32 %v4375, 4294901760
        %v4377 = vsub.f32 %v4375, %v4376
        %v4378 = vand.u32 %v4377, 4294901760
        %4379 = vmatpush1.msra.mxu0 %v4378
        %4380 = vmatprep.subr.mxu0 0.0
        %v4381 = vand.u32 %v1426, 4294901760
        %v4382 = vsub.f32 %v1426, %v4381
        %v4383 = vand.u32 %v4382, 4294901760
        %v4384 = vsub.f32 %v4382, %v4383
        %v4385 = vand.u32 %v4384, 4294901760
        %4386 = vmatpush1.msra.mxu0 %v4385
        %4387 = vmatprep.subr.mxu0 0.0
        %v4388 = vand.u32 %v1425, 4294901760
        %v4389 = vsub.f32 %v1425, %v4388
        %v4390 = vand.u32 %v4389, 4294901760
        %v4391 = vsub.f32 %v4389, %v4390
        %v4392 = vand.u32 %v4391, 4294901760
        %4393 = vmatpush1.msra.mxu0 %v4392
        %4394 = vmatprep.subr.mxu0 0.0
        %v4395 = vand.u32 %v1424, 4294901760
        %v4396 = vsub.f32 %v1424, %v4395
        %v4397 = vand.u32 %v4396, 4294901760
        %v4398 = vsub.f32 %v4396, %v4397
        %v4399 = vand.u32 %v4398, 4294901760
        %4400 = vmatpush1.msra.mxu0 %v4399
        %4401 = vmatprep.subr.mxu0 0.0
        %v4402 = vand.u32 %v1423, 4294901760
        %v4403 = vsub.f32 %v1423, %v4402
        %v4404 = vand.u32 %v4403, 4294901760
        %v4405 = vsub.f32 %v4403, %v4404
        %v4406 = vand.u32 %v4405, 4294901760
        %4407 = vmatpush1.msra.mxu0 %v4406
        %4408 = vmatprep.subr.mxu0 0.0
        %v4409 = vand.u32 %v1422, 4294901760
        %v4410 = vsub.f32 %v1422, %v4409
        %v4411 = vand.u32 %v4410, 4294901760
        %v4412 = vsub.f32 %v4410, %v4411
        %v4413 = vand.u32 %v4412, 4294901760
        %4414 = vmatpush1.msra.mxu0 %v4413
        %4415 = vmatprep.subr.mxu0 0.0
        %v4416 = vand.u32 %v1421, 4294901760
        %v4417 = vsub.f32 %v1421, %v4416
        %v4418 = vand.u32 %v4417, 4294901760
        %v4419 = vsub.f32 %v4417, %v4418
        %v4420 = vand.u32 %v4419, 4294901760
        %4421 = vmatpush1.msra.mxu0 %v4420
        %4422 = vmatprep.subr.mxu0 0.0
        %v4423 = vand.u32 %v1420, 4294901760
        %v4424 = vsub.f32 %v1420, %v4423
        %v4425 = vand.u32 %v4424, 4294901760
        %v4426 = vsub.f32 %v4424, %v4425
        %v4427 = vand.u32 %v4426, 4294901760
        %4428 = vmatpush1.msra.mxu0 %v4427
        %4429 = vmatprep.subr.mxu0 0.0
        %v4430 = vand.u32 %v1419, 4294901760
        %v4431 = vsub.f32 %v1419, %v4430
        %v4432 = vand.u32 %v4431, 4294901760
        %v4433 = vsub.f32 %v4431, %v4432
        %v4434 = vand.u32 %v4433, 4294901760
        %4435 = vmatpush1.msra.mxu0 %v4434
        %4436 = vmatprep.subr.mxu0 0.0
        %v4437 = vand.u32 %v1418, 4294901760
        %v4438 = vsub.f32 %v1418, %v4437
        %v4439 = vand.u32 %v4438, 4294901760
        %v4440 = vsub.f32 %v4438, %v4439
        %v4441 = vand.u32 %v4440, 4294901760
        %4442 = vmatpush1.msra.mxu0 %v4441
        %4443 = vmatprep.subr.mxu0 0.0
        %v4444 = vand.u32 %v1449, 4294901760
        %v4445 = vsub.f32 %v1449, %v4444
        %v4446 = vand.u32 %v4445, 4294901760
        %v4447 = vsub.f32 %v4445, %v4446
        %v4448 = vand.u32 %v4447, 4294901760
        %4449 = vmatpush2.msra.mxu0 %v4448
        %4450 = vmatprep.subr.mxu0 0.0
        %v4451 = vand.u32 %v1448, 4294901760
        %v4452 = vsub.f32 %v1448, %v4451
        %v4453 = vand.u32 %v4452, 4294901760
        %v4454 = vsub.f32 %v4452, %v4453
        %v4455 = vand.u32 %v4454, 4294901760
        %4456 = vmatpush2.msra.mxu0 %v4455
        %4457 = vmatprep.subr.mxu0 0.0
        %v4458 = vand.u32 %v1447, 4294901760
        %v4459 = vsub.f32 %v1447, %v4458
        %v4460 = vand.u32 %v4459, 4294901760
        %v4461 = vsub.f32 %v4459, %v4460
        %v4462 = vand.u32 %v4461, 4294901760
        %4463 = vmatpush2.msra.mxu0 %v4462
        %4464 = vmatprep.subr.mxu0 0.0
        %v4465 = vand.u32 %v1446, 4294901760
        %v4466 = vsub.f32 %v1446, %v4465
        %v4467 = vand.u32 %v4466, 4294901760
        %v4468 = vsub.f32 %v4466, %v4467
        %v4469 = vand.u32 %v4468, 4294901760
        %4470 = vmatpush2.msra.mxu0 %v4469
        %4471 = vmatprep.subr.mxu0 0.0
        %v4472 = vand.u32 %v1445, 4294901760
        %v4473 = vsub.f32 %v1445, %v4472
        %v4474 = vand.u32 %v4473, 4294901760
        %v4475 = vsub.f32 %v4473, %v4474
        %v4476 = vand.u32 %v4475, 4294901760
        %4477 = vmatpush2.msra.mxu0 %v4476
        %4478 = vmatprep.subr.mxu0 0.0
        %v4479 = vand.u32 %v1444, 4294901760
        %v4480 = vsub.f32 %v1444, %v4479
        %v4481 = vand.u32 %v4480, 4294901760
        %v4482 = vsub.f32 %v4480, %v4481
        %v4483 = vand.u32 %v4482, 4294901760
        %4484 = vmatpush2.msra.mxu0 %v4483
        %4485 = vmatprep.subr.mxu0 0.0
        %v4486 = vand.u32 %v1443, 4294901760
        %v4487 = vsub.f32 %v1443, %v4486
        %v4488 = vand.u32 %v4487, 4294901760
        %v4489 = vsub.f32 %v4487, %v4488
        %v4490 = vand.u32 %v4489, 4294901760
        %4491 = vmatpush2.msra.mxu0 %v4490
        %4492 = vmatprep.subr.mxu0 0.0
        %v4493 = vand.u32 %v1442, 4294901760
        %v4494 = vsub.f32 %v1442, %v4493
        %v4495 = vand.u32 %v4494, 4294901760
        %v4496 = vsub.f32 %v4494, %v4495
        %v4497 = vand.u32 %v4496, 4294901760
        %4498 = vmatpush2.msra.mxu0 %v4497
        %4499 = vmatprep.subr.mxu0 0.0
        %v4500 = vand.u32 %v1441, 4294901760
        %v4501 = vsub.f32 %v1441, %v4500
        %v4502 = vand.u32 %v4501, 4294901760
        %v4503 = vsub.f32 %v4501, %v4502
        %v4504 = vand.u32 %v4503, 4294901760
        %4505 = vmatpush2.msra.mxu0 %v4504
        %4506 = vmatprep.subr.mxu0 0.0
        %v4507 = vand.u32 %v1440, 4294901760
        %v4508 = vsub.f32 %v1440, %v4507
        %v4509 = vand.u32 %v4508, 4294901760
        %v4510 = vsub.f32 %v4508, %v4509
        %v4511 = vand.u32 %v4510, 4294901760
        %4512 = vmatpush2.msra.mxu0 %v4511
        %4513 = vmatprep.subr.mxu0 0.0
        %v4514 = vand.u32 %v1439, 4294901760
        %v4515 = vsub.f32 %v1439, %v4514
        %v4516 = vand.u32 %v4515, 4294901760
        %v4517 = vsub.f32 %v4515, %v4516
        %v4518 = vand.u32 %v4517, 4294901760
        %4519 = vmatpush2.msra.mxu0 %v4518
        %4520 = vmatprep.subr.mxu0 0.0
        %v4521 = vand.u32 %v1438, 4294901760
        %v4522 = vsub.f32 %v1438, %v4521
        %v4523 = vand.u32 %v4522, 4294901760
        %v4524 = vsub.f32 %v4522, %v4523
        %v4525 = vand.u32 %v4524, 4294901760
        %4526 = vmatpush2.msra.mxu0 %v4525
        %4527 = vmatprep.subr.mxu0 0.0
        %v4528 = vand.u32 %v1437, 4294901760
        %v4529 = vsub.f32 %v1437, %v4528
        %v4530 = vand.u32 %v4529, 4294901760
        %v4531 = vsub.f32 %v4529, %v4530
        %v4532 = vand.u32 %v4531, 4294901760
        %4533 = vmatpush2.msra.mxu0 %v4532
        %4534 = vmatprep.subr.mxu0 0.0
        %v4535 = vand.u32 %v1436, 4294901760
        %v4536 = vsub.f32 %v1436, %v4535
        %v4537 = vand.u32 %v4536, 4294901760
        %v4538 = vsub.f32 %v4536, %v4537
        %v4539 = vand.u32 %v4538, 4294901760
        %4540 = vmatpush2.msra.mxu0 %v4539
        %4541 = vmatprep.subr.mxu0 0.0
        %v4542 = vand.u32 %v1435, 4294901760
        %v4543 = vsub.f32 %v1435, %v4542
        %v4544 = vand.u32 %v4543, 4294901760
        %v4545 = vsub.f32 %v4543, %v4544
        %v4546 = vand.u32 %v4545, 4294901760
        %4547 = vmatpush2.msra.mxu0 %v4546
        %4548 = vmatprep.subr.mxu0 0.0
        %v4549 = vand.u32 %v1434, 4294901760
        %v4550 = vsub.f32 %v1434, %v4549
        %v4551 = vand.u32 %v4550, 4294901760
        %v4552 = vsub.f32 %v4550, %v4551
        %v4553 = vand.u32 %v4552, 4294901760
        %4554 = vmatpush2.msra.mxu0 %v4553
        %v4555 = vand.u32 %v1381, 4294901760
        %4556 = vmatprep.mubr.f32.mxu0 %v4555
        %v4557 = vand.u32 %v1380, 4294901760
        %4558 = vmatmul.mubr.f32.gmra.mxu0 %v4557
        %v4559 = vpop.f32.mrf.mxu0
        %v4560 = vadd.f32 %v4313, %v4559
        %v4561 = vpop.f32.mrf.mxu0
        %v4562 = vand.u32 %v1385, 4294901760
        %4563 = vmatprep.mubr.f32.mxu0 %v4562
        %v4564 = vand.u32 %v1384, 4294901760
        %4565 = vmatmul.mubr.f32.gmra.mxu0 %v4564
        %v4566 = vpop.f32.mrf.mxu0
        %v4567 = vadd.f32 %v4328, %v4566
        %v4568 = vpop.f32.mrf.mxu0
        %4569 = vdwg.mxu0
        %4570 = vmatprep.subr.mxu0 0.0
        %v4571 = vand.u32 %v1433, 4294901760
        %v4572 = vsub.f32 %v1433, %v4571
        %4573 = vmatpush1.msra.mxu0 %v4572
        %4574 = vmatprep.subr.mxu0 0.0
        %v4575 = vand.u32 %v1432, 4294901760
        %v4576 = vsub.f32 %v1432, %v4575
        %4577 = vmatpush1.msra.mxu0 %v4576
        %4578 = vmatprep.subr.mxu0 0.0
        %v4579 = vand.u32 %v1431, 4294901760
        %v4580 = vsub.f32 %v1431, %v4579
        %4581 = vmatpush1.msra.mxu0 %v4580
        %4582 = vmatprep.subr.mxu0 0.0
        %v4583 = vand.u32 %v1430, 4294901760
        %v4584 = vsub.f32 %v1430, %v4583
        %4585 = vmatpush1.msra.mxu0 %v4584
        %4586 = vmatprep.subr.mxu0 0.0
        %v4587 = vand.u32 %v1429, 4294901760
        %v4588 = vsub.f32 %v1429, %v4587
        %4589 = vmatpush1.msra.mxu0 %v4588
        %4590 = vmatprep.subr.mxu0 0.0
        %v4591 = vand.u32 %v1428, 4294901760
        %v4592 = vsub.f32 %v1428, %v4591
        %4593 = vmatpush1.msra.mxu0 %v4592
        %4594 = vmatprep.subr.mxu0 0.0
        %v4595 = vand.u32 %v1427, 4294901760
        %v4596 = vsub.f32 %v1427, %v4595
        %4597 = vmatpush1.msra.mxu0 %v4596
        %4598 = vmatprep.subr.mxu0 0.0
        %v4599 = vand.u32 %v1426, 4294901760
        %v4600 = vsub.f32 %v1426, %v4599
        %4601 = vmatpush1.msra.mxu0 %v4600
        %4602 = vmatprep.subr.mxu0 0.0
        %v4603 = vand.u32 %v1425, 4294901760
        %v4604 = vsub.f32 %v1425, %v4603
        %4605 = vmatpush1.msra.mxu0 %v4604
        %4606 = vmatprep.subr.mxu0 0.0
        %v4607 = vand.u32 %v1424, 4294901760
        %v4608 = vsub.f32 %v1424, %v4607
        %4609 = vmatpush1.msra.mxu0 %v4608
        %4610 = vmatprep.subr.mxu0 0.0
        %v4611 = vand.u32 %v1423, 4294901760
        %v4612 = vsub.f32 %v1423, %v4611
        %4613 = vmatpush1.msra.mxu0 %v4612
        %4614 = vmatprep.subr.mxu0 0.0
        %v4615 = vand.u32 %v1422, 4294901760
        %v4616 = vsub.f32 %v1422, %v4615
        %4617 = vmatpush1.msra.mxu0 %v4616
        %4618 = vmatprep.subr.mxu0 0.0
        %v4619 = vand.u32 %v1421, 4294901760
        %v4620 = vsub.f32 %v1421, %v4619
        %4621 = vmatpush1.msra.mxu0 %v4620
        %4622 = vmatprep.subr.mxu0 0.0
        %v4623 = vand.u32 %v1420, 4294901760
        %v4624 = vsub.f32 %v1420, %v4623
        %4625 = vmatpush1.msra.mxu0 %v4624
        %4626 = vmatprep.subr.mxu0 0.0
        %v4627 = vand.u32 %v1419, 4294901760
        %v4628 = vsub.f32 %v1419, %v4627
        %4629 = vmatpush1.msra.mxu0 %v4628
        %4630 = vmatprep.subr.mxu0 0.0
        %v4631 = vand.u32 %v1418, 4294901760
        %v4632 = vsub.f32 %v1418, %v4631
        %4633 = vmatpush1.msra.mxu0 %v4632
        %4634 = vmatprep.subr.mxu0 0.0
        %v4635 = vand.u32 %v1449, 4294901760
        %v4636 = vsub.f32 %v1449, %v4635
        %4637 = vmatpush2.msra.mxu0 %v4636
        %4638 = vmatprep.subr.mxu0 0.0
        %v4639 = vand.u32 %v1448, 4294901760
        %v4640 = vsub.f32 %v1448, %v4639
        %4641 = vmatpush2.msra.mxu0 %v4640
        %4642 = vmatprep.subr.mxu0 0.0
        %v4643 = vand.u32 %v1447, 4294901760
        %v4644 = vsub.f32 %v1447, %v4643
        %4645 = vmatpush2.msra.mxu0 %v4644
        %4646 = vmatprep.subr.mxu0 0.0
        %v4647 = vand.u32 %v1446, 4294901760
        %v4648 = vsub.f32 %v1446, %v4647
        %4649 = vmatpush2.msra.mxu0 %v4648
        %4650 = vmatprep.subr.mxu0 0.0
        %v4651 = vand.u32 %v1445, 4294901760
        %v4652 = vsub.f32 %v1445, %v4651
        %4653 = vmatpush2.msra.mxu0 %v4652
        %4654 = vmatprep.subr.mxu0 0.0
        %v4655 = vand.u32 %v1444, 4294901760
        %v4656 = vsub.f32 %v1444, %v4655
        %4657 = vmatpush2.msra.mxu0 %v4656
        %4658 = vmatprep.subr.mxu0 0.0
        %v4659 = vand.u32 %v1443, 4294901760
        %v4660 = vsub.f32 %v1443, %v4659
        %4661 = vmatpush2.msra.mxu0 %v4660
        %4662 = vmatprep.subr.mxu0 0.0
        %v4663 = vand.u32 %v1442, 4294901760
        %v4664 = vsub.f32 %v1442, %v4663
        %4665 = vmatpush2.msra.mxu0 %v4664
        %4666 = vmatprep.subr.mxu0 0.0
        %v4667 = vand.u32 %v1441, 4294901760
        %v4668 = vsub.f32 %v1441, %v4667
        %4669 = vmatpush2.msra.mxu0 %v4668
        %4670 = vmatprep.subr.mxu0 0.0
        %v4671 = vand.u32 %v1440, 4294901760
        %v4672 = vsub.f32 %v1440, %v4671
        %4673 = vmatpush2.msra.mxu0 %v4672
        %4674 = vmatprep.subr.mxu0 0.0
        %v4675 = vand.u32 %v1439, 4294901760
        %v4676 = vsub.f32 %v1439, %v4675
        %4677 = vmatpush2.msra.mxu0 %v4676
        %4678 = vmatprep.subr.mxu0 0.0
        %v4679 = vand.u32 %v1438, 4294901760
        %v4680 = vsub.f32 %v1438, %v4679
        %4681 = vmatpush2.msra.mxu0 %v4680
        %4682 = vmatprep.subr.mxu0 0.0
        %v4683 = vand.u32 %v1437, 4294901760
        %v4684 = vsub.f32 %v1437, %v4683
        %4685 = vmatpush2.msra.mxu0 %v4684
        %4686 = vmatprep.subr.mxu0 0.0
        %v4687 = vand.u32 %v1436, 4294901760
        %v4688 = vsub.f32 %v1436, %v4687
        %4689 = vmatpush2.msra.mxu0 %v4688
        %4690 = vmatprep.subr.mxu0 0.0
        %v4691 = vand.u32 %v1435, 4294901760
        %v4692 = vsub.f32 %v1435, %v4691
        %4693 = vmatpush2.msra.mxu0 %v4692
        %4694 = vmatprep.subr.mxu0 0.0
        %v4695 = vand.u32 %v1434, 4294901760
        %v4696 = vsub.f32 %v1434, %v4695
        %4697 = vmatpush2.msra.mxu0 %v4696
        %v4698 = vand.u32 %v1381, 4294901760
        %v4699 = vsub.f32 %v1381, %v4698
        %4700 = vmatprep.mubr.f32.mxu0 %v4699
        %v4701 = vand.u32 %v1380, 4294901760
        %v4702 = vsub.f32 %v1380, %v4701
        %4703 = vmatmul.mubr.f32.gmra.mxu0 %v4702
        %v4704 = vpop.f32.mrf.mxu0
        %v4705 = vadd.f32 %v4560, %v4704
        %v4706 = vpop.f32.mrf.mxu0
        %v4707 = vand.u32 %v1385, 4294901760
        %v4708 = vsub.f32 %v1385, %v4707
        %4709 = vmatprep.mubr.f32.mxu0 %v4708
        %v4710 = vand.u32 %v1384, 4294901760
        %v4711 = vsub.f32 %v1384, %v4710
        %4712 = vmatmul.mubr.f32.gmra.mxu0 %v4711
        %v4713 = vpop.f32.mrf.mxu0
        %v4714 = vadd.f32 %v4567, %v4713
        %v4715 = vpop.f32.mrf.mxu0
        %4716 = vdwg.mxu0
        %4717 = vmatprep.subr.mxu0 0.0
        %v4718 = vand.u32 %v1433, 4294901760
        %4719 = vmatpush1.msra.mxu0 %v4718
        %4720 = vmatprep.subr.mxu0 0.0
        %v4721 = vand.u32 %v1432, 4294901760
        %4722 = vmatpush1.msra.mxu0 %v4721
        %4723 = vmatprep.subr.mxu0 0.0
        %v4724 = vand.u32 %v1431, 4294901760
        %4725 = vmatpush1.msra.mxu0 %v4724
        %4726 = vmatprep.subr.mxu0 0.0
        %v4727 = vand.u32 %v1430, 4294901760
        %4728 = vmatpush1.msra.mxu0 %v4727
        %4729 = vmatprep.subr.mxu0 0.0
        %v4730 = vand.u32 %v1429, 4294901760
        %4731 = vmatpush1.msra.mxu0 %v4730
        %4732 = vmatprep.subr.mxu0 0.0
        %v4733 = vand.u32 %v1428, 4294901760
        %4734 = vmatpush1.msra.mxu0 %v4733
        %4735 = vmatprep.subr.mxu0 0.0
        %v4736 = vand.u32 %v1427, 4294901760
        %4737 = vmatpush1.msra.mxu0 %v4736
        %4738 = vmatprep.subr.mxu0 0.0
        %v4739 = vand.u32 %v1426, 4294901760
        %4740 = vmatpush1.msra.mxu0 %v4739
        %4741 = vmatprep.subr.mxu0 0.0
        %v4742 = vand.u32 %v1425, 4294901760
        %4743 = vmatpush1.msra.mxu0 %v4742
        %4744 = vmatprep.subr.mxu0 0.0
        %v4745 = vand.u32 %v1424, 4294901760
        %4746 = vmatpush1.msra.mxu0 %v4745
        %4747 = vmatprep.subr.mxu0 0.0
        %v4748 = vand.u32 %v1423, 4294901760
        %4749 = vmatpush1.msra.mxu0 %v4748
        %4750 = vmatprep.subr.mxu0 0.0
        %v4751 = vand.u32 %v1422, 4294901760
        %4752 = vmatpush1.msra.mxu0 %v4751
        %4753 = vmatprep.subr.mxu0 0.0
        %v4754 = vand.u32 %v1421, 4294901760
        %4755 = vmatpush1.msra.mxu0 %v4754
        %4756 = vmatprep.subr.mxu0 0.0
        %v4757 = vand.u32 %v1420, 4294901760
        %4758 = vmatpush1.msra.mxu0 %v4757
        %4759 = vmatprep.subr.mxu0 0.0
        %v4760 = vand.u32 %v1419, 4294901760
        %4761 = vmatpush1.msra.mxu0 %v4760
        %4762 = vmatprep.subr.mxu0 0.0
        %v4763 = vand.u32 %v1418, 4294901760
        %4764 = vmatpush1.msra.mxu0 %v4763
        %4765 = vmatprep.subr.mxu0 0.0
        %v4766 = vand.u32 %v1449, 4294901760
        %4767 = vmatpush2.msra.mxu0 %v4766
        %4768 = vmatprep.subr.mxu0 0.0
        %v4769 = vand.u32 %v1448, 4294901760
        %4770 = vmatpush2.msra.mxu0 %v4769
        %4771 = vmatprep.subr.mxu0 0.0
        %v4772 = vand.u32 %v1447, 4294901760
        %4773 = vmatpush2.msra.mxu0 %v4772
        %4774 = vmatprep.subr.mxu0 0.0
        %v4775 = vand.u32 %v1446, 4294901760
        %4776 = vmatpush2.msra.mxu0 %v4775
        %4777 = vmatprep.subr.mxu0 0.0
        %v4778 = vand.u32 %v1445, 4294901760
        %4779 = vmatpush2.msra.mxu0 %v4778
        %4780 = vmatprep.subr.mxu0 0.0
        %v4781 = vand.u32 %v1444, 4294901760
        %4782 = vmatpush2.msra.mxu0 %v4781
        %4783 = vmatprep.subr.mxu0 0.0
        %v4784 = vand.u32 %v1443, 4294901760
        %4785 = vmatpush2.msra.mxu0 %v4784
        %4786 = vmatprep.subr.mxu0 0.0
        %v4787 = vand.u32 %v1442, 4294901760
        %4788 = vmatpush2.msra.mxu0 %v4787
        %4789 = vmatprep.subr.mxu0 0.0
        %v4790 = vand.u32 %v1441, 4294901760
        %4791 = vmatpush2.msra.mxu0 %v4790
        %4792 = vmatprep.subr.mxu0 0.0
        %v4793 = vand.u32 %v1440, 4294901760
        %4794 = vmatpush2.msra.mxu0 %v4793
        %4795 = vmatprep.subr.mxu0 0.0
        %v4796 = vand.u32 %v1439, 4294901760
        %4797 = vmatpush2.msra.mxu0 %v4796
        %4798 = vmatprep.subr.mxu0 0.0
        %v4799 = vand.u32 %v1438, 4294901760
        %4800 = vmatpush2.msra.mxu0 %v4799
        %4801 = vmatprep.subr.mxu0 0.0
        %v4802 = vand.u32 %v1437, 4294901760
        %4803 = vmatpush2.msra.mxu0 %v4802
        %4804 = vmatprep.subr.mxu0 0.0
        %v4805 = vand.u32 %v1436, 4294901760
        %4806 = vmatpush2.msra.mxu0 %v4805
        %4807 = vmatprep.subr.mxu0 0.0
        %v4808 = vand.u32 %v1435, 4294901760
        %4809 = vmatpush2.msra.mxu0 %v4808
        %4810 = vmatprep.subr.mxu0 0.0
        %v4811 = vand.u32 %v1434, 4294901760
        %4812 = vmatpush2.msra.mxu0 %v4811
        %v4813 = vand.u32 %v1381, 4294901760
        %v4814 = vsub.f32 %v1381, %v4813
        %v4815 = vand.u32 %v4814, 4294901760
        %4816 = vmatprep.mubr.f32.mxu0 %v4815
        %v4817 = vand.u32 %v1380, 4294901760
        %v4818 = vsub.f32 %v1380, %v4817
        %v4819 = vand.u32 %v4818, 4294901760
        %4820 = vmatmul.mubr.f32.gmra.mxu0 %v4819
        %v4821 = vpop.f32.mrf.mxu0
        %v4822 = vadd.f32 %v4705, %v4821
        %v4823 = vpop.f32.mrf.mxu0
        %v4824 = vand.u32 %v1385, 4294901760
        %v4825 = vsub.f32 %v1385, %v4824
        %v4826 = vand.u32 %v4825, 4294901760
        %4827 = vmatprep.mubr.f32.mxu0 %v4826
        %v4828 = vand.u32 %v1384, 4294901760
        %v4829 = vsub.f32 %v1384, %v4828
        %v4830 = vand.u32 %v4829, 4294901760
        %4831 = vmatmul.mubr.f32.gmra.mxu0 %v4830
        %v4832 = vpop.f32.mrf.mxu0
        %v4833 = vadd.f32 %v4714, %v4832
        %v4834 = vpop.f32.mrf.mxu0
        %4835 = vdwg.mxu0
        %4836 = vmatprep.subr.mxu0 0.0
        %v4837 = vand.u32 %v1433, 4294901760
        %v4838 = vsub.f32 %v1433, %v4837
        %v4839 = vand.u32 %v4838, 4294901760
        %4840 = vmatpush1.msra.mxu0 %v4839
        %4841 = vmatprep.subr.mxu0 0.0
        %v4842 = vand.u32 %v1432, 4294901760
        %v4843 = vsub.f32 %v1432, %v4842
        %v4844 = vand.u32 %v4843, 4294901760
        %4845 = vmatpush1.msra.mxu0 %v4844
        %4846 = vmatprep.subr.mxu0 0.0
        %v4847 = vand.u32 %v1431, 4294901760
        %v4848 = vsub.f32 %v1431, %v4847
        %v4849 = vand.u32 %v4848, 4294901760
        %4850 = vmatpush1.msra.mxu0 %v4849
        %4851 = vmatprep.subr.mxu0 0.0
        %v4852 = vand.u32 %v1430, 4294901760
        %v4853 = vsub.f32 %v1430, %v4852
        %v4854 = vand.u32 %v4853, 4294901760
        %4855 = vmatpush1.msra.mxu0 %v4854
        %4856 = vmatprep.subr.mxu0 0.0
        %v4857 = vand.u32 %v1429, 4294901760
        %v4858 = vsub.f32 %v1429, %v4857
        %v4859 = vand.u32 %v4858, 4294901760
        %4860 = vmatpush1.msra.mxu0 %v4859
        %4861 = vmatprep.subr.mxu0 0.0
        %v4862 = vand.u32 %v1428, 4294901760
        %v4863 = vsub.f32 %v1428, %v4862
        %v4864 = vand.u32 %v4863, 4294901760
        %4865 = vmatpush1.msra.mxu0 %v4864
        %4866 = vmatprep.subr.mxu0 0.0
        %v4867 = vand.u32 %v1427, 4294901760
        %v4868 = vsub.f32 %v1427, %v4867
        %v4869 = vand.u32 %v4868, 4294901760
        %4870 = vmatpush1.msra.mxu0 %v4869
        %4871 = vmatprep.subr.mxu0 0.0
        %v4872 = vand.u32 %v1426, 4294901760
        %v4873 = vsub.f32 %v1426, %v4872
        %v4874 = vand.u32 %v4873, 4294901760
        %4875 = vmatpush1.msra.mxu0 %v4874
        %4876 = vmatprep.subr.mxu0 0.0
        %v4877 = vand.u32 %v1425, 4294901760
        %v4878 = vsub.f32 %v1425, %v4877
        %v4879 = vand.u32 %v4878, 4294901760
        %4880 = vmatpush1.msra.mxu0 %v4879
        %4881 = vmatprep.subr.mxu0 0.0
        %v4882 = vand.u32 %v1424, 4294901760
        %v4883 = vsub.f32 %v1424, %v4882
        %v4884 = vand.u32 %v4883, 4294901760
        %4885 = vmatpush1.msra.mxu0 %v4884
        %4886 = vmatprep.subr.mxu0 0.0
        %v4887 = vand.u32 %v1423, 4294901760
        %v4888 = vsub.f32 %v1423, %v4887
        %v4889 = vand.u32 %v4888, 4294901760
        %4890 = vmatpush1.msra.mxu0 %v4889
        %4891 = vmatprep.subr.mxu0 0.0
        %v4892 = vand.u32 %v1422, 4294901760
        %v4893 = vsub.f32 %v1422, %v4892
        %v4894 = vand.u32 %v4893, 4294901760
        %4895 = vmatpush1.msra.mxu0 %v4894
        %4896 = vmatprep.subr.mxu0 0.0
        %v4897 = vand.u32 %v1421, 4294901760
        %v4898 = vsub.f32 %v1421, %v4897
        %v4899 = vand.u32 %v4898, 4294901760
        %4900 = vmatpush1.msra.mxu0 %v4899
        %4901 = vmatprep.subr.mxu0 0.0
        %v4902 = vand.u32 %v1420, 4294901760
        %v4903 = vsub.f32 %v1420, %v4902
        %v4904 = vand.u32 %v4903, 4294901760
        %4905 = vmatpush1.msra.mxu0 %v4904
        %4906 = vmatprep.subr.mxu0 0.0
        %v4907 = vand.u32 %v1419, 4294901760
        %v4908 = vsub.f32 %v1419, %v4907
        %v4909 = vand.u32 %v4908, 4294901760
        %4910 = vmatpush1.msra.mxu0 %v4909
        %4911 = vmatprep.subr.mxu0 0.0
        %v4912 = vand.u32 %v1418, 4294901760
        %v4913 = vsub.f32 %v1418, %v4912
        %v4914 = vand.u32 %v4913, 4294901760
        %4915 = vmatpush1.msra.mxu0 %v4914
        %4916 = vmatprep.subr.mxu0 0.0
        %v4917 = vand.u32 %v1449, 4294901760
        %v4918 = vsub.f32 %v1449, %v4917
        %v4919 = vand.u32 %v4918, 4294901760
        %4920 = vmatpush2.msra.mxu0 %v4919
        %4921 = vmatprep.subr.mxu0 0.0
        %v4922 = vand.u32 %v1448, 4294901760
        %v4923 = vsub.f32 %v1448, %v4922
        %v4924 = vand.u32 %v4923, 4294901760
        %4925 = vmatpush2.msra.mxu0 %v4924
        %4926 = vmatprep.subr.mxu0 0.0
        %v4927 = vand.u32 %v1447, 4294901760
        %v4928 = vsub.f32 %v1447, %v4927
        %v4929 = vand.u32 %v4928, 4294901760
        %4930 = vmatpush2.msra.mxu0 %v4929
        %4931 = vmatprep.subr.mxu0 0.0
        %v4932 = vand.u32 %v1446, 4294901760
        %v4933 = vsub.f32 %v1446, %v4932
        %v4934 = vand.u32 %v4933, 4294901760
        %4935 = vmatpush2.msra.mxu0 %v4934
        %4936 = vmatprep.subr.mxu0 0.0
        %v4937 = vand.u32 %v1445, 4294901760
        %v4938 = vsub.f32 %v1445, %v4937
        %v4939 = vand.u32 %v4938, 4294901760
        %4940 = vmatpush2.msra.mxu0 %v4939
        %4941 = vmatprep.subr.mxu0 0.0
        %v4942 = vand.u32 %v1444, 4294901760
        %v4943 = vsub.f32 %v1444, %v4942
        %v4944 = vand.u32 %v4943, 4294901760
        %4945 = vmatpush2.msra.mxu0 %v4944
        %4946 = vmatprep.subr.mxu0 0.0
        %v4947 = vand.u32 %v1443, 4294901760
        %v4948 = vsub.f32 %v1443, %v4947
        %v4949 = vand.u32 %v4948, 4294901760
        %4950 = vmatpush2.msra.mxu0 %v4949
        %4951 = vmatprep.subr.mxu0 0.0
        %v4952 = vand.u32 %v1442, 4294901760
        %v4953 = vsub.f32 %v1442, %v4952
        %v4954 = vand.u32 %v4953, 4294901760
        %4955 = vmatpush2.msra.mxu0 %v4954
        %4956 = vmatprep.subr.mxu0 0.0
        %v4957 = vand.u32 %v1441, 4294901760
        %v4958 = vsub.f32 %v1441, %v4957
        %v4959 = vand.u32 %v4958, 4294901760
        %4960 = vmatpush2.msra.mxu0 %v4959
        %4961 = vmatprep.subr.mxu0 0.0
        %v4962 = vand.u32 %v1440, 4294901760
        %v4963 = vsub.f32 %v1440, %v4962
        %v4964 = vand.u32 %v4963, 4294901760
        %4965 = vmatpush2.msra.mxu0 %v4964
        %4966 = vmatprep.subr.mxu0 0.0
        %v4967 = vand.u32 %v1439, 4294901760
        %v4968 = vsub.f32 %v1439, %v4967
        %v4969 = vand.u32 %v4968, 4294901760
        %4970 = vmatpush2.msra.mxu0 %v4969
        %4971 = vmatprep.subr.mxu0 0.0
        %v4972 = vand.u32 %v1438, 4294901760
        %v4973 = vsub.f32 %v1438, %v4972
        %v4974 = vand.u32 %v4973, 4294901760
        %4975 = vmatpush2.msra.mxu0 %v4974
        %4976 = vmatprep.subr.mxu0 0.0
        %v4977 = vand.u32 %v1437, 4294901760
        %v4978 = vsub.f32 %v1437, %v4977
        %v4979 = vand.u32 %v4978, 4294901760
        %4980 = vmatpush2.msra.mxu0 %v4979
        %4981 = vmatprep.subr.mxu0 0.0
        %v4982 = vand.u32 %v1436, 4294901760
        %v4983 = vsub.f32 %v1436, %v4982
        %v4984 = vand.u32 %v4983, 4294901760
        %4985 = vmatpush2.msra.mxu0 %v4984
        %4986 = vmatprep.subr.mxu0 0.0
        %v4987 = vand.u32 %v1435, 4294901760
        %v4988 = vsub.f32 %v1435, %v4987
        %v4989 = vand.u32 %v4988, 4294901760
        %4990 = vmatpush2.msra.mxu0 %v4989
        %4991 = vmatprep.subr.mxu0 0.0
        %v4992 = vand.u32 %v1434, 4294901760
        %v4993 = vsub.f32 %v1434, %v4992
        %v4994 = vand.u32 %v4993, 4294901760
        %4995 = vmatpush2.msra.mxu0 %v4994
        %v4996 = vand.u32 %v1381, 4294901760
        %4997 = vmatprep.mubr.f32.mxu0 %v4996
        %v4998 = vand.u32 %v1380, 4294901760
        %4999 = vmatmul.mubr.f32.gmra.mxu0 %v4998
        %v5000 = vpop.f32.mrf.mxu0
        %v5001 = vadd.f32 %v4822, %v5000
        %v5002 = vpop.f32.mrf.mxu0
        %v5003 = vand.u32 %v1385, 4294901760
        %5004 = vmatprep.mubr.f32.mxu0 %v5003
        %v5005 = vand.u32 %v1384, 4294901760
        %5006 = vmatmul.mubr.f32.gmra.mxu0 %v5005
        %v5007 = vpop.f32.mrf.mxu0
        %v5008 = vadd.f32 %v4833, %v5007
        %v5009 = vpop.f32.mrf.mxu0
        %5010 = vdwg.mxu0
        %5011 = vmatprep.subr.mxu0 0.0
        %v5012 = vand.u32 %v1433, 4294901760
        %5013 = vmatpush1.msra.mxu0 %v5012
        %5014 = vmatprep.subr.mxu0 0.0
        %v5015 = vand.u32 %v1432, 4294901760
        %5016 = vmatpush1.msra.mxu0 %v5015
        %5017 = vmatprep.subr.mxu0 0.0
        %v5018 = vand.u32 %v1431, 4294901760
        %5019 = vmatpush1.msra.mxu0 %v5018
        %5020 = vmatprep.subr.mxu0 0.0
        %v5021 = vand.u32 %v1430, 4294901760
        %5022 = vmatpush1.msra.mxu0 %v5021
        %5023 = vmatprep.subr.mxu0 0.0
        %v5024 = vand.u32 %v1429, 4294901760
        %5025 = vmatpush1.msra.mxu0 %v5024
        %5026 = vmatprep.subr.mxu0 0.0
        %v5027 = vand.u32 %v1428, 4294901760
        %5028 = vmatpush1.msra.mxu0 %v5027
        %5029 = vmatprep.subr.mxu0 0.0
        %v5030 = vand.u32 %v1427, 4294901760
        %5031 = vmatpush1.msra.mxu0 %v5030
        %5032 = vmatprep.subr.mxu0 0.0
        %v5033 = vand.u32 %v1426, 4294901760
        %5034 = vmatpush1.msra.mxu0 %v5033
        %5035 = vmatprep.subr.mxu0 0.0
        %v5036 = vand.u32 %v1425, 4294901760
        %5037 = vmatpush1.msra.mxu0 %v5036
        %5038 = vmatprep.subr.mxu0 0.0
        %v5039 = vand.u32 %v1424, 4294901760
        %5040 = vmatpush1.msra.mxu0 %v5039
        %5041 = vmatprep.subr.mxu0 0.0
        %v5042 = vand.u32 %v1423, 4294901760
        %5043 = vmatpush1.msra.mxu0 %v5042
        %5044 = vmatprep.subr.mxu0 0.0
        %v5045 = vand.u32 %v1422, 4294901760
        %5046 = vmatpush1.msra.mxu0 %v5045
        %5047 = vmatprep.subr.mxu0 0.0
        %v5048 = vand.u32 %v1421, 4294901760
        %5049 = vmatpush1.msra.mxu0 %v5048
        %5050 = vmatprep.subr.mxu0 0.0
        %v5051 = vand.u32 %v1420, 4294901760
        %5052 = vmatpush1.msra.mxu0 %v5051
        %5053 = vmatprep.subr.mxu0 0.0
        %v5054 = vand.u32 %v1419, 4294901760
        %5055 = vmatpush1.msra.mxu0 %v5054
        %5056 = vmatprep.subr.mxu0 0.0
        %v5057 = vand.u32 %v1418, 4294901760
        %5058 = vmatpush1.msra.mxu0 %v5057
        %5059 = vmatprep.subr.mxu0 0.0
        %v5060 = vand.u32 %v1449, 4294901760
        %5061 = vmatpush2.msra.mxu0 %v5060
        %5062 = vmatprep.subr.mxu0 0.0
        %v5063 = vand.u32 %v1448, 4294901760
        %5064 = vmatpush2.msra.mxu0 %v5063
        %5065 = vmatprep.subr.mxu0 0.0
        %v5066 = vand.u32 %v1447, 4294901760
        %5067 = vmatpush2.msra.mxu0 %v5066
        %5068 = vmatprep.subr.mxu0 0.0
        %v5069 = vand.u32 %v1446, 4294901760
        %5070 = vmatpush2.msra.mxu0 %v5069
        %5071 = vmatprep.subr.mxu0 0.0
        %v5072 = vand.u32 %v1445, 4294901760
        %5073 = vmatpush2.msra.mxu0 %v5072
        %5074 = vmatprep.subr.mxu0 0.0
        %v5075 = vand.u32 %v1444, 4294901760
        %5076 = vmatpush2.msra.mxu0 %v5075
        %5077 = vmatprep.subr.mxu0 0.0
        %v5078 = vand.u32 %v1443, 4294901760
        %5079 = vmatpush2.msra.mxu0 %v5078
        %5080 = vmatprep.subr.mxu0 0.0
        %v5081 = vand.u32 %v1442, 4294901760
        %5082 = vmatpush2.msra.mxu0 %v5081
        %5083 = vmatprep.subr.mxu0 0.0
        %v5084 = vand.u32 %v1441, 4294901760
        %5085 = vmatpush2.msra.mxu0 %v5084
        %5086 = vmatprep.subr.mxu0 0.0
        %v5087 = vand.u32 %v1440, 4294901760
        %5088 = vmatpush2.msra.mxu0 %v5087
        %5089 = vmatprep.subr.mxu0 0.0
        %v5090 = vand.u32 %v1439, 4294901760
        %5091 = vmatpush2.msra.mxu0 %v5090
        %5092 = vmatprep.subr.mxu0 0.0
        %v5093 = vand.u32 %v1438, 4294901760
        %5094 = vmatpush2.msra.mxu0 %v5093
        %5095 = vmatprep.subr.mxu0 0.0
        %v5096 = vand.u32 %v1437, 4294901760
        %5097 = vmatpush2.msra.mxu0 %v5096
        %5098 = vmatprep.subr.mxu0 0.0
        %v5099 = vand.u32 %v1436, 4294901760
        %5100 = vmatpush2.msra.mxu0 %v5099
        %5101 = vmatprep.subr.mxu0 0.0
        %v5102 = vand.u32 %v1435, 4294901760
        %5103 = vmatpush2.msra.mxu0 %v5102
        %5104 = vmatprep.subr.mxu0 0.0
        %v5105 = vand.u32 %v1434, 4294901760
        %5106 = vmatpush2.msra.mxu0 %v5105
        %v5107 = vand.u32 %v1381, 4294901760
        %5108 = vmatprep.mubr.f32.mxu0 %v5107
        %v5109 = vand.u32 %v1380, 4294901760
        %5110 = vmatmul.mubr.f32.gmra.mxu0 %v5109
        %v5111 = vpop.f32.mrf.mxu0
        %v5112 = vadd.f32 %v5001, %v5111
        %v5113 = vpop.f32.mrf.mxu0
        %v5114 = vand.u32 %v1385, 4294901760
        %5115 = vmatprep.mubr.f32.mxu0 %v5114
        %v5116 = vand.u32 %v1384, 4294901760
        %5117 = vmatmul.mubr.f32.gmra.mxu0 %v5116
        %v5118 = vpop.f32.mrf.mxu0
        %v5119 = vadd.f32 %v5008, %v5118
        %v5120 = vpop.f32.mrf.mxu0
        %5121 = vdwg.mxu0
        %v5122 = vld [vmem:[%s8] sm:$0xff]
        %v5123 = vld [vmem:[%s9] sm:$0xff]
        %v5125 = vsel %vm646, %v5123, 0
        %5127 = vmatprep.subr.mxu0 0.0
        %5128 = vmatpush1.msra.mxu0 0.0
        %5129 = vmatprep.subr.mxu0 0.0
        %5130 = vmatpush1.msra.mxu0 0.0
        %5131 = vmatprep.subr.mxu0 0.0
        %5132 = vmatpush1.msra.mxu0 0.0
        %5133 = vmatprep.subr.mxu0 0.0
        %5134 = vmatpush1.msra.mxu0 0.0
        %5135 = vmatprep.subr.mxu0 0.0
        %5136 = vmatpush1.msra.mxu0 0.0
        %5137 = vmatprep.subr.mxu0 0.0
        %5138 = vmatpush1.msra.mxu0 0.0
        %5139 = vmatprep.subr.mxu0 0.0
        %5140 = vmatpush1.msra.mxu0 0.0
        %5141 = vmatprep.subr.mxu0 0.0
        %5142 = vmatpush1.msra.mxu0 0.0
        %5143 = vmatprep.subr.mxu0 0.0
        %5144 = vmatpush1.msra.mxu0 0.0
        %5145 = vmatprep.subr.mxu0 0.0
        %5146 = vmatpush1.msra.mxu0 0.0
        %5147 = vmatprep.subr.mxu0 0.0
        %5148 = vmatpush1.msra.mxu0 0.0
        %5149 = vmatprep.subr.mxu0 0.0
        %5150 = vmatpush1.msra.mxu0 0.0
        %5151 = vmatprep.subr.mxu0 0.0
        %5152 = vmatpush1.msra.mxu0 0.0
        %5153 = vmatprep.subr.mxu0 0.0
        %5154 = vmatpush1.msra.mxu0 0.0
        %5155 = vmatprep.subr.mxu0 0.0
        %v5156 = vand.u32 %v5119, 4294901760
        %5157 = vmatpush1.msra.mxu0 %v5156
        %5158 = vmatprep.subr.mxu0 0.0
        %v5159 = vand.u32 %v5112, 4294901760
        %5160 = vmatpush1.msra.mxu0 %v5159
        %5161 = vmatprep.subr.mxu0 0.0
        %5162 = vmatpush2.msra.mxu0 0.0
        %5163 = vmatprep.subr.mxu0 0.0
        %5164 = vmatpush2.msra.mxu0 0.0
        %5165 = vmatprep.subr.mxu0 0.0
        %5166 = vmatpush2.msra.mxu0 0.0
        %5167 = vmatprep.subr.mxu0 0.0
        %5168 = vmatpush2.msra.mxu0 0.0
        %5169 = vmatprep.subr.mxu0 0.0
        %5170 = vmatpush2.msra.mxu0 0.0
        %5171 = vmatprep.subr.mxu0 0.0
        %5172 = vmatpush2.msra.mxu0 0.0
        %5173 = vmatprep.subr.mxu0 0.0
        %5174 = vmatpush2.msra.mxu0 0.0
        %5175 = vmatprep.subr.mxu0 0.0
        %5176 = vmatpush2.msra.mxu0 0.0
        %5177 = vmatprep.subr.mxu0 0.0
        %5178 = vmatpush2.msra.mxu0 0.0
        %5179 = vmatprep.subr.mxu0 0.0
        %5180 = vmatpush2.msra.mxu0 0.0
        %5181 = vmatprep.subr.mxu0 0.0
        %5182 = vmatpush2.msra.mxu0 0.0
        %5183 = vmatprep.subr.mxu0 0.0
        %5184 = vmatpush2.msra.mxu0 0.0
        %5185 = vmatprep.subr.mxu0 0.0
        %5186 = vmatpush2.msra.mxu0 0.0
        %5187 = vmatprep.subr.mxu0 0.0
        %5188 = vmatpush2.msra.mxu0 0.0
        %5189 = vmatprep.subr.mxu0 0.0
        %5190 = vmatpush2.msra.mxu0 0.0
        %5191 = vmatprep.subr.mxu0 0.0
        %5192 = vmatpush2.msra.mxu0 0.0
        %5193 = vmatprep.mubr.f32.mxu0 0.0
        %v5194 = vand.u32 %v5125, 4294901760
        %v5195 = vsub.f32 %v5125, %v5194
        %v5196 = vand.u32 %v5195, 4294901760
        %v5197 = vsub.f32 %v5195, %v5196
        %v5198 = vand.u32 %v5197, 4294901760
        %5199 = vmatmul.mubr.f32.gmra.mxu0 %v5198
        %v5200 = vpop.f32.mrf.mxu0
        %v5201 = vadd.f32 0.0, %v5200
        %v5202 = vpop.f32.mrf.mxu0
        %5203 = vdwg.mxu0
        %5204 = vmatprep.subr.mxu0 0.0
        %5205 = vmatpush1.msra.mxu0 0.0
        %5206 = vmatprep.subr.mxu0 0.0
        %5207 = vmatpush1.msra.mxu0 0.0
        %5208 = vmatprep.subr.mxu0 0.0
        %5209 = vmatpush1.msra.mxu0 0.0
        %5210 = vmatprep.subr.mxu0 0.0
        %5211 = vmatpush1.msra.mxu0 0.0
        %5212 = vmatprep.subr.mxu0 0.0
        %5213 = vmatpush1.msra.mxu0 0.0
        %5214 = vmatprep.subr.mxu0 0.0
        %5215 = vmatpush1.msra.mxu0 0.0
        %5216 = vmatprep.subr.mxu0 0.0
        %5217 = vmatpush1.msra.mxu0 0.0
        %5218 = vmatprep.subr.mxu0 0.0
        %5219 = vmatpush1.msra.mxu0 0.0
        %5220 = vmatprep.subr.mxu0 0.0
        %5221 = vmatpush1.msra.mxu0 0.0
        %5222 = vmatprep.subr.mxu0 0.0
        %5223 = vmatpush1.msra.mxu0 0.0
        %5224 = vmatprep.subr.mxu0 0.0
        %5225 = vmatpush1.msra.mxu0 0.0
        %5226 = vmatprep.subr.mxu0 0.0
        %5227 = vmatpush1.msra.mxu0 0.0
        %5228 = vmatprep.subr.mxu0 0.0
        %5229 = vmatpush1.msra.mxu0 0.0
        %5230 = vmatprep.subr.mxu0 0.0
        %5231 = vmatpush1.msra.mxu0 0.0
        %5232 = vmatprep.subr.mxu0 0.0
        %v5233 = vand.u32 %v5119, 4294901760
        %v5234 = vsub.f32 %v5119, %v5233
        %v5235 = vand.u32 %v5234, 4294901760
        %v5236 = vsub.f32 %v5234, %v5235
        %v5237 = vand.u32 %v5236, 4294901760
        %5238 = vmatpush1.msra.mxu0 %v5237
        %5239 = vmatprep.subr.mxu0 0.0
        %v5240 = vand.u32 %v5112, 4294901760
        %v5241 = vsub.f32 %v5112, %v5240
        %v5242 = vand.u32 %v5241, 4294901760
        %v5243 = vsub.f32 %v5241, %v5242
        %v5244 = vand.u32 %v5243, 4294901760
        %5245 = vmatpush1.msra.mxu0 %v5244
        %5246 = vmatprep.subr.mxu0 0.0
        %5247 = vmatpush2.msra.mxu0 0.0
        %5248 = vmatprep.subr.mxu0 0.0
        %5249 = vmatpush2.msra.mxu0 0.0
        %5250 = vmatprep.subr.mxu0 0.0
        %5251 = vmatpush2.msra.mxu0 0.0
        %5252 = vmatprep.subr.mxu0 0.0
        %5253 = vmatpush2.msra.mxu0 0.0
        %5254 = vmatprep.subr.mxu0 0.0
        %5255 = vmatpush2.msra.mxu0 0.0
        %5256 = vmatprep.subr.mxu0 0.0
        %5257 = vmatpush2.msra.mxu0 0.0
        %5258 = vmatprep.subr.mxu0 0.0
        %5259 = vmatpush2.msra.mxu0 0.0
        %5260 = vmatprep.subr.mxu0 0.0
        %5261 = vmatpush2.msra.mxu0 0.0
        %5262 = vmatprep.subr.mxu0 0.0
        %5263 = vmatpush2.msra.mxu0 0.0
        %5264 = vmatprep.subr.mxu0 0.0
        %5265 = vmatpush2.msra.mxu0 0.0
        %5266 = vmatprep.subr.mxu0 0.0
        %5267 = vmatpush2.msra.mxu0 0.0
        %5268 = vmatprep.subr.mxu0 0.0
        %5269 = vmatpush2.msra.mxu0 0.0
        %5270 = vmatprep.subr.mxu0 0.0
        %5271 = vmatpush2.msra.mxu0 0.0
        %5272 = vmatprep.subr.mxu0 0.0
        %5273 = vmatpush2.msra.mxu0 0.0
        %5274 = vmatprep.subr.mxu0 0.0
        %5275 = vmatpush2.msra.mxu0 0.0
        %5276 = vmatprep.subr.mxu0 0.0
        %5277 = vmatpush2.msra.mxu0 0.0
        %5278 = vmatprep.mubr.f32.mxu0 0.0
        %v5279 = vand.u32 %v5125, 4294901760
        %5280 = vmatmul.mubr.f32.gmra.mxu0 %v5279
        %v5281 = vpop.f32.mrf.mxu0
        %v5282 = vadd.f32 %v5201, %v5281
        %v5283 = vpop.f32.mrf.mxu0
        %5284 = vdwg.mxu0
        %5285 = vmatprep.subr.mxu0 0.0
        %5286 = vmatpush1.msra.mxu0 0.0
        %5287 = vmatprep.subr.mxu0 0.0
        %5288 = vmatpush1.msra.mxu0 0.0
        %5289 = vmatprep.subr.mxu0 0.0
        %5290 = vmatpush1.msra.mxu0 0.0
        %5291 = vmatprep.subr.mxu0 0.0
        %5292 = vmatpush1.msra.mxu0 0.0
        %5293 = vmatprep.subr.mxu0 0.0
        %5294 = vmatpush1.msra.mxu0 0.0
        %5295 = vmatprep.subr.mxu0 0.0
        %5296 = vmatpush1.msra.mxu0 0.0
        %5297 = vmatprep.subr.mxu0 0.0
        %5298 = vmatpush1.msra.mxu0 0.0
        %5299 = vmatprep.subr.mxu0 0.0
        %5300 = vmatpush1.msra.mxu0 0.0
        %5301 = vmatprep.subr.mxu0 0.0
        %5302 = vmatpush1.msra.mxu0 0.0
        %5303 = vmatprep.subr.mxu0 0.0
        %5304 = vmatpush1.msra.mxu0 0.0
        %5305 = vmatprep.subr.mxu0 0.0
        %5306 = vmatpush1.msra.mxu0 0.0
        %5307 = vmatprep.subr.mxu0 0.0
        %5308 = vmatpush1.msra.mxu0 0.0
        %5309 = vmatprep.subr.mxu0 0.0
        %5310 = vmatpush1.msra.mxu0 0.0
        %5311 = vmatprep.subr.mxu0 0.0
        %5312 = vmatpush1.msra.mxu0 0.0
        %5313 = vmatprep.subr.mxu0 0.0
        %v5314 = vand.u32 %v5119, 4294901760
        %v5315 = vsub.f32 %v5119, %v5314
        %5316 = vmatpush1.msra.mxu0 %v5315
        %5317 = vmatprep.subr.mxu0 0.0
        %v5318 = vand.u32 %v5112, 4294901760
        %v5319 = vsub.f32 %v5112, %v5318
        %5320 = vmatpush1.msra.mxu0 %v5319
        %5321 = vmatprep.subr.mxu0 0.0
        %5322 = vmatpush2.msra.mxu0 0.0
        %5323 = vmatprep.subr.mxu0 0.0
        %5324 = vmatpush2.msra.mxu0 0.0
        %5325 = vmatprep.subr.mxu0 0.0
        %5326 = vmatpush2.msra.mxu0 0.0
        %5327 = vmatprep.subr.mxu0 0.0
        %5328 = vmatpush2.msra.mxu0 0.0
        %5329 = vmatprep.subr.mxu0 0.0
        %5330 = vmatpush2.msra.mxu0 0.0
        %5331 = vmatprep.subr.mxu0 0.0
        %5332 = vmatpush2.msra.mxu0 0.0
        %5333 = vmatprep.subr.mxu0 0.0
        %5334 = vmatpush2.msra.mxu0 0.0
        %5335 = vmatprep.subr.mxu0 0.0
        %5336 = vmatpush2.msra.mxu0 0.0
        %5337 = vmatprep.subr.mxu0 0.0
        %5338 = vmatpush2.msra.mxu0 0.0
        %5339 = vmatprep.subr.mxu0 0.0
        %5340 = vmatpush2.msra.mxu0 0.0
        %5341 = vmatprep.subr.mxu0 0.0
        %5342 = vmatpush2.msra.mxu0 0.0
        %5343 = vmatprep.subr.mxu0 0.0
        %5344 = vmatpush2.msra.mxu0 0.0
        %5345 = vmatprep.subr.mxu0 0.0
        %5346 = vmatpush2.msra.mxu0 0.0
        %5347 = vmatprep.subr.mxu0 0.0
        %5348 = vmatpush2.msra.mxu0 0.0
        %5349 = vmatprep.subr.mxu0 0.0
        %5350 = vmatpush2.msra.mxu0 0.0
        %5351 = vmatprep.subr.mxu0 0.0
        %5352 = vmatpush2.msra.mxu0 0.0
        %5353 = vmatprep.mubr.f32.mxu0 0.0
        %v5354 = vand.u32 %v5125, 4294901760
        %v5355 = vsub.f32 %v5125, %v5354
        %5356 = vmatmul.mubr.f32.gmra.mxu0 %v5355
        %v5357 = vpop.f32.mrf.mxu0
        %v5358 = vadd.f32 %v5282, %v5357
        %v5359 = vpop.f32.mrf.mxu0
        %5360 = vdwg.mxu0
        %5361 = vmatprep.subr.mxu0 0.0
        %5362 = vmatpush1.msra.mxu0 0.0
        %5363 = vmatprep.subr.mxu0 0.0
        %5364 = vmatpush1.msra.mxu0 0.0
        %5365 = vmatprep.subr.mxu0 0.0
        %5366 = vmatpush1.msra.mxu0 0.0
        %5367 = vmatprep.subr.mxu0 0.0
        %5368 = vmatpush1.msra.mxu0 0.0
        %5369 = vmatprep.subr.mxu0 0.0
        %5370 = vmatpush1.msra.mxu0 0.0
        %5371 = vmatprep.subr.mxu0 0.0
        %5372 = vmatpush1.msra.mxu0 0.0
        %5373 = vmatprep.subr.mxu0 0.0
        %5374 = vmatpush1.msra.mxu0 0.0
        %5375 = vmatprep.subr.mxu0 0.0
        %5376 = vmatpush1.msra.mxu0 0.0
        %5377 = vmatprep.subr.mxu0 0.0
        %5378 = vmatpush1.msra.mxu0 0.0
        %5379 = vmatprep.subr.mxu0 0.0
        %5380 = vmatpush1.msra.mxu0 0.0
        %5381 = vmatprep.subr.mxu0 0.0
        %5382 = vmatpush1.msra.mxu0 0.0
        %5383 = vmatprep.subr.mxu0 0.0
        %5384 = vmatpush1.msra.mxu0 0.0
        %5385 = vmatprep.subr.mxu0 0.0
        %5386 = vmatpush1.msra.mxu0 0.0
        %5387 = vmatprep.subr.mxu0 0.0
        %5388 = vmatpush1.msra.mxu0 0.0
        %5389 = vmatprep.subr.mxu0 0.0
        %v5390 = vand.u32 %v5119, 4294901760
        %5391 = vmatpush1.msra.mxu0 %v5390
        %5392 = vmatprep.subr.mxu0 0.0
        %v5393 = vand.u32 %v5112, 4294901760
        %5394 = vmatpush1.msra.mxu0 %v5393
        %5395 = vmatprep.subr.mxu0 0.0
        %5396 = vmatpush2.msra.mxu0 0.0
        %5397 = vmatprep.subr.mxu0 0.0
        %5398 = vmatpush2.msra.mxu0 0.0
        %5399 = vmatprep.subr.mxu0 0.0
        %5400 = vmatpush2.msra.mxu0 0.0
        %5401 = vmatprep.subr.mxu0 0.0
        %5402 = vmatpush2.msra.mxu0 0.0
        %5403 = vmatprep.subr.mxu0 0.0
        %5404 = vmatpush2.msra.mxu0 0.0
        %5405 = vmatprep.subr.mxu0 0.0
        %5406 = vmatpush2.msra.mxu0 0.0
        %5407 = vmatprep.subr.mxu0 0.0
        %5408 = vmatpush2.msra.mxu0 0.0
        %5409 = vmatprep.subr.mxu0 0.0
        %5410 = vmatpush2.msra.mxu0 0.0
        %5411 = vmatprep.subr.mxu0 0.0
        %5412 = vmatpush2.msra.mxu0 0.0
        %5413 = vmatprep.subr.mxu0 0.0
        %5414 = vmatpush2.msra.mxu0 0.0
        %5415 = vmatprep.subr.mxu0 0.0
        %5416 = vmatpush2.msra.mxu0 0.0
        %5417 = vmatprep.subr.mxu0 0.0
        %5418 = vmatpush2.msra.mxu0 0.0
        %5419 = vmatprep.subr.mxu0 0.0
        %5420 = vmatpush2.msra.mxu0 0.0
        %5421 = vmatprep.subr.mxu0 0.0
        %5422 = vmatpush2.msra.mxu0 0.0
        %5423 = vmatprep.subr.mxu0 0.0
        %5424 = vmatpush2.msra.mxu0 0.0
        %5425 = vmatprep.subr.mxu0 0.0
        %5426 = vmatpush2.msra.mxu0 0.0
        %5427 = vmatprep.mubr.f32.mxu0 0.0
        %v5428 = vand.u32 %v5125, 4294901760
        %v5429 = vsub.f32 %v5125, %v5428
        %v5430 = vand.u32 %v5429, 4294901760
        %5431 = vmatmul.mubr.f32.gmra.mxu0 %v5430
        %v5432 = vpop.f32.mrf.mxu0
        %v5433 = vadd.f32 %v5358, %v5432
        %v5434 = vpop.f32.mrf.mxu0
        %5435 = vdwg.mxu0
        %5436 = vmatprep.subr.mxu0 0.0
        %5437 = vmatpush1.msra.mxu0 0.0
        %5438 = vmatprep.subr.mxu0 0.0
        %5439 = vmatpush1.msra.mxu0 0.0
        %5440 = vmatprep.subr.mxu0 0.0
        %5441 = vmatpush1.msra.mxu0 0.0
        %5442 = vmatprep.subr.mxu0 0.0
        %5443 = vmatpush1.msra.mxu0 0.0
        %5444 = vmatprep.subr.mxu0 0.0
        %5445 = vmatpush1.msra.mxu0 0.0
        %5446 = vmatprep.subr.mxu0 0.0
        %5447 = vmatpush1.msra.mxu0 0.0
        %5448 = vmatprep.subr.mxu0 0.0
        %5449 = vmatpush1.msra.mxu0 0.0
        %5450 = vmatprep.subr.mxu0 0.0
        %5451 = vmatpush1.msra.mxu0 0.0
        %5452 = vmatprep.subr.mxu0 0.0
        %5453 = vmatpush1.msra.mxu0 0.0
        %5454 = vmatprep.subr.mxu0 0.0
        %5455 = vmatpush1.msra.mxu0 0.0
        %5456 = vmatprep.subr.mxu0 0.0
        %5457 = vmatpush1.msra.mxu0 0.0
        %5458 = vmatprep.subr.mxu0 0.0
        %5459 = vmatpush1.msra.mxu0 0.0
        %5460 = vmatprep.subr.mxu0 0.0
        %5461 = vmatpush1.msra.mxu0 0.0
        %5462 = vmatprep.subr.mxu0 0.0
        %5463 = vmatpush1.msra.mxu0 0.0
        %5464 = vmatprep.subr.mxu0 0.0
        %v5465 = vand.u32 %v5119, 4294901760
        %v5466 = vsub.f32 %v5119, %v5465
        %v5467 = vand.u32 %v5466, 4294901760
        %5468 = vmatpush1.msra.mxu0 %v5467
        %5469 = vmatprep.subr.mxu0 0.0
        %v5470 = vand.u32 %v5112, 4294901760
        %v5471 = vsub.f32 %v5112, %v5470
        %v5472 = vand.u32 %v5471, 4294901760
        %5473 = vmatpush1.msra.mxu0 %v5472
        %5474 = vmatprep.subr.mxu0 0.0
        %5475 = vmatpush2.msra.mxu0 0.0
        %5476 = vmatprep.subr.mxu0 0.0
        %5477 = vmatpush2.msra.mxu0 0.0
        %5478 = vmatprep.subr.mxu0 0.0
        %5479 = vmatpush2.msra.mxu0 0.0
        %5480 = vmatprep.subr.mxu0 0.0
        %5481 = vmatpush2.msra.mxu0 0.0
        %5482 = vmatprep.subr.mxu0 0.0
        %5483 = vmatpush2.msra.mxu0 0.0
        %5484 = vmatprep.subr.mxu0 0.0
        %5485 = vmatpush2.msra.mxu0 0.0
        %5486 = vmatprep.subr.mxu0 0.0
        %5487 = vmatpush2.msra.mxu0 0.0
        %5488 = vmatprep.subr.mxu0 0.0
        %5489 = vmatpush2.msra.mxu0 0.0
        %5490 = vmatprep.subr.mxu0 0.0
        %5491 = vmatpush2.msra.mxu0 0.0
        %5492 = vmatprep.subr.mxu0 0.0
        %5493 = vmatpush2.msra.mxu0 0.0
        %5494 = vmatprep.subr.mxu0 0.0
        %5495 = vmatpush2.msra.mxu0 0.0
        %5496 = vmatprep.subr.mxu0 0.0
        %5497 = vmatpush2.msra.mxu0 0.0
        %5498 = vmatprep.subr.mxu0 0.0
        %5499 = vmatpush2.msra.mxu0 0.0
        %5500 = vmatprep.subr.mxu0 0.0
        %5501 = vmatpush2.msra.mxu0 0.0
        %5502 = vmatprep.subr.mxu0 0.0
        %5503 = vmatpush2.msra.mxu0 0.0
        %5504 = vmatprep.subr.mxu0 0.0
        %5505 = vmatpush2.msra.mxu0 0.0
        %5506 = vmatprep.mubr.f32.mxu0 0.0
        %v5507 = vand.u32 %v5125, 4294901760
        %5508 = vmatmul.mubr.f32.gmra.mxu0 %v5507
        %v5509 = vpop.f32.mrf.mxu0
        %v5510 = vadd.f32 %v5433, %v5509
        %v5511 = vpop.f32.mrf.mxu0
        %5512 = vdwg.mxu0
        %5513 = vmatprep.subr.mxu0 0.0
        %5514 = vmatpush1.msra.mxu0 0.0
        %5515 = vmatprep.subr.mxu0 0.0
        %5516 = vmatpush1.msra.mxu0 0.0
        %5517 = vmatprep.subr.mxu0 0.0
        %5518 = vmatpush1.msra.mxu0 0.0
        %5519 = vmatprep.subr.mxu0 0.0
        %5520 = vmatpush1.msra.mxu0 0.0
        %5521 = vmatprep.subr.mxu0 0.0
        %5522 = vmatpush1.msra.mxu0 0.0
        %5523 = vmatprep.subr.mxu0 0.0
        %5524 = vmatpush1.msra.mxu0 0.0
        %5525 = vmatprep.subr.mxu0 0.0
        %5526 = vmatpush1.msra.mxu0 0.0
        %5527 = vmatprep.subr.mxu0 0.0
        %5528 = vmatpush1.msra.mxu0 0.0
        %5529 = vmatprep.subr.mxu0 0.0
        %5530 = vmatpush1.msra.mxu0 0.0
        %5531 = vmatprep.subr.mxu0 0.0
        %5532 = vmatpush1.msra.mxu0 0.0
        %5533 = vmatprep.subr.mxu0 0.0
        %5534 = vmatpush1.msra.mxu0 0.0
        %5535 = vmatprep.subr.mxu0 0.0
        %5536 = vmatpush1.msra.mxu0 0.0
        %5537 = vmatprep.subr.mxu0 0.0
        %5538 = vmatpush1.msra.mxu0 0.0
        %5539 = vmatprep.subr.mxu0 0.0
        %5540 = vmatpush1.msra.mxu0 0.0
        %5541 = vmatprep.subr.mxu0 0.0
        %v5542 = vand.u32 %v5119, 4294901760
        %5543 = vmatpush1.msra.mxu0 %v5542
        %5544 = vmatprep.subr.mxu0 0.0
        %v5545 = vand.u32 %v5112, 4294901760
        %5546 = vmatpush1.msra.mxu0 %v5545
        %5547 = vmatprep.subr.mxu0 0.0
        %5548 = vmatpush2.msra.mxu0 0.0
        %5549 = vmatprep.subr.mxu0 0.0
        %5550 = vmatpush2.msra.mxu0 0.0
        %5551 = vmatprep.subr.mxu0 0.0
        %5552 = vmatpush2.msra.mxu0 0.0
        %5553 = vmatprep.subr.mxu0 0.0
        %5554 = vmatpush2.msra.mxu0 0.0
        %5555 = vmatprep.subr.mxu0 0.0
        %5556 = vmatpush2.msra.mxu0 0.0
        %5557 = vmatprep.subr.mxu0 0.0
        %5558 = vmatpush2.msra.mxu0 0.0
        %5559 = vmatprep.subr.mxu0 0.0
        %5560 = vmatpush2.msra.mxu0 0.0
        %5561 = vmatprep.subr.mxu0 0.0
        %5562 = vmatpush2.msra.mxu0 0.0
        %5563 = vmatprep.subr.mxu0 0.0
        %5564 = vmatpush2.msra.mxu0 0.0
        %5565 = vmatprep.subr.mxu0 0.0
        %5566 = vmatpush2.msra.mxu0 0.0
        %5567 = vmatprep.subr.mxu0 0.0
        %5568 = vmatpush2.msra.mxu0 0.0
        %5569 = vmatprep.subr.mxu0 0.0
        %5570 = vmatpush2.msra.mxu0 0.0
        %5571 = vmatprep.subr.mxu0 0.0
        %5572 = vmatpush2.msra.mxu0 0.0
        %5573 = vmatprep.subr.mxu0 0.0
        %5574 = vmatpush2.msra.mxu0 0.0
        %5575 = vmatprep.subr.mxu0 0.0
        %5576 = vmatpush2.msra.mxu0 0.0
        %5577 = vmatprep.subr.mxu0 0.0
        %5578 = vmatpush2.msra.mxu0 0.0
        %5579 = vmatprep.mubr.f32.mxu0 0.0
        %v5580 = vand.u32 %v5125, 4294901760
        %5581 = vmatmul.mubr.f32.gmra.mxu0 %v5580
        %v5582 = vpop.f32.mrf.mxu0
        %v5583 = vadd.f32 %v5510, %v5582
        %v5584 = vpop.f32.mrf.mxu0
        %5585 = vdwg.mxu0
        %v5587 = vsel %vm646, %v5122, 0
        %5589 = vmatprep.subr.mxu0 0.0
        %5590 = vmatpush1.msra.mxu0 0.0
        %5591 = vmatprep.subr.mxu0 0.0
        %5592 = vmatpush1.msra.mxu0 0.0
        %5593 = vmatprep.subr.mxu0 0.0
        %5594 = vmatpush1.msra.mxu0 0.0
        %5595 = vmatprep.subr.mxu0 0.0
        %5596 = vmatpush1.msra.mxu0 0.0
        %5597 = vmatprep.subr.mxu0 0.0
        %5598 = vmatpush1.msra.mxu0 0.0
        %5599 = vmatprep.subr.mxu0 0.0
        %5600 = vmatpush1.msra.mxu0 0.0
        %5601 = vmatprep.subr.mxu0 0.0
        %5602 = vmatpush1.msra.mxu0 0.0
        %5603 = vmatprep.subr.mxu0 0.0
        %5604 = vmatpush1.msra.mxu0 0.0
        %5605 = vmatprep.subr.mxu0 0.0
        %5606 = vmatpush1.msra.mxu0 0.0
        %5607 = vmatprep.subr.mxu0 0.0
        %5608 = vmatpush1.msra.mxu0 0.0
        %5609 = vmatprep.subr.mxu0 0.0
        %5610 = vmatpush1.msra.mxu0 0.0
        %5611 = vmatprep.subr.mxu0 0.0
        %5612 = vmatpush1.msra.mxu0 0.0
        %5613 = vmatprep.subr.mxu0 0.0
        %5614 = vmatpush1.msra.mxu0 0.0
        %5615 = vmatprep.subr.mxu0 0.0
        %5616 = vmatpush1.msra.mxu0 0.0
        %5617 = vmatprep.subr.mxu0 0.0
        %v5618 = vand.u32 %v3283, 4294901760
        %5619 = vmatpush1.msra.mxu0 %v5618
        %5620 = vmatprep.subr.mxu0 0.0
        %v5621 = vand.u32 %v3276, 4294901760
        %5622 = vmatpush1.msra.mxu0 %v5621
        %5623 = vmatprep.subr.mxu0 0.0
        %5624 = vmatpush2.msra.mxu0 0.0
        %5625 = vmatprep.subr.mxu0 0.0
        %5626 = vmatpush2.msra.mxu0 0.0
        %5627 = vmatprep.subr.mxu0 0.0
        %5628 = vmatpush2.msra.mxu0 0.0
        %5629 = vmatprep.subr.mxu0 0.0
        %5630 = vmatpush2.msra.mxu0 0.0
        %5631 = vmatprep.subr.mxu0 0.0
        %5632 = vmatpush2.msra.mxu0 0.0
        %5633 = vmatprep.subr.mxu0 0.0
        %5634 = vmatpush2.msra.mxu0 0.0
        %5635 = vmatprep.subr.mxu0 0.0
        %5636 = vmatpush2.msra.mxu0 0.0
        %5637 = vmatprep.subr.mxu0 0.0
        %5638 = vmatpush2.msra.mxu0 0.0
        %5639 = vmatprep.subr.mxu0 0.0
        %5640 = vmatpush2.msra.mxu0 0.0
        %5641 = vmatprep.subr.mxu0 0.0
        %5642 = vmatpush2.msra.mxu0 0.0
        %5643 = vmatprep.subr.mxu0 0.0
        %5644 = vmatpush2.msra.mxu0 0.0
        %5645 = vmatprep.subr.mxu0 0.0
        %5646 = vmatpush2.msra.mxu0 0.0
        %5647 = vmatprep.subr.mxu0 0.0
        %5648 = vmatpush2.msra.mxu0 0.0
        %5649 = vmatprep.subr.mxu0 0.0
        %5650 = vmatpush2.msra.mxu0 0.0
        %5651 = vmatprep.subr.mxu0 0.0
        %5652 = vmatpush2.msra.mxu0 0.0
        %5653 = vmatprep.subr.mxu0 0.0
        %5654 = vmatpush2.msra.mxu0 0.0
        %5655 = vmatprep.mubr.f32.mxu0 0.0
        %v5656 = vand.u32 %v5587, 4294901760
        %v5657 = vsub.f32 %v5587, %v5656
        %v5658 = vand.u32 %v5657, 4294901760
        %v5659 = vsub.f32 %v5657, %v5658
        %v5660 = vand.u32 %v5659, 4294901760
        %5661 = vmatmul.mubr.f32.gmra.mxu0 %v5660
        %v5662 = vpop.f32.mrf.mxu0
        %v5663 = vadd.f32 %v5583, %v5662
        %v5664 = vpop.f32.mrf.mxu0
        %5665 = vdwg.mxu0
        %5666 = vmatprep.subr.mxu0 0.0
        %5667 = vmatpush1.msra.mxu0 0.0
        %5668 = vmatprep.subr.mxu0 0.0
        %5669 = vmatpush1.msra.mxu0 0.0
        %5670 = vmatprep.subr.mxu0 0.0
        %5671 = vmatpush1.msra.mxu0 0.0
        %5672 = vmatprep.subr.mxu0 0.0
        %5673 = vmatpush1.msra.mxu0 0.0
        %5674 = vmatprep.subr.mxu0 0.0
        %5675 = vmatpush1.msra.mxu0 0.0
        %5676 = vmatprep.subr.mxu0 0.0
        %5677 = vmatpush1.msra.mxu0 0.0
        %5678 = vmatprep.subr.mxu0 0.0
        %5679 = vmatpush1.msra.mxu0 0.0
        %5680 = vmatprep.subr.mxu0 0.0
        %5681 = vmatpush1.msra.mxu0 0.0
        %5682 = vmatprep.subr.mxu0 0.0
        %5683 = vmatpush1.msra.mxu0 0.0
        %5684 = vmatprep.subr.mxu0 0.0
        %5685 = vmatpush1.msra.mxu0 0.0
        %5686 = vmatprep.subr.mxu0 0.0
        %5687 = vmatpush1.msra.mxu0 0.0
        %5688 = vmatprep.subr.mxu0 0.0
        %5689 = vmatpush1.msra.mxu0 0.0
        %5690 = vmatprep.subr.mxu0 0.0
        %5691 = vmatpush1.msra.mxu0 0.0
        %5692 = vmatprep.subr.mxu0 0.0
        %5693 = vmatpush1.msra.mxu0 0.0
        %5694 = vmatprep.subr.mxu0 0.0
        %v5695 = vand.u32 %v3283, 4294901760
        %v5696 = vsub.f32 %v3283, %v5695
        %v5697 = vand.u32 %v5696, 4294901760
        %v5698 = vsub.f32 %v5696, %v5697
        %v5699 = vand.u32 %v5698, 4294901760
        %5700 = vmatpush1.msra.mxu0 %v5699
        %5701 = vmatprep.subr.mxu0 0.0
        %v5702 = vand.u32 %v3276, 4294901760
        %v5703 = vsub.f32 %v3276, %v5702
        %v5704 = vand.u32 %v5703, 4294901760
        %v5705 = vsub.f32 %v5703, %v5704
        %v5706 = vand.u32 %v5705, 4294901760
        %5707 = vmatpush1.msra.mxu0 %v5706
        %5708 = vmatprep.subr.mxu0 0.0
        %5709 = vmatpush2.msra.mxu0 0.0
        %5710 = vmatprep.subr.mxu0 0.0
        %5711 = vmatpush2.msra.mxu0 0.0
        %5712 = vmatprep.subr.mxu0 0.0
        %5713 = vmatpush2.msra.mxu0 0.0
        %5714 = vmatprep.subr.mxu0 0.0
        %5715 = vmatpush2.msra.mxu0 0.0
        %5716 = vmatprep.subr.mxu0 0.0
        %5717 = vmatpush2.msra.mxu0 0.0
        %5718 = vmatprep.subr.mxu0 0.0
        %5719 = vmatpush2.msra.mxu0 0.0
        %5720 = vmatprep.subr.mxu0 0.0
        %5721 = vmatpush2.msra.mxu0 0.0
        %5722 = vmatprep.subr.mxu0 0.0
        %5723 = vmatpush2.msra.mxu0 0.0
        %5724 = vmatprep.subr.mxu0 0.0
        %5725 = vmatpush2.msra.mxu0 0.0
        %5726 = vmatprep.subr.mxu0 0.0
        %5727 = vmatpush2.msra.mxu0 0.0
        %5728 = vmatprep.subr.mxu0 0.0
        %5729 = vmatpush2.msra.mxu0 0.0
        %5730 = vmatprep.subr.mxu0 0.0
        %5731 = vmatpush2.msra.mxu0 0.0
        %5732 = vmatprep.subr.mxu0 0.0
        %5733 = vmatpush2.msra.mxu0 0.0
        %5734 = vmatprep.subr.mxu0 0.0
        %5735 = vmatpush2.msra.mxu0 0.0
        %5736 = vmatprep.subr.mxu0 0.0
        %5737 = vmatpush2.msra.mxu0 0.0
        %5738 = vmatprep.subr.mxu0 0.0
        %5739 = vmatpush2.msra.mxu0 0.0
        %5740 = vmatprep.mubr.f32.mxu0 0.0
        %v5741 = vand.u32 %v5587, 4294901760
        %5742 = vmatmul.mubr.f32.gmra.mxu0 %v5741
        %v5743 = vpop.f32.mrf.mxu0
        %v5744 = vadd.f32 %v5663, %v5743
        %v5745 = vpop.f32.mrf.mxu0
        %5746 = vdwg.mxu0
        %5747 = vmatprep.subr.mxu0 0.0
        %5748 = vmatpush1.msra.mxu0 0.0
        %5749 = vmatprep.subr.mxu0 0.0
        %5750 = vmatpush1.msra.mxu0 0.0
        %5751 = vmatprep.subr.mxu0 0.0
        %5752 = vmatpush1.msra.mxu0 0.0
        %5753 = vmatprep.subr.mxu0 0.0
        %5754 = vmatpush1.msra.mxu0 0.0
        %5755 = vmatprep.subr.mxu0 0.0
        %5756 = vmatpush1.msra.mxu0 0.0
        %5757 = vmatprep.subr.mxu0 0.0
        %5758 = vmatpush1.msra.mxu0 0.0
        %5759 = vmatprep.subr.mxu0 0.0
        %5760 = vmatpush1.msra.mxu0 0.0
        %5761 = vmatprep.subr.mxu0 0.0
        %5762 = vmatpush1.msra.mxu0 0.0
        %5763 = vmatprep.subr.mxu0 0.0
        %5764 = vmatpush1.msra.mxu0 0.0
        %5765 = vmatprep.subr.mxu0 0.0
        %5766 = vmatpush1.msra.mxu0 0.0
        %5767 = vmatprep.subr.mxu0 0.0
        %5768 = vmatpush1.msra.mxu0 0.0
        %5769 = vmatprep.subr.mxu0 0.0
        %5770 = vmatpush1.msra.mxu0 0.0
        %5771 = vmatprep.subr.mxu0 0.0
        %5772 = vmatpush1.msra.mxu0 0.0
        %5773 = vmatprep.subr.mxu0 0.0
        %5774 = vmatpush1.msra.mxu0 0.0
        %5775 = vmatprep.subr.mxu0 0.0
        %v5776 = vand.u32 %v3283, 4294901760
        %v5777 = vsub.f32 %v3283, %v5776
        %5778 = vmatpush1.msra.mxu0 %v5777
        %5779 = vmatprep.subr.mxu0 0.0
        %v5780 = vand.u32 %v3276, 4294901760
        %v5781 = vsub.f32 %v3276, %v5780
        %5782 = vmatpush1.msra.mxu0 %v5781
        %5783 = vmatprep.subr.mxu0 0.0
        %5784 = vmatpush2.msra.mxu0 0.0
        %5785 = vmatprep.subr.mxu0 0.0
        %5786 = vmatpush2.msra.mxu0 0.0
        %5787 = vmatprep.subr.mxu0 0.0
        %5788 = vmatpush2.msra.mxu0 0.0
        %5789 = vmatprep.subr.mxu0 0.0
        %5790 = vmatpush2.msra.mxu0 0.0
        %5791 = vmatprep.subr.mxu0 0.0
        %5792 = vmatpush2.msra.mxu0 0.0
        %5793 = vmatprep.subr.mxu0 0.0
        %5794 = vmatpush2.msra.mxu0 0.0
        %5795 = vmatprep.subr.mxu0 0.0
        %5796 = vmatpush2.msra.mxu0 0.0
        %5797 = vmatprep.subr.mxu0 0.0
        %5798 = vmatpush2.msra.mxu0 0.0
        %5799 = vmatprep.subr.mxu0 0.0
        %5800 = vmatpush2.msra.mxu0 0.0
        %5801 = vmatprep.subr.mxu0 0.0
        %5802 = vmatpush2.msra.mxu0 0.0
        %5803 = vmatprep.subr.mxu0 0.0
        %5804 = vmatpush2.msra.mxu0 0.0
        %5805 = vmatprep.subr.mxu0 0.0
        %5806 = vmatpush2.msra.mxu0 0.0
        %5807 = vmatprep.subr.mxu0 0.0
        %5808 = vmatpush2.msra.mxu0 0.0
        %5809 = vmatprep.subr.mxu0 0.0
        %5810 = vmatpush2.msra.mxu0 0.0
        %5811 = vmatprep.subr.mxu0 0.0
        %5812 = vmatpush2.msra.mxu0 0.0
        %5813 = vmatprep.subr.mxu0 0.0
        %5814 = vmatpush2.msra.mxu0 0.0
        %5815 = vmatprep.mubr.f32.mxu0 0.0
        %v5816 = vand.u32 %v5587, 4294901760
        %v5817 = vsub.f32 %v5587, %v5816
        %5818 = vmatmul.mubr.f32.gmra.mxu0 %v5817
        %v5819 = vpop.f32.mrf.mxu0
        %v5820 = vadd.f32 %v5744, %v5819
        %v5821 = vpop.f32.mrf.mxu0
        %5822 = vdwg.mxu0
        %5823 = vmatprep.subr.mxu0 0.0
        %5824 = vmatpush1.msra.mxu0 0.0
        %5825 = vmatprep.subr.mxu0 0.0
        %5826 = vmatpush1.msra.mxu0 0.0
        %5827 = vmatprep.subr.mxu0 0.0
        %5828 = vmatpush1.msra.mxu0 0.0
        %5829 = vmatprep.subr.mxu0 0.0
        %5830 = vmatpush1.msra.mxu0 0.0
        %5831 = vmatprep.subr.mxu0 0.0
        %5832 = vmatpush1.msra.mxu0 0.0
        %5833 = vmatprep.subr.mxu0 0.0
        %5834 = vmatpush1.msra.mxu0 0.0
        %5835 = vmatprep.subr.mxu0 0.0
        %5836 = vmatpush1.msra.mxu0 0.0
        %5837 = vmatprep.subr.mxu0 0.0
        %5838 = vmatpush1.msra.mxu0 0.0
        %5839 = vmatprep.subr.mxu0 0.0
        %5840 = vmatpush1.msra.mxu0 0.0
        %5841 = vmatprep.subr.mxu0 0.0
        %5842 = vmatpush1.msra.mxu0 0.0
        %5843 = vmatprep.subr.mxu0 0.0
        %5844 = vmatpush1.msra.mxu0 0.0
        %5845 = vmatprep.subr.mxu0 0.0
        %5846 = vmatpush1.msra.mxu0 0.0
        %5847 = vmatprep.subr.mxu0 0.0
        %5848 = vmatpush1.msra.mxu0 0.0
        %5849 = vmatprep.subr.mxu0 0.0
        %5850 = vmatpush1.msra.mxu0 0.0
        %5851 = vmatprep.subr.mxu0 0.0
        %v5852 = vand.u32 %v3283, 4294901760
        %5853 = vmatpush1.msra.mxu0 %v5852
        %5854 = vmatprep.subr.mxu0 0.0
        %v5855 = vand.u32 %v3276, 4294901760
        %5856 = vmatpush1.msra.mxu0 %v5855
        %5857 = vmatprep.subr.mxu0 0.0
        %5858 = vmatpush2.msra.mxu0 0.0
        %5859 = vmatprep.subr.mxu0 0.0
        %5860 = vmatpush2.msra.mxu0 0.0
        %5861 = vmatprep.subr.mxu0 0.0
        %5862 = vmatpush2.msra.mxu0 0.0
        %5863 = vmatprep.subr.mxu0 0.0
        %5864 = vmatpush2.msra.mxu0 0.0
        %5865 = vmatprep.subr.mxu0 0.0
        %5866 = vmatpush2.msra.mxu0 0.0
        %5867 = vmatprep.subr.mxu0 0.0
        %5868 = vmatpush2.msra.mxu0 0.0
        %5869 = vmatprep.subr.mxu0 0.0
        %5870 = vmatpush2.msra.mxu0 0.0
        %5871 = vmatprep.subr.mxu0 0.0
        %5872 = vmatpush2.msra.mxu0 0.0
        %5873 = vmatprep.subr.mxu0 0.0
        %5874 = vmatpush2.msra.mxu0 0.0
        %5875 = vmatprep.subr.mxu0 0.0
        %5876 = vmatpush2.msra.mxu0 0.0
        %5877 = vmatprep.subr.mxu0 0.0
        %5878 = vmatpush2.msra.mxu0 0.0
        %5879 = vmatprep.subr.mxu0 0.0
        %5880 = vmatpush2.msra.mxu0 0.0
        %5881 = vmatprep.subr.mxu0 0.0
        %5882 = vmatpush2.msra.mxu0 0.0
        %5883 = vmatprep.subr.mxu0 0.0
        %5884 = vmatpush2.msra.mxu0 0.0
        %5885 = vmatprep.subr.mxu0 0.0
        %5886 = vmatpush2.msra.mxu0 0.0
        %5887 = vmatprep.subr.mxu0 0.0
        %5888 = vmatpush2.msra.mxu0 0.0
        %5889 = vmatprep.mubr.f32.mxu0 0.0
        %v5890 = vand.u32 %v5587, 4294901760
        %v5891 = vsub.f32 %v5587, %v5890
        %v5892 = vand.u32 %v5891, 4294901760
        %5893 = vmatmul.mubr.f32.gmra.mxu0 %v5892
        %v5894 = vpop.f32.mrf.mxu0
        %v5895 = vadd.f32 %v5820, %v5894
        %v5896 = vpop.f32.mrf.mxu0
        %5897 = vdwg.mxu0
        %5898 = vmatprep.subr.mxu0 0.0
        %5899 = vmatpush1.msra.mxu0 0.0
        %5900 = vmatprep.subr.mxu0 0.0
        %5901 = vmatpush1.msra.mxu0 0.0
        %5902 = vmatprep.subr.mxu0 0.0
        %5903 = vmatpush1.msra.mxu0 0.0
        %5904 = vmatprep.subr.mxu0 0.0
        %5905 = vmatpush1.msra.mxu0 0.0
        %5906 = vmatprep.subr.mxu0 0.0
        %5907 = vmatpush1.msra.mxu0 0.0
        %5908 = vmatprep.subr.mxu0 0.0
        %5909 = vmatpush1.msra.mxu0 0.0
        %5910 = vmatprep.subr.mxu0 0.0
        %5911 = vmatpush1.msra.mxu0 0.0
        %5912 = vmatprep.subr.mxu0 0.0
        %5913 = vmatpush1.msra.mxu0 0.0
        %5914 = vmatprep.subr.mxu0 0.0
        %5915 = vmatpush1.msra.mxu0 0.0
        %5916 = vmatprep.subr.mxu0 0.0
        %5917 = vmatpush1.msra.mxu0 0.0
        %5918 = vmatprep.subr.mxu0 0.0
        %5919 = vmatpush1.msra.mxu0 0.0
        %5920 = vmatprep.subr.mxu0 0.0
        %5921 = vmatpush1.msra.mxu0 0.0
        %5922 = vmatprep.subr.mxu0 0.0
        %5923 = vmatpush1.msra.mxu0 0.0
        %5924 = vmatprep.subr.mxu0 0.0
        %5925 = vmatpush1.msra.mxu0 0.0
        %5926 = vmatprep.subr.mxu0 0.0
        %v5927 = vand.u32 %v3283, 4294901760
        %v5928 = vsub.f32 %v3283, %v5927
        %v5929 = vand.u32 %v5928, 4294901760
        %5930 = vmatpush1.msra.mxu0 %v5929
        %5931 = vmatprep.subr.mxu0 0.0
        %v5932 = vand.u32 %v3276, 4294901760
        %v5933 = vsub.f32 %v3276, %v5932
        %v5934 = vand.u32 %v5933, 4294901760
        %5935 = vmatpush1.msra.mxu0 %v5934
        %5936 = vmatprep.subr.mxu0 0.0
        %5937 = vmatpush2.msra.mxu0 0.0
        %5938 = vmatprep.subr.mxu0 0.0
        %5939 = vmatpush2.msra.mxu0 0.0
        %5940 = vmatprep.subr.mxu0 0.0
        %5941 = vmatpush2.msra.mxu0 0.0
        %5942 = vmatprep.subr.mxu0 0.0
        %5943 = vmatpush2.msra.mxu0 0.0
        %5944 = vmatprep.subr.mxu0 0.0
        %5945 = vmatpush2.msra.mxu0 0.0
        %5946 = vmatprep.subr.mxu0 0.0
        %5947 = vmatpush2.msra.mxu0 0.0
        %5948 = vmatprep.subr.mxu0 0.0
        %5949 = vmatpush2.msra.mxu0 0.0
        %5950 = vmatprep.subr.mxu0 0.0
        %5951 = vmatpush2.msra.mxu0 0.0
        %5952 = vmatprep.subr.mxu0 0.0
        %5953 = vmatpush2.msra.mxu0 0.0
        %5954 = vmatprep.subr.mxu0 0.0
        %5955 = vmatpush2.msra.mxu0 0.0
        %5956 = vmatprep.subr.mxu0 0.0
        %5957 = vmatpush2.msra.mxu0 0.0
        %5958 = vmatprep.subr.mxu0 0.0
        %5959 = vmatpush2.msra.mxu0 0.0
        %5960 = vmatprep.subr.mxu0 0.0
        %5961 = vmatpush2.msra.mxu0 0.0
        %5962 = vmatprep.subr.mxu0 0.0
        %5963 = vmatpush2.msra.mxu0 0.0
        %5964 = vmatprep.subr.mxu0 0.0
        %5965 = vmatpush2.msra.mxu0 0.0
        %5966 = vmatprep.subr.mxu0 0.0
        %5967 = vmatpush2.msra.mxu0 0.0
        %5968 = vmatprep.mubr.f32.mxu0 0.0
        %v5969 = vand.u32 %v5587, 4294901760
        %5970 = vmatmul.mubr.f32.gmra.mxu0 %v5969
        %v5971 = vpop.f32.mrf.mxu0
        %v5972 = vadd.f32 %v5895, %v5971
        %v5973 = vpop.f32.mrf.mxu0
        %5974 = vdwg.mxu0
        %5975 = vmatprep.subr.mxu0 0.0
        %5976 = vmatpush1.msra.mxu0 0.0
        %5977 = vmatprep.subr.mxu0 0.0
        %5978 = vmatpush1.msra.mxu0 0.0
        %5979 = vmatprep.subr.mxu0 0.0
        %5980 = vmatpush1.msra.mxu0 0.0
        %5981 = vmatprep.subr.mxu0 0.0
        %5982 = vmatpush1.msra.mxu0 0.0
        %5983 = vmatprep.subr.mxu0 0.0
        %5984 = vmatpush1.msra.mxu0 0.0
        %5985 = vmatprep.subr.mxu0 0.0
        %5986 = vmatpush1.msra.mxu0 0.0
        %5987 = vmatprep.subr.mxu0 0.0
        %5988 = vmatpush1.msra.mxu0 0.0
        %5989 = vmatprep.subr.mxu0 0.0
        %5990 = vmatpush1.msra.mxu0 0.0
        %5991 = vmatprep.subr.mxu0 0.0
        %5992 = vmatpush1.msra.mxu0 0.0
        %5993 = vmatprep.subr.mxu0 0.0
        %5994 = vmatpush1.msra.mxu0 0.0
        %5995 = vmatprep.subr.mxu0 0.0
        %5996 = vmatpush1.msra.mxu0 0.0
        %5997 = vmatprep.subr.mxu0 0.0
        %5998 = vmatpush1.msra.mxu0 0.0
        %5999 = vmatprep.subr.mxu0 0.0
        %6000 = vmatpush1.msra.mxu0 0.0
        %6001 = vmatprep.subr.mxu0 0.0
        %6002 = vmatpush1.msra.mxu0 0.0
        %6003 = vmatprep.subr.mxu0 0.0
        %v6004 = vand.u32 %v3283, 4294901760
        %6005 = vmatpush1.msra.mxu0 %v6004
        %6006 = vmatprep.subr.mxu0 0.0
        %v6007 = vand.u32 %v3276, 4294901760
        %6008 = vmatpush1.msra.mxu0 %v6007
        %6009 = vmatprep.subr.mxu0 0.0
        %6010 = vmatpush2.msra.mxu0 0.0
        %6011 = vmatprep.subr.mxu0 0.0
        %6012 = vmatpush2.msra.mxu0 0.0
        %6013 = vmatprep.subr.mxu0 0.0
        %6014 = vmatpush2.msra.mxu0 0.0
        %6015 = vmatprep.subr.mxu0 0.0
        %6016 = vmatpush2.msra.mxu0 0.0
        %6017 = vmatprep.subr.mxu0 0.0
        %6018 = vmatpush2.msra.mxu0 0.0
        %6019 = vmatprep.subr.mxu0 0.0
        %6020 = vmatpush2.msra.mxu0 0.0
        %6021 = vmatprep.subr.mxu0 0.0
        %6022 = vmatpush2.msra.mxu0 0.0
        %6023 = vmatprep.subr.mxu0 0.0
        %6024 = vmatpush2.msra.mxu0 0.0
        %6025 = vmatprep.subr.mxu0 0.0
        %6026 = vmatpush2.msra.mxu0 0.0
        %6027 = vmatprep.subr.mxu0 0.0
        %6028 = vmatpush2.msra.mxu0 0.0
        %6029 = vmatprep.subr.mxu0 0.0
        %6030 = vmatpush2.msra.mxu0 0.0
        %6031 = vmatprep.subr.mxu0 0.0
        %6032 = vmatpush2.msra.mxu0 0.0
        %6033 = vmatprep.subr.mxu0 0.0
        %6034 = vmatpush2.msra.mxu0 0.0
        %6035 = vmatprep.subr.mxu0 0.0
        %6036 = vmatpush2.msra.mxu0 0.0
        %6037 = vmatprep.subr.mxu0 0.0
        %6038 = vmatpush2.msra.mxu0 0.0
        %6039 = vmatprep.subr.mxu0 0.0
        %6040 = vmatpush2.msra.mxu0 0.0
        %6041 = vmatprep.mubr.f32.mxu0 0.0
        %v6042 = vand.u32 %v5587, 4294901760
        %6043 = vmatmul.mubr.f32.gmra.mxu0 %v6042
        %v6044 = vpop.f32.mrf.mxu0
        %v6045 = vadd.f32 %v5972, %v6044
        %v6046 = vpop.f32.mrf.mxu0
        %6047 = vdwg.mxu0
        %v6048 = vld [vmem:[%s10] sm:$0xff]
        %6050 = vset.pattern.permute.xlu0 0
        %6051 = vperm.xlu0 %6050, %v6048
        %v6052 = vpop.permute.xlu0 %6051
        %v6054 = vadd.f32 %v6045, %v6052
        %v6055 = vmax.f32 %v6054, 0.0
        %v6056 = vld [vmem:[%s11] sm:$0xff]
        %v6057 = vld [vmem:[%s11 + $0x8] sm:$0xff]
        %v6058 = vld [vmem:[%s11 + $0x10] sm:$0xff]
        %v6059 = vld [vmem:[%s11 + $0x18] sm:$0xff]
        %v6060 = vld [vmem:[%s12] sm:$0xff]
        %v6061 = vld [vmem:[%s12 + $0x8] sm:$0xff]
        %v6062 = vld [vmem:[%s12 + $0x10] sm:$0xff]
        %v6063 = vld [vmem:[%s12 + $0x18] sm:$0xff]
        %6065 = vset.pattern.permute.xlu0 0
        %6066 = vperm.xlu0 %6065, %v6060
        %v6067 = vpop.permute.xlu0 %6066
        %6070 = vset.pattern.permute.xlu0 0
        %6071 = vperm.xlu0 %6070, %v6061
        %v6072 = vpop.permute.xlu0 %6071
        %6075 = vset.pattern.permute.xlu0 0
        %6076 = vperm.xlu0 %6075, %v6062
        %v6077 = vpop.permute.xlu0 %6076
        %6080 = vset.pattern.permute.xlu0 0
        %6081 = vperm.xlu0 %6080, %v6063
        %v6082 = vpop.permute.xlu0 %6081
        %vm6084 = vcmask 64512
        %v6086 = vsel %vm6084, %v6056, 0
        %v6089 = vsel %vm6084, %v6057, 0
        %v6092 = vsel %vm6084, %v6058, 0
        %v6095 = vsel %vm6084, %v6059, 0
        %6097 = vmatprep.subr.mxu0 0.0
        %6098 = vmatpush1.msra.mxu0 0.0
        %6099 = vmatprep.subr.mxu0 0.0
        %6100 = vmatpush1.msra.mxu0 0.0
        %6101 = vmatprep.subr.mxu0 0.0
        %6102 = vmatpush1.msra.mxu0 0.0
        %6103 = vmatprep.subr.mxu0 0.0
        %6104 = vmatpush1.msra.mxu0 0.0
        %6105 = vmatprep.subr.mxu0 0.0
        %6106 = vmatpush1.msra.mxu0 0.0
        %6107 = vmatprep.subr.mxu0 0.0
        %6108 = vmatpush1.msra.mxu0 0.0
        %6109 = vmatprep.subr.mxu0 0.0
        %6110 = vmatpush1.msra.mxu0 0.0
        %6111 = vmatprep.subr.mxu0 0.0
        %6112 = vmatpush1.msra.mxu0 0.0
        %6113 = vmatprep.subr.mxu0 0.0
        %6114 = vmatpush1.msra.mxu0 0.0
        %6115 = vmatprep.subr.mxu0 0.0
        %6116 = vmatpush1.msra.mxu0 0.0
        %6117 = vmatprep.subr.mxu0 0.0
        %6118 = vmatpush1.msra.mxu0 0.0
        %6119 = vmatprep.subr.mxu0 0.0
        %6120 = vmatpush1.msra.mxu0 0.0
        %6121 = vmatprep.subr.mxu0 0.0
        %6122 = vmatpush1.msra.mxu0 0.0
        %6123 = vmatprep.subr.mxu0 0.0
        %6124 = vmatpush1.msra.mxu0 0.0
        %6125 = vmatprep.subr.mxu0 0.0
        %6126 = vmatpush1.msra.mxu0 0.0
        %6127 = vmatprep.subr.mxu0 0.0
        %v6128 = vand.u32 %v6055, 4294901760
        %6129 = vmatpush1.msra.mxu0 %v6128
        %6130 = vmatprep.subr.mxu0 0.0
        %6131 = vmatpush2.msra.mxu0 0.0
        %6132 = vmatprep.subr.mxu0 0.0
        %6133 = vmatpush2.msra.mxu0 0.0
        %6134 = vmatprep.subr.mxu0 0.0
        %6135 = vmatpush2.msra.mxu0 0.0
        %6136 = vmatprep.subr.mxu0 0.0
        %6137 = vmatpush2.msra.mxu0 0.0
        %6138 = vmatprep.subr.mxu0 0.0
        %6139 = vmatpush2.msra.mxu0 0.0
        %6140 = vmatprep.subr.mxu0 0.0
        %6141 = vmatpush2.msra.mxu0 0.0
        %6142 = vmatprep.subr.mxu0 0.0
        %6143 = vmatpush2.msra.mxu0 0.0
        %6144 = vmatprep.subr.mxu0 0.0
        %6145 = vmatpush2.msra.mxu0 0.0
        %6146 = vmatprep.subr.mxu0 0.0
        %6147 = vmatpush2.msra.mxu0 0.0
        %6148 = vmatprep.subr.mxu0 0.0
        %6149 = vmatpush2.msra.mxu0 0.0
        %6150 = vmatprep.subr.mxu0 0.0
        %6151 = vmatpush2.msra.mxu0 0.0
        %6152 = vmatprep.subr.mxu0 0.0
        %6153 = vmatpush2.msra.mxu0 0.0
        %6154 = vmatprep.subr.mxu0 0.0
        %6155 = vmatpush2.msra.mxu0 0.0
        %6156 = vmatprep.subr.mxu0 0.0
        %6157 = vmatpush2.msra.mxu0 0.0
        %6158 = vmatprep.subr.mxu0 0.0
        %6159 = vmatpush2.msra.mxu0 0.0
        %6160 = vmatprep.subr.mxu0 0.0
        %6161 = vmatpush2.msra.mxu0 0.0
        %6162 = vmatprep.mubr.f32.mxu0 0.0
        %v6163 = vand.u32 %v6086, 4294901760
        %v6164 = vsub.f32 %v6086, %v6163
        %v6165 = vand.u32 %v6164, 4294901760
        %v6166 = vsub.f32 %v6164, %v6165
        %v6167 = vand.u32 %v6166, 4294901760
        %6168 = vmatmul.mubr.f32.gmra.mxu0 %v6167
        %v6169 = vpop.f32.mrf.mxu0
        %v6170 = vadd.f32 %v6067, %v6169
        %v6171 = vpop.f32.mrf.mxu0
        %6172 = vmatprep.mubr.f32.mxu0 0.0
        %v6173 = vand.u32 %v6089, 4294901760
        %v6174 = vsub.f32 %v6089, %v6173
        %v6175 = vand.u32 %v6174, 4294901760
        %v6176 = vsub.f32 %v6174, %v6175
        %v6177 = vand.u32 %v6176, 4294901760
        %6178 = vmatmul.mubr.f32.gmra.mxu0 %v6177
        %v6179 = vpop.f32.mrf.mxu0
        %v6180 = vadd.f32 %v6072, %v6179
        %v6181 = vpop.f32.mrf.mxu0
        %6182 = vmatprep.mubr.f32.mxu0 0.0
        %v6183 = vand.u32 %v6092, 4294901760
        %v6184 = vsub.f32 %v6092, %v6183
        %v6185 = vand.u32 %v6184, 4294901760
        %v6186 = vsub.f32 %v6184, %v6185
        %v6187 = vand.u32 %v6186, 4294901760
        %6188 = vmatmul.mubr.f32.gmra.mxu0 %v6187
        %v6189 = vpop.f32.mrf.mxu0
        %v6190 = vadd.f32 %v6077, %v6189
        %v6191 = vpop.f32.mrf.mxu0
        %6192 = vmatprep.mubr.f32.mxu0 0.0
        %v6193 = vand.u32 %v6095, 4294901760
        %v6194 = vsub.f32 %v6095, %v6193
        %v6195 = vand.u32 %v6194, 4294901760
        %v6196 = vsub.f32 %v6194, %v6195
        %v6197 = vand.u32 %v6196, 4294901760
        %6198 = vmatmul.mubr.f32.gmra.mxu0 %v6197
        %v6199 = vpop.f32.mrf.mxu0
        %v6200 = vadd.f32 %v6082, %v6199
        %v6201 = vpop.f32.mrf.mxu0
        %6202 = vdwg.mxu0
        %6203 = vmatprep.subr.mxu0 0.0
        %6204 = vmatpush1.msra.mxu0 0.0
        %6205 = vmatprep.subr.mxu0 0.0
        %6206 = vmatpush1.msra.mxu0 0.0
        %6207 = vmatprep.subr.mxu0 0.0
        %6208 = vmatpush1.msra.mxu0 0.0
        %6209 = vmatprep.subr.mxu0 0.0
        %6210 = vmatpush1.msra.mxu0 0.0
        %6211 = vmatprep.subr.mxu0 0.0
        %6212 = vmatpush1.msra.mxu0 0.0
        %6213 = vmatprep.subr.mxu0 0.0
        %6214 = vmatpush1.msra.mxu0 0.0
        %6215 = vmatprep.subr.mxu0 0.0
        %6216 = vmatpush1.msra.mxu0 0.0
        %6217 = vmatprep.subr.mxu0 0.0
        %6218 = vmatpush1.msra.mxu0 0.0
        %6219 = vmatprep.subr.mxu0 0.0
        %6220 = vmatpush1.msra.mxu0 0.0
        %6221 = vmatprep.subr.mxu0 0.0
        %6222 = vmatpush1.msra.mxu0 0.0
        %6223 = vmatprep.subr.mxu0 0.0
        %6224 = vmatpush1.msra.mxu0 0.0
        %6225 = vmatprep.subr.mxu0 0.0
        %6226 = vmatpush1.msra.mxu0 0.0
        %6227 = vmatprep.subr.mxu0 0.0
        %6228 = vmatpush1.msra.mxu0 0.0
        %6229 = vmatprep.subr.mxu0 0.0
        %6230 = vmatpush1.msra.mxu0 0.0
        %6231 = vmatprep.subr.mxu0 0.0
        %6232 = vmatpush1.msra.mxu0 0.0
        %6233 = vmatprep.subr.mxu0 0.0
        %v6234 = vand.u32 %v6055, 4294901760
        %v6235 = vsub.f32 %v6055, %v6234
        %v6236 = vand.u32 %v6235, 4294901760
        %v6237 = vsub.f32 %v6235, %v6236
        %v6238 = vand.u32 %v6237, 4294901760
        %6239 = vmatpush1.msra.mxu0 %v6238
        %6240 = vmatprep.subr.mxu0 0.0
        %6241 = vmatpush2.msra.mxu0 0.0
        %6242 = vmatprep.subr.mxu0 0.0
        %6243 = vmatpush2.msra.mxu0 0.0
        %6244 = vmatprep.subr.mxu0 0.0
        %6245 = vmatpush2.msra.mxu0 0.0
        %6246 = vmatprep.subr.mxu0 0.0
        %6247 = vmatpush2.msra.mxu0 0.0
        %6248 = vmatprep.subr.mxu0 0.0
        %6249 = vmatpush2.msra.mxu0 0.0
        %6250 = vmatprep.subr.mxu0 0.0
        %6251 = vmatpush2.msra.mxu0 0.0
        %6252 = vmatprep.subr.mxu0 0.0
        %6253 = vmatpush2.msra.mxu0 0.0
        %6254 = vmatprep.subr.mxu0 0.0
        %6255 = vmatpush2.msra.mxu0 0.0
        %6256 = vmatprep.subr.mxu0 0.0
        %6257 = vmatpush2.msra.mxu0 0.0
        %6258 = vmatprep.subr.mxu0 0.0
        %6259 = vmatpush2.msra.mxu0 0.0
        %6260 = vmatprep.subr.mxu0 0.0
        %6261 = vmatpush2.msra.mxu0 0.0
        %6262 = vmatprep.subr.mxu0 0.0
        %6263 = vmatpush2.msra.mxu0 0.0
        %6264 = vmatprep.subr.mxu0 0.0
        %6265 = vmatpush2.msra.mxu0 0.0
        %6266 = vmatprep.subr.mxu0 0.0
        %6267 = vmatpush2.msra.mxu0 0.0
        %6268 = vmatprep.subr.mxu0 0.0
        %6269 = vmatpush2.msra.mxu0 0.0
        %6270 = vmatprep.subr.mxu0 0.0
        %6271 = vmatpush2.msra.mxu0 0.0
        %6272 = vmatprep.mubr.f32.mxu0 0.0
        %v6273 = vand.u32 %v6086, 4294901760
        %6274 = vmatmul.mubr.f32.gmra.mxu0 %v6273
        %v6275 = vpop.f32.mrf.mxu0
        %v6276 = vadd.f32 %v6170, %v6275
        %v6277 = vpop.f32.mrf.mxu0
        %6278 = vmatprep.mubr.f32.mxu0 0.0
        %v6279 = vand.u32 %v6089, 4294901760
        %6280 = vmatmul.mubr.f32.gmra.mxu0 %v6279
        %v6281 = vpop.f32.mrf.mxu0
        %v6282 = vadd.f32 %v6180, %v6281
        %v6283 = vpop.f32.mrf.mxu0
        %6284 = vmatprep.mubr.f32.mxu0 0.0
        %v6285 = vand.u32 %v6092, 4294901760
        %6286 = vmatmul.mubr.f32.gmra.mxu0 %v6285
        %v6287 = vpop.f32.mrf.mxu0
        %v6288 = vadd.f32 %v6190, %v6287
        %v6289 = vpop.f32.mrf.mxu0
        %6290 = vmatprep.mubr.f32.mxu0 0.0
        %v6291 = vand.u32 %v6095, 4294901760
        %6292 = vmatmul.mubr.f32.gmra.mxu0 %v6291
        %v6293 = vpop.f32.mrf.mxu0
        %v6294 = vadd.f32 %v6200, %v6293
        %v6295 = vpop.f32.mrf.mxu0
        %6296 = vdwg.mxu0
        %6297 = vmatprep.subr.mxu0 0.0
        %6298 = vmatpush1.msra.mxu0 0.0
        %6299 = vmatprep.subr.mxu0 0.0
        %6300 = vmatpush1.msra.mxu0 0.0
        %6301 = vmatprep.subr.mxu0 0.0
        %6302 = vmatpush1.msra.mxu0 0.0
        %6303 = vmatprep.subr.mxu0 0.0
        %6304 = vmatpush1.msra.mxu0 0.0
        %6305 = vmatprep.subr.mxu0 0.0
        %6306 = vmatpush1.msra.mxu0 0.0
        %6307 = vmatprep.subr.mxu0 0.0
        %6308 = vmatpush1.msra.mxu0 0.0
        %6309 = vmatprep.subr.mxu0 0.0
        %6310 = vmatpush1.msra.mxu0 0.0
        %6311 = vmatprep.subr.mxu0 0.0
        %6312 = vmatpush1.msra.mxu0 0.0
        %6313 = vmatprep.subr.mxu0 0.0
        %6314 = vmatpush1.msra.mxu0 0.0
        %6315 = vmatprep.subr.mxu0 0.0
        %6316 = vmatpush1.msra.mxu0 0.0
        %6317 = vmatprep.subr.mxu0 0.0
        %6318 = vmatpush1.msra.mxu0 0.0
        %6319 = vmatprep.subr.mxu0 0.0
        %6320 = vmatpush1.msra.mxu0 0.0
        %6321 = vmatprep.subr.mxu0 0.0
        %6322 = vmatpush1.msra.mxu0 0.0
        %6323 = vmatprep.subr.mxu0 0.0
        %6324 = vmatpush1.msra.mxu0 0.0
        %6325 = vmatprep.subr.mxu0 0.0
        %6326 = vmatpush1.msra.mxu0 0.0
        %6327 = vmatprep.subr.mxu0 0.0
        %v6328 = vand.u32 %v6055, 4294901760
        %v6329 = vsub.f32 %v6055, %v6328
        %6330 = vmatpush1.msra.mxu0 %v6329
        %6331 = vmatprep.subr.mxu0 0.0
        %6332 = vmatpush2.msra.mxu0 0.0
        %6333 = vmatprep.subr.mxu0 0.0
        %6334 = vmatpush2.msra.mxu0 0.0
        %6335 = vmatprep.subr.mxu0 0.0
        %6336 = vmatpush2.msra.mxu0 0.0
        %6337 = vmatprep.subr.mxu0 0.0
        %6338 = vmatpush2.msra.mxu0 0.0
        %6339 = vmatprep.subr.mxu0 0.0
        %6340 = vmatpush2.msra.mxu0 0.0
        %6341 = vmatprep.subr.mxu0 0.0
        %6342 = vmatpush2.msra.mxu0 0.0
        %6343 = vmatprep.subr.mxu0 0.0
        %6344 = vmatpush2.msra.mxu0 0.0
        %6345 = vmatprep.subr.mxu0 0.0
        %6346 = vmatpush2.msra.mxu0 0.0
        %6347 = vmatprep.subr.mxu0 0.0
        %6348 = vmatpush2.msra.mxu0 0.0
        %6349 = vmatprep.subr.mxu0 0.0
        %6350 = vmatpush2.msra.mxu0 0.0
        %6351 = vmatprep.subr.mxu0 0.0
        %6352 = vmatpush2.msra.mxu0 0.0
        %6353 = vmatprep.subr.mxu0 0.0
        %6354 = vmatpush2.msra.mxu0 0.0
        %6355 = vmatprep.subr.mxu0 0.0
        %6356 = vmatpush2.msra.mxu0 0.0
        %6357 = vmatprep.subr.mxu0 0.0
        %6358 = vmatpush2.msra.mxu0 0.0
        %6359 = vmatprep.subr.mxu0 0.0
        %6360 = vmatpush2.msra.mxu0 0.0
        %6361 = vmatprep.subr.mxu0 0.0
        %6362 = vmatpush2.msra.mxu0 0.0
        %6363 = vmatprep.mubr.f32.mxu0 0.0
        %v6364 = vand.u32 %v6086, 4294901760
        %v6365 = vsub.f32 %v6086, %v6364
        %6366 = vmatmul.mubr.f32.gmra.mxu0 %v6365
        %v6367 = vpop.f32.mrf.mxu0
        %v6368 = vadd.f32 %v6276, %v6367
        %v6369 = vpop.f32.mrf.mxu0
        %6370 = vmatprep.mubr.f32.mxu0 0.0
        %v6371 = vand.u32 %v6089, 4294901760
        %v6372 = vsub.f32 %v6089, %v6371
        %6373 = vmatmul.mubr.f32.gmra.mxu0 %v6372
        %v6374 = vpop.f32.mrf.mxu0
        %v6375 = vadd.f32 %v6282, %v6374
        %v6376 = vpop.f32.mrf.mxu0
        %6377 = vmatprep.mubr.f32.mxu0 0.0
        %v6378 = vand.u32 %v6092, 4294901760
        %v6379 = vsub.f32 %v6092, %v6378
        %6380 = vmatmul.mubr.f32.gmra.mxu0 %v6379
        %v6381 = vpop.f32.mrf.mxu0
        %v6382 = vadd.f32 %v6288, %v6381
        %v6383 = vpop.f32.mrf.mxu0
        %6384 = vmatprep.mubr.f32.mxu0 0.0
        %v6385 = vand.u32 %v6095, 4294901760
        %v6386 = vsub.f32 %v6095, %v6385
        %6387 = vmatmul.mubr.f32.gmra.mxu0 %v6386
        %v6388 = vpop.f32.mrf.mxu0
        %v6389 = vadd.f32 %v6294, %v6388
        %v6390 = vpop.f32.mrf.mxu0
        %6391 = vdwg.mxu0
        %6392 = vmatprep.subr.mxu0 0.0
        %6393 = vmatpush1.msra.mxu0 0.0
        %6394 = vmatprep.subr.mxu0 0.0
        %6395 = vmatpush1.msra.mxu0 0.0
        %6396 = vmatprep.subr.mxu0 0.0
        %6397 = vmatpush1.msra.mxu0 0.0
        %6398 = vmatprep.subr.mxu0 0.0
        %6399 = vmatpush1.msra.mxu0 0.0
        %6400 = vmatprep.subr.mxu0 0.0
        %6401 = vmatpush1.msra.mxu0 0.0
        %6402 = vmatprep.subr.mxu0 0.0
        %6403 = vmatpush1.msra.mxu0 0.0
        %6404 = vmatprep.subr.mxu0 0.0
        %6405 = vmatpush1.msra.mxu0 0.0
        %6406 = vmatprep.subr.mxu0 0.0
        %6407 = vmatpush1.msra.mxu0 0.0
        %6408 = vmatprep.subr.mxu0 0.0
        %6409 = vmatpush1.msra.mxu0 0.0
        %6410 = vmatprep.subr.mxu0 0.0
        %6411 = vmatpush1.msra.mxu0 0.0
        %6412 = vmatprep.subr.mxu0 0.0
        %6413 = vmatpush1.msra.mxu0 0.0
        %6414 = vmatprep.subr.mxu0 0.0
        %6415 = vmatpush1.msra.mxu0 0.0
        %6416 = vmatprep.subr.mxu0 0.0
        %6417 = vmatpush1.msra.mxu0 0.0
        %6418 = vmatprep.subr.mxu0 0.0
        %6419 = vmatpush1.msra.mxu0 0.0
        %6420 = vmatprep.subr.mxu0 0.0
        %6421 = vmatpush1.msra.mxu0 0.0
        %6422 = vmatprep.subr.mxu0 0.0
        %v6423 = vand.u32 %v6055, 4294901760
        %6424 = vmatpush1.msra.mxu0 %v6423
        %6425 = vmatprep.subr.mxu0 0.0
        %6426 = vmatpush2.msra.mxu0 0.0
        %6427 = vmatprep.subr.mxu0 0.0
        %6428 = vmatpush2.msra.mxu0 0.0
        %6429 = vmatprep.subr.mxu0 0.0
        %6430 = vmatpush2.msra.mxu0 0.0
        %6431 = vmatprep.subr.mxu0 0.0
        %6432 = vmatpush2.msra.mxu0 0.0
        %6433 = vmatprep.subr.mxu0 0.0
        %6434 = vmatpush2.msra.mxu0 0.0
        %6435 = vmatprep.subr.mxu0 0.0
        %6436 = vmatpush2.msra.mxu0 0.0
        %6437 = vmatprep.subr.mxu0 0.0
        %6438 = vmatpush2.msra.mxu0 0.0
        %6439 = vmatprep.subr.mxu0 0.0
        %6440 = vmatpush2.msra.mxu0 0.0
        %6441 = vmatprep.subr.mxu0 0.0
        %6442 = vmatpush2.msra.mxu0 0.0
        %6443 = vmatprep.subr.mxu0 0.0
        %6444 = vmatpush2.msra.mxu0 0.0
        %6445 = vmatprep.subr.mxu0 0.0
        %6446 = vmatpush2.msra.mxu0 0.0
        %6447 = vmatprep.subr.mxu0 0.0
        %6448 = vmatpush2.msra.mxu0 0.0
        %6449 = vmatprep.subr.mxu0 0.0
        %6450 = vmatpush2.msra.mxu0 0.0
        %6451 = vmatprep.subr.mxu0 0.0
        %6452 = vmatpush2.msra.mxu0 0.0
        %6453 = vmatprep.subr.mxu0 0.0
        %6454 = vmatpush2.msra.mxu0 0.0
        %6455 = vmatprep.subr.mxu0 0.0
        %6456 = vmatpush2.msra.mxu0 0.0
        %6457 = vmatprep.mubr.f32.mxu0 0.0
        %v6458 = vand.u32 %v6086, 4294901760
        %v6459 = vsub.f32 %v6086, %v6458
        %v6460 = vand.u32 %v6459, 4294901760
        %6461 = vmatmul.mubr.f32.gmra.mxu0 %v6460
        %v6462 = vpop.f32.mrf.mxu0
        %v6463 = vadd.f32 %v6368, %v6462
        %v6464 = vpop.f32.mrf.mxu0
        %6465 = vmatprep.mubr.f32.mxu0 0.0
        %v6466 = vand.u32 %v6089, 4294901760
        %v6467 = vsub.f32 %v6089, %v6466
        %v6468 = vand.u32 %v6467, 4294901760
        %6469 = vmatmul.mubr.f32.gmra.mxu0 %v6468
        %v6470 = vpop.f32.mrf.mxu0
        %v6471 = vadd.f32 %v6375, %v6470
        %v6472 = vpop.f32.mrf.mxu0
        %6473 = vmatprep.mubr.f32.mxu0 0.0
        %v6474 = vand.u32 %v6092, 4294901760
        %v6475 = vsub.f32 %v6092, %v6474
        %v6476 = vand.u32 %v6475, 4294901760
        %6477 = vmatmul.mubr.f32.gmra.mxu0 %v6476
        %v6478 = vpop.f32.mrf.mxu0
        %v6479 = vadd.f32 %v6382, %v6478
        %v6480 = vpop.f32.mrf.mxu0
        %6481 = vmatprep.mubr.f32.mxu0 0.0
        %v6482 = vand.u32 %v6095, 4294901760
        %v6483 = vsub.f32 %v6095, %v6482
        %v6484 = vand.u32 %v6483, 4294901760
        %6485 = vmatmul.mubr.f32.gmra.mxu0 %v6484
        %v6486 = vpop.f32.mrf.mxu0
        %v6487 = vadd.f32 %v6389, %v6486
        %v6488 = vpop.f32.mrf.mxu0
        %6489 = vdwg.mxu0
        %6490 = vmatprep.subr.mxu0 0.0
        %6491 = vmatpush1.msra.mxu0 0.0
        %6492 = vmatprep.subr.mxu0 0.0
        %6493 = vmatpush1.msra.mxu0 0.0
        %6494 = vmatprep.subr.mxu0 0.0
        %6495 = vmatpush1.msra.mxu0 0.0
        %6496 = vmatprep.subr.mxu0 0.0
        %6497 = vmatpush1.msra.mxu0 0.0
        %6498 = vmatprep.subr.mxu0 0.0
        %6499 = vmatpush1.msra.mxu0 0.0
        %6500 = vmatprep.subr.mxu0 0.0
        %6501 = vmatpush1.msra.mxu0 0.0
        %6502 = vmatprep.subr.mxu0 0.0
        %6503 = vmatpush1.msra.mxu0 0.0
        %6504 = vmatprep.subr.mxu0 0.0
        %6505 = vmatpush1.msra.mxu0 0.0
        %6506 = vmatprep.subr.mxu0 0.0
        %6507 = vmatpush1.msra.mxu0 0.0
        %6508 = vmatprep.subr.mxu0 0.0
        %6509 = vmatpush1.msra.mxu0 0.0
        %6510 = vmatprep.subr.mxu0 0.0
        %6511 = vmatpush1.msra.mxu0 0.0
        %6512 = vmatprep.subr.mxu0 0.0
        %6513 = vmatpush1.msra.mxu0 0.0
        %6514 = vmatprep.subr.mxu0 0.0
        %6515 = vmatpush1.msra.mxu0 0.0
        %6516 = vmatprep.subr.mxu0 0.0
        %6517 = vmatpush1.msra.mxu0 0.0
        %6518 = vmatprep.subr.mxu0 0.0
        %6519 = vmatpush1.msra.mxu0 0.0
        %6520 = vmatprep.subr.mxu0 0.0
        %v6521 = vand.u32 %v6055, 4294901760
        %v6522 = vsub.f32 %v6055, %v6521
        %v6523 = vand.u32 %v6522, 4294901760
        %6524 = vmatpush1.msra.mxu0 %v6523
        %6525 = vmatprep.subr.mxu0 0.0
        %6526 = vmatpush2.msra.mxu0 0.0
        %6527 = vmatprep.subr.mxu0 0.0
        %6528 = vmatpush2.msra.mxu0 0.0
        %6529 = vmatprep.subr.mxu0 0.0
        %6530 = vmatpush2.msra.mxu0 0.0
        %6531 = vmatprep.subr.mxu0 0.0
        %6532 = vmatpush2.msra.mxu0 0.0
        %6533 = vmatprep.subr.mxu0 0.0
        %6534 = vmatpush2.msra.mxu0 0.0
        %6535 = vmatprep.subr.mxu0 0.0
        %6536 = vmatpush2.msra.mxu0 0.0
        %6537 = vmatprep.subr.mxu0 0.0
        %6538 = vmatpush2.msra.mxu0 0.0
        %6539 = vmatprep.subr.mxu0 0.0
        %6540 = vmatpush2.msra.mxu0 0.0
        %6541 = vmatprep.subr.mxu0 0.0
        %6542 = vmatpush2.msra.mxu0 0.0
        %6543 = vmatprep.subr.mxu0 0.0
        %6544 = vmatpush2.msra.mxu0 0.0
        %6545 = vmatprep.subr.mxu0 0.0
        %6546 = vmatpush2.msra.mxu0 0.0
        %6547 = vmatprep.subr.mxu0 0.0
        %6548 = vmatpush2.msra.mxu0 0.0
        %6549 = vmatprep.subr.mxu0 0.0
        %6550 = vmatpush2.msra.mxu0 0.0
        %6551 = vmatprep.subr.mxu0 0.0
        %6552 = vmatpush2.msra.mxu0 0.0
        %6553 = vmatprep.subr.mxu0 0.0
        %6554 = vmatpush2.msra.mxu0 0.0
        %6555 = vmatprep.subr.mxu0 0.0
        %6556 = vmatpush2.msra.mxu0 0.0
        %6557 = vmatprep.mubr.f32.mxu0 0.0
        %v6558 = vand.u32 %v6086, 4294901760
        %6559 = vmatmul.mubr.f32.gmra.mxu0 %v6558
        %v6560 = vpop.f32.mrf.mxu0
        %v6561 = vadd.f32 %v6463, %v6560
        %v6562 = vpop.f32.mrf.mxu0
        %6563 = vmatprep.mubr.f32.mxu0 0.0
        %v6564 = vand.u32 %v6089, 4294901760
        %6565 = vmatmul.mubr.f32.gmra.mxu0 %v6564
        %v6566 = vpop.f32.mrf.mxu0
        %v6567 = vadd.f32 %v6471, %v6566
        %v6568 = vpop.f32.mrf.mxu0
        %6569 = vmatprep.mubr.f32.mxu0 0.0
        %v6570 = vand.u32 %v6092, 4294901760
        %6571 = vmatmul.mubr.f32.gmra.mxu0 %v6570
        %v6572 = vpop.f32.mrf.mxu0
        %v6573 = vadd.f32 %v6479, %v6572
        %v6574 = vpop.f32.mrf.mxu0
        %6575 = vmatprep.mubr.f32.mxu0 0.0
        %v6576 = vand.u32 %v6095, 4294901760
        %6577 = vmatmul.mubr.f32.gmra.mxu0 %v6576
        %v6578 = vpop.f32.mrf.mxu0
        %v6579 = vadd.f32 %v6487, %v6578
        %v6580 = vpop.f32.mrf.mxu0
        %6581 = vdwg.mxu0
        %6582 = vmatprep.subr.mxu0 0.0
        %6583 = vmatpush1.msra.mxu0 0.0
        %6584 = vmatprep.subr.mxu0 0.0
        %6585 = vmatpush1.msra.mxu0 0.0
        %6586 = vmatprep.subr.mxu0 0.0
        %6587 = vmatpush1.msra.mxu0 0.0
        %6588 = vmatprep.subr.mxu0 0.0
        %6589 = vmatpush1.msra.mxu0 0.0
        %6590 = vmatprep.subr.mxu0 0.0
        %6591 = vmatpush1.msra.mxu0 0.0
        %6592 = vmatprep.subr.mxu0 0.0
        %6593 = vmatpush1.msra.mxu0 0.0
        %6594 = vmatprep.subr.mxu0 0.0
        %6595 = vmatpush1.msra.mxu0 0.0
        %6596 = vmatprep.subr.mxu0 0.0
        %6597 = vmatpush1.msra.mxu0 0.0
        %6598 = vmatprep.subr.mxu0 0.0
        %6599 = vmatpush1.msra.mxu0 0.0
        %6600 = vmatprep.subr.mxu0 0.0
        %6601 = vmatpush1.msra.mxu0 0.0
        %6602 = vmatprep.subr.mxu0 0.0
        %6603 = vmatpush1.msra.mxu0 0.0
        %6604 = vmatprep.subr.mxu0 0.0
        %6605 = vmatpush1.msra.mxu0 0.0
        %6606 = vmatprep.subr.mxu0 0.0
        %6607 = vmatpush1.msra.mxu0 0.0
        %6608 = vmatprep.subr.mxu0 0.0
        %6609 = vmatpush1.msra.mxu0 0.0
        %6610 = vmatprep.subr.mxu0 0.0
        %6611 = vmatpush1.msra.mxu0 0.0
        %6612 = vmatprep.subr.mxu0 0.0
        %v6613 = vand.u32 %v6055, 4294901760
        %6614 = vmatpush1.msra.mxu0 %v6613
        %6615 = vmatprep.subr.mxu0 0.0
        %6616 = vmatpush2.msra.mxu0 0.0
        %6617 = vmatprep.subr.mxu0 0.0
        %6618 = vmatpush2.msra.mxu0 0.0
        %6619 = vmatprep.subr.mxu0 0.0
        %6620 = vmatpush2.msra.mxu0 0.0
        %6621 = vmatprep.subr.mxu0 0.0
        %6622 = vmatpush2.msra.mxu0 0.0
        %6623 = vmatprep.subr.mxu0 0.0
        %6624 = vmatpush2.msra.mxu0 0.0
        %6625 = vmatprep.subr.mxu0 0.0
        %6626 = vmatpush2.msra.mxu0 0.0
        %6627 = vmatprep.subr.mxu0 0.0
        %6628 = vmatpush2.msra.mxu0 0.0
        %6629 = vmatprep.subr.mxu0 0.0
        %6630 = vmatpush2.msra.mxu0 0.0
        %6631 = vmatprep.subr.mxu0 0.0
        %6632 = vmatpush2.msra.mxu0 0.0
        %6633 = vmatprep.subr.mxu0 0.0
        %6634 = vmatpush2.msra.mxu0 0.0
        %6635 = vmatprep.subr.mxu0 0.0
        %6636 = vmatpush2.msra.mxu0 0.0
        %6637 = vmatprep.subr.mxu0 0.0
        %6638 = vmatpush2.msra.mxu0 0.0
        %6639 = vmatprep.subr.mxu0 0.0
        %6640 = vmatpush2.msra.mxu0 0.0
        %6641 = vmatprep.subr.mxu0 0.0
        %6642 = vmatpush2.msra.mxu0 0.0
        %6643 = vmatprep.subr.mxu0 0.0
        %6644 = vmatpush2.msra.mxu0 0.0
        %6645 = vmatprep.subr.mxu0 0.0
        %6646 = vmatpush2.msra.mxu0 0.0
        %6647 = vmatprep.mubr.f32.mxu0 0.0
        %v6648 = vand.u32 %v6086, 4294901760
        %6649 = vmatmul.mubr.f32.gmra.mxu0 %v6648
        %v6650 = vpop.f32.mrf.mxu0
        %v6651 = vadd.f32 %v6561, %v6650
        %v6652 = vpop.f32.mrf.mxu0
        %6653 = vmatprep.mubr.f32.mxu0 0.0
        %v6654 = vand.u32 %v6089, 4294901760
        %6655 = vmatmul.mubr.f32.gmra.mxu0 %v6654
        %v6656 = vpop.f32.mrf.mxu0
        %v6657 = vadd.f32 %v6567, %v6656
        %v6658 = vpop.f32.mrf.mxu0
        %6659 = vmatprep.mubr.f32.mxu0 0.0
        %v6660 = vand.u32 %v6092, 4294901760
        %6661 = vmatmul.mubr.f32.gmra.mxu0 %v6660
        %v6662 = vpop.f32.mrf.mxu0
        %v6663 = vadd.f32 %v6573, %v6662
        %v6664 = vpop.f32.mrf.mxu0
        %6665 = vmatprep.mubr.f32.mxu0 0.0
        %v6666 = vand.u32 %v6095, 4294901760
        %6667 = vmatmul.mubr.f32.gmra.mxu0 %v6666
        %v6668 = vpop.f32.mrf.mxu0
        %v6669 = vadd.f32 %v6579, %v6668
        %v6670 = vpop.f32.mrf.mxu0
        %6671 = vdwg.mxu0
        %v6672 = vmax.f32 %v6651, 0.0
        %v6673 = vmax.f32 %v6657, 0.0
        %v6674 = vmax.f32 %v6663, 0.0
        %v6675 = vmax.f32 %v6669, 0.0
        %v6676 = vmin.f32 %v6672, 1.0
        %v6677 = vmin.f32 %v6673, 1.0
        %v6678 = vmin.f32 %v6674, 1.0
        %v6679 = vmin.f32 %v6675, 1.0
        %v6680 = vld [vmem:[%s2] sm:$0xff]
        %v6682 = vcombine.high %v6680, %v6680
        %v6684 = vunpack.c.l.s4 1983009808
        %v6685 = vunpack.c.0.s8 %v6684
        %v6686 = vlaneseq
        %v6687 = vshrl.u32 %v6686, 7
        %v6688 = vsub.s32 %v6685, %v6687
        %v6689 = vrot.slane %v6680, %v6688
        %v6691 = vunpack.c.l.s4 1983009808
        %v6692 = vunpack.c.0.s8 %v6691
        %v6693 = vlaneseq
        %v6694 = vshrl.u32 %v6693, 7
        %v6695 = vsub.s32 %v6692, %v6694
        %v6696 = vrot.slane %v6682, %v6695
        %v6697 = vcombine.high %v6689, %v6689
        %v6698 = vcombine.high %v6696, %v6696
        %vm6699 = vcmask 15360
        %v6701 = vsel %vm6699, %v6676, 0
        %v6704 = vsel %vm6699, %v6677, 0
        %vm6706 = vcmask 1041408
        %v6707 = vsel %vm6706, %v6689, 0
        %v6709 = vsel %vm6706, %v6697, 0
        %v6711 = vsel %vm6706, %v6696, 0
        %v6713 = vsel %vm6706, %v6698, 0
        %6715 = vmatprep.subr.mxu0 0.0
        %6716 = vmatpush1.msra.mxu0 0.0
        %6717 = vmatprep.subr.mxu0 0.0
        %6718 = vmatpush1.msra.mxu0 0.0
        %6719 = vmatprep.subr.mxu0 0.0
        %6720 = vmatpush1.msra.mxu0 0.0
        %6721 = vmatprep.subr.mxu0 0.0
        %6722 = vmatpush1.msra.mxu0 0.0
        %6723 = vmatprep.subr.mxu0 0.0
        %6724 = vmatpush1.msra.mxu0 0.0
        %6725 = vmatprep.subr.mxu0 0.0
        %6726 = vmatpush1.msra.mxu0 0.0
        %6727 = vmatprep.subr.mxu0 0.0
        %6728 = vmatpush1.msra.mxu0 0.0
        %6729 = vmatprep.subr.mxu0 0.0
        %6730 = vmatpush1.msra.mxu0 0.0
        %6731 = vmatprep.subr.mxu0 0.0
        %6732 = vmatpush1.msra.mxu0 0.0
        %6733 = vmatprep.subr.mxu0 0.0
        %6734 = vmatpush1.msra.mxu0 0.0
        %6735 = vmatprep.subr.mxu0 0.0
        %6736 = vmatpush1.msra.mxu0 0.0
        %6737 = vmatprep.subr.mxu0 0.0
        %6738 = vmatpush1.msra.mxu0 0.0
        %6739 = vmatprep.subr.mxu0 0.0
        %6740 = vmatpush1.msra.mxu0 0.0
        %6741 = vmatprep.subr.mxu0 0.0
        %6742 = vmatpush1.msra.mxu0 0.0
        %6743 = vmatprep.subr.mxu0 0.0
        %6744 = vmatpush1.msra.mxu0 0.0
        %v6745 = vand.u32 %v6709, 4294901760
        %6746 = vmatprep.subr.mxu0 %v6745
        %v6747 = vand.u32 %v6707, 4294901760
        %6748 = vmatpush1.msra.mxu0 %v6747
        %6749 = vmatprep.subr.mxu0 0.0
        %6750 = vmatpush2.msra.mxu0 0.0
        %6751 = vmatprep.subr.mxu0 0.0
        %6752 = vmatpush2.msra.mxu0 0.0
        %6753 = vmatprep.subr.mxu0 0.0
        %6754 = vmatpush2.msra.mxu0 0.0
        %6755 = vmatprep.subr.mxu0 0.0
        %6756 = vmatpush2.msra.mxu0 0.0
        %6757 = vmatprep.subr.mxu0 0.0
        %6758 = vmatpush2.msra.mxu0 0.0
        %6759 = vmatprep.subr.mxu0 0.0
        %6760 = vmatpush2.msra.mxu0 0.0
        %6761 = vmatprep.subr.mxu0 0.0
        %6762 = vmatpush2.msra.mxu0 0.0
        %6763 = vmatprep.subr.mxu0 0.0
        %6764 = vmatpush2.msra.mxu0 0.0
        %6765 = vmatprep.subr.mxu0 0.0
        %6766 = vmatpush2.msra.mxu0 0.0
        %6767 = vmatprep.subr.mxu0 0.0
        %6768 = vmatpush2.msra.mxu0 0.0
        %6769 = vmatprep.subr.mxu0 0.0
        %6770 = vmatpush2.msra.mxu0 0.0
        %6771 = vmatprep.subr.mxu0 0.0
        %6772 = vmatpush2.msra.mxu0 0.0
        %6773 = vmatprep.subr.mxu0 0.0
        %6774 = vmatpush2.msra.mxu0 0.0
        %6775 = vmatprep.subr.mxu0 0.0
        %6776 = vmatpush2.msra.mxu0 0.0
        %6777 = vmatprep.subr.mxu0 0.0
        %6778 = vmatpush2.msra.mxu0 0.0
        %6779 = vmatprep.subr.mxu0 0.0
        %6780 = vmatpush2.msra.mxu0 0.0
        %6781 = vmatprep.mubr.f32.mxu0 0.0
        %v6782 = vand.u32 %v6701, 4294901760
        %v6783 = vsub.f32 %v6701, %v6782
        %v6784 = vand.u32 %v6783, 4294901760
        %v6785 = vsub.f32 %v6783, %v6784
        %v6786 = vand.u32 %v6785, 4294901760
        %6787 = vmatmul.mubr.f32.gmra.mxu0 %v6786
        %v6788 = vpop.f32.mrf.mxu0
        %v6789 = vadd.f32 0.0, %v6788
        %v6790 = vpop.f32.mrf.mxu0
        %v6791 = vadd.f32 0.0, %v6790
        %6792 = vmatprep.mubr.f32.mxu0 0.0
        %v6793 = vand.u32 %v6704, 4294901760
        %v6794 = vsub.f32 %v6704, %v6793
        %v6795 = vand.u32 %v6794, 4294901760
        %v6796 = vsub.f32 %v6794, %v6795
        %v6797 = vand.u32 %v6796, 4294901760
        %6798 = vmatmul.mubr.f32.gmra.mxu0 %v6797
        %v6799 = vpop.f32.mrf.mxu0
        %v6800 = vadd.f32 0.0, %v6799
        %v6801 = vpop.f32.mrf.mxu0
        %v6802 = vadd.f32 0.0, %v6801
        %6803 = vdwg.mxu0
        %6804 = vmatprep.subr.mxu0 0.0
        %6805 = vmatpush1.msra.mxu0 0.0
        %6806 = vmatprep.subr.mxu0 0.0
        %6807 = vmatpush1.msra.mxu0 0.0
        %6808 = vmatprep.subr.mxu0 0.0
        %6809 = vmatpush1.msra.mxu0 0.0
        %6810 = vmatprep.subr.mxu0 0.0
        %6811 = vmatpush1.msra.mxu0 0.0
        %6812 = vmatprep.subr.mxu0 0.0
        %6813 = vmatpush1.msra.mxu0 0.0
        %6814 = vmatprep.subr.mxu0 0.0
        %6815 = vmatpush1.msra.mxu0 0.0
        %6816 = vmatprep.subr.mxu0 0.0
        %6817 = vmatpush1.msra.mxu0 0.0
        %6818 = vmatprep.subr.mxu0 0.0
        %6819 = vmatpush1.msra.mxu0 0.0
        %6820 = vmatprep.subr.mxu0 0.0
        %6821 = vmatpush1.msra.mxu0 0.0
        %6822 = vmatprep.subr.mxu0 0.0
        %6823 = vmatpush1.msra.mxu0 0.0
        %6824 = vmatprep.subr.mxu0 0.0
        %6825 = vmatpush1.msra.mxu0 0.0
        %6826 = vmatprep.subr.mxu0 0.0
        %6827 = vmatpush1.msra.mxu0 0.0
        %6828 = vmatprep.subr.mxu0 0.0
        %6829 = vmatpush1.msra.mxu0 0.0
        %6830 = vmatprep.subr.mxu0 0.0
        %6831 = vmatpush1.msra.mxu0 0.0
        %6832 = vmatprep.subr.mxu0 0.0
        %6833 = vmatpush1.msra.mxu0 0.0
        %v6834 = vand.u32 %v6709, 4294901760
        %v6835 = vsub.f32 %v6709, %v6834
        %v6836 = vand.u32 %v6835, 4294901760
        %v6837 = vsub.f32 %v6835, %v6836
        %v6838 = vand.u32 %v6837, 4294901760
        %6839 = vmatprep.subr.mxu0 %v6838
        %v6840 = vand.u32 %v6707, 4294901760
        %v6841 = vsub.f32 %v6707, %v6840
        %v6842 = vand.u32 %v6841, 4294901760
        %v6843 = vsub.f32 %v6841, %v6842
        %v6844 = vand.u32 %v6843, 4294901760
        %6845 = vmatpush1.msra.mxu0 %v6844
        %6846 = vmatprep.subr.mxu0 0.0
        %6847 = vmatpush2.msra.mxu0 0.0
        %6848 = vmatprep.subr.mxu0 0.0
        %6849 = vmatpush2.msra.mxu0 0.0
        %6850 = vmatprep.subr.mxu0 0.0
        %6851 = vmatpush2.msra.mxu0 0.0
        %6852 = vmatprep.subr.mxu0 0.0
        %6853 = vmatpush2.msra.mxu0 0.0
        %6854 = vmatprep.subr.mxu0 0.0
        %6855 = vmatpush2.msra.mxu0 0.0
        %6856 = vmatprep.subr.mxu0 0.0
        %6857 = vmatpush2.msra.mxu0 0.0
        %6858 = vmatprep.subr.mxu0 0.0
        %6859 = vmatpush2.msra.mxu0 0.0
        %6860 = vmatprep.subr.mxu0 0.0
        %6861 = vmatpush2.msra.mxu0 0.0
        %6862 = vmatprep.subr.mxu0 0.0
        %6863 = vmatpush2.msra.mxu0 0.0
        %6864 = vmatprep.subr.mxu0 0.0
        %6865 = vmatpush2.msra.mxu0 0.0
        %6866 = vmatprep.subr.mxu0 0.0
        %6867 = vmatpush2.msra.mxu0 0.0
        %6868 = vmatprep.subr.mxu0 0.0
        %6869 = vmatpush2.msra.mxu0 0.0
        %6870 = vmatprep.subr.mxu0 0.0
        %6871 = vmatpush2.msra.mxu0 0.0
        %6872 = vmatprep.subr.mxu0 0.0
        %6873 = vmatpush2.msra.mxu0 0.0
        %6874 = vmatprep.subr.mxu0 0.0
        %6875 = vmatpush2.msra.mxu0 0.0
        %6876 = vmatprep.subr.mxu0 0.0
        %6877 = vmatpush2.msra.mxu0 0.0
        %6878 = vmatprep.mubr.f32.mxu0 0.0
        %v6879 = vand.u32 %v6701, 4294901760
        %6880 = vmatmul.mubr.f32.gmra.mxu0 %v6879
        %v6881 = vpop.f32.mrf.mxu0
        %v6882 = vadd.f32 %v6789, %v6881
        %v6883 = vpop.f32.mrf.mxu0
        %v6884 = vadd.f32 %v6791, %v6883
        %6885 = vmatprep.mubr.f32.mxu0 0.0
        %v6886 = vand.u32 %v6704, 4294901760
        %6887 = vmatmul.mubr.f32.gmra.mxu0 %v6886
        %v6888 = vpop.f32.mrf.mxu0
        %v6889 = vadd.f32 %v6800, %v6888
        %v6890 = vpop.f32.mrf.mxu0
        %v6891 = vadd.f32 %v6802, %v6890
        %6892 = vdwg.mxu0
        %6893 = vmatprep.subr.mxu0 0.0
        %6894 = vmatpush1.msra.mxu0 0.0
        %6895 = vmatprep.subr.mxu0 0.0
        %6896 = vmatpush1.msra.mxu0 0.0
        %6897 = vmatprep.subr.mxu0 0.0
        %6898 = vmatpush1.msra.mxu0 0.0
        %6899 = vmatprep.subr.mxu0 0.0
        %6900 = vmatpush1.msra.mxu0 0.0
        %6901 = vmatprep.subr.mxu0 0.0
        %6902 = vmatpush1.msra.mxu0 0.0
        %6903 = vmatprep.subr.mxu0 0.0
        %6904 = vmatpush1.msra.mxu0 0.0
        %6905 = vmatprep.subr.mxu0 0.0
        %6906 = vmatpush1.msra.mxu0 0.0
        %6907 = vmatprep.subr.mxu0 0.0
        %6908 = vmatpush1.msra.mxu0 0.0
        %6909 = vmatprep.subr.mxu0 0.0
        %6910 = vmatpush1.msra.mxu0 0.0
        %6911 = vmatprep.subr.mxu0 0.0
        %6912 = vmatpush1.msra.mxu0 0.0
        %6913 = vmatprep.subr.mxu0 0.0
        %6914 = vmatpush1.msra.mxu0 0.0
        %6915 = vmatprep.subr.mxu0 0.0
        %6916 = vmatpush1.msra.mxu0 0.0
        %6917 = vmatprep.subr.mxu0 0.0
        %6918 = vmatpush1.msra.mxu0 0.0
        %6919 = vmatprep.subr.mxu0 0.0
        %6920 = vmatpush1.msra.mxu0 0.0
        %6921 = vmatprep.subr.mxu0 0.0
        %6922 = vmatpush1.msra.mxu0 0.0
        %v6923 = vand.u32 %v6709, 4294901760
        %v6924 = vsub.f32 %v6709, %v6923
        %6925 = vmatprep.subr.mxu0 %v6924
        %v6926 = vand.u32 %v6707, 4294901760
        %v6927 = vsub.f32 %v6707, %v6926
        %6928 = vmatpush1.msra.mxu0 %v6927
        %6929 = vmatprep.subr.mxu0 0.0
        %6930 = vmatpush2.msra.mxu0 0.0
        %6931 = vmatprep.subr.mxu0 0.0
        %6932 = vmatpush2.msra.mxu0 0.0
        %6933 = vmatprep.subr.mxu0 0.0
        %6934 = vmatpush2.msra.mxu0 0.0
        %6935 = vmatprep.subr.mxu0 0.0
        %6936 = vmatpush2.msra.mxu0 0.0
        %6937 = vmatprep.subr.mxu0 0.0
        %6938 = vmatpush2.msra.mxu0 0.0
        %6939 = vmatprep.subr.mxu0 0.0
        %6940 = vmatpush2.msra.mxu0 0.0
        %6941 = vmatprep.subr.mxu0 0.0
        %6942 = vmatpush2.msra.mxu0 0.0
        %6943 = vmatprep.subr.mxu0 0.0
        %6944 = vmatpush2.msra.mxu0 0.0
        %6945 = vmatprep.subr.mxu0 0.0
        %6946 = vmatpush2.msra.mxu0 0.0
        %6947 = vmatprep.subr.mxu0 0.0
        %6948 = vmatpush2.msra.mxu0 0.0
        %6949 = vmatprep.subr.mxu0 0.0
        %6950 = vmatpush2.msra.mxu0 0.0
        %6951 = vmatprep.subr.mxu0 0.0
        %6952 = vmatpush2.msra.mxu0 0.0
        %6953 = vmatprep.subr.mxu0 0.0
        %6954 = vmatpush2.msra.mxu0 0.0
        %6955 = vmatprep.subr.mxu0 0.0
        %6956 = vmatpush2.msra.mxu0 0.0
        %6957 = vmatprep.subr.mxu0 0.0
        %6958 = vmatpush2.msra.mxu0 0.0
        %6959 = vmatprep.subr.mxu0 0.0
        %6960 = vmatpush2.msra.mxu0 0.0
        %6961 = vmatprep.mubr.f32.mxu0 0.0
        %v6962 = vand.u32 %v6701, 4294901760
        %v6963 = vsub.f32 %v6701, %v6962
        %6964 = vmatmul.mubr.f32.gmra.mxu0 %v6963
        %v6965 = vpop.f32.mrf.mxu0
        %v6966 = vadd.f32 %v6882, %v6965
        %v6967 = vpop.f32.mrf.mxu0
        %v6968 = vadd.f32 %v6884, %v6967
        %6969 = vmatprep.mubr.f32.mxu0 0.0
        %v6970 = vand.u32 %v6704, 4294901760
        %v6971 = vsub.f32 %v6704, %v6970
        %6972 = vmatmul.mubr.f32.gmra.mxu0 %v6971
        %v6973 = vpop.f32.mrf.mxu0
        %v6974 = vadd.f32 %v6889, %v6973
        %v6975 = vpop.f32.mrf.mxu0
        %v6976 = vadd.f32 %v6891, %v6975
        %6977 = vdwg.mxu0
        %6978 = vmatprep.subr.mxu0 0.0
        %6979 = vmatpush1.msra.mxu0 0.0
        %6980 = vmatprep.subr.mxu0 0.0
        %6981 = vmatpush1.msra.mxu0 0.0
        %6982 = vmatprep.subr.mxu0 0.0
        %6983 = vmatpush1.msra.mxu0 0.0
        %6984 = vmatprep.subr.mxu0 0.0
        %6985 = vmatpush1.msra.mxu0 0.0
        %6986 = vmatprep.subr.mxu0 0.0
        %6987 = vmatpush1.msra.mxu0 0.0
        %6988 = vmatprep.subr.mxu0 0.0
        %6989 = vmatpush1.msra.mxu0 0.0
        %6990 = vmatprep.subr.mxu0 0.0
        %6991 = vmatpush1.msra.mxu0 0.0
        %6992 = vmatprep.subr.mxu0 0.0
        %6993 = vmatpush1.msra.mxu0 0.0
        %6994 = vmatprep.subr.mxu0 0.0
        %6995 = vmatpush1.msra.mxu0 0.0
        %6996 = vmatprep.subr.mxu0 0.0
        %6997 = vmatpush1.msra.mxu0 0.0
        %6998 = vmatprep.subr.mxu0 0.0
        %6999 = vmatpush1.msra.mxu0 0.0
        %7000 = vmatprep.subr.mxu0 0.0
        %7001 = vmatpush1.msra.mxu0 0.0
        %7002 = vmatprep.subr.mxu0 0.0
        %7003 = vmatpush1.msra.mxu0 0.0
        %7004 = vmatprep.subr.mxu0 0.0
        %7005 = vmatpush1.msra.mxu0 0.0
        %7006 = vmatprep.subr.mxu0 0.0
        %7007 = vmatpush1.msra.mxu0 0.0
        %v7008 = vand.u32 %v6709, 4294901760
        %7009 = vmatprep.subr.mxu0 %v7008
        %v7010 = vand.u32 %v6707, 4294901760
        %7011 = vmatpush1.msra.mxu0 %v7010
        %7012 = vmatprep.subr.mxu0 0.0
        %7013 = vmatpush2.msra.mxu0 0.0
        %7014 = vmatprep.subr.mxu0 0.0
        %7015 = vmatpush2.msra.mxu0 0.0
        %7016 = vmatprep.subr.mxu0 0.0
        %7017 = vmatpush2.msra.mxu0 0.0
        %7018 = vmatprep.subr.mxu0 0.0
        %7019 = vmatpush2.msra.mxu0 0.0
        %7020 = vmatprep.subr.mxu0 0.0
        %7021 = vmatpush2.msra.mxu0 0.0
        %7022 = vmatprep.subr.mxu0 0.0
        %7023 = vmatpush2.msra.mxu0 0.0
        %7024 = vmatprep.subr.mxu0 0.0
        %7025 = vmatpush2.msra.mxu0 0.0
        %7026 = vmatprep.subr.mxu0 0.0
        %7027 = vmatpush2.msra.mxu0 0.0
        %7028 = vmatprep.subr.mxu0 0.0
        %7029 = vmatpush2.msra.mxu0 0.0
        %7030 = vmatprep.subr.mxu0 0.0
        %7031 = vmatpush2.msra.mxu0 0.0
        %7032 = vmatprep.subr.mxu0 0.0
        %7033 = vmatpush2.msra.mxu0 0.0
        %7034 = vmatprep.subr.mxu0 0.0
        %7035 = vmatpush2.msra.mxu0 0.0
        %7036 = vmatprep.subr.mxu0 0.0
        %7037 = vmatpush2.msra.mxu0 0.0
        %7038 = vmatprep.subr.mxu0 0.0
        %7039 = vmatpush2.msra.mxu0 0.0
        %7040 = vmatprep.subr.mxu0 0.0
        %7041 = vmatpush2.msra.mxu0 0.0
        %7042 = vmatprep.subr.mxu0 0.0
        %7043 = vmatpush2.msra.mxu0 0.0
        %7044 = vmatprep.mubr.f32.mxu0 0.0
        %v7045 = vand.u32 %v6701, 4294901760
        %v7046 = vsub.f32 %v6701, %v7045
        %v7047 = vand.u32 %v7046, 4294901760
        %7048 = vmatmul.mubr.f32.gmra.mxu0 %v7047
        %v7049 = vpop.f32.mrf.mxu0
        %v7050 = vadd.f32 %v6966, %v7049
        %v7051 = vpop.f32.mrf.mxu0
        %v7052 = vadd.f32 %v6968, %v7051
        %7053 = vmatprep.mubr.f32.mxu0 0.0
        %v7054 = vand.u32 %v6704, 4294901760
        %v7055 = vsub.f32 %v6704, %v7054
        %v7056 = vand.u32 %v7055, 4294901760
        %7057 = vmatmul.mubr.f32.gmra.mxu0 %v7056
        %v7058 = vpop.f32.mrf.mxu0
        %v7059 = vadd.f32 %v6974, %v7058
        %v7060 = vpop.f32.mrf.mxu0
        %v7061 = vadd.f32 %v6976, %v7060
        %7062 = vdwg.mxu0
        %7063 = vmatprep.subr.mxu0 0.0
        %7064 = vmatpush1.msra.mxu0 0.0
        %7065 = vmatprep.subr.mxu0 0.0
        %7066 = vmatpush1.msra.mxu0 0.0
        %7067 = vmatprep.subr.mxu0 0.0
        %7068 = vmatpush1.msra.mxu0 0.0
        %7069 = vmatprep.subr.mxu0 0.0
        %7070 = vmatpush1.msra.mxu0 0.0
        %7071 = vmatprep.subr.mxu0 0.0
        %7072 = vmatpush1.msra.mxu0 0.0
        %7073 = vmatprep.subr.mxu0 0.0
        %7074 = vmatpush1.msra.mxu0 0.0
        %7075 = vmatprep.subr.mxu0 0.0
        %7076 = vmatpush1.msra.mxu0 0.0
        %7077 = vmatprep.subr.mxu0 0.0
        %7078 = vmatpush1.msra.mxu0 0.0
        %7079 = vmatprep.subr.mxu0 0.0
        %7080 = vmatpush1.msra.mxu0 0.0
        %7081 = vmatprep.subr.mxu0 0.0
        %7082 = vmatpush1.msra.mxu0 0.0
        %7083 = vmatprep.subr.mxu0 0.0
        %7084 = vmatpush1.msra.mxu0 0.0
        %7085 = vmatprep.subr.mxu0 0.0
        %7086 = vmatpush1.msra.mxu0 0.0
        %7087 = vmatprep.subr.mxu0 0.0
        %7088 = vmatpush1.msra.mxu0 0.0
        %7089 = vmatprep.subr.mxu0 0.0
        %7090 = vmatpush1.msra.mxu0 0.0
        %7091 = vmatprep.subr.mxu0 0.0
        %7092 = vmatpush1.msra.mxu0 0.0
        %v7093 = vand.u32 %v6709, 4294901760
        %v7094 = vsub.f32 %v6709, %v7093
        %v7095 = vand.u32 %v7094, 4294901760
        %7096 = vmatprep.subr.mxu0 %v7095
        %v7097 = vand.u32 %v6707, 4294901760
        %v7098 = vsub.f32 %v6707, %v7097
        %v7099 = vand.u32 %v7098, 4294901760
        %7100 = vmatpush1.msra.mxu0 %v7099
        %7101 = vmatprep.subr.mxu0 0.0
        %7102 = vmatpush2.msra.mxu0 0.0
        %7103 = vmatprep.subr.mxu0 0.0
        %7104 = vmatpush2.msra.mxu0 0.0
        %7105 = vmatprep.subr.mxu0 0.0
        %7106 = vmatpush2.msra.mxu0 0.0
        %7107 = vmatprep.subr.mxu0 0.0
        %7108 = vmatpush2.msra.mxu0 0.0
        %7109 = vmatprep.subr.mxu0 0.0
        %7110 = vmatpush2.msra.mxu0 0.0
        %7111 = vmatprep.subr.mxu0 0.0
        %7112 = vmatpush2.msra.mxu0 0.0
        %7113 = vmatprep.subr.mxu0 0.0
        %7114 = vmatpush2.msra.mxu0 0.0
        %7115 = vmatprep.subr.mxu0 0.0
        %7116 = vmatpush2.msra.mxu0 0.0
        %7117 = vmatprep.subr.mxu0 0.0
        %7118 = vmatpush2.msra.mxu0 0.0
        %7119 = vmatprep.subr.mxu0 0.0
        %7120 = vmatpush2.msra.mxu0 0.0
        %7121 = vmatprep.subr.mxu0 0.0
        %7122 = vmatpush2.msra.mxu0 0.0
        %7123 = vmatprep.subr.mxu0 0.0
        %7124 = vmatpush2.msra.mxu0 0.0
        %7125 = vmatprep.subr.mxu0 0.0
        %7126 = vmatpush2.msra.mxu0 0.0
        %7127 = vmatprep.subr.mxu0 0.0
        %7128 = vmatpush2.msra.mxu0 0.0
        %7129 = vmatprep.subr.mxu0 0.0
        %7130 = vmatpush2.msra.mxu0 0.0
        %7131 = vmatprep.subr.mxu0 0.0
        %7132 = vmatpush2.msra.mxu0 0.0
        %7133 = vmatprep.mubr.f32.mxu0 0.0
        %v7134 = vand.u32 %v6701, 4294901760
        %7135 = vmatmul.mubr.f32.gmra.mxu0 %v7134
        %v7136 = vpop.f32.mrf.mxu0
        %v7137 = vadd.f32 %v7050, %v7136
        %v7138 = vpop.f32.mrf.mxu0
        %v7139 = vadd.f32 %v7052, %v7138
        %7140 = vmatprep.mubr.f32.mxu0 0.0
        %v7141 = vand.u32 %v6704, 4294901760
        %7142 = vmatmul.mubr.f32.gmra.mxu0 %v7141
        %v7143 = vpop.f32.mrf.mxu0
        %v7144 = vadd.f32 %v7059, %v7143
        %v7145 = vpop.f32.mrf.mxu0
        %v7146 = vadd.f32 %v7061, %v7145
        %7147 = vdwg.mxu0
        %7148 = vmatprep.subr.mxu0 0.0
        %7149 = vmatpush1.msra.mxu0 0.0
        %7150 = vmatprep.subr.mxu0 0.0
        %7151 = vmatpush1.msra.mxu0 0.0
        %7152 = vmatprep.subr.mxu0 0.0
        %7153 = vmatpush1.msra.mxu0 0.0
        %7154 = vmatprep.subr.mxu0 0.0
        %7155 = vmatpush1.msra.mxu0 0.0
        %7156 = vmatprep.subr.mxu0 0.0
        %7157 = vmatpush1.msra.mxu0 0.0
        %7158 = vmatprep.subr.mxu0 0.0
        %7159 = vmatpush1.msra.mxu0 0.0
        %7160 = vmatprep.subr.mxu0 0.0
        %7161 = vmatpush1.msra.mxu0 0.0
        %7162 = vmatprep.subr.mxu0 0.0
        %7163 = vmatpush1.msra.mxu0 0.0
        %7164 = vmatprep.subr.mxu0 0.0
        %7165 = vmatpush1.msra.mxu0 0.0
        %7166 = vmatprep.subr.mxu0 0.0
        %7167 = vmatpush1.msra.mxu0 0.0
        %7168 = vmatprep.subr.mxu0 0.0
        %7169 = vmatpush1.msra.mxu0 0.0
        %7170 = vmatprep.subr.mxu0 0.0
        %7171 = vmatpush1.msra.mxu0 0.0
        %7172 = vmatprep.subr.mxu0 0.0
        %7173 = vmatpush1.msra.mxu0 0.0
        %7174 = vmatprep.subr.mxu0 0.0
        %7175 = vmatpush1.msra.mxu0 0.0
        %7176 = vmatprep.subr.mxu0 0.0
        %7177 = vmatpush1.msra.mxu0 0.0
        %v7178 = vand.u32 %v6709, 4294901760
        %7179 = vmatprep.subr.mxu0 %v7178
        %v7180 = vand.u32 %v6707, 4294901760
        %7181 = vmatpush1.msra.mxu0 %v7180
        %7182 = vmatprep.subr.mxu0 0.0
        %7183 = vmatpush2.msra.mxu0 0.0
        %7184 = vmatprep.subr.mxu0 0.0
        %7185 = vmatpush2.msra.mxu0 0.0
        %7186 = vmatprep.subr.mxu0 0.0
        %7187 = vmatpush2.msra.mxu0 0.0
        %7188 = vmatprep.subr.mxu0 0.0
        %7189 = vmatpush2.msra.mxu0 0.0
        %7190 = vmatprep.subr.mxu0 0.0
        %7191 = vmatpush2.msra.mxu0 0.0
        %7192 = vmatprep.subr.mxu0 0.0
        %7193 = vmatpush2.msra.mxu0 0.0
        %7194 = vmatprep.subr.mxu0 0.0
        %7195 = vmatpush2.msra.mxu0 0.0
        %7196 = vmatprep.subr.mxu0 0.0
        %7197 = vmatpush2.msra.mxu0 0.0
        %7198 = vmatprep.subr.mxu0 0.0
        %7199 = vmatpush2.msra.mxu0 0.0
        %7200 = vmatprep.subr.mxu0 0.0
        %7201 = vmatpush2.msra.mxu0 0.0
        %7202 = vmatprep.subr.mxu0 0.0
        %7203 = vmatpush2.msra.mxu0 0.0
        %7204 = vmatprep.subr.mxu0 0.0
        %7205 = vmatpush2.msra.mxu0 0.0
        %7206 = vmatprep.subr.mxu0 0.0
        %7207 = vmatpush2.msra.mxu0 0.0
        %7208 = vmatprep.subr.mxu0 0.0
        %7209 = vmatpush2.msra.mxu0 0.0
        %7210 = vmatprep.subr.mxu0 0.0
        %7211 = vmatpush2.msra.mxu0 0.0
        %7212 = vmatprep.subr.mxu0 0.0
        %7213 = vmatpush2.msra.mxu0 0.0
        %7214 = vmatprep.mubr.f32.mxu0 0.0
        %v7215 = vand.u32 %v6701, 4294901760
        %7216 = vmatmul.mubr.f32.gmra.mxu0 %v7215
        %v7217 = vpop.f32.mrf.mxu0
        %v7218 = vadd.f32 %v7137, %v7217
        %v7219 = vpop.f32.mrf.mxu0
        %v7220 = vadd.f32 %v7139, %v7219
        %7221 = vmatprep.mubr.f32.mxu0 0.0
        %v7222 = vand.u32 %v6704, 4294901760
        %7223 = vmatmul.mubr.f32.gmra.mxu0 %v7222
        %v7224 = vpop.f32.mrf.mxu0
        %v7225 = vadd.f32 %v7144, %v7224
        %v7226 = vpop.f32.mrf.mxu0
        %v7227 = vadd.f32 %v7146, %v7226
        %7228 = vdwg.mxu0
        %7229 = vmatprep.subr.mxu0 0.0
        %7230 = vmatpush1.msra.mxu0 0.0
        %7231 = vmatprep.subr.mxu0 0.0
        %7232 = vmatpush1.msra.mxu0 0.0
        %7233 = vmatprep.subr.mxu0 0.0
        %7234 = vmatpush1.msra.mxu0 0.0
        %7235 = vmatprep.subr.mxu0 0.0
        %7236 = vmatpush1.msra.mxu0 0.0
        %7237 = vmatprep.subr.mxu0 0.0
        %7238 = vmatpush1.msra.mxu0 0.0
        %7239 = vmatprep.subr.mxu0 0.0
        %7240 = vmatpush1.msra.mxu0 0.0
        %7241 = vmatprep.subr.mxu0 0.0
        %7242 = vmatpush1.msra.mxu0 0.0
        %7243 = vmatprep.subr.mxu0 0.0
        %7244 = vmatpush1.msra.mxu0 0.0
        %7245 = vmatprep.subr.mxu0 0.0
        %7246 = vmatpush1.msra.mxu0 0.0
        %7247 = vmatprep.subr.mxu0 0.0
        %7248 = vmatpush1.msra.mxu0 0.0
        %7249 = vmatprep.subr.mxu0 0.0
        %7250 = vmatpush1.msra.mxu0 0.0
        %7251 = vmatprep.subr.mxu0 0.0
        %7252 = vmatpush1.msra.mxu0 0.0
        %7253 = vmatprep.subr.mxu0 0.0
        %7254 = vmatpush1.msra.mxu0 0.0
        %7255 = vmatprep.subr.mxu0 0.0
        %7256 = vmatpush1.msra.mxu0 0.0
        %7257 = vmatprep.subr.mxu0 0.0
        %7258 = vmatpush1.msra.mxu0 0.0
        %v7259 = vand.u32 %v6713, 4294901760
        %7260 = vmatprep.subr.mxu0 %v7259
        %v7261 = vand.u32 %v6711, 4294901760
        %7262 = vmatpush1.msra.mxu0 %v7261
        %7263 = vmatprep.subr.mxu0 0.0
        %7264 = vmatpush2.msra.mxu0 0.0
        %7265 = vmatprep.subr.mxu0 0.0
        %7266 = vmatpush2.msra.mxu0 0.0
        %7267 = vmatprep.subr.mxu0 0.0
        %7268 = vmatpush2.msra.mxu0 0.0
        %7269 = vmatprep.subr.mxu0 0.0
        %7270 = vmatpush2.msra.mxu0 0.0
        %7271 = vmatprep.subr.mxu0 0.0
        %7272 = vmatpush2.msra.mxu0 0.0
        %7273 = vmatprep.subr.mxu0 0.0
        %7274 = vmatpush2.msra.mxu0 0.0
        %7275 = vmatprep.subr.mxu0 0.0
        %7276 = vmatpush2.msra.mxu0 0.0
        %7277 = vmatprep.subr.mxu0 0.0
        %7278 = vmatpush2.msra.mxu0 0.0
        %7279 = vmatprep.subr.mxu0 0.0
        %7280 = vmatpush2.msra.mxu0 0.0
        %7281 = vmatprep.subr.mxu0 0.0
        %7282 = vmatpush2.msra.mxu0 0.0
        %7283 = vmatprep.subr.mxu0 0.0
        %7284 = vmatpush2.msra.mxu0 0.0
        %7285 = vmatprep.subr.mxu0 0.0
        %7286 = vmatpush2.msra.mxu0 0.0
        %7287 = vmatprep.subr.mxu0 0.0
        %7288 = vmatpush2.msra.mxu0 0.0
        %7289 = vmatprep.subr.mxu0 0.0
        %7290 = vmatpush2.msra.mxu0 0.0
        %7291 = vmatprep.subr.mxu0 0.0
        %7292 = vmatpush2.msra.mxu0 0.0
        %7293 = vmatprep.subr.mxu0 0.0
        %7294 = vmatpush2.msra.mxu0 0.0
        %7295 = vmatprep.mubr.f32.mxu0 0.0
        %v7296 = vand.u32 %v6701, 4294901760
        %v7297 = vsub.f32 %v6701, %v7296
        %v7298 = vand.u32 %v7297, 4294901760
        %v7299 = vsub.f32 %v7297, %v7298
        %v7300 = vand.u32 %v7299, 4294901760
        %7301 = vmatmul.mubr.f32.gmra.mxu0 %v7300
        %v7302 = vpop.f32.mrf.mxu0
        %v7303 = vadd.f32 0.0, %v7302
        %v7304 = vpop.f32.mrf.mxu0
        %v7305 = vadd.f32 0.0, %v7304
        %7306 = vmatprep.mubr.f32.mxu0 0.0
        %v7307 = vand.u32 %v6704, 4294901760
        %v7308 = vsub.f32 %v6704, %v7307
        %v7309 = vand.u32 %v7308, 4294901760
        %v7310 = vsub.f32 %v7308, %v7309
        %v7311 = vand.u32 %v7310, 4294901760
        %7312 = vmatmul.mubr.f32.gmra.mxu0 %v7311
        %v7313 = vpop.f32.mrf.mxu0
        %v7314 = vadd.f32 0.0, %v7313
        %v7315 = vpop.f32.mrf.mxu0
        %v7316 = vadd.f32 0.0, %v7315
        %7317 = vdwg.mxu0
        %7318 = vmatprep.subr.mxu0 0.0
        %7319 = vmatpush1.msra.mxu0 0.0
        %7320 = vmatprep.subr.mxu0 0.0
        %7321 = vmatpush1.msra.mxu0 0.0
        %7322 = vmatprep.subr.mxu0 0.0
        %7323 = vmatpush1.msra.mxu0 0.0
        %7324 = vmatprep.subr.mxu0 0.0
        %7325 = vmatpush1.msra.mxu0 0.0
        %7326 = vmatprep.subr.mxu0 0.0
        %7327 = vmatpush1.msra.mxu0 0.0
        %7328 = vmatprep.subr.mxu0 0.0
        %7329 = vmatpush1.msra.mxu0 0.0
        %7330 = vmatprep.subr.mxu0 0.0
        %7331 = vmatpush1.msra.mxu0 0.0
        %7332 = vmatprep.subr.mxu0 0.0
        %7333 = vmatpush1.msra.mxu0 0.0
        %7334 = vmatprep.subr.mxu0 0.0
        %7335 = vmatpush1.msra.mxu0 0.0
        %7336 = vmatprep.subr.mxu0 0.0
        %7337 = vmatpush1.msra.mxu0 0.0
        %7338 = vmatprep.subr.mxu0 0.0
        %7339 = vmatpush1.msra.mxu0 0.0
        %7340 = vmatprep.subr.mxu0 0.0
        %7341 = vmatpush1.msra.mxu0 0.0
        %7342 = vmatprep.subr.mxu0 0.0
        %7343 = vmatpush1.msra.mxu0 0.0
        %7344 = vmatprep.subr.mxu0 0.0
        %7345 = vmatpush1.msra.mxu0 0.0
        %7346 = vmatprep.subr.mxu0 0.0
        %7347 = vmatpush1.msra.mxu0 0.0
        %v7348 = vand.u32 %v6713, 4294901760
        %v7349 = vsub.f32 %v6713, %v7348
        %v7350 = vand.u32 %v7349, 4294901760
        %v7351 = vsub.f32 %v7349, %v7350
        %v7352 = vand.u32 %v7351, 4294901760
        %7353 = vmatprep.subr.mxu0 %v7352
        %v7354 = vand.u32 %v6711, 4294901760
        %v7355 = vsub.f32 %v6711, %v7354
        %v7356 = vand.u32 %v7355, 4294901760
        %v7357 = vsub.f32 %v7355, %v7356
        %v7358 = vand.u32 %v7357, 4294901760
        %7359 = vmatpush1.msra.mxu0 %v7358
        %7360 = vmatprep.subr.mxu0 0.0
        %7361 = vmatpush2.msra.mxu0 0.0
        %7362 = vmatprep.subr.mxu0 0.0
        %7363 = vmatpush2.msra.mxu0 0.0
        %7364 = vmatprep.subr.mxu0 0.0
        %7365 = vmatpush2.msra.mxu0 0.0
        %7366 = vmatprep.subr.mxu0 0.0
        %7367 = vmatpush2.msra.mxu0 0.0
        %7368 = vmatprep.subr.mxu0 0.0
        %7369 = vmatpush2.msra.mxu0 0.0
        %7370 = vmatprep.subr.mxu0 0.0
        %7371 = vmatpush2.msra.mxu0 0.0
        %7372 = vmatprep.subr.mxu0 0.0
        %7373 = vmatpush2.msra.mxu0 0.0
        %7374 = vmatprep.subr.mxu0 0.0
        %7375 = vmatpush2.msra.mxu0 0.0
        %7376 = vmatprep.subr.mxu0 0.0
        %7377 = vmatpush2.msra.mxu0 0.0
        %7378 = vmatprep.subr.mxu0 0.0
        %7379 = vmatpush2.msra.mxu0 0.0
        %7380 = vmatprep.subr.mxu0 0.0
        %7381 = vmatpush2.msra.mxu0 0.0
        %7382 = vmatprep.subr.mxu0 0.0
        %7383 = vmatpush2.msra.mxu0 0.0
        %7384 = vmatprep.subr.mxu0 0.0
        %7385 = vmatpush2.msra.mxu0 0.0
        %7386 = vmatprep.subr.mxu0 0.0
        %7387 = vmatpush2.msra.mxu0 0.0
        %7388 = vmatprep.subr.mxu0 0.0
        %7389 = vmatpush2.msra.mxu0 0.0
        %7390 = vmatprep.subr.mxu0 0.0
        %7391 = vmatpush2.msra.mxu0 0.0
        %7392 = vmatprep.mubr.f32.mxu0 0.0
        %v7393 = vand.u32 %v6701, 4294901760
        %7394 = vmatmul.mubr.f32.gmra.mxu0 %v7393
        %v7395 = vpop.f32.mrf.mxu0
        %v7396 = vadd.f32 %v7303, %v7395
        %v7397 = vpop.f32.mrf.mxu0
        %v7398 = vadd.f32 %v7305, %v7397
        %7399 = vmatprep.mubr.f32.mxu0 0.0
        %v7400 = vand.u32 %v6704, 4294901760
        %7401 = vmatmul.mubr.f32.gmra.mxu0 %v7400
        %v7402 = vpop.f32.mrf.mxu0
        %v7403 = vadd.f32 %v7314, %v7402
        %v7404 = vpop.f32.mrf.mxu0
        %v7405 = vadd.f32 %v7316, %v7404
        %7406 = vdwg.mxu0
        %7407 = vmatprep.subr.mxu0 0.0
        %7408 = vmatpush1.msra.mxu0 0.0
        %7409 = vmatprep.subr.mxu0 0.0
        %7410 = vmatpush1.msra.mxu0 0.0
        %7411 = vmatprep.subr.mxu0 0.0
        %7412 = vmatpush1.msra.mxu0 0.0
        %7413 = vmatprep.subr.mxu0 0.0
        %7414 = vmatpush1.msra.mxu0 0.0
        %7415 = vmatprep.subr.mxu0 0.0
        %7416 = vmatpush1.msra.mxu0 0.0
        %7417 = vmatprep.subr.mxu0 0.0
        %7418 = vmatpush1.msra.mxu0 0.0
        %7419 = vmatprep.subr.mxu0 0.0
        %7420 = vmatpush1.msra.mxu0 0.0
        %7421 = vmatprep.subr.mxu0 0.0
        %7422 = vmatpush1.msra.mxu0 0.0
        %7423 = vmatprep.subr.mxu0 0.0
        %7424 = vmatpush1.msra.mxu0 0.0
        %7425 = vmatprep.subr.mxu0 0.0
        %7426 = vmatpush1.msra.mxu0 0.0
        %7427 = vmatprep.subr.mxu0 0.0
        %7428 = vmatpush1.msra.mxu0 0.0
        %7429 = vmatprep.subr.mxu0 0.0
        %7430 = vmatpush1.msra.mxu0 0.0
        %7431 = vmatprep.subr.mxu0 0.0
        %7432 = vmatpush1.msra.mxu0 0.0
        %7433 = vmatprep.subr.mxu0 0.0
        %7434 = vmatpush1.msra.mxu0 0.0
        %7435 = vmatprep.subr.mxu0 0.0
        %7436 = vmatpush1.msra.mxu0 0.0
        %v7437 = vand.u32 %v6713, 4294901760
        %v7438 = vsub.f32 %v6713, %v7437
        %7439 = vmatprep.subr.mxu0 %v7438
        %v7440 = vand.u32 %v6711, 4294901760
        %v7441 = vsub.f32 %v6711, %v7440
        %7442 = vmatpush1.msra.mxu0 %v7441
        %7443 = vmatprep.subr.mxu0 0.0
        %7444 = vmatpush2.msra.mxu0 0.0
        %7445 = vmatprep.subr.mxu0 0.0
        %7446 = vmatpush2.msra.mxu0 0.0
        %7447 = vmatprep.subr.mxu0 0.0
        %7448 = vmatpush2.msra.mxu0 0.0
        %7449 = vmatprep.subr.mxu0 0.0
        %7450 = vmatpush2.msra.mxu0 0.0
        %7451 = vmatprep.subr.mxu0 0.0
        %7452 = vmatpush2.msra.mxu0 0.0
        %7453 = vmatprep.subr.mxu0 0.0
        %7454 = vmatpush2.msra.mxu0 0.0
        %7455 = vmatprep.subr.mxu0 0.0
        %7456 = vmatpush2.msra.mxu0 0.0
        %7457 = vmatprep.subr.mxu0 0.0
        %7458 = vmatpush2.msra.mxu0 0.0
        %7459 = vmatprep.subr.mxu0 0.0
        %7460 = vmatpush2.msra.mxu0 0.0
        %7461 = vmatprep.subr.mxu0 0.0
        %7462 = vmatpush2.msra.mxu0 0.0
        %7463 = vmatprep.subr.mxu0 0.0
        %7464 = vmatpush2.msra.mxu0 0.0
        %7465 = vmatprep.subr.mxu0 0.0
        %7466 = vmatpush2.msra.mxu0 0.0
        %7467 = vmatprep.subr.mxu0 0.0
        %7468 = vmatpush2.msra.mxu0 0.0
        %7469 = vmatprep.subr.mxu0 0.0
        %7470 = vmatpush2.msra.mxu0 0.0
        %7471 = vmatprep.subr.mxu0 0.0
        %7472 = vmatpush2.msra.mxu0 0.0
        %7473 = vmatprep.subr.mxu0 0.0
        %7474 = vmatpush2.msra.mxu0 0.0
        %7475 = vmatprep.mubr.f32.mxu0 0.0
        %v7476 = vand.u32 %v6701, 4294901760
        %v7477 = vsub.f32 %v6701, %v7476
        %7478 = vmatmul.mubr.f32.gmra.mxu0 %v7477
        %v7479 = vpop.f32.mrf.mxu0
        %v7480 = vadd.f32 %v7396, %v7479
        %v7481 = vpop.f32.mrf.mxu0
        %v7482 = vadd.f32 %v7398, %v7481
        %7483 = vmatprep.mubr.f32.mxu0 0.0
        %v7484 = vand.u32 %v6704, 4294901760
        %v7485 = vsub.f32 %v6704, %v7484
        %7486 = vmatmul.mubr.f32.gmra.mxu0 %v7485
        %v7487 = vpop.f32.mrf.mxu0
        %v7488 = vadd.f32 %v7403, %v7487
        %v7489 = vpop.f32.mrf.mxu0
        %v7490 = vadd.f32 %v7405, %v7489
        %7491 = vdwg.mxu0
        %7492 = vmatprep.subr.mxu0 0.0
        %7493 = vmatpush1.msra.mxu0 0.0
        %7494 = vmatprep.subr.mxu0 0.0
        %7495 = vmatpush1.msra.mxu0 0.0
        %7496 = vmatprep.subr.mxu0 0.0
        %7497 = vmatpush1.msra.mxu0 0.0
        %7498 = vmatprep.subr.mxu0 0.0
        %7499 = vmatpush1.msra.mxu0 0.0
        %7500 = vmatprep.subr.mxu0 0.0
        %7501 = vmatpush1.msra.mxu0 0.0
        %7502 = vmatprep.subr.mxu0 0.0
        %7503 = vmatpush1.msra.mxu0 0.0
        %7504 = vmatprep.subr.mxu0 0.0
        %7505 = vmatpush1.msra.mxu0 0.0
        %7506 = vmatprep.subr.mxu0 0.0
        %7507 = vmatpush1.msra.mxu0 0.0
        %7508 = vmatprep.subr.mxu0 0.0
        %7509 = vmatpush1.msra.mxu0 0.0
        %7510 = vmatprep.subr.mxu0 0.0
        %7511 = vmatpush1.msra.mxu0 0.0
        %7512 = vmatprep.subr.mxu0 0.0
        %7513 = vmatpush1.msra.mxu0 0.0
        %7514 = vmatprep.subr.mxu0 0.0
        %7515 = vmatpush1.msra.mxu0 0.0
        %7516 = vmatprep.subr.mxu0 0.0
        %7517 = vmatpush1.msra.mxu0 0.0
        %7518 = vmatprep.subr.mxu0 0.0
        %7519 = vmatpush1.msra.mxu0 0.0
        %7520 = vmatprep.subr.mxu0 0.0
        %7521 = vmatpush1.msra.mxu0 0.0
        %v7522 = vand.u32 %v6713, 4294901760
        %7523 = vmatprep.subr.mxu0 %v7522
        %v7524 = vand.u32 %v6711, 4294901760
        %7525 = vmatpush1.msra.mxu0 %v7524
        %7526 = vmatprep.subr.mxu0 0.0
        %7527 = vmatpush2.msra.mxu0 0.0
        %7528 = vmatprep.subr.mxu0 0.0
        %7529 = vmatpush2.msra.mxu0 0.0
        %7530 = vmatprep.subr.mxu0 0.0
        %7531 = vmatpush2.msra.mxu0 0.0
        %7532 = vmatprep.subr.mxu0 0.0
        %7533 = vmatpush2.msra.mxu0 0.0
        %7534 = vmatprep.subr.mxu0 0.0
        %7535 = vmatpush2.msra.mxu0 0.0
        %7536 = vmatprep.subr.mxu0 0.0
        %7537 = vmatpush2.msra.mxu0 0.0
        %7538 = vmatprep.subr.mxu0 0.0
        %7539 = vmatpush2.msra.mxu0 0.0
        %7540 = vmatprep.subr.mxu0 0.0
        %7541 = vmatpush2.msra.mxu0 0.0
        %7542 = vmatprep.subr.mxu0 0.0
        %7543 = vmatpush2.msra.mxu0 0.0
        %7544 = vmatprep.subr.mxu0 0.0
        %7545 = vmatpush2.msra.mxu0 0.0
        %7546 = vmatprep.subr.mxu0 0.0
        %7547 = vmatpush2.msra.mxu0 0.0
        %7548 = vmatprep.subr.mxu0 0.0
        %7549 = vmatpush2.msra.mxu0 0.0
        %7550 = vmatprep.subr.mxu0 0.0
        %7551 = vmatpush2.msra.mxu0 0.0
        %7552 = vmatprep.subr.mxu0 0.0
        %7553 = vmatpush2.msra.mxu0 0.0
        %7554 = vmatprep.subr.mxu0 0.0
        %7555 = vmatpush2.msra.mxu0 0.0
        %7556 = vmatprep.subr.mxu0 0.0
        %7557 = vmatpush2.msra.mxu0 0.0
        %7558 = vmatprep.mubr.f32.mxu0 0.0
        %v7559 = vand.u32 %v6701, 4294901760
        %v7560 = vsub.f32 %v6701, %v7559
        %v7561 = vand.u32 %v7560, 4294901760
        %7562 = vmatmul.mubr.f32.gmra.mxu0 %v7561
        %v7563 = vpop.f32.mrf.mxu0
        %v7564 = vadd.f32 %v7480, %v7563
        %v7565 = vpop.f32.mrf.mxu0
        %v7566 = vadd.f32 %v7482, %v7565
        %7567 = vmatprep.mubr.f32.mxu0 0.0
        %v7568 = vand.u32 %v6704, 4294901760
        %v7569 = vsub.f32 %v6704, %v7568
        %v7570 = vand.u32 %v7569, 4294901760
        %7571 = vmatmul.mubr.f32.gmra.mxu0 %v7570
        %v7572 = vpop.f32.mrf.mxu0
        %v7573 = vadd.f32 %v7488, %v7572
        %v7574 = vpop.f32.mrf.mxu0
        %v7575 = vadd.f32 %v7490, %v7574
        %7576 = vdwg.mxu0
        %7577 = vmatprep.subr.mxu0 0.0
        %7578 = vmatpush1.msra.mxu0 0.0
        %7579 = vmatprep.subr.mxu0 0.0
        %7580 = vmatpush1.msra.mxu0 0.0
        %7581 = vmatprep.subr.mxu0 0.0
        %7582 = vmatpush1.msra.mxu0 0.0
        %7583 = vmatprep.subr.mxu0 0.0
        %7584 = vmatpush1.msra.mxu0 0.0
        %7585 = vmatprep.subr.mxu0 0.0
        %7586 = vmatpush1.msra.mxu0 0.0
        %7587 = vmatprep.subr.mxu0 0.0
        %7588 = vmatpush1.msra.mxu0 0.0
        %7589 = vmatprep.subr.mxu0 0.0
        %7590 = vmatpush1.msra.mxu0 0.0
        %7591 = vmatprep.subr.mxu0 0.0
        %7592 = vmatpush1.msra.mxu0 0.0
        %7593 = vmatprep.subr.mxu0 0.0
        %7594 = vmatpush1.msra.mxu0 0.0
        %7595 = vmatprep.subr.mxu0 0.0
        %7596 = vmatpush1.msra.mxu0 0.0
        %7597 = vmatprep.subr.mxu0 0.0
        %7598 = vmatpush1.msra.mxu0 0.0
        %7599 = vmatprep.subr.mxu0 0.0
        %7600 = vmatpush1.msra.mxu0 0.0
        %7601 = vmatprep.subr.mxu0 0.0
        %7602 = vmatpush1.msra.mxu0 0.0
        %7603 = vmatprep.subr.mxu0 0.0
        %7604 = vmatpush1.msra.mxu0 0.0
        %7605 = vmatprep.subr.mxu0 0.0
        %7606 = vmatpush1.msra.mxu0 0.0
        %v7607 = vand.u32 %v6713, 4294901760
        %v7608 = vsub.f32 %v6713, %v7607
        %v7609 = vand.u32 %v7608, 4294901760
        %7610 = vmatprep.subr.mxu0 %v7609
        %v7611 = vand.u32 %v6711, 4294901760
        %v7612 = vsub.f32 %v6711, %v7611
        %v7613 = vand.u32 %v7612, 4294901760
        %7614 = vmatpush1.msra.mxu0 %v7613
        %7615 = vmatprep.subr.mxu0 0.0
        %7616 = vmatpush2.msra.mxu0 0.0
        %7617 = vmatprep.subr.mxu0 0.0
        %7618 = vmatpush2.msra.mxu0 0.0
        %7619 = vmatprep.subr.mxu0 0.0
        %7620 = vmatpush2.msra.mxu0 0.0
        %7621 = vmatprep.subr.mxu0 0.0
        %7622 = vmatpush2.msra.mxu0 0.0
        %7623 = vmatprep.subr.mxu0 0.0
        %7624 = vmatpush2.msra.mxu0 0.0
        %7625 = vmatprep.subr.mxu0 0.0
        %7626 = vmatpush2.msra.mxu0 0.0
        %7627 = vmatprep.subr.mxu0 0.0
        %7628 = vmatpush2.msra.mxu0 0.0
        %7629 = vmatprep.subr.mxu0 0.0
        %7630 = vmatpush2.msra.mxu0 0.0
        %7631 = vmatprep.subr.mxu0 0.0
        %7632 = vmatpush2.msra.mxu0 0.0
        %7633 = vmatprep.subr.mxu0 0.0
        %7634 = vmatpush2.msra.mxu0 0.0
        %7635 = vmatprep.subr.mxu0 0.0
        %7636 = vmatpush2.msra.mxu0 0.0
        %7637 = vmatprep.subr.mxu0 0.0
        %7638 = vmatpush2.msra.mxu0 0.0
        %7639 = vmatprep.subr.mxu0 0.0
        %7640 = vmatpush2.msra.mxu0 0.0
        %7641 = vmatprep.subr.mxu0 0.0
        %7642 = vmatpush2.msra.mxu0 0.0
        %7643 = vmatprep.subr.mxu0 0.0
        %7644 = vmatpush2.msra.mxu0 0.0
        %7645 = vmatprep.subr.mxu0 0.0
        %7646 = vmatpush2.msra.mxu0 0.0
        %7647 = vmatprep.mubr.f32.mxu0 0.0
        %v7648 = vand.u32 %v6701, 4294901760
        %7649 = vmatmul.mubr.f32.gmra.mxu0 %v7648
        %v7650 = vpop.f32.mrf.mxu0
        %v7651 = vadd.f32 %v7564, %v7650
        %v7652 = vpop.f32.mrf.mxu0
        %v7653 = vadd.f32 %v7566, %v7652
        %7654 = vmatprep.mubr.f32.mxu0 0.0
        %v7655 = vand.u32 %v6704, 4294901760
        %7656 = vmatmul.mubr.f32.gmra.mxu0 %v7655
        %v7657 = vpop.f32.mrf.mxu0
        %v7658 = vadd.f32 %v7573, %v7657
        %v7659 = vpop.f32.mrf.mxu0
        %v7660 = vadd.f32 %v7575, %v7659
        %7661 = vdwg.mxu0
        %7662 = vmatprep.subr.mxu0 0.0
        %7663 = vmatpush1.msra.mxu0 0.0
        %7664 = vmatprep.subr.mxu0 0.0
        %7665 = vmatpush1.msra.mxu0 0.0
        %7666 = vmatprep.subr.mxu0 0.0
        %7667 = vmatpush1.msra.mxu0 0.0
        %7668 = vmatprep.subr.mxu0 0.0
        %7669 = vmatpush1.msra.mxu0 0.0
        %7670 = vmatprep.subr.mxu0 0.0
        %7671 = vmatpush1.msra.mxu0 0.0
        %7672 = vmatprep.subr.mxu0 0.0
        %7673 = vmatpush1.msra.mxu0 0.0
        %7674 = vmatprep.subr.mxu0 0.0
        %7675 = vmatpush1.msra.mxu0 0.0
        %7676 = vmatprep.subr.mxu0 0.0
        %7677 = vmatpush1.msra.mxu0 0.0
        %7678 = vmatprep.subr.mxu0 0.0
        %7679 = vmatpush1.msra.mxu0 0.0
        %7680 = vmatprep.subr.mxu0 0.0
        %7681 = vmatpush1.msra.mxu0 0.0
        %7682 = vmatprep.subr.mxu0 0.0
        %7683 = vmatpush1.msra.mxu0 0.0
        %7684 = vmatprep.subr.mxu0 0.0
        %7685 = vmatpush1.msra.mxu0 0.0
        %7686 = vmatprep.subr.mxu0 0.0
        %7687 = vmatpush1.msra.mxu0 0.0
        %7688 = vmatprep.subr.mxu0 0.0
        %7689 = vmatpush1.msra.mxu0 0.0
        %7690 = vmatprep.subr.mxu0 0.0
        %7691 = vmatpush1.msra.mxu0 0.0
        %v7692 = vand.u32 %v6713, 4294901760
        %7693 = vmatprep.subr.mxu0 %v7692
        %v7694 = vand.u32 %v6711, 4294901760
        %7695 = vmatpush1.msra.mxu0 %v7694
        %7696 = vmatprep.subr.mxu0 0.0
        %7697 = vmatpush2.msra.mxu0 0.0
        %7698 = vmatprep.subr.mxu0 0.0
        %7699 = vmatpush2.msra.mxu0 0.0
        %7700 = vmatprep.subr.mxu0 0.0
        %7701 = vmatpush2.msra.mxu0 0.0
        %7702 = vmatprep.subr.mxu0 0.0
        %7703 = vmatpush2.msra.mxu0 0.0
        %7704 = vmatprep.subr.mxu0 0.0
        %7705 = vmatpush2.msra.mxu0 0.0
        %7706 = vmatprep.subr.mxu0 0.0
        %7707 = vmatpush2.msra.mxu0 0.0
        %7708 = vmatprep.subr.mxu0 0.0
        %7709 = vmatpush2.msra.mxu0 0.0
        %7710 = vmatprep.subr.mxu0 0.0
        %7711 = vmatpush2.msra.mxu0 0.0
        %7712 = vmatprep.subr.mxu0 0.0
        %7713 = vmatpush2.msra.mxu0 0.0
        %7714 = vmatprep.subr.mxu0 0.0
        %7715 = vmatpush2.msra.mxu0 0.0
        %7716 = vmatprep.subr.mxu0 0.0
        %7717 = vmatpush2.msra.mxu0 0.0
        %7718 = vmatprep.subr.mxu0 0.0
        %7719 = vmatpush2.msra.mxu0 0.0
        %7720 = vmatprep.subr.mxu0 0.0
        %7721 = vmatpush2.msra.mxu0 0.0
        %7722 = vmatprep.subr.mxu0 0.0
        %7723 = vmatpush2.msra.mxu0 0.0
        %7724 = vmatprep.subr.mxu0 0.0
        %7725 = vmatpush2.msra.mxu0 0.0
        %7726 = vmatprep.subr.mxu0 0.0
        %7727 = vmatpush2.msra.mxu0 0.0
        %7728 = vmatprep.mubr.f32.mxu0 0.0
        %v7729 = vand.u32 %v6701, 4294901760
        %7730 = vmatmul.mubr.f32.gmra.mxu0 %v7729
        %v7731 = vpop.f32.mrf.mxu0
        %v7732 = vadd.f32 %v7651, %v7731
        %v7733 = vpop.f32.mrf.mxu0
        %v7734 = vadd.f32 %v7653, %v7733
        %7735 = vmatprep.mubr.f32.mxu0 0.0
        %v7736 = vand.u32 %v6704, 4294901760
        %7737 = vmatmul.mubr.f32.gmra.mxu0 %v7736
        %v7738 = vpop.f32.mrf.mxu0
        %v7739 = vadd.f32 %v7658, %v7738
        %v7740 = vpop.f32.mrf.mxu0
        %v7741 = vadd.f32 %v7660, %v7740
        %7742 = vdwg.mxu0
        %v7744 = vsel %vm6699, %v6678, 0
        %v7747 = vsel %vm6699, %v6679, 0
        %7749 = vmatprep.subr.mxu0 0.0
        %7750 = vmatpush1.msra.mxu0 0.0
        %7751 = vmatprep.subr.mxu0 0.0
        %7752 = vmatpush1.msra.mxu0 0.0
        %7753 = vmatprep.subr.mxu0 0.0
        %7754 = vmatpush1.msra.mxu0 0.0
        %7755 = vmatprep.subr.mxu0 0.0
        %7756 = vmatpush1.msra.mxu0 0.0
        %7757 = vmatprep.subr.mxu0 0.0
        %7758 = vmatpush1.msra.mxu0 0.0
        %7759 = vmatprep.subr.mxu0 0.0
        %7760 = vmatpush1.msra.mxu0 0.0
        %7761 = vmatprep.subr.mxu0 0.0
        %7762 = vmatpush1.msra.mxu0 0.0
        %7763 = vmatprep.subr.mxu0 0.0
        %7764 = vmatpush1.msra.mxu0 0.0
        %7765 = vmatprep.subr.mxu0 0.0
        %7766 = vmatpush1.msra.mxu0 0.0
        %7767 = vmatprep.subr.mxu0 0.0
        %7768 = vmatpush1.msra.mxu0 0.0
        %7769 = vmatprep.subr.mxu0 0.0
        %7770 = vmatpush1.msra.mxu0 0.0
        %7771 = vmatprep.subr.mxu0 0.0
        %7772 = vmatpush1.msra.mxu0 0.0
        %7773 = vmatprep.subr.mxu0 0.0
        %7774 = vmatpush1.msra.mxu0 0.0
        %7775 = vmatprep.subr.mxu0 0.0
        %7776 = vmatpush1.msra.mxu0 0.0
        %7777 = vmatprep.subr.mxu0 0.0
        %7778 = vmatpush1.msra.mxu0 0.0
        %v7779 = vand.u32 %v6709, 4294901760
        %7780 = vmatprep.subr.mxu0 %v7779
        %v7781 = vand.u32 %v6707, 4294901760
        %7782 = vmatpush1.msra.mxu0 %v7781
        %7783 = vmatprep.subr.mxu0 0.0
        %7784 = vmatpush2.msra.mxu0 0.0
        %7785 = vmatprep.subr.mxu0 0.0
        %7786 = vmatpush2.msra.mxu0 0.0
        %7787 = vmatprep.subr.mxu0 0.0
        %7788 = vmatpush2.msra.mxu0 0.0
        %7789 = vmatprep.subr.mxu0 0.0
        %7790 = vmatpush2.msra.mxu0 0.0
        %7791 = vmatprep.subr.mxu0 0.0
        %7792 = vmatpush2.msra.mxu0 0.0
        %7793 = vmatprep.subr.mxu0 0.0
        %7794 = vmatpush2.msra.mxu0 0.0
        %7795 = vmatprep.subr.mxu0 0.0
        %7796 = vmatpush2.msra.mxu0 0.0
        %7797 = vmatprep.subr.mxu0 0.0
        %7798 = vmatpush2.msra.mxu0 0.0
        %7799 = vmatprep.subr.mxu0 0.0
        %7800 = vmatpush2.msra.mxu0 0.0
        %7801 = vmatprep.subr.mxu0 0.0
        %7802 = vmatpush2.msra.mxu0 0.0
        %7803 = vmatprep.subr.mxu0 0.0
        %7804 = vmatpush2.msra.mxu0 0.0
        %7805 = vmatprep.subr.mxu0 0.0
        %7806 = vmatpush2.msra.mxu0 0.0
        %7807 = vmatprep.subr.mxu0 0.0
        %7808 = vmatpush2.msra.mxu0 0.0
        %7809 = vmatprep.subr.mxu0 0.0
        %7810 = vmatpush2.msra.mxu0 0.0
        %7811 = vmatprep.subr.mxu0 0.0
        %7812 = vmatpush2.msra.mxu0 0.0
        %7813 = vmatprep.subr.mxu0 0.0
        %7814 = vmatpush2.msra.mxu0 0.0
        %7815 = vmatprep.mubr.f32.mxu0 0.0
        %v7816 = vand.u32 %v7744, 4294901760
        %v7817 = vsub.f32 %v7744, %v7816
        %v7818 = vand.u32 %v7817, 4294901760
        %v7819 = vsub.f32 %v7817, %v7818
        %v7820 = vand.u32 %v7819, 4294901760
        %7821 = vmatmul.mubr.f32.gmra.mxu0 %v7820
        %v7822 = vpop.f32.mrf.mxu0
        %v7823 = vadd.f32 0.0, %v7822
        %v7824 = vpop.f32.mrf.mxu0
        %v7825 = vadd.f32 0.0, %v7824
        %7826 = vmatprep.mubr.f32.mxu0 0.0
        %v7827 = vand.u32 %v7747, 4294901760
        %v7828 = vsub.f32 %v7747, %v7827
        %v7829 = vand.u32 %v7828, 4294901760
        %v7830 = vsub.f32 %v7828, %v7829
        %v7831 = vand.u32 %v7830, 4294901760
        %7832 = vmatmul.mubr.f32.gmra.mxu0 %v7831
        %v7833 = vpop.f32.mrf.mxu0
        %v7834 = vadd.f32 0.0, %v7833
        %v7835 = vpop.f32.mrf.mxu0
        %v7836 = vadd.f32 0.0, %v7835
        %7837 = vdwg.mxu0
        %7838 = vmatprep.subr.mxu0 0.0
        %7839 = vmatpush1.msra.mxu0 0.0
        %7840 = vmatprep.subr.mxu0 0.0
        %7841 = vmatpush1.msra.mxu0 0.0
        %7842 = vmatprep.subr.mxu0 0.0
        %7843 = vmatpush1.msra.mxu0 0.0
        %7844 = vmatprep.subr.mxu0 0.0
        %7845 = vmatpush1.msra.mxu0 0.0
        %7846 = vmatprep.subr.mxu0 0.0
        %7847 = vmatpush1.msra.mxu0 0.0
        %7848 = vmatprep.subr.mxu0 0.0
        %7849 = vmatpush1.msra.mxu0 0.0
        %7850 = vmatprep.subr.mxu0 0.0
        %7851 = vmatpush1.msra.mxu0 0.0
        %7852 = vmatprep.subr.mxu0 0.0
        %7853 = vmatpush1.msra.mxu0 0.0
        %7854 = vmatprep.subr.mxu0 0.0
        %7855 = vmatpush1.msra.mxu0 0.0
        %7856 = vmatprep.subr.mxu0 0.0
        %7857 = vmatpush1.msra.mxu0 0.0
        %7858 = vmatprep.subr.mxu0 0.0
        %7859 = vmatpush1.msra.mxu0 0.0
        %7860 = vmatprep.subr.mxu0 0.0
        %7861 = vmatpush1.msra.mxu0 0.0
        %7862 = vmatprep.subr.mxu0 0.0
        %7863 = vmatpush1.msra.mxu0 0.0
        %7864 = vmatprep.subr.mxu0 0.0
        %7865 = vmatpush1.msra.mxu0 0.0
        %7866 = vmatprep.subr.mxu0 0.0
        %7867 = vmatpush1.msra.mxu0 0.0
        %v7868 = vand.u32 %v6709, 4294901760
        %v7869 = vsub.f32 %v6709, %v7868
        %v7870 = vand.u32 %v7869, 4294901760
        %v7871 = vsub.f32 %v7869, %v7870
        %v7872 = vand.u32 %v7871, 4294901760
        %7873 = vmatprep.subr.mxu0 %v7872
        %v7874 = vand.u32 %v6707, 4294901760
        %v7875 = vsub.f32 %v6707, %v7874
        %v7876 = vand.u32 %v7875, 4294901760
        %v7877 = vsub.f32 %v7875, %v7876
        %v7878 = vand.u32 %v7877, 4294901760
        %7879 = vmatpush1.msra.mxu0 %v7878
        %7880 = vmatprep.subr.mxu0 0.0
        %7881 = vmatpush2.msra.mxu0 0.0
        %7882 = vmatprep.subr.mxu0 0.0
        %7883 = vmatpush2.msra.mxu0 0.0
        %7884 = vmatprep.subr.mxu0 0.0
        %7885 = vmatpush2.msra.mxu0 0.0
        %7886 = vmatprep.subr.mxu0 0.0
        %7887 = vmatpush2.msra.mxu0 0.0
        %7888 = vmatprep.subr.mxu0 0.0
        %7889 = vmatpush2.msra.mxu0 0.0
        %7890 = vmatprep.subr.mxu0 0.0
        %7891 = vmatpush2.msra.mxu0 0.0
        %7892 = vmatprep.subr.mxu0 0.0
        %7893 = vmatpush2.msra.mxu0 0.0
        %7894 = vmatprep.subr.mxu0 0.0
        %7895 = vmatpush2.msra.mxu0 0.0
        %7896 = vmatprep.subr.mxu0 0.0
        %7897 = vmatpush2.msra.mxu0 0.0
        %7898 = vmatprep.subr.mxu0 0.0
        %7899 = vmatpush2.msra.mxu0 0.0
        %7900 = vmatprep.subr.mxu0 0.0
        %7901 = vmatpush2.msra.mxu0 0.0
        %7902 = vmatprep.subr.mxu0 0.0
        %7903 = vmatpush2.msra.mxu0 0.0
        %7904 = vmatprep.subr.mxu0 0.0
        %7905 = vmatpush2.msra.mxu0 0.0
        %7906 = vmatprep.subr.mxu0 0.0
        %7907 = vmatpush2.msra.mxu0 0.0
        %7908 = vmatprep.subr.mxu0 0.0
        %7909 = vmatpush2.msra.mxu0 0.0
        %7910 = vmatprep.subr.mxu0 0.0
        %7911 = vmatpush2.msra.mxu0 0.0
        %7912 = vmatprep.mubr.f32.mxu0 0.0
        %v7913 = vand.u32 %v7744, 4294901760
        %7914 = vmatmul.mubr.f32.gmra.mxu0 %v7913
        %v7915 = vpop.f32.mrf.mxu0
        %v7916 = vadd.f32 %v7823, %v7915
        %v7917 = vpop.f32.mrf.mxu0
        %v7918 = vadd.f32 %v7825, %v7917
        %7919 = vmatprep.mubr.f32.mxu0 0.0
        %v7920 = vand.u32 %v7747, 4294901760
        %7921 = vmatmul.mubr.f32.gmra.mxu0 %v7920
        %v7922 = vpop.f32.mrf.mxu0
        %v7923 = vadd.f32 %v7834, %v7922
        %v7924 = vpop.f32.mrf.mxu0
        %v7925 = vadd.f32 %v7836, %v7924
        %7926 = vdwg.mxu0
        %7927 = vmatprep.subr.mxu0 0.0
        %7928 = vmatpush1.msra.mxu0 0.0
        %7929 = vmatprep.subr.mxu0 0.0
        %7930 = vmatpush1.msra.mxu0 0.0
        %7931 = vmatprep.subr.mxu0 0.0
        %7932 = vmatpush1.msra.mxu0 0.0
        %7933 = vmatprep.subr.mxu0 0.0
        %7934 = vmatpush1.msra.mxu0 0.0
        %7935 = vmatprep.subr.mxu0 0.0
        %7936 = vmatpush1.msra.mxu0 0.0
        %7937 = vmatprep.subr.mxu0 0.0
        %7938 = vmatpush1.msra.mxu0 0.0
        %7939 = vmatprep.subr.mxu0 0.0
        %7940 = vmatpush1.msra.mxu0 0.0
        %7941 = vmatprep.subr.mxu0 0.0
        %7942 = vmatpush1.msra.mxu0 0.0
        %7943 = vmatprep.subr.mxu0 0.0
        %7944 = vmatpush1.msra.mxu0 0.0
        %7945 = vmatprep.subr.mxu0 0.0
        %7946 = vmatpush1.msra.mxu0 0.0
        %7947 = vmatprep.subr.mxu0 0.0
        %7948 = vmatpush1.msra.mxu0 0.0
        %7949 = vmatprep.subr.mxu0 0.0
        %7950 = vmatpush1.msra.mxu0 0.0
        %7951 = vmatprep.subr.mxu0 0.0
        %7952 = vmatpush1.msra.mxu0 0.0
        %7953 = vmatprep.subr.mxu0 0.0
        %7954 = vmatpush1.msra.mxu0 0.0
        %7955 = vmatprep.subr.mxu0 0.0
        %7956 = vmatpush1.msra.mxu0 0.0
        %v7957 = vand.u32 %v6709, 4294901760
        %v7958 = vsub.f32 %v6709, %v7957
        %7959 = vmatprep.subr.mxu0 %v7958
        %v7960 = vand.u32 %v6707, 4294901760
        %v7961 = vsub.f32 %v6707, %v7960
        %7962 = vmatpush1.msra.mxu0 %v7961
        %7963 = vmatprep.subr.mxu0 0.0
        %7964 = vmatpush2.msra.mxu0 0.0
        %7965 = vmatprep.subr.mxu0 0.0
        %7966 = vmatpush2.msra.mxu0 0.0
        %7967 = vmatprep.subr.mxu0 0.0
        %7968 = vmatpush2.msra.mxu0 0.0
        %7969 = vmatprep.subr.mxu0 0.0
        %7970 = vmatpush2.msra.mxu0 0.0
        %7971 = vmatprep.subr.mxu0 0.0
        %7972 = vmatpush2.msra.mxu0 0.0
        %7973 = vmatprep.subr.mxu0 0.0
        %7974 = vmatpush2.msra.mxu0 0.0
        %7975 = vmatprep.subr.mxu0 0.0
        %7976 = vmatpush2.msra.mxu0 0.0
        %7977 = vmatprep.subr.mxu0 0.0
        %7978 = vmatpush2.msra.mxu0 0.0
        %7979 = vmatprep.subr.mxu0 0.0
        %7980 = vmatpush2.msra.mxu0 0.0
        %7981 = vmatprep.subr.mxu0 0.0
        %7982 = vmatpush2.msra.mxu0 0.0
        %7983 = vmatprep.subr.mxu0 0.0
        %7984 = vmatpush2.msra.mxu0 0.0
        %7985 = vmatprep.subr.mxu0 0.0
        %7986 = vmatpush2.msra.mxu0 0.0
        %7987 = vmatprep.subr.mxu0 0.0
        %7988 = vmatpush2.msra.mxu0 0.0
        %7989 = vmatprep.subr.mxu0 0.0
        %7990 = vmatpush2.msra.mxu0 0.0
        %7991 = vmatprep.subr.mxu0 0.0
        %7992 = vmatpush2.msra.mxu0 0.0
        %7993 = vmatprep.subr.mxu0 0.0
        %7994 = vmatpush2.msra.mxu0 0.0
        %7995 = vmatprep.mubr.f32.mxu0 0.0
        %v7996 = vand.u32 %v7744, 4294901760
        %v7997 = vsub.f32 %v7744, %v7996
        %7998 = vmatmul.mubr.f32.gmra.mxu0 %v7997
        %v7999 = vpop.f32.mrf.mxu0
        %v8000 = vadd.f32 %v7916, %v7999
        %v8001 = vpop.f32.mrf.mxu0
        %v8002 = vadd.f32 %v7918, %v8001
        %8003 = vmatprep.mubr.f32.mxu0 0.0
        %v8004 = vand.u32 %v7747, 4294901760
        %v8005 = vsub.f32 %v7747, %v8004
        %8006 = vmatmul.mubr.f32.gmra.mxu0 %v8005
        %v8007 = vpop.f32.mrf.mxu0
        %v8008 = vadd.f32 %v7923, %v8007
        %v8009 = vpop.f32.mrf.mxu0
        %v8010 = vadd.f32 %v7925, %v8009
        %8011 = vdwg.mxu0
        %8012 = vmatprep.subr.mxu0 0.0
        %8013 = vmatpush1.msra.mxu0 0.0
        %8014 = vmatprep.subr.mxu0 0.0
        %8015 = vmatpush1.msra.mxu0 0.0
        %8016 = vmatprep.subr.mxu0 0.0
        %8017 = vmatpush1.msra.mxu0 0.0
        %8018 = vmatprep.subr.mxu0 0.0
        %8019 = vmatpush1.msra.mxu0 0.0
        %8020 = vmatprep.subr.mxu0 0.0
        %8021 = vmatpush1.msra.mxu0 0.0
        %8022 = vmatprep.subr.mxu0 0.0
        %8023 = vmatpush1.msra.mxu0 0.0
        %8024 = vmatprep.subr.mxu0 0.0
        %8025 = vmatpush1.msra.mxu0 0.0
        %8026 = vmatprep.subr.mxu0 0.0
        %8027 = vmatpush1.msra.mxu0 0.0
        %8028 = vmatprep.subr.mxu0 0.0
        %8029 = vmatpush1.msra.mxu0 0.0
        %8030 = vmatprep.subr.mxu0 0.0
        %8031 = vmatpush1.msra.mxu0 0.0
        %8032 = vmatprep.subr.mxu0 0.0
        %8033 = vmatpush1.msra.mxu0 0.0
        %8034 = vmatprep.subr.mxu0 0.0
        %8035 = vmatpush1.msra.mxu0 0.0
        %8036 = vmatprep.subr.mxu0 0.0
        %8037 = vmatpush1.msra.mxu0 0.0
        %8038 = vmatprep.subr.mxu0 0.0
        %8039 = vmatpush1.msra.mxu0 0.0
        %8040 = vmatprep.subr.mxu0 0.0
        %8041 = vmatpush1.msra.mxu0 0.0
        %v8042 = vand.u32 %v6709, 4294901760
        %8043 = vmatprep.subr.mxu0 %v8042
        %v8044 = vand.u32 %v6707, 4294901760
        %8045 = vmatpush1.msra.mxu0 %v8044
        %8046 = vmatprep.subr.mxu0 0.0
        %8047 = vmatpush2.msra.mxu0 0.0
        %8048 = vmatprep.subr.mxu0 0.0
        %8049 = vmatpush2.msra.mxu0 0.0
        %8050 = vmatprep.subr.mxu0 0.0
        %8051 = vmatpush2.msra.mxu0 0.0
        %8052 = vmatprep.subr.mxu0 0.0
        %8053 = vmatpush2.msra.mxu0 0.0
        %8054 = vmatprep.subr.mxu0 0.0
        %8055 = vmatpush2.msra.mxu0 0.0
        %8056 = vmatprep.subr.mxu0 0.0
        %8057 = vmatpush2.msra.mxu0 0.0
        %8058 = vmatprep.subr.mxu0 0.0
        %8059 = vmatpush2.msra.mxu0 0.0
        %8060 = vmatprep.subr.mxu0 0.0
        %8061 = vmatpush2.msra.mxu0 0.0
        %8062 = vmatprep.subr.mxu0 0.0
        %8063 = vmatpush2.msra.mxu0 0.0
        %8064 = vmatprep.subr.mxu0 0.0
        %8065 = vmatpush2.msra.mxu0 0.0
        %8066 = vmatprep.subr.mxu0 0.0
        %8067 = vmatpush2.msra.mxu0 0.0
        %8068 = vmatprep.subr.mxu0 0.0
        %8069 = vmatpush2.msra.mxu0 0.0
        %8070 = vmatprep.subr.mxu0 0.0
        %8071 = vmatpush2.msra.mxu0 0.0
        %8072 = vmatprep.subr.mxu0 0.0
        %8073 = vmatpush2.msra.mxu0 0.0
        %8074 = vmatprep.subr.mxu0 0.0
        %8075 = vmatpush2.msra.mxu0 0.0
        %8076 = vmatprep.subr.mxu0 0.0
        %8077 = vmatpush2.msra.mxu0 0.0
        %8078 = vmatprep.mubr.f32.mxu0 0.0
        %v8079 = vand.u32 %v7744, 4294901760
        %v8080 = vsub.f32 %v7744, %v8079
        %v8081 = vand.u32 %v8080, 4294901760
        %8082 = vmatmul.mubr.f32.gmra.mxu0 %v8081
        %v8083 = vpop.f32.mrf.mxu0
        %v8084 = vadd.f32 %v8000, %v8083
        %v8085 = vpop.f32.mrf.mxu0
        %v8086 = vadd.f32 %v8002, %v8085
        %8087 = vmatprep.mubr.f32.mxu0 0.0
        %v8088 = vand.u32 %v7747, 4294901760
        %v8089 = vsub.f32 %v7747, %v8088
        %v8090 = vand.u32 %v8089, 4294901760
        %8091 = vmatmul.mubr.f32.gmra.mxu0 %v8090
        %v8092 = vpop.f32.mrf.mxu0
        %v8093 = vadd.f32 %v8008, %v8092
        %v8094 = vpop.f32.mrf.mxu0
        %v8095 = vadd.f32 %v8010, %v8094
        %8096 = vdwg.mxu0
        %8097 = vmatprep.subr.mxu0 0.0
        %8098 = vmatpush1.msra.mxu0 0.0
        %8099 = vmatprep.subr.mxu0 0.0
        %8100 = vmatpush1.msra.mxu0 0.0
        %8101 = vmatprep.subr.mxu0 0.0
        %8102 = vmatpush1.msra.mxu0 0.0
        %8103 = vmatprep.subr.mxu0 0.0
        %8104 = vmatpush1.msra.mxu0 0.0
        %8105 = vmatprep.subr.mxu0 0.0
        %8106 = vmatpush1.msra.mxu0 0.0
        %8107 = vmatprep.subr.mxu0 0.0
        %8108 = vmatpush1.msra.mxu0 0.0
        %8109 = vmatprep.subr.mxu0 0.0
        %8110 = vmatpush1.msra.mxu0 0.0
        %8111 = vmatprep.subr.mxu0 0.0
        %8112 = vmatpush1.msra.mxu0 0.0
        %8113 = vmatprep.subr.mxu0 0.0
        %8114 = vmatpush1.msra.mxu0 0.0
        %8115 = vmatprep.subr.mxu0 0.0
        %8116 = vmatpush1.msra.mxu0 0.0
        %8117 = vmatprep.subr.mxu0 0.0
        %8118 = vmatpush1.msra.mxu0 0.0
        %8119 = vmatprep.subr.mxu0 0.0
        %8120 = vmatpush1.msra.mxu0 0.0
        %8121 = vmatprep.subr.mxu0 0.0
        %8122 = vmatpush1.msra.mxu0 0.0
        %8123 = vmatprep.subr.mxu0 0.0
        %8124 = vmatpush1.msra.mxu0 0.0
        %8125 = vmatprep.subr.mxu0 0.0
        %8126 = vmatpush1.msra.mxu0 0.0
        %v8127 = vand.u32 %v6709, 4294901760
        %v8128 = vsub.f32 %v6709, %v8127
        %v8129 = vand.u32 %v8128, 4294901760
        %8130 = vmatprep.subr.mxu0 %v8129
        %v8131 = vand.u32 %v6707, 4294901760
        %v8132 = vsub.f32 %v6707, %v8131
        %v8133 = vand.u32 %v8132, 4294901760
        %8134 = vmatpush1.msra.mxu0 %v8133
        %8135 = vmatprep.subr.mxu0 0.0
        %8136 = vmatpush2.msra.mxu0 0.0
        %8137 = vmatprep.subr.mxu0 0.0
        %8138 = vmatpush2.msra.mxu0 0.0
        %8139 = vmatprep.subr.mxu0 0.0
        %8140 = vmatpush2.msra.mxu0 0.0
        %8141 = vmatprep.subr.mxu0 0.0
        %8142 = vmatpush2.msra.mxu0 0.0
        %8143 = vmatprep.subr.mxu0 0.0
        %8144 = vmatpush2.msra.mxu0 0.0
        %8145 = vmatprep.subr.mxu0 0.0
        %8146 = vmatpush2.msra.mxu0 0.0
        %8147 = vmatprep.subr.mxu0 0.0
        %8148 = vmatpush2.msra.mxu0 0.0
        %8149 = vmatprep.subr.mxu0 0.0
        %8150 = vmatpush2.msra.mxu0 0.0
        %8151 = vmatprep.subr.mxu0 0.0
        %8152 = vmatpush2.msra.mxu0 0.0
        %8153 = vmatprep.subr.mxu0 0.0
        %8154 = vmatpush2.msra.mxu0 0.0
        %8155 = vmatprep.subr.mxu0 0.0
        %8156 = vmatpush2.msra.mxu0 0.0
        %8157 = vmatprep.subr.mxu0 0.0
        %8158 = vmatpush2.msra.mxu0 0.0
        %8159 = vmatprep.subr.mxu0 0.0
        %8160 = vmatpush2.msra.mxu0 0.0
        %8161 = vmatprep.subr.mxu0 0.0
        %8162 = vmatpush2.msra.mxu0 0.0
        %8163 = vmatprep.subr.mxu0 0.0
        %8164 = vmatpush2.msra.mxu0 0.0
        %8165 = vmatprep.subr.mxu0 0.0
        %8166 = vmatpush2.msra.mxu0 0.0
        %8167 = vmatprep.mubr.f32.mxu0 0.0
        %v8168 = vand.u32 %v7744, 4294901760
        %8169 = vmatmul.mubr.f32.gmra.mxu0 %v8168
        %v8170 = vpop.f32.mrf.mxu0
        %v8171 = vadd.f32 %v8084, %v8170
        %v8172 = vpop.f32.mrf.mxu0
        %v8173 = vadd.f32 %v8086, %v8172
        %8174 = vmatprep.mubr.f32.mxu0 0.0
        %v8175 = vand.u32 %v7747, 4294901760
        %8176 = vmatmul.mubr.f32.gmra.mxu0 %v8175
        %v8177 = vpop.f32.mrf.mxu0
        %v8178 = vadd.f32 %v8093, %v8177
        %v8179 = vpop.f32.mrf.mxu0
        %v8180 = vadd.f32 %v8095, %v8179
        %8181 = vdwg.mxu0
        %8182 = vmatprep.subr.mxu0 0.0
        %8183 = vmatpush1.msra.mxu0 0.0
        %8184 = vmatprep.subr.mxu0 0.0
        %8185 = vmatpush1.msra.mxu0 0.0
        %8186 = vmatprep.subr.mxu0 0.0
        %8187 = vmatpush1.msra.mxu0 0.0
        %8188 = vmatprep.subr.mxu0 0.0
        %8189 = vmatpush1.msra.mxu0 0.0
        %8190 = vmatprep.subr.mxu0 0.0
        %8191 = vmatpush1.msra.mxu0 0.0
        %8192 = vmatprep.subr.mxu0 0.0
        %8193 = vmatpush1.msra.mxu0 0.0
        %8194 = vmatprep.subr.mxu0 0.0
        %8195 = vmatpush1.msra.mxu0 0.0
        %8196 = vmatprep.subr.mxu0 0.0
        %8197 = vmatpush1.msra.mxu0 0.0
        %8198 = vmatprep.subr.mxu0 0.0
        %8199 = vmatpush1.msra.mxu0 0.0
        %8200 = vmatprep.subr.mxu0 0.0
        %8201 = vmatpush1.msra.mxu0 0.0
        %8202 = vmatprep.subr.mxu0 0.0
        %8203 = vmatpush1.msra.mxu0 0.0
        %8204 = vmatprep.subr.mxu0 0.0
        %8205 = vmatpush1.msra.mxu0 0.0
        %8206 = vmatprep.subr.mxu0 0.0
        %8207 = vmatpush1.msra.mxu0 0.0
        %8208 = vmatprep.subr.mxu0 0.0
        %8209 = vmatpush1.msra.mxu0 0.0
        %8210 = vmatprep.subr.mxu0 0.0
        %8211 = vmatpush1.msra.mxu0 0.0
        %v8212 = vand.u32 %v6709, 4294901760
        %8213 = vmatprep.subr.mxu0 %v8212
        %v8214 = vand.u32 %v6707, 4294901760
        %8215 = vmatpush1.msra.mxu0 %v8214
        %8216 = vmatprep.subr.mxu0 0.0
        %8217 = vmatpush2.msra.mxu0 0.0
        %8218 = vmatprep.subr.mxu0 0.0
        %8219 = vmatpush2.msra.mxu0 0.0
        %8220 = vmatprep.subr.mxu0 0.0
        %8221 = vmatpush2.msra.mxu0 0.0
        %8222 = vmatprep.subr.mxu0 0.0
        %8223 = vmatpush2.msra.mxu0 0.0
        %8224 = vmatprep.subr.mxu0 0.0
        %8225 = vmatpush2.msra.mxu0 0.0
        %8226 = vmatprep.subr.mxu0 0.0
        %8227 = vmatpush2.msra.mxu0 0.0
        %8228 = vmatprep.subr.mxu0 0.0
        %8229 = vmatpush2.msra.mxu0 0.0
        %8230 = vmatprep.subr.mxu0 0.0
        %8231 = vmatpush2.msra.mxu0 0.0
        %8232 = vmatprep.subr.mxu0 0.0
        %8233 = vmatpush2.msra.mxu0 0.0
        %8234 = vmatprep.subr.mxu0 0.0
        %8235 = vmatpush2.msra.mxu0 0.0
        %8236 = vmatprep.subr.mxu0 0.0
        %8237 = vmatpush2.msra.mxu0 0.0
        %8238 = vmatprep.subr.mxu0 0.0
        %8239 = vmatpush2.msra.mxu0 0.0
        %8240 = vmatprep.subr.mxu0 0.0
        %8241 = vmatpush2.msra.mxu0 0.0
        %8242 = vmatprep.subr.mxu0 0.0
        %8243 = vmatpush2.msra.mxu0 0.0
        %8244 = vmatprep.subr.mxu0 0.0
        %8245 = vmatpush2.msra.mxu0 0.0
        %8246 = vmatprep.subr.mxu0 0.0
        %8247 = vmatpush2.msra.mxu0 0.0
        %8248 = vmatprep.mubr.f32.mxu0 0.0
        %v8249 = vand.u32 %v7744, 4294901760
        %8250 = vmatmul.mubr.f32.gmra.mxu0 %v8249
        %v8251 = vpop.f32.mrf.mxu0
        %v8252 = vadd.f32 %v8171, %v8251
        %v8253 = vpop.f32.mrf.mxu0
        %v8254 = vadd.f32 %v8173, %v8253
        %8255 = vmatprep.mubr.f32.mxu0 0.0
        %v8256 = vand.u32 %v7747, 4294901760
        %8257 = vmatmul.mubr.f32.gmra.mxu0 %v8256
        %v8258 = vpop.f32.mrf.mxu0
        %v8259 = vadd.f32 %v8178, %v8258
        %v8260 = vpop.f32.mrf.mxu0
        %v8261 = vadd.f32 %v8180, %v8260
        %8262 = vdwg.mxu0
        %8263 = vmatprep.subr.mxu0 0.0
        %8264 = vmatpush1.msra.mxu0 0.0
        %8265 = vmatprep.subr.mxu0 0.0
        %8266 = vmatpush1.msra.mxu0 0.0
        %8267 = vmatprep.subr.mxu0 0.0
        %8268 = vmatpush1.msra.mxu0 0.0
        %8269 = vmatprep.subr.mxu0 0.0
        %8270 = vmatpush1.msra.mxu0 0.0
        %8271 = vmatprep.subr.mxu0 0.0
        %8272 = vmatpush1.msra.mxu0 0.0
        %8273 = vmatprep.subr.mxu0 0.0
        %8274 = vmatpush1.msra.mxu0 0.0
        %8275 = vmatprep.subr.mxu0 0.0
        %8276 = vmatpush1.msra.mxu0 0.0
        %8277 = vmatprep.subr.mxu0 0.0
        %8278 = vmatpush1.msra.mxu0 0.0
        %8279 = vmatprep.subr.mxu0 0.0
        %8280 = vmatpush1.msra.mxu0 0.0
        %8281 = vmatprep.subr.mxu0 0.0
        %8282 = vmatpush1.msra.mxu0 0.0
        %8283 = vmatprep.subr.mxu0 0.0
        %8284 = vmatpush1.msra.mxu0 0.0
        %8285 = vmatprep.subr.mxu0 0.0
        %8286 = vmatpush1.msra.mxu0 0.0
        %8287 = vmatprep.subr.mxu0 0.0
        %8288 = vmatpush1.msra.mxu0 0.0
        %8289 = vmatprep.subr.mxu0 0.0
        %8290 = vmatpush1.msra.mxu0 0.0
        %8291 = vmatprep.subr.mxu0 0.0
        %8292 = vmatpush1.msra.mxu0 0.0
        %v8293 = vand.u32 %v6713, 4294901760
        %8294 = vmatprep.subr.mxu0 %v8293
        %v8295 = vand.u32 %v6711, 4294901760
        %8296 = vmatpush1.msra.mxu0 %v8295
        %8297 = vmatprep.subr.mxu0 0.0
        %8298 = vmatpush2.msra.mxu0 0.0
        %8299 = vmatprep.subr.mxu0 0.0
        %8300 = vmatpush2.msra.mxu0 0.0
        %8301 = vmatprep.subr.mxu0 0.0
        %8302 = vmatpush2.msra.mxu0 0.0
        %8303 = vmatprep.subr.mxu0 0.0
        %8304 = vmatpush2.msra.mxu0 0.0
        %8305 = vmatprep.subr.mxu0 0.0
        %8306 = vmatpush2.msra.mxu0 0.0
        %8307 = vmatprep.subr.mxu0 0.0
        %8308 = vmatpush2.msra.mxu0 0.0
        %8309 = vmatprep.subr.mxu0 0.0
        %8310 = vmatpush2.msra.mxu0 0.0
        %8311 = vmatprep.subr.mxu0 0.0
        %8312 = vmatpush2.msra.mxu0 0.0
        %8313 = vmatprep.subr.mxu0 0.0
        %8314 = vmatpush2.msra.mxu0 0.0
        %8315 = vmatprep.subr.mxu0 0.0
        %8316 = vmatpush2.msra.mxu0 0.0
        %8317 = vmatprep.subr.mxu0 0.0
        %8318 = vmatpush2.msra.mxu0 0.0
        %8319 = vmatprep.subr.mxu0 0.0
        %8320 = vmatpush2.msra.mxu0 0.0
        %8321 = vmatprep.subr.mxu0 0.0
        %8322 = vmatpush2.msra.mxu0 0.0
        %8323 = vmatprep.subr.mxu0 0.0
        %8324 = vmatpush2.msra.mxu0 0.0
        %8325 = vmatprep.subr.mxu0 0.0
        %8326 = vmatpush2.msra.mxu0 0.0
        %8327 = vmatprep.subr.mxu0 0.0
        %8328 = vmatpush2.msra.mxu0 0.0
        %8329 = vmatprep.mubr.f32.mxu0 0.0
        %v8330 = vand.u32 %v7744, 4294901760
        %v8331 = vsub.f32 %v7744, %v8330
        %v8332 = vand.u32 %v8331, 4294901760
        %v8333 = vsub.f32 %v8331, %v8332
        %v8334 = vand.u32 %v8333, 4294901760
        %8335 = vmatmul.mubr.f32.gmra.mxu0 %v8334
        %v8336 = vpop.f32.mrf.mxu0
        %v8337 = vadd.f32 0.0, %v8336
        %v8338 = vpop.f32.mrf.mxu0
        %v8339 = vadd.f32 0.0, %v8338
        %8340 = vmatprep.mubr.f32.mxu0 0.0
        %v8341 = vand.u32 %v7747, 4294901760
        %v8342 = vsub.f32 %v7747, %v8341
        %v8343 = vand.u32 %v8342, 4294901760
        %v8344 = vsub.f32 %v8342, %v8343
        %v8345 = vand.u32 %v8344, 4294901760
        %8346 = vmatmul.mubr.f32.gmra.mxu0 %v8345
        %v8347 = vpop.f32.mrf.mxu0
        %v8348 = vadd.f32 0.0, %v8347
        %v8349 = vpop.f32.mrf.mxu0
        %v8350 = vadd.f32 0.0, %v8349
        %8351 = vdwg.mxu0
        %8352 = vmatprep.subr.mxu0 0.0
        %8353 = vmatpush1.msra.mxu0 0.0
        %8354 = vmatprep.subr.mxu0 0.0
        %8355 = vmatpush1.msra.mxu0 0.0
        %8356 = vmatprep.subr.mxu0 0.0
        %8357 = vmatpush1.msra.mxu0 0.0
        %8358 = vmatprep.subr.mxu0 0.0
        %8359 = vmatpush1.msra.mxu0 0.0
        %8360 = vmatprep.subr.mxu0 0.0
        %8361 = vmatpush1.msra.mxu0 0.0
        %8362 = vmatprep.subr.mxu0 0.0
        %8363 = vmatpush1.msra.mxu0 0.0
        %8364 = vmatprep.subr.mxu0 0.0
        %8365 = vmatpush1.msra.mxu0 0.0
        %8366 = vmatprep.subr.mxu0 0.0
        %8367 = vmatpush1.msra.mxu0 0.0
        %8368 = vmatprep.subr.mxu0 0.0
        %8369 = vmatpush1.msra.mxu0 0.0
        %8370 = vmatprep.subr.mxu0 0.0
        %8371 = vmatpush1.msra.mxu0 0.0
        %8372 = vmatprep.subr.mxu0 0.0
        %8373 = vmatpush1.msra.mxu0 0.0
        %8374 = vmatprep.subr.mxu0 0.0
        %8375 = vmatpush1.msra.mxu0 0.0
        %8376 = vmatprep.subr.mxu0 0.0
        %8377 = vmatpush1.msra.mxu0 0.0
        %8378 = vmatprep.subr.mxu0 0.0
        %8379 = vmatpush1.msra.mxu0 0.0
        %8380 = vmatprep.subr.mxu0 0.0
        %8381 = vmatpush1.msra.mxu0 0.0
        %v8382 = vand.u32 %v6713, 4294901760
        %v8383 = vsub.f32 %v6713, %v8382
        %v8384 = vand.u32 %v8383, 4294901760
        %v8385 = vsub.f32 %v8383, %v8384
        %v8386 = vand.u32 %v8385, 4294901760
        %8387 = vmatprep.subr.mxu0 %v8386
        %v8388 = vand.u32 %v6711, 4294901760
        %v8389 = vsub.f32 %v6711, %v8388
        %v8390 = vand.u32 %v8389, 4294901760
        %v8391 = vsub.f32 %v8389, %v8390
        %v8392 = vand.u32 %v8391, 4294901760
        %8393 = vmatpush1.msra.mxu0 %v8392
        %8394 = vmatprep.subr.mxu0 0.0
        %8395 = vmatpush2.msra.mxu0 0.0
        %8396 = vmatprep.subr.mxu0 0.0
        %8397 = vmatpush2.msra.mxu0 0.0
        %8398 = vmatprep.subr.mxu0 0.0
        %8399 = vmatpush2.msra.mxu0 0.0
        %8400 = vmatprep.subr.mxu0 0.0
        %8401 = vmatpush2.msra.mxu0 0.0
        %8402 = vmatprep.subr.mxu0 0.0
        %8403 = vmatpush2.msra.mxu0 0.0
        %8404 = vmatprep.subr.mxu0 0.0
        %8405 = vmatpush2.msra.mxu0 0.0
        %8406 = vmatprep.subr.mxu0 0.0
        %8407 = vmatpush2.msra.mxu0 0.0
        %8408 = vmatprep.subr.mxu0 0.0
        %8409 = vmatpush2.msra.mxu0 0.0
        %8410 = vmatprep.subr.mxu0 0.0
        %8411 = vmatpush2.msra.mxu0 0.0
        %8412 = vmatprep.subr.mxu0 0.0
        %8413 = vmatpush2.msra.mxu0 0.0
        %8414 = vmatprep.subr.mxu0 0.0
        %8415 = vmatpush2.msra.mxu0 0.0
        %8416 = vmatprep.subr.mxu0 0.0
        %8417 = vmatpush2.msra.mxu0 0.0
        %8418 = vmatprep.subr.mxu0 0.0
        %8419 = vmatpush2.msra.mxu0 0.0
        %8420 = vmatprep.subr.mxu0 0.0
        %8421 = vmatpush2.msra.mxu0 0.0
        %8422 = vmatprep.subr.mxu0 0.0
        %8423 = vmatpush2.msra.mxu0 0.0
        %8424 = vmatprep.subr.mxu0 0.0
        %8425 = vmatpush2.msra.mxu0 0.0
        %8426 = vmatprep.mubr.f32.mxu0 0.0
        %v8427 = vand.u32 %v7744, 4294901760
        %8428 = vmatmul.mubr.f32.gmra.mxu0 %v8427
        %v8429 = vpop.f32.mrf.mxu0
        %v8430 = vadd.f32 %v8337, %v8429
        %v8431 = vpop.f32.mrf.mxu0
        %v8432 = vadd.f32 %v8339, %v8431
        %8433 = vmatprep.mubr.f32.mxu0 0.0
        %v8434 = vand.u32 %v7747, 4294901760
        %8435 = vmatmul.mubr.f32.gmra.mxu0 %v8434
        %v8436 = vpop.f32.mrf.mxu0
        %v8437 = vadd.f32 %v8348, %v8436
        %v8438 = vpop.f32.mrf.mxu0
        %v8439 = vadd.f32 %v8350, %v8438
        %8440 = vdwg.mxu0
        %8441 = vmatprep.subr.mxu0 0.0
        %8442 = vmatpush1.msra.mxu0 0.0
        %8443 = vmatprep.subr.mxu0 0.0
        %8444 = vmatpush1.msra.mxu0 0.0
        %8445 = vmatprep.subr.mxu0 0.0
        %8446 = vmatpush1.msra.mxu0 0.0
        %8447 = vmatprep.subr.mxu0 0.0
        %8448 = vmatpush1.msra.mxu0 0.0
        %8449 = vmatprep.subr.mxu0 0.0
        %8450 = vmatpush1.msra.mxu0 0.0
        %8451 = vmatprep.subr.mxu0 0.0
        %8452 = vmatpush1.msra.mxu0 0.0
        %8453 = vmatprep.subr.mxu0 0.0
        %8454 = vmatpush1.msra.mxu0 0.0
        %8455 = vmatprep.subr.mxu0 0.0
        %8456 = vmatpush1.msra.mxu0 0.0
        %8457 = vmatprep.subr.mxu0 0.0
        %8458 = vmatpush1.msra.mxu0 0.0
        %8459 = vmatprep.subr.mxu0 0.0
        %8460 = vmatpush1.msra.mxu0 0.0
        %8461 = vmatprep.subr.mxu0 0.0
        %8462 = vmatpush1.msra.mxu0 0.0
        %8463 = vmatprep.subr.mxu0 0.0
        %8464 = vmatpush1.msra.mxu0 0.0
        %8465 = vmatprep.subr.mxu0 0.0
        %8466 = vmatpush1.msra.mxu0 0.0
        %8467 = vmatprep.subr.mxu0 0.0
        %8468 = vmatpush1.msra.mxu0 0.0
        %8469 = vmatprep.subr.mxu0 0.0
        %8470 = vmatpush1.msra.mxu0 0.0
        %v8471 = vand.u32 %v6713, 4294901760
        %v8472 = vsub.f32 %v6713, %v8471
        %8473 = vmatprep.subr.mxu0 %v8472
        %v8474 = vand.u32 %v6711, 4294901760
        %v8475 = vsub.f32 %v6711, %v8474
        %8476 = vmatpush1.msra.mxu0 %v8475
        %8477 = vmatprep.subr.mxu0 0.0
        %8478 = vmatpush2.msra.mxu0 0.0
        %8479 = vmatprep.subr.mxu0 0.0
        %8480 = vmatpush2.msra.mxu0 0.0
        %8481 = vmatprep.subr.mxu0 0.0
        %8482 = vmatpush2.msra.mxu0 0.0
        %8483 = vmatprep.subr.mxu0 0.0
        %8484 = vmatpush2.msra.mxu0 0.0
        %8485 = vmatprep.subr.mxu0 0.0
        %8486 = vmatpush2.msra.mxu0 0.0
        %8487 = vmatprep.subr.mxu0 0.0
        %8488 = vmatpush2.msra.mxu0 0.0
        %8489 = vmatprep.subr.mxu0 0.0
        %8490 = vmatpush2.msra.mxu0 0.0
        %8491 = vmatprep.subr.mxu0 0.0
        %8492 = vmatpush2.msra.mxu0 0.0
        %8493 = vmatprep.subr.mxu0 0.0
        %8494 = vmatpush2.msra.mxu0 0.0
        %8495 = vmatprep.subr.mxu0 0.0
        %8496 = vmatpush2.msra.mxu0 0.0
        %8497 = vmatprep.subr.mxu0 0.0
        %8498 = vmatpush2.msra.mxu0 0.0
        %8499 = vmatprep.subr.mxu0 0.0
        %8500 = vmatpush2.msra.mxu0 0.0
        %8501 = vmatprep.subr.mxu0 0.0
        %8502 = vmatpush2.msra.mxu0 0.0
        %8503 = vmatprep.subr.mxu0 0.0
        %8504 = vmatpush2.msra.mxu0 0.0
        %8505 = vmatprep.subr.mxu0 0.0
        %8506 = vmatpush2.msra.mxu0 0.0
        %8507 = vmatprep.subr.mxu0 0.0
        %8508 = vmatpush2.msra.mxu0 0.0
        %8509 = vmatprep.mubr.f32.mxu0 0.0
        %v8510 = vand.u32 %v7744, 4294901760
        %v8511 = vsub.f32 %v7744, %v8510
        %8512 = vmatmul.mubr.f32.gmra.mxu0 %v8511
        %v8513 = vpop.f32.mrf.mxu0
        %v8514 = vadd.f32 %v8430, %v8513
        %v8515 = vpop.f32.mrf.mxu0
        %v8516 = vadd.f32 %v8432, %v8515
        %8517 = vmatprep.mubr.f32.mxu0 0.0
        %v8518 = vand.u32 %v7747, 4294901760
        %v8519 = vsub.f32 %v7747, %v8518
        %8520 = vmatmul.mubr.f32.gmra.mxu0 %v8519
        %v8521 = vpop.f32.mrf.mxu0
        %v8522 = vadd.f32 %v8437, %v8521
        %v8523 = vpop.f32.mrf.mxu0
        %v8524 = vadd.f32 %v8439, %v8523
        %8525 = vdwg.mxu0
        %8526 = vmatprep.subr.mxu0 0.0
        %8527 = vmatpush1.msra.mxu0 0.0
        %8528 = vmatprep.subr.mxu0 0.0
        %8529 = vmatpush1.msra.mxu0 0.0
        %8530 = vmatprep.subr.mxu0 0.0
        %8531 = vmatpush1.msra.mxu0 0.0
        %8532 = vmatprep.subr.mxu0 0.0
        %8533 = vmatpush1.msra.mxu0 0.0
        %8534 = vmatprep.subr.mxu0 0.0
        %8535 = vmatpush1.msra.mxu0 0.0
        %8536 = vmatprep.subr.mxu0 0.0
        %8537 = vmatpush1.msra.mxu0 0.0
        %8538 = vmatprep.subr.mxu0 0.0
        %8539 = vmatpush1.msra.mxu0 0.0
        %8540 = vmatprep.subr.mxu0 0.0
        %8541 = vmatpush1.msra.mxu0 0.0
        %8542 = vmatprep.subr.mxu0 0.0
        %8543 = vmatpush1.msra.mxu0 0.0
        %8544 = vmatprep.subr.mxu0 0.0
        %8545 = vmatpush1.msra.mxu0 0.0
        %8546 = vmatprep.subr.mxu0 0.0
        %8547 = vmatpush1.msra.mxu0 0.0
        %8548 = vmatprep.subr.mxu0 0.0
        %8549 = vmatpush1.msra.mxu0 0.0
        %8550 = vmatprep.subr.mxu0 0.0
        %8551 = vmatpush1.msra.mxu0 0.0
        %8552 = vmatprep.subr.mxu0 0.0
        %8553 = vmatpush1.msra.mxu0 0.0
        %8554 = vmatprep.subr.mxu0 0.0
        %8555 = vmatpush1.msra.mxu0 0.0
        %v8556 = vand.u32 %v6713, 4294901760
        %8557 = vmatprep.subr.mxu0 %v8556
        %v8558 = vand.u32 %v6711, 4294901760
        %8559 = vmatpush1.msra.mxu0 %v8558
        %8560 = vmatprep.subr.mxu0 0.0
        %8561 = vmatpush2.msra.mxu0 0.0
        %8562 = vmatprep.subr.mxu0 0.0
        %8563 = vmatpush2.msra.mxu0 0.0
        %8564 = vmatprep.subr.mxu0 0.0
        %8565 = vmatpush2.msra.mxu0 0.0
        %8566 = vmatprep.subr.mxu0 0.0
        %8567 = vmatpush2.msra.mxu0 0.0
        %8568 = vmatprep.subr.mxu0 0.0
        %8569 = vmatpush2.msra.mxu0 0.0
        %8570 = vmatprep.subr.mxu0 0.0
        %8571 = vmatpush2.msra.mxu0 0.0
        %8572 = vmatprep.subr.mxu0 0.0
        %8573 = vmatpush2.msra.mxu0 0.0
        %8574 = vmatprep.subr.mxu0 0.0
        %8575 = vmatpush2.msra.mxu0 0.0
        %8576 = vmatprep.subr.mxu0 0.0
        %8577 = vmatpush2.msra.mxu0 0.0
        %8578 = vmatprep.subr.mxu0 0.0
        %8579 = vmatpush2.msra.mxu0 0.0
        %8580 = vmatprep.subr.mxu0 0.0
        %8581 = vmatpush2.msra.mxu0 0.0
        %8582 = vmatprep.subr.mxu0 0.0
        %8583 = vmatpush2.msra.mxu0 0.0
        %8584 = vmatprep.subr.mxu0 0.0
        %8585 = vmatpush2.msra.mxu0 0.0
        %8586 = vmatprep.subr.mxu0 0.0
        %8587 = vmatpush2.msra.mxu0 0.0
        %8588 = vmatprep.subr.mxu0 0.0
        %8589 = vmatpush2.msra.mxu0 0.0
        %8590 = vmatprep.subr.mxu0 0.0
        %8591 = vmatpush2.msra.mxu0 0.0
        %8592 = vmatprep.mubr.f32.mxu0 0.0
        %v8593 = vand.u32 %v7744, 4294901760
        %v8594 = vsub.f32 %v7744, %v8593
        %v8595 = vand.u32 %v8594, 4294901760
        %8596 = vmatmul.mubr.f32.gmra.mxu0 %v8595
        %v8597 = vpop.f32.mrf.mxu0
        %v8598 = vadd.f32 %v8514, %v8597
        %v8599 = vpop.f32.mrf.mxu0
        %v8600 = vadd.f32 %v8516, %v8599
        %8601 = vmatprep.mubr.f32.mxu0 0.0
        %v8602 = vand.u32 %v7747, 4294901760
        %v8603 = vsub.f32 %v7747, %v8602
        %v8604 = vand.u32 %v8603, 4294901760
        %8605 = vmatmul.mubr.f32.gmra.mxu0 %v8604
        %v8606 = vpop.f32.mrf.mxu0
        %v8607 = vadd.f32 %v8522, %v8606
        %v8608 = vpop.f32.mrf.mxu0
        %v8609 = vadd.f32 %v8524, %v8608
        %8610 = vdwg.mxu0
        %8611 = vmatprep.subr.mxu0 0.0
        %8612 = vmatpush1.msra.mxu0 0.0
        %8613 = vmatprep.subr.mxu0 0.0
        %8614 = vmatpush1.msra.mxu0 0.0
        %8615 = vmatprep.subr.mxu0 0.0
        %8616 = vmatpush1.msra.mxu0 0.0
        %8617 = vmatprep.subr.mxu0 0.0
        %8618 = vmatpush1.msra.mxu0 0.0
        %8619 = vmatprep.subr.mxu0 0.0
        %8620 = vmatpush1.msra.mxu0 0.0
        %8621 = vmatprep.subr.mxu0 0.0
        %8622 = vmatpush1.msra.mxu0 0.0
        %8623 = vmatprep.subr.mxu0 0.0
        %8624 = vmatpush1.msra.mxu0 0.0
        %8625 = vmatprep.subr.mxu0 0.0
        %8626 = vmatpush1.msra.mxu0 0.0
        %8627 = vmatprep.subr.mxu0 0.0
        %8628 = vmatpush1.msra.mxu0 0.0
        %8629 = vmatprep.subr.mxu0 0.0
        %8630 = vmatpush1.msra.mxu0 0.0
        %8631 = vmatprep.subr.mxu0 0.0
        %8632 = vmatpush1.msra.mxu0 0.0
        %8633 = vmatprep.subr.mxu0 0.0
        %8634 = vmatpush1.msra.mxu0 0.0
        %8635 = vmatprep.subr.mxu0 0.0
        %8636 = vmatpush1.msra.mxu0 0.0
        %8637 = vmatprep.subr.mxu0 0.0
        %8638 = vmatpush1.msra.mxu0 0.0
        %8639 = vmatprep.subr.mxu0 0.0
        %8640 = vmatpush1.msra.mxu0 0.0
        %v8641 = vand.u32 %v6713, 4294901760
        %v8642 = vsub.f32 %v6713, %v8641
        %v8643 = vand.u32 %v8642, 4294901760
        %8644 = vmatprep.subr.mxu0 %v8643
        %v8645 = vand.u32 %v6711, 4294901760
        %v8646 = vsub.f32 %v6711, %v8645
        %v8647 = vand.u32 %v8646, 4294901760
        %8648 = vmatpush1.msra.mxu0 %v8647
        %8649 = vmatprep.subr.mxu0 0.0
        %8650 = vmatpush2.msra.mxu0 0.0
        %8651 = vmatprep.subr.mxu0 0.0
        %8652 = vmatpush2.msra.mxu0 0.0
        %8653 = vmatprep.subr.mxu0 0.0
        %8654 = vmatpush2.msra.mxu0 0.0
        %8655 = vmatprep.subr.mxu0 0.0
        %8656 = vmatpush2.msra.mxu0 0.0
        %8657 = vmatprep.subr.mxu0 0.0
        %8658 = vmatpush2.msra.mxu0 0.0
        %8659 = vmatprep.subr.mxu0 0.0
        %8660 = vmatpush2.msra.mxu0 0.0
        %8661 = vmatprep.subr.mxu0 0.0
        %8662 = vmatpush2.msra.mxu0 0.0
        %8663 = vmatprep.subr.mxu0 0.0
        %8664 = vmatpush2.msra.mxu0 0.0
        %8665 = vmatprep.subr.mxu0 0.0
        %8666 = vmatpush2.msra.mxu0 0.0
        %8667 = vmatprep.subr.mxu0 0.0
        %8668 = vmatpush2.msra.mxu0 0.0
        %8669 = vmatprep.subr.mxu0 0.0
        %8670 = vmatpush2.msra.mxu0 0.0
        %8671 = vmatprep.subr.mxu0 0.0
        %8672 = vmatpush2.msra.mxu0 0.0
        %8673 = vmatprep.subr.mxu0 0.0
        %8674 = vmatpush2.msra.mxu0 0.0
        %8675 = vmatprep.subr.mxu0 0.0
        %8676 = vmatpush2.msra.mxu0 0.0
        %8677 = vmatprep.subr.mxu0 0.0
        %8678 = vmatpush2.msra.mxu0 0.0
        %8679 = vmatprep.subr.mxu0 0.0
        %8680 = vmatpush2.msra.mxu0 0.0
        %8681 = vmatprep.mubr.f32.mxu0 0.0
        %v8682 = vand.u32 %v7744, 4294901760
        %8683 = vmatmul.mubr.f32.gmra.mxu0 %v8682
        %v8684 = vpop.f32.mrf.mxu0
        %v8685 = vadd.f32 %v8598, %v8684
        %v8686 = vpop.f32.mrf.mxu0
        %v8687 = vadd.f32 %v8600, %v8686
        %8688 = vmatprep.mubr.f32.mxu0 0.0
        %v8689 = vand.u32 %v7747, 4294901760
        %8690 = vmatmul.mubr.f32.gmra.mxu0 %v8689
        %v8691 = vpop.f32.mrf.mxu0
        %v8692 = vadd.f32 %v8607, %v8691
        %v8693 = vpop.f32.mrf.mxu0
        %v8694 = vadd.f32 %v8609, %v8693
        %8695 = vdwg.mxu0
        %8696 = vmatprep.subr.mxu0 0.0
        %8697 = vmatpush1.msra.mxu0 0.0
        %8698 = vmatprep.subr.mxu0 0.0
        %8699 = vmatpush1.msra.mxu0 0.0
        %8700 = vmatprep.subr.mxu0 0.0
        %8701 = vmatpush1.msra.mxu0 0.0
        %8702 = vmatprep.subr.mxu0 0.0
        %8703 = vmatpush1.msra.mxu0 0.0
        %8704 = vmatprep.subr.mxu0 0.0
        %8705 = vmatpush1.msra.mxu0 0.0
        %8706 = vmatprep.subr.mxu0 0.0
        %8707 = vmatpush1.msra.mxu0 0.0
        %8708 = vmatprep.subr.mxu0 0.0
        %8709 = vmatpush1.msra.mxu0 0.0
        %8710 = vmatprep.subr.mxu0 0.0
        %8711 = vmatpush1.msra.mxu0 0.0
        %8712 = vmatprep.subr.mxu0 0.0
        %8713 = vmatpush1.msra.mxu0 0.0
        %8714 = vmatprep.subr.mxu0 0.0
        %8715 = vmatpush1.msra.mxu0 0.0
        %8716 = vmatprep.subr.mxu0 0.0
        %8717 = vmatpush1.msra.mxu0 0.0
        %8718 = vmatprep.subr.mxu0 0.0
        %8719 = vmatpush1.msra.mxu0 0.0
        %8720 = vmatprep.subr.mxu0 0.0
        %8721 = vmatpush1.msra.mxu0 0.0
        %8722 = vmatprep.subr.mxu0 0.0
        %8723 = vmatpush1.msra.mxu0 0.0
        %8724 = vmatprep.subr.mxu0 0.0
        %8725 = vmatpush1.msra.mxu0 0.0
        %v8726 = vand.u32 %v6713, 4294901760
        %8727 = vmatprep.subr.mxu0 %v8726
        %v8728 = vand.u32 %v6711, 4294901760
        %8729 = vmatpush1.msra.mxu0 %v8728
        %8730 = vmatprep.subr.mxu0 0.0
        %8731 = vmatpush2.msra.mxu0 0.0
        %8732 = vmatprep.subr.mxu0 0.0
        %8733 = vmatpush2.msra.mxu0 0.0
        %8734 = vmatprep.subr.mxu0 0.0
        %8735 = vmatpush2.msra.mxu0 0.0
        %8736 = vmatprep.subr.mxu0 0.0
        %8737 = vmatpush2.msra.mxu0 0.0
        %8738 = vmatprep.subr.mxu0 0.0
        %8739 = vmatpush2.msra.mxu0 0.0
        %8740 = vmatprep.subr.mxu0 0.0
        %8741 = vmatpush2.msra.mxu0 0.0
        %8742 = vmatprep.subr.mxu0 0.0
        %8743 = vmatpush2.msra.mxu0 0.0
        %8744 = vmatprep.subr.mxu0 0.0
        %8745 = vmatpush2.msra.mxu0 0.0
        %8746 = vmatprep.subr.mxu0 0.0
        %8747 = vmatpush2.msra.mxu0 0.0
        %8748 = vmatprep.subr.mxu0 0.0
        %8749 = vmatpush2.msra.mxu0 0.0
        %8750 = vmatprep.subr.mxu0 0.0
        %8751 = vmatpush2.msra.mxu0 0.0
        %8752 = vmatprep.subr.mxu0 0.0
        %8753 = vmatpush2.msra.mxu0 0.0
        %8754 = vmatprep.subr.mxu0 0.0
        %8755 = vmatpush2.msra.mxu0 0.0
        %8756 = vmatprep.subr.mxu0 0.0
        %8757 = vmatpush2.msra.mxu0 0.0
        %8758 = vmatprep.subr.mxu0 0.0
        %8759 = vmatpush2.msra.mxu0 0.0
        %8760 = vmatprep.subr.mxu0 0.0
        %8761 = vmatpush2.msra.mxu0 0.0
        %8762 = vmatprep.mubr.f32.mxu0 0.0
        %v8763 = vand.u32 %v7744, 4294901760
        %8764 = vmatmul.mubr.f32.gmra.mxu0 %v8763
        %v8765 = vpop.f32.mrf.mxu0
        %v8766 = vadd.f32 %v8685, %v8765
        %v8767 = vpop.f32.mrf.mxu0
        %v8768 = vadd.f32 %v8687, %v8767
        %8769 = vmatprep.mubr.f32.mxu0 0.0
        %v8770 = vand.u32 %v7747, 4294901760
        %8771 = vmatmul.mubr.f32.gmra.mxu0 %v8770
        %v8772 = vpop.f32.mrf.mxu0
        %v8773 = vadd.f32 %v8692, %v8772
        %v8774 = vpop.f32.mrf.mxu0
        %v8775 = vadd.f32 %v8694, %v8774
        %8776 = vdwg.mxu0
        %v8777 = vmul.f32 %v736, %v7218
        %v8778 = vmul.f32 %v737, %v7220
        %v8779 = vmul.f32 %v738, %v7732
        %v8780 = vmul.f32 %v739, %v7734
        %v8781 = vmul.f32 %v740, %v7225
        %v8782 = vmul.f32 %v741, %v7227
        %v8783 = vmul.f32 %v742, %v7739
        %v8784 = vmul.f32 %v743, %v7741
        %v8785 = vmul.f32 %v1378, %v8252
        %v8786 = vmul.f32 %v1379, %v8254
        %v8787 = vmul.f32 %v1380, %v8766
        %v8788 = vmul.f32 %v1381, %v8768
        %v8789 = vmul.f32 %v1382, %v8259
        %v8790 = vmul.f32 %v1383, %v8261
        %v8791 = vmul.f32 %v1384, %v8773
        %v8792 = vmul.f32 %v1385, %v8775
        %v8793 = vld [vmem:[%s13] sm:$0xff]
        %v8794 = vpack.c.bf16 %v8793, %v8793
        %v8795 = vpack.c.bf16 %v8781, %v8777
        %v8796 = vpack.c.bf16 %v8782, %v8778
        %v8797 = vpack.c.bf16 %v8783, %v8779
        %v8798 = vpack.c.bf16 %v8784, %v8780
        %v8799 = vld [vmem:[%s14] sm:$0xff]
        %v8800 = vpack.c.bf16 %v8799, %v8799
        %v8801 = vpack.c.bf16 %v8789, %v8785
        %v8802 = vpack.c.bf16 %v8790, %v8786
        %v8803 = vpack.c.bf16 %v8791, %v8787
        %v8804 = vpack.c.bf16 %v8792, %v8788
        %v8806 = vsel %vm646, %v8800, 0
        %8808 = vmatprep.subr.bf16.mxu0 0
        %8809 = vmatpush1.bf16.msra.mxu0 0
        %8810 = vmatprep.subr.bf16.mxu0 0
        %8811 = vmatpush1.bf16.msra.mxu0 0
        %8812 = vmatprep.subr.bf16.mxu0 0
        %8813 = vmatpush1.bf16.msra.mxu0 0
        %8814 = vmatprep.subr.bf16.mxu0 0
        %8815 = vmatpush1.bf16.msra.mxu0 0
        %8816 = vmatprep.subr.bf16.mxu0 0
        %8817 = vmatpush1.bf16.msra.mxu0 0
        %8818 = vmatprep.subr.bf16.mxu0 0
        %8819 = vmatpush1.bf16.msra.mxu0 0
        %8820 = vmatprep.subr.bf16.mxu0 0
        %8821 = vmatpush1.bf16.msra.mxu0 0
        %8822 = vmatprep.subr.bf16.mxu0 %v8802
        %8823 = vmatpush1.bf16.msra.mxu0 %v8801
        %8824 = vmatprep.subr.bf16.mxu0 0
        %8825 = vmatpush2.bf16.msra.mxu0 0
        %8826 = vmatprep.subr.bf16.mxu0 0
        %8827 = vmatpush2.bf16.msra.mxu0 0
        %8828 = vmatprep.subr.bf16.mxu0 0
        %8829 = vmatpush2.bf16.msra.mxu0 0
        %8830 = vmatprep.subr.bf16.mxu0 0
        %8831 = vmatpush2.bf16.msra.mxu0 0
        %8832 = vmatprep.subr.bf16.mxu0 0
        %8833 = vmatpush2.bf16.msra.mxu0 0
        %8834 = vmatprep.subr.bf16.mxu0 0
        %8835 = vmatpush2.bf16.msra.mxu0 0
        %8836 = vmatprep.subr.bf16.mxu0 0
        %8837 = vmatpush2.bf16.msra.mxu0 0
        %8838 = vmatprep.subr.bf16.mxu0 0
        %8839 = vmatpush2.bf16.msra.mxu0 0
        %8840 = vmatprep.mubr.bf16.mxu0 0
        %8841 = vmatmul.mubr.bf16.gmra.mxu0 %v8806
        %v8842 = vpop.f32.mrf.mxu0
        %v8843 = vadd.f32 0.0, %v8842
        %v8844 = vpop.f32.mrf.mxu0
        %v8845 = vadd.f32 0.0, %v8844
        %v8846 = vpop.f32.mrf.mxu0
        %v8847 = vpop.f32.mrf.mxu0
        %8848 = vdwg.mxu0
        %8849 = vmatprep.subr.bf16.mxu0 0
        %8850 = vmatpush1.bf16.msra.mxu0 0
        %8851 = vmatprep.subr.bf16.mxu0 0
        %8852 = vmatpush1.bf16.msra.mxu0 0
        %8853 = vmatprep.subr.bf16.mxu0 0
        %8854 = vmatpush1.bf16.msra.mxu0 0
        %8855 = vmatprep.subr.bf16.mxu0 0
        %8856 = vmatpush1.bf16.msra.mxu0 0
        %8857 = vmatprep.subr.bf16.mxu0 0
        %8858 = vmatpush1.bf16.msra.mxu0 0
        %8859 = vmatprep.subr.bf16.mxu0 0
        %8860 = vmatpush1.bf16.msra.mxu0 0
        %8861 = vmatprep.subr.bf16.mxu0 0
        %8862 = vmatpush1.bf16.msra.mxu0 0
        %8863 = vmatprep.subr.bf16.mxu0 %v8804
        %8864 = vmatpush1.bf16.msra.mxu0 %v8803
        %8865 = vmatprep.subr.bf16.mxu0 0
        %8866 = vmatpush2.bf16.msra.mxu0 0
        %8867 = vmatprep.subr.bf16.mxu0 0
        %8868 = vmatpush2.bf16.msra.mxu0 0
        %8869 = vmatprep.subr.bf16.mxu0 0
        %8870 = vmatpush2.bf16.msra.mxu0 0
        %8871 = vmatprep.subr.bf16.mxu0 0
        %8872 = vmatpush2.bf16.msra.mxu0 0
        %8873 = vmatprep.subr.bf16.mxu0 0
        %8874 = vmatpush2.bf16.msra.mxu0 0
        %8875 = vmatprep.subr.bf16.mxu0 0
        %8876 = vmatpush2.bf16.msra.mxu0 0
        %8877 = vmatprep.subr.bf16.mxu0 0
        %8878 = vmatpush2.bf16.msra.mxu0 0
        %8879 = vmatprep.subr.bf16.mxu0 0
        %8880 = vmatpush2.bf16.msra.mxu0 0
        %8881 = vmatprep.mubr.bf16.mxu0 0
        %8882 = vmatmul.mubr.bf16.gmra.mxu0 %v8806
        %v8883 = vpop.f32.mrf.mxu0
        %v8884 = vadd.f32 0.0, %v8883
        %v8885 = vpop.f32.mrf.mxu0
        %v8886 = vadd.f32 0.0, %v8885
        %v8887 = vpop.f32.mrf.mxu0
        %v8888 = vpop.f32.mrf.mxu0
        %8889 = vdwg.mxu0
        %v8891 = vsel %vm646, %v8794, 0
        %8893 = vmatprep.subr.bf16.mxu0 0
        %8894 = vmatpush1.bf16.msra.mxu0 0
        %8895 = vmatprep.subr.bf16.mxu0 0
        %8896 = vmatpush1.bf16.msra.mxu0 0
        %8897 = vmatprep.subr.bf16.mxu0 0
        %8898 = vmatpush1.bf16.msra.mxu0 0
        %8899 = vmatprep.subr.bf16.mxu0 0
        %8900 = vmatpush1.bf16.msra.mxu0 0
        %8901 = vmatprep.subr.bf16.mxu0 0
        %8902 = vmatpush1.bf16.msra.mxu0 0
        %8903 = vmatprep.subr.bf16.mxu0 0
        %8904 = vmatpush1.bf16.msra.mxu0 0
        %8905 = vmatprep.subr.bf16.mxu0 0
        %8906 = vmatpush1.bf16.msra.mxu0 0
        %8907 = vmatprep.subr.bf16.mxu0 %v8796
        %8908 = vmatpush1.bf16.msra.mxu0 %v8795
        %8909 = vmatprep.subr.bf16.mxu0 0
        %8910 = vmatpush2.bf16.msra.mxu0 0
        %8911 = vmatprep.subr.bf16.mxu0 0
        %8912 = vmatpush2.bf16.msra.mxu0 0
        %8913 = vmatprep.subr.bf16.mxu0 0
        %8914 = vmatpush2.bf16.msra.mxu0 0
        %8915 = vmatprep.subr.bf16.mxu0 0
        %8916 = vmatpush2.bf16.msra.mxu0 0
        %8917 = vmatprep.subr.bf16.mxu0 0
        %8918 = vmatpush2.bf16.msra.mxu0 0
        %8919 = vmatprep.subr.bf16.mxu0 0
        %8920 = vmatpush2.bf16.msra.mxu0 0
        %8921 = vmatprep.subr.bf16.mxu0 0
        %8922 = vmatpush2.bf16.msra.mxu0 0
        %8923 = vmatprep.subr.bf16.mxu0 0
        %8924 = vmatpush2.bf16.msra.mxu0 0
        %8925 = vmatprep.mubr.bf16.mxu0 0
        %8926 = vmatmul.mubr.bf16.gmra.mxu0 %v8891
        %v8927 = vpop.f32.mrf.mxu0
        %v8928 = vadd.f32 %v8843, %v8927
        %v8929 = vpop.f32.mrf.mxu0
        %v8930 = vadd.f32 %v8845, %v8929
        %v8931 = vpop.f32.mrf.mxu0
        %v8932 = vpop.f32.mrf.mxu0
        %8933 = vdwg.mxu0
        %8934 = vmatprep.subr.bf16.mxu0 0
        %8935 = vmatpush1.bf16.msra.mxu0 0
        %8936 = vmatprep.subr.bf16.mxu0 0
        %8937 = vmatpush1.bf16.msra.mxu0 0
        %8938 = vmatprep.subr.bf16.mxu0 0
        %8939 = vmatpush1.bf16.msra.mxu0 0
        %8940 = vmatprep.subr.bf16.mxu0 0
        %8941 = vmatpush1.bf16.msra.mxu0 0
        %8942 = vmatprep.subr.bf16.mxu0 0
        %8943 = vmatpush1.bf16.msra.mxu0 0
        %8944 = vmatprep.subr.bf16.mxu0 0
        %8945 = vmatpush1.bf16.msra.mxu0 0
        %8946 = vmatprep.subr.bf16.mxu0 0
        %8947 = vmatpush1.bf16.msra.mxu0 0
        %8948 = vmatprep.subr.bf16.mxu0 %v8798
        %8949 = vmatpush1.bf16.msra.mxu0 %v8797
        %8950 = vmatprep.subr.bf16.mxu0 0
        %8951 = vmatpush2.bf16.msra.mxu0 0
        %8952 = vmatprep.subr.bf16.mxu0 0
        %8953 = vmatpush2.bf16.msra.mxu0 0
        %8954 = vmatprep.subr.bf16.mxu0 0
        %8955 = vmatpush2.bf16.msra.mxu0 0
        %8956 = vmatprep.subr.bf16.mxu0 0
        %8957 = vmatpush2.bf16.msra.mxu0 0
        %8958 = vmatprep.subr.bf16.mxu0 0
        %8959 = vmatpush2.bf16.msra.mxu0 0
        %8960 = vmatprep.subr.bf16.mxu0 0
        %8961 = vmatpush2.bf16.msra.mxu0 0
        %8962 = vmatprep.subr.bf16.mxu0 0
        %8963 = vmatpush2.bf16.msra.mxu0 0
        %8964 = vmatprep.subr.bf16.mxu0 0
        %8965 = vmatpush2.bf16.msra.mxu0 0
        %8966 = vmatprep.mubr.bf16.mxu0 0
        %8967 = vmatmul.mubr.bf16.gmra.mxu0 %v8891
        %v8968 = vpop.f32.mrf.mxu0
        %v8969 = vadd.f32 %v8884, %v8968
        %v8970 = vpop.f32.mrf.mxu0
        %v8971 = vadd.f32 %v8886, %v8970
        %v8972 = vpop.f32.mrf.mxu0
        %v8973 = vpop.f32.mrf.mxu0
        %8974 = vdwg.mxu0
        %v8975 = vld [vmem:[%s15] sm:$0xff]
        %8977 = vset.pattern.permute.xlu0 0
        %8978 = vperm.xlu0 %8977, %v8975
        %v8979 = vpop.permute.xlu0 %8978
        %v8981 = vadd.f32 %v8928, %v8979
        %v8982 = vadd.f32 %v8930, %v8979
        %v8983 = vadd.f32 %v8969, %v8979
        %v8984 = vadd.f32 %v8971, %v8979
        %v8985 = vld [vmem:[%s16] sm:$0xff]
        %v8986 = vld [vmem:[%s17] sm:$0xff]
        %8987 = vrot.lane.b32.xlu0 %v8981, 17
        %v8988 = vpop.permute.xlu0 %8987
        %8989 = vrot.lane.b32.xlu0 %v8982, 17
        %v8990 = vpop.permute.xlu0 %8989
        %8991 = vrot.lane.b32.xlu0 %v8983, 17
        %v8992 = vpop.permute.xlu0 %8991
        %8993 = vrot.lane.b32.xlu0 %v8984, 17
        %v8994 = vpop.permute.xlu0 %8993
        %v8995 = vsel %vm766, %v8992, %v8994
        %v8996 = vsel %vm766, %v8990, %v8992
        %v8997 = vsel %vm766, %v8988, %v8990
        %v8998 = vsel %vm766, %v8994, %v8988
        %v8999 = vmul.f32 %v8998, %v778
        %v9000 = vmul.f32 %v8997, %v782
        %v9001 = vmul.f32 %v8996, %v786
        %v9002 = vmul.f32 %v8995, %v790
        %9004 = vset.pattern.permute.xlu0 0
        %9005 = vperm.xlu0 %9004, %v8985
        %v9006 = vpop.permute.xlu0 %9005
        %v9008 = vmul.f32 %v8999, %v9006
        %v9009 = vmul.f32 %v9000, %v9006
        %v9010 = vmul.f32 %v9001, %v9006
        %v9011 = vmul.f32 %v9002, %v9006
        %v9012 = vadd.f32 %v9008, 0.0
        %v9013 = vadd.f32 %v9009, 0.0
        %v9014 = vadd.f32 %v9010, 0.0
        %v9015 = vadd.f32 %v9011, 0.0
        %9016 = vrot.lane.b32.xlu0 %v8981, 16
        %v9017 = vpop.permute.xlu0 %9016
        %9018 = vrot.lane.b32.xlu0 %v8982, 16
        %v9019 = vpop.permute.xlu0 %9018
        %9020 = vrot.lane.b32.xlu0 %v8983, 16
        %v9021 = vpop.permute.xlu0 %9020
        %9022 = vrot.lane.b32.xlu0 %v8984, 16
        %v9023 = vpop.permute.xlu0 %9022
        %v9024 = vsel %vm841, %v9021, %v9023
        %v9025 = vsel %vm841, %v9019, %v9021
        %v9026 = vsel %vm841, %v9017, %v9019
        %v9027 = vsel %vm841, %v9023, %v9017
        %v9028 = vmul.f32 %v9027, %v853
        %v9029 = vmul.f32 %v9026, %v857
        %v9030 = vmul.f32 %v9025, %v861
        %v9031 = vmul.f32 %v9024, %v865
        %9032 = vset.pattern.permute.xlu0 1
        %9033 = vperm.xlu0 %9032, %v8985
        %v9034 = vpop.permute.xlu0 %9033
        %v9036 = vmul.f32 %v9028, %v9034
        %v9037 = vmul.f32 %v9029, %v9034
        %v9038 = vmul.f32 %v9030, %v9034
        %v9039 = vmul.f32 %v9031, %v9034
        %v9040 = vadd.f32 %v9012, %v9036
        %v9041 = vadd.f32 %v9013, %v9037
        %v9042 = vadd.f32 %v9014, %v9038
        %v9043 = vadd.f32 %v9015, %v9039
        %9044 = vrot.lane.b32.xlu0 %v8981, 15
        %v9045 = vpop.permute.xlu0 %9044
        %9046 = vrot.lane.b32.xlu0 %v8982, 15
        %v9047 = vpop.permute.xlu0 %9046
        %9048 = vrot.lane.b32.xlu0 %v8983, 15
        %v9049 = vpop.permute.xlu0 %9048
        %9050 = vrot.lane.b32.xlu0 %v8984, 15
        %v9051 = vpop.permute.xlu0 %9050
        %v9052 = vsel %vm914, %v9049, %v9051
        %v9053 = vsel %vm914, %v9047, %v9049
        %v9054 = vsel %vm914, %v9045, %v9047
        %v9055 = vsel %vm914, %v9051, %v9045
        %v9056 = vmul.f32 %v9055, %v926
        %v9057 = vmul.f32 %v9054, %v930
        %v9058 = vmul.f32 %v9053, %v934
        %v9059 = vmul.f32 %v9052, %v938
        %9060 = vset.pattern.permute.xlu0 2
        %9061 = vperm.xlu0 %9060, %v8985
        %v9062 = vpop.permute.xlu0 %9061
        %v9064 = vmul.f32 %v9056, %v9062
        %v9065 = vmul.f32 %v9057, %v9062
        %v9066 = vmul.f32 %v9058, %v9062
        %v9067 = vmul.f32 %v9059, %v9062
        %v9068 = vadd.f32 %v9040, %v9064
        %v9069 = vadd.f32 %v9041, %v9065
        %v9070 = vadd.f32 %v9042, %v9066
        %v9071 = vadd.f32 %v9043, %v9067
        %9072 = vrot.lane.b32.xlu0 %v8981, 1
        %v9073 = vpop.permute.xlu0 %9072
        %9074 = vrot.lane.b32.xlu0 %v8982, 1
        %v9075 = vpop.permute.xlu0 %9074
        %9076 = vrot.lane.b32.xlu0 %v8983, 1
        %v9077 = vpop.permute.xlu0 %9076
        %9078 = vrot.lane.b32.xlu0 %v8984, 1
        %v9079 = vpop.permute.xlu0 %9078
        %v9080 = vsel %vm987, %v9077, %v9079
        %v9081 = vsel %vm987, %v9075, %v9077
        %v9082 = vsel %vm987, %v9073, %v9075
        %v9083 = vsel %vm987, %v9079, %v9073
        %v9084 = vmul.f32 %v9083, %v999
        %v9085 = vmul.f32 %v9082, %v1003
        %v9086 = vmul.f32 %v9081, %v1007
        %v9087 = vmul.f32 %v9080, %v1011
        %9088 = vset.pattern.permute.xlu0 3
        %9089 = vperm.xlu0 %9088, %v8985
        %v9090 = vpop.permute.xlu0 %9089
        %v9092 = vmul.f32 %v9084, %v9090
        %v9093 = vmul.f32 %v9085, %v9090
        %v9094 = vmul.f32 %v9086, %v9090
        %v9095 = vmul.f32 %v9087, %v9090
        %v9096 = vadd.f32 %v9068, %v9092
        %v9097 = vadd.f32 %v9069, %v9093
        %v9098 = vadd.f32 %v9070, %v9094
        %v9099 = vadd.f32 %v9071, %v9095
        %9100 = vset.pattern.permute.xlu0 4
        %9101 = vperm.xlu0 %9100, %v8985
        %v9102 = vpop.permute.xlu0 %9101
        %v9104 = vmul.f32 %v8981, %v9102
        %v9105 = vmul.f32 %v8982, %v9102
        %v9106 = vmul.f32 %v8983, %v9102
        %v9107 = vmul.f32 %v8984, %v9102
        %v9108 = vadd.f32 %v9096, %v9104
        %v9109 = vadd.f32 %v9097, %v9105
        %v9110 = vadd.f32 %v9098, %v9106
        %v9111 = vadd.f32 %v9099, %v9107
        %9112 = vrot.lane.b32.xlu0 %v8981, 127
        %v9113 = vpop.permute.xlu0 %9112
        %9114 = vrot.lane.b32.xlu0 %v8982, 127
        %v9115 = vpop.permute.xlu0 %9114
        %9116 = vrot.lane.b32.xlu0 %v8983, 127
        %v9117 = vpop.permute.xlu0 %9116
        %9118 = vrot.lane.b32.xlu0 %v8984, 127
        %v9119 = vpop.permute.xlu0 %9118
        %v9120 = vsel %vm1084, %v9117, %v9119
        %v9121 = vsel %vm1084, %v9115, %v9117
        %v9122 = vsel %vm1084, %v9113, %v9115
        %v9123 = vsel %vm1084, %v9119, %v9113
        %v9124 = vmul.f32 %v9122, %v1096
        %v9125 = vmul.f32 %v9121, %v1100
        %v9126 = vmul.f32 %v9120, %v1104
        %v9127 = vmul.f32 %v9123, %v1108
        %9128 = vset.pattern.permute.xlu0 5
        %9129 = vperm.xlu0 %9128, %v8985
        %v9130 = vpop.permute.xlu0 %9129
        %v9132 = vmul.f32 %v9124, %v9130
        %v9133 = vmul.f32 %v9125, %v9130
        %v9134 = vmul.f32 %v9126, %v9130
        %v9135 = vmul.f32 %v9127, %v9130
        %v9136 = vadd.f32 %v9108, %v9132
        %v9137 = vadd.f32 %v9109, %v9133
        %v9138 = vadd.f32 %v9110, %v9134
        %v9139 = vadd.f32 %v9111, %v9135
        %9140 = vrot.lane.b32.xlu0 %v8981, 113
        %v9141 = vpop.permute.xlu0 %9140
        %9142 = vrot.lane.b32.xlu0 %v8982, 113
        %v9143 = vpop.permute.xlu0 %9142
        %9144 = vrot.lane.b32.xlu0 %v8983, 113
        %v9145 = vpop.permute.xlu0 %9144
        %9146 = vrot.lane.b32.xlu0 %v8984, 113
        %v9147 = vpop.permute.xlu0 %9146
        %v9148 = vsel %vm1157, %v9145, %v9147
        %v9149 = vsel %vm1157, %v9143, %v9145
        %v9150 = vsel %vm1157, %v9141, %v9143
        %v9151 = vsel %vm1157, %v9147, %v9141
        %v9152 = vmul.f32 %v9150, %v1169
        %v9153 = vmul.f32 %v9149, %v1173
        %v9154 = vmul.f32 %v9148, %v1177
        %v9155 = vmul.f32 %v9151, %v1181
        %9156 = vset.pattern.permute.xlu0 6
        %9157 = vperm.xlu0 %9156, %v8985
        %v9158 = vpop.permute.xlu0 %9157
        %v9160 = vmul.f32 %v9152, %v9158
        %v9161 = vmul.f32 %v9153, %v9158
        %v9162 = vmul.f32 %v9154, %v9158
        %v9163 = vmul.f32 %v9155, %v9158
        %v9164 = vadd.f32 %v9136, %v9160
        %v9165 = vadd.f32 %v9137, %v9161
        %v9166 = vadd.f32 %v9138, %v9162
        %v9167 = vadd.f32 %v9139, %v9163
        %9168 = vrot.lane.b32.xlu0 %v8981, 112
        %v9169 = vpop.permute.xlu0 %9168
        %9170 = vrot.lane.b32.xlu0 %v8982, 112
        %v9171 = vpop.permute.xlu0 %9170
        %9172 = vrot.lane.b32.xlu0 %v8983, 112
        %v9173 = vpop.permute.xlu0 %9172
        %9174 = vrot.lane.b32.xlu0 %v8984, 112
        %v9175 = vpop.permute.xlu0 %9174
        %v9176 = vsel %vm1230, %v9173, %v9175
        %v9177 = vsel %vm1230, %v9171, %v9173
        %v9178 = vsel %vm1230, %v9169, %v9171
        %v9179 = vsel %vm1230, %v9175, %v9169
        %v9180 = vmul.f32 %v9178, %v1242
        %v9181 = vmul.f32 %v9177, %v1246
        %v9182 = vmul.f32 %v9176, %v1250
        %v9183 = vmul.f32 %v9179, %v1254
        %9184 = vset.pattern.permute.xlu0 7
        %9185 = vperm.xlu0 %9184, %v8985
        %v9186 = vpop.permute.xlu0 %9185
        %v9188 = vmul.f32 %v9180, %v9186
        %v9189 = vmul.f32 %v9181, %v9186
        %v9190 = vmul.f32 %v9182, %v9186
        %v9191 = vmul.f32 %v9183, %v9186
        %v9192 = vadd.f32 %v9164, %v9188
        %v9193 = vadd.f32 %v9165, %v9189
        %v9194 = vadd.f32 %v9166, %v9190
        %v9195 = vadd.f32 %v9167, %v9191
        %9196 = vrot.lane.b32.xlu0 %v8981, 111
        %v9197 = vpop.permute.xlu0 %9196
        %9198 = vrot.lane.b32.xlu0 %v8982, 111
        %v9199 = vpop.permute.xlu0 %9198
        %9200 = vrot.lane.b32.xlu0 %v8983, 111
        %v9201 = vpop.permute.xlu0 %9200
        %9202 = vrot.lane.b32.xlu0 %v8984, 111
        %v9203 = vpop.permute.xlu0 %9202
        %v9204 = vsel %vm1303, %v9201, %v9203
        %v9205 = vsel %vm1303, %v9199, %v9201
        %v9206 = vsel %vm1303, %v9197, %v9199
        %v9207 = vsel %vm1303, %v9203, %v9197
        %v9208 = vmul.f32 %v9206, %v1315
        %v9209 = vmul.f32 %v9205, %v1319
        %v9210 = vmul.f32 %v9204, %v1323
        %v9211 = vmul.f32 %v9207, %v1327
        %9212 = vset.pattern.permute.xlu0 8
        %9213 = vperm.xlu0 %9212, %v8985
        %v9214 = vpop.permute.xlu0 %9213
        %v9216 = vmul.f32 %v9208, %v9214
        %v9217 = vmul.f32 %v9209, %v9214
        %v9218 = vmul.f32 %v9210, %v9214
        %v9219 = vmul.f32 %v9211, %v9214
        %v9220 = vadd.f32 %v9192, %v9216
        %v9221 = vadd.f32 %v9193, %v9217
        %v9222 = vadd.f32 %v9194, %v9218
        %v9223 = vadd.f32 %v9195, %v9219
        %9225 = vset.pattern.permute.xlu0 0
        %9226 = vperm.xlu0 %9225, %v8986
        %v9227 = vpop.permute.xlu0 %9226
        %v9229 = vadd.f32 %v9220, %v9227
        %v9230 = vadd.f32 %v9221, %v9227
        %v9231 = vadd.f32 %v9222, %v9227
        %v9232 = vadd.f32 %v9223, %v9227
        %v9233 = vadd.f32 %v8981, %v611
        %v9234 = vadd.f32 %v8982, %v612
        %v9235 = vadd.f32 %v8983, %v613
        %v9236 = vadd.f32 %v8984, %v614
        %9237 = vst [vmem:[%s607] sm:$0xff] %v9233
        %9238 = vst [vmem:[%s607 + $0x8] sm:$0xff] %v9234
        %9239 = vst [vmem:[%s607 + $0x10] sm:$0xff] %v9235
        %9240 = vst [vmem:[%s607 + $0x18] sm:$0xff] %v9236
        %v9241 = vadd.f32 %v9229, %v615
        %v9242 = vadd.f32 %v9230, %v616
        %v9243 = vadd.f32 %v9231, %v617
        %v9244 = vadd.f32 %v9232, %v618
        %9245 = vst [vmem:[%s607 + $0x20] sm:$0xff] %v9241
        %9246 = vst [vmem:[%s607 + $0x28] sm:$0xff] %v9242
        %9247 = vst [vmem:[%s607 + $0x30] sm:$0xff] %v9243
        %9248 = vst [vmem:[%s607 + $0x38] sm:$0xff] %v9244
        %s9249 = sand.u32 %s423, 1
        %s9250 = scalar_lea.sflag [#allocation4], %s9249
        %s9251 = sand.u32 %s423, 1
        %s9252 = smul.addr %s9251, 64
        %s9253 = scalar_lea.vmem [#allocation3], %s9252
        // Predicated region
        $region116: #{tpu_custom_call.1} parent=110 // pred_check
          %p9254 = pneg %p433
        $region117: #{tpu_custom_call.1} parent=110 // pred_check_branch
          %9256 = sbr.rel (%p9254) target = $region119
        $region118: #{tpu_custom_call.1} parent=110 // pred_region
          %s9257 = smul.u32 4, %s32
          %s9259 = ssub.s32 1024, 1024
          %9260 = vsyncadd %s9250, %s9259
          %s9261 = smul.addr %s9257, 128
          %s9262 = scalar_lea.hbm %s18, %s9261
          %s9263 = sshll.u32 %s9253, 4
          %s9264 = int_to_ptr.vmem [resolvable:$true] %s9263
          %9269 = dma.vmem_to_hbm [thread:$0]  %s9264, 1024, %s9262, %s9250, 512, 1024, 32
        $region119: #{tpu_custom_call.1} parent=110 // pred_fallthru
          _
      $region111: #{tpu_custom_call.1} parent=5 // pred_fallthru
        _
      %p9270 = scmp.le.s32.totalorder 2, %s27
      // Predicated region
      $region120: #{tpu_custom_call.1} parent=5 // pred_check
        %p9271 = pneg %p9270
      $region121: #{tpu_custom_call.1} parent=5 // pred_check_branch
        %9273 = sbr.rel (%p9271) target = $region123
      $region122: #{tpu_custom_call.1} parent=5 // pred_region
        %s9274 = ssub.s32 %s27, 2
        // Predicated region
        $region124: #{tpu_custom_call.1} parent=122 // pred_check
          %p9275 = pneg %p439
        $region125: #{tpu_custom_call.1} parent=122 // pred_check_branch
          %9277 = sbr.rel (%p9275) target = $region127
        $region126: #{tpu_custom_call.1} parent=122 // pred_region
          %s9278 = sand.u32 %s424, 1
          %s9279 = scalar_lea.sflag [#allocation4], %s9278
          %s9280 = sand.u32 %s424, 1
          %s9281 = smul.addr %s9280, 64
          %s9282 = scalar_lea.vmem [#allocation3], %s9281
          %9283 = dma.done %s9279, 1024
        $region127: #{tpu_custom_call.1} parent=122 // pred_fallthru
          _
      $region123: #{tpu_custom_call.1} parent=5 // pred_fallthru
        _
    $region6: #{tpu_custom_call.1} parent=1 // loop_footer
      %s31 = sadd.s32 1, %s27
    $region7: #{tpu_custom_call.1} parent=1 // loop_footer_branch
      %26 = sbr.rel target = $region3
    $region8: #{tpu_custom_call.1} parent=1 // loop_exit
      _
    %9284 = vsyncpa [#allocation4], 1
    %s9285 = scalar_lea.sflag [#allocation4], 1
    %9286 = vsyncpa %s9285, 1

</llo_original>
